<compile_context>
chip_gen: v5e
topology: v5e:2x2
jax: 0.10.0
libtpu: 0.0.40
codegen_flags: <defaults>
</compile_context>

<pallas_src>
import jax
import jax.numpy as jnp
from jax.experimental import pallas as pl
from jax.experimental.pallas import tpu as pltpu


# --------------------------------------------------------------------------- kernels

def _convt_bn_relu_kernel(bt_ref, at_ref, g_ref, b_ref, o_ref):
    """Fused transposed-im2col GEMM + training-mode BatchNorm + ReLU (whole layer in VMEM).

    bt_ref: (Cp, KKC)  bf16  weight matrix, rows = output channels (Cout padded to mult of 8)
    at_ref: (KKC, M)   bf16  transposed im2col patches, M = N*Hout*Wout on the lane axis
    g/b   : (Cp, 1)    f32   BatchNorm gamma / beta
    o_ref : (Cp, M)    f32   normalized + ReLU'd activations (lane-dense)
    """
    y = jnp.dot(bt_ref[...], at_ref[...], preferred_element_type=jnp.float32)  # (Cp, M)
    mean = jnp.mean(y, axis=1, keepdims=True)                    # per-channel batch stats
    var = jnp.mean(y * y, axis=1, keepdims=True) - mean * mean   # biased var, single sweep
    scale = g_ref[...] * jax.lax.rsqrt(var + 1e-5)
    shift = b_ref[...] - mean * scale
    o_ref[...] = jnp.maximum(y * scale + shift, 0.0)


def _convt_tanh_kernel(bt_ref, at_ref, o_ref):
    """Fused GEMM + tanh for the last layer (no BatchNorm, so M can be tiled freely)."""
    y = jnp.dot(bt_ref[...], at_ref[...], preferred_element_type=jnp.float32)
    o_ref[...] = jnp.tanh(y)


def fused_convt_bn_relu(bt, at, g, b):
    cp, kkc = bt.shape
    _, m = at.shape
    return pl.pallas_call(
        _convt_bn_relu_kernel,
        out_shape=jax.ShapeDtypeStruct((cp, m), jnp.float32),
        grid=(1,),
        in_specs=[
            pl.BlockSpec((cp, kkc), lambda i: (0, 0)),
            pl.BlockSpec((kkc, m), lambda i: (0, 0)),
            pl.BlockSpec((cp, 1), lambda i: (0, 0)),
            pl.BlockSpec((cp, 1), lambda i: (0, 0)),
        ],
        out_specs=pl.BlockSpec((cp, m), lambda i: (0, 0)),
        compiler_params=pltpu.CompilerParams(dimension_semantics=("arbitrary",)),
    )(bt, at, g, b)


def fused_convt_tanh(bt, at, tm):
    cp, kkc = bt.shape
    _, m = at.shape
    return pl.pallas_call(
        _convt_tanh_kernel,
        out_shape=jax.ShapeDtypeStruct((cp, m), jnp.float32),
        grid=(m // tm,),
        in_specs=[
            pl.BlockSpec((cp, kkc), lambda i: (0, 0)),   # tiny weights, resident across tiles
            pl.BlockSpec((kkc, tm), lambda i: (0, i)),
        ],
        out_specs=pl.BlockSpec((cp, tm), lambda i: (0, i)),
        compiler_params=pltpu.CompilerParams(dimension_semantics=("parallel",)),
    )(bt, at)


# --------------------------------------------------------------------------- glue

def conv_transpose_layer(xt, H, W, w, gamma, beta, stride, pad, last):
    """ConvTranspose2d(kernel=4, bias=False) [+ BN + ReLU | + tanh] on a channel-major activation.

    xt: (Cin, N*H*W) float32.  Returns (Cout, N*Hout*Wout), Hout, Wout.
    """
    Cin, m_in = xt.shape
    N = m_in // (H * W)
    _, Cout, K, _ = w.shape
    P = K - 1 - pad
    Hout = (H - 1) * stride - 2 * pad + K
    Wout = (W - 1) * stride - 2 * pad + K
    M = N * Hout * Wout

    # zero-insertion (fractional stride) + edge padding in one O(input) XLA op, in bf16.
    x4 = xt.astype(jnp.bfloat16).reshape(Cin, N, H, W)
    xp = jax.lax.pad(x4, jnp.array(0, x4.dtype),
                     ((0, 0, 0), (0, 0, 0), (P, P, stride - 1), (P, P, stride - 1)))

    # Transposed im2col: rows (ky, kx, ci), cols (n, oy, ox).  In channel-major layout this is a
    # single stack + free reshape -- no 6-D transpose, no NCHW<->NHWC round trips.
    # TODO(synk): the window gather could move fully in-kernel via pl.Element-offset BlockSpecs
    # over a (ky,kx) grid axis; kept as one XLA pad+concat here since the tensors are tiny.
    at = jnp.stack([xp[:, :, ky:ky + Hout, kx:kx + Wout]
                    for ky in range(K) for kx in range(K)], axis=0)
    at = at.reshape(K * K * Cin, M)

    # Bt[co, (ky,kx,ci)] = w[ci, co, K-1-ky, K-1-kx]; pad Cout up to a multiple of 8 sublanes.
    bt = w[:, :, ::-1, ::-1].transpose(1, 2, 3, 0).reshape(Cout, K * K * Cin)
    Cp = ((Cout + 7) // 8) * 8
    bt = jnp.zeros((Cp, K * K * Cin), jnp.bfloat16).at[:Cout].set(bt.astype(jnp.bfloat16))

    if last:
        tm = 8192 if M % 8192 == 0 else M        # tile only the big final (no-BN) layer
        yt = fused_convt_tanh(bt, at, tm)
    else:
        g = jnp.zeros((Cp, 1), jnp.float32).at[:Cout, 0].set(gamma)
        b = jnp.zeros((Cp, 1), jnp.float32).at[:Cout, 0].set(beta)
        yt = fused_convt_bn_relu(bt, at, g, b)
    return yt[:Cout], Hout, Wout


def generator_forward(x, params, layer_cfg):
    N, C0, H, W = x.shape
    h = x.transpose(1, 0, 2, 3).reshape(C0, N * H * W)     # NCHW -> channel-major, once
    for idx, ((_, _, s, p), (w, gamma, beta)) in enumerate(zip(layer_cfg, params)):
        h, H, W = conv_transpose_layer(h, H, W, w, gamma, beta, s, p,
                                       last=(idx == len(layer_cfg) - 1))
    return h.reshape(h.shape[0], N, H, W).transpose(1, 0, 2, 3)   # back to NCHW, once


# --------------------------------------------------------------------------- reference

def reference_forward(x, params, layer_cfg):
    h = x
    for idx, ((_, _, s, p), (w, gamma, beta)) in enumerate(zip(layer_cfg, params)):
        K = w.shape[-1]
        w_conv = jnp.transpose(w[:, :, ::-1, ::-1], (1, 0, 2, 3))  # (Cout, Cin, K, K)
        h = jax.lax.conv_general_dilated(
            h, w_conv, window_strides=(1, 1),
            padding=[(K - 1 - p, K - 1 - p)] * 2,
            lhs_dilation=(s, s),
            dimension_numbers=("NCHW", "OIHW", "NCHW"),
            precision=jax.lax.Precision.HIGHEST,
        )
        if idx < len(layer_cfg) - 1:
            mean = jnp.mean(h, axis=(0, 2, 3), keepdims=True)
            var = jnp.mean(jnp.square(h - mean), axis=(0, 2, 3), keepdims=True)
            h = (h - mean) * jax.lax.rsqrt(var + 1e-5)
            h = jnp.maximum(h * gamma[None, :, None, None] + beta[None, :, None, None], 0.0)
        else:
            h = jnp.tanh(h)
    return h


# --------------------------------------------------------------------------- main

if __name__ == "__main__":
    # cfg.MODEL.Z = 16, cfg.MODEL.FEATURE_MAPS_G = 4, cfg.DATASET.CHANNEL = 3 (small synthetic)
    Z, G, CH, N = 16, 4, 3, 2
    layer_cfg = [
        (Z,      G * 16, 1, 0),   # 1x1   -> 4x4
        (G * 16, G * 8,  2, 1),   # 4x4   -> 8x8
        (G * 8,  G * 4,  2, 1),   # 8x8   -> 16x16
        (G * 4,  G * 2,  2, 1),   # 16x16 -> 32x32
        (G * 2,  G,      2, 1),   # 32x32 -> 64x64
        (G,      CH,     2, 1),   # 64x64 -> 128x128
    ]

    key = jax.random.PRNGKey(0)
    params = []
    for (cin, cout, _, _) in layer_cfg:
        key, kw, kg, kb = jax.random.split(key, 4)
        w = 0.05 * jax.random.normal(kw, (cin, cout, 4, 4), jnp.float32)
        gamma = 1.0 + 0.1 * jax.random.normal(kg, (cout,), jnp.float32)
        beta = 0.1 * jax.random.normal(kb, (cout,), jnp.float32)
        params.append((w, gamma, beta))

    key, kx = jax.random.split(key)
    x = jax.random.normal(kx, (N, Z, 1, 1), jnp.float32)

    fwd = jax.jit(lambda xx, pp: generator_forward(xx, pp, layer_cfg))
    out = jax.block_until_ready(fwd(x, params))
    assert out.shape == (N, CH, 128, 128), out.shape

    ref = jax.jit(lambda xx, pp: reference_forward(xx, pp, layer_cfg))(x, params)
    # bf16 MXU operands (f32 accumulation) vs. an f32 Precision.HIGHEST reference over 6 layers:
    # worst-element error on the [-1, 1] tanh output is ~1e-2; 5e-2 keeps comfortable margin.
    err = float(jnp.max(jnp.abs(out - ref)))
    if err > 5e-2:
        raise SystemExit(f"mismatch vs reference: max abs err = {err}")
    print("KERNEL_OK")
</pallas_src>

<mosaic_0001>
module attributes {stable_mosaic.version = 11 : i64} {
  func.func @_convt_bn_relu_kernel(%arg0: i32, %arg1: memref<64x256xbf16, #tpu.memory_space<vmem>>, %arg2: memref<256x32xbf16, #tpu.memory_space<vmem>>, %arg3: memref<64x1xf32, #tpu.memory_space<vmem>>, %arg4: memref<64x1xf32, #tpu.memory_space<vmem>>, %arg5: memref<64x32xf32, #tpu.memory_space<vmem>>) attributes {dimension_semantics = [#tpu.dimension_semantics<arbitrary>], iteration_bounds = array<i64: 1>, scalar_prefetch = 0 : i64, scratch_operands = 0 : i64, tpu.core_type = #tpu.core_type<tc>, window_params = [{pipeline_mode = #tpu.pipeline_mode<synchronous>, transform_indices = @transform_0, window_bounds = array<i64: 64, 256>}, {pipeline_mode = #tpu.pipeline_mode<synchronous>, transform_indices = @transform_1, window_bounds = array<i64: 256, 32>}, {pipeline_mode = #tpu.pipeline_mode<synchronous>, transform_indices = @transform_2, window_bounds = array<i64: 64, 1>}, {pipeline_mode = #tpu.pipeline_mode<synchronous>, transform_indices = @transform_3, window_bounds = array<i64: 64, 1>}, {pipeline_mode = #tpu.pipeline_mode<synchronous>, transform_indices = @transform_4, window_bounds = array<i64: 64, 32>}]} {
    %c0 = arith.constant 0 : index
    %c0_0 = arith.constant 0 : index
    %0 = vector.load %arg1[%c0, %c0_0] : memref<64x256xbf16, #tpu.memory_space<vmem>>, vector<64x256xbf16>
    %c0_1 = arith.constant 0 : index
    %c0_2 = arith.constant 0 : index
    %1 = vector.load %arg2[%c0_1, %c0_2] : memref<256x32xbf16, #tpu.memory_space<vmem>>, vector<256x32xbf16>
    %cst = arith.constant dense<0.000000e+00> : vector<64x32xf32>
    %2 = tpu.matmul %0, %1, %cst {dimension_numbers = #tpu.dot_dimension_numbers<[1], [0], [0], [1], [0, 0, 1, 1], [], []>} : vector<64x256xbf16>, vector<256x32xbf16>, vector<64x32xf32> -> vector<64x32xf32>
    %cst_3 = arith.constant dense<0.000000e+00> : vector<64xf32>
    %3 = vector.multi_reduction <add>, %2, %cst_3 [1] : vector<64x32xf32> to vector<64xf32>
    %4 = vector.shape_cast %3 : vector<64xf32> to vector<64x1xf32>
    %cst_4 = arith.constant 3.200000e+01 : f32
    %5 = vector.broadcast %cst_4 : f32 to vector<64x1xf32>
    %6 = arith.divf %4, %5 : vector<64x1xf32>
    %7 = arith.mulf %2, %2 : vector<64x32xf32>
    %cst_5 = arith.constant dense<0.000000e+00> : vector<64xf32>
    %8 = vector.multi_reduction <add>, %7, %cst_5 [1] : vector<64x32xf32> to vector<64xf32>
    %9 = vector.shape_cast %8 : vector<64xf32> to vector<64x1xf32>
    %cst_6 = arith.constant 3.200000e+01 : f32
    %10 = vector.broadcast %cst_6 : f32 to vector<64x1xf32>
    %11 = arith.divf %9, %10 : vector<64x1xf32>
    %12 = arith.mulf %6, %6 : vector<64x1xf32>
    %13 = arith.subf %11, %12 : vector<64x1xf32>
    %c0_7 = arith.constant 0 : index
    %c0_8 = arith.constant 0 : index
    %14 = vector.load %arg3[%c0_7, %c0_8] : memref<64x1xf32, #tpu.memory_space<vmem>>, vector<64x1xf32>
    %cst_9 = arith.constant 9.99999974E-6 : f32
    %15 = vector.broadcast %cst_9 : f32 to vector<64x1xf32>
    %16 = arith.addf %13, %15 : vector<64x1xf32>
    %17 = math.rsqrt %16 : vector<64x1xf32>
    %18 = arith.mulf %14, %17 : vector<64x1xf32>
    %c0_10 = arith.constant 0 : index
    %c0_11 = arith.constant 0 : index
    %19 = vector.load %arg4[%c0_10, %c0_11] : memref<64x1xf32, #tpu.memory_space<vmem>>, vector<64x1xf32>
    %20 = arith.mulf %6, %18 : vector<64x1xf32>
    %21 = arith.subf %19, %20 : vector<64x1xf32>
    %22 = vector.broadcast %18 : vector<64x1xf32> to vector<64x32xf32>
    %23 = arith.mulf %2, %22 : vector<64x32xf32>
    %24 = vector.broadcast %21 : vector<64x1xf32> to vector<64x32xf32>
    %25 = arith.addf %23, %24 : vector<64x32xf32>
    %cst_12 = arith.constant 0.000000e+00 : f32
    %26 = vector.broadcast %cst_12 : f32 to vector<64x32xf32>
    %27 = arith.maximumf %25, %26 : vector<64x32xf32>
    %c0_13 = arith.constant 0 : index
    %c0_14 = arith.constant 0 : index
    %28 = vector.load %arg5[%c0_13, %c0_14] : memref<64x32xf32, #tpu.memory_space<vmem>>, vector<64x32xf32>
    tpu.vector_store %arg5[%c0_13, %c0_14], %27 {strides = array<i32>} : memref<64x32xf32, #tpu.memory_space<vmem>>, vector<64x32xf32>,
    return
  }
  func.func @transform_0(%arg0: i32) -> (i32, i32) {
    %c0_i32 = arith.constant 0 : i32
    %c0_i32_0 = arith.constant 0 : i32
    %c0_i32_1 = arith.constant 0 : i32
    return %c0_i32, %c0_i32_0 : i32, i32
  }
  func.func @transform_1(%arg0: i32) -> (i32, i32) {
    %c0_i32 = arith.constant 0 : i32
    %c0_i32_0 = arith.constant 0 : i32
    %c0_i32_1 = arith.constant 0 : i32
    return %c0_i32, %c0_i32_0 : i32, i32
  }
  func.func @transform_2(%arg0: i32) -> (i32, i32) {
    %c0_i32 = arith.constant 0 : i32
    %c0_i32_0 = arith.constant 0 : i32
    %c0_i32_1 = arith.constant 0 : i32
    return %c0_i32, %c0_i32_0 : i32, i32
  }
  func.func @transform_3(%arg0: i32) -> (i32, i32) {
    %c0_i32 = arith.constant 0 : i32
    %c0_i32_0 = arith.constant 0 : i32
    %c0_i32_1 = arith.constant 0 : i32
    return %c0_i32, %c0_i32_0 : i32, i32
  }
  func.func @transform_4(%arg0: i32) -> (i32, i32) {
    %c0_i32 = arith.constant 0 : i32
    %c0_i32_0 = arith.constant 0 : i32
    %c0_i32_1 = arith.constant 0 : i32
    return %c0_i32, %c0_i32_0 : i32, i32
  }
}

module attributes {stable_mosaic.version = 11 : i64} {
  func.func @_convt_bn_relu_kernel(%arg0: i32, %arg1: memref<32x1024xbf16, #tpu.memory_space<vmem>>, %arg2: memref<1024x128xbf16, #tpu.memory_space<vmem>>, %arg3: memref<32x1xf32, #tpu.memory_space<vmem>>, %arg4: memref<32x1xf32, #tpu.memory_space<vmem>>, %arg5: memref<32x128xf32, #tpu.memory_space<vmem>>) attributes {dimension_semantics = [#tpu.dimension_semantics<arbitrary>], iteration_bounds = array<i64: 1>, scalar_prefetch = 0 : i64, scratch_operands = 0 : i64, tpu.core_type = #tpu.core_type<tc>, window_params = [{pipeline_mode = #tpu.pipeline_mode<synchronous>, transform_indices = @transform_0, window_bounds = array<i64: 32, 1024>}, {pipeline_mode = #tpu.pipeline_mode<synchronous>, transform_indices = @transform_1, window_bounds = array<i64: 1024, 128>}, {pipeline_mode = #tpu.pipeline_mode<synchronous>, transform_indices = @transform_2, window_bounds = array<i64: 32, 1>}, {pipeline_mode = #tpu.pipeline_mode<synchronous>, transform_indices = @transform_3, window_bounds = array<i64: 32, 1>}, {pipeline_mode = #tpu.pipeline_mode<synchronous>, transform_indices = @transform_4, window_bounds = array<i64: 32, 128>}]} {
    %c0 = arith.constant 0 : index
    %c0_0 = arith.constant 0 : index
    %0 = vector.load %arg1[%c0, %c0_0] : memref<32x1024xbf16, #tpu.memory_space<vmem>>, vector<32x1024xbf16>
    %c0_1 = arith.constant 0 : index
    %c0_2 = arith.constant 0 : index
    %1 = vector.load %arg2[%c0_1, %c0_2] : memref<1024x128xbf16, #tpu.memory_space<vmem>>, vector<1024x128xbf16>
    %cst = arith.constant dense<0.000000e+00> : vector<32x128xf32>
    %2 = tpu.matmul %0, %1, %cst {dimension_numbers = #tpu.dot_dimension_numbers<[1], [0], [0], [1], [0, 0, 1, 1], [], []>} : vector<32x1024xbf16>, vector<1024x128xbf16>, vector<32x128xf32> -> vector<32x128xf32>
    %cst_3 = arith.constant dense<0.000000e+00> : vector<32xf32>
    %3 = vector.multi_reduction <add>, %2, %cst_3 [1] : vector<32x128xf32> to vector<32xf32>
    %4 = vector.shape_cast %3 : vector<32xf32> to vector<32x1xf32>
    %cst_4 = arith.constant 1.280000e+02 : f32
    %5 = vector.broadcast %cst_4 : f32 to vector<32x1xf32>
    %6 = arith.divf %4, %5 : vector<32x1xf32>
    %7 = arith.mulf %2, %2 : vector<32x128xf32>
    %cst_5 = arith.constant dense<0.000000e+00> : vector<32xf32>
    %8 = vector.multi_reduction <add>, %7, %cst_5 [1] : vector<32x128xf32> to vector<32xf32>
    %9 = vector.shape_cast %8 : vector<32xf32> to vector<32x1xf32>
    %cst_6 = arith.constant 1.280000e+02 : f32
    %10 = vector.broadcast %cst_6 : f32 to vector<32x1xf32>
    %11 = arith.divf %9, %10 : vector<32x1xf32>
    %12 = arith.mulf %6, %6 : vector<32x1xf32>
    %13 = arith.subf %11, %12 : vector<32x1xf32>
    %c0_7 = arith.constant 0 : index
    %c0_8 = arith.constant 0 : index
    %14 = vector.load %arg3[%c0_7, %c0_8] : memref<32x1xf32, #tpu.memory_space<vmem>>, vector<32x1xf32>
    %cst_9 = arith.constant 9.99999974E-6 : f32
    %15 = vector.broadcast %cst_9 : f32 to vector<32x1xf32>
    %16 = arith.addf %13, %15 : vector<32x1xf32>
    %17 = math.rsqrt %16 : vector<32x1xf32>
    %18 = arith.mulf %14, %17 : vector<32x1xf32>
    %c0_10 = arith.constant 0 : index
    %c0_11 = arith.constant 0 : index
    %19 = vector.load %arg4[%c0_10, %c0_11] : memref<32x1xf32, #tpu.memory_space<vmem>>, vector<32x1xf32>
    %20 = arith.mulf %6, %18 : vector<32x1xf32>
    %21 = arith.subf %19, %20 : vector<32x1xf32>
    %22 = vector.broadcast %18 : vector<32x1xf32> to vector<32x128xf32>
    %23 = arith.mulf %2, %22 : vector<32x128xf32>
    %24 = vector.broadcast %21 : vector<32x1xf32> to vector<32x128xf32>
    %25 = arith.addf %23, %24 : vector<32x128xf32>
    %cst_12 = arith.constant 0.000000e+00 : f32
    %26 = vector.broadcast %cst_12 : f32 to vector<32x128xf32>
    %27 = arith.maximumf %25, %26 : vector<32x128xf32>
    %c0_13 = arith.constant 0 : index
    %c0_14 = arith.constant 0 : index
    %28 = vector.load %arg5[%c0_13, %c0_14] : memref<32x128xf32, #tpu.memory_space<vmem>>, vector<32x128xf32>
    tpu.vector_store %arg5[%c0_13, %c0_14], %27 {strides = array<i32>} : memref<32x128xf32, #tpu.memory_space<vmem>>, vector<32x128xf32>,
    return
  }
  func.func @transform_0(%arg0: i32) -> (i32, i32) {
    %c0_i32 = arith.constant 0 : i32
    %c0_i32_0 = arith.constant 0 : i32
    %c0_i32_1 = arith.constant 0 : i32
    return %c0_i32, %c0_i32_0 : i32, i32
  }
  func.func @transform_1(%arg0: i32) -> (i32, i32) {
    %c0_i32 = arith.constant 0 : i32
    %c0_i32_0 = arith.constant 0 : i32
    %c0_i32_1 = arith.constant 0 : i32
    return %c0_i32, %c0_i32_0 : i32, i32
  }
  func.func @transform_2(%arg0: i32) -> (i32, i32) {
    %c0_i32 = arith.constant 0 : i32
    %c0_i32_0 = arith.constant 0 : i32
    %c0_i32_1 = arith.constant 0 : i32
    return %c0_i32, %c0_i32_0 : i32, i32
  }
  func.func @transform_3(%arg0: i32) -> (i32, i32) {
    %c0_i32 = arith.constant 0 : i32
    %c0_i32_0 = arith.constant 0 : i32
    %c0_i32_1 = arith.constant 0 : i32
    return %c0_i32, %c0_i32_0 : i32, i32
  }
  func.func @transform_4(%arg0: i32) -> (i32, i32) {
    %c0_i32 = arith.constant 0 : i32
    %c0_i32_0 = arith.constant 0 : i32
    %c0_i32_1 = arith.constant 0 : i32
    return %c0_i32, %c0_i32_0 : i32, i32
  }
}

module attributes {stable_mosaic.version = 11 : i64} {
  func.func @_convt_bn_relu_kernel(%arg0: i32, %arg1: memref<16x512xbf16, #tpu.memory_space<vmem>>, %arg2: memref<512x512xbf16, #tpu.memory_space<vmem>>, %arg3: memref<16x1xf32, #tpu.memory_space<vmem>>, %arg4: memref<16x1xf32, #tpu.memory_space<vmem>>, %arg5: memref<16x512xf32, #tpu.memory_space<vmem>>) attributes {dimension_semantics = [#tpu.dimension_semantics<arbitrary>], iteration_bounds = array<i64: 1>, scalar_prefetch = 0 : i64, scratch_operands = 0 : i64, tpu.core_type = #tpu.core_type<tc>, window_params = [{pipeline_mode = #tpu.pipeline_mode<synchronous>, transform_indices = @transform_0, window_bounds = array<i64: 16, 512>}, {pipeline_mode = #tpu.pipeline_mode<synchronous>, transform_indices = @transform_1, window_bounds = array<i64: 512, 512>}, {pipeline_mode = #tpu.pipeline_mode<synchronous>, transform_indices = @transform_2, window_bounds = array<i64: 16, 1>}, {pipeline_mode = #tpu.pipeline_mode<synchronous>, transform_indices = @transform_3, window_bounds = array<i64: 16, 1>}, {pipeline_mode = #tpu.pipeline_mode<synchronous>, transform_indices = @transform_4, window_bounds = array<i64: 16, 512>}]} {
    %c0 = arith.constant 0 : index
    %c0_0 = arith.constant 0 : index
    %0 = vector.load %arg1[%c0, %c0_0] : memref<16x512xbf16, #tpu.memory_space<vmem>>, vector<16x512xbf16>
    %c0_1 = arith.constant 0 : index
    %c0_2 = arith.constant 0 : index
    %1 = vector.load %arg2[%c0_1, %c0_2] : memref<512x512xbf16, #tpu.memory_space<vmem>>, vector<512x512xbf16>
    %cst = arith.constant dense<0.000000e+00> : vector<16x512xf32>
    %2 = tpu.matmul %0, %1, %cst {dimension_numbers = #tpu.dot_dimension_numbers<[1], [0], [0], [1], [0, 0, 1, 1], [], []>} : vector<16x512xbf16>, vector<512x512xbf16>, vector<16x512xf32> -> vector<16x512xf32>
    %cst_3 = arith.constant dense<0.000000e+00> : vector<16xf32>
    %3 = vector.multi_reduction <add>, %2, %cst_3 [1] : vector<16x512xf32> to vector<16xf32>
    %4 = vector.shape_cast %3 : vector<16xf32> to vector<16x1xf32>
    %cst_4 = arith.constant 5.120000e+02 : f32
    %5 = vector.broadcast %cst_4 : f32 to vector<16x1xf32>
    %6 = arith.divf %4, %5 : vector<16x1xf32>
    %7 = arith.mulf %2, %2 : vector<16x512xf32>
    %cst_5 = arith.constant dense<0.000000e+00> : vector<16xf32>
    %8 = vector.multi_reduction <add>, %7, %cst_5 [1] : vector<16x512xf32> to vector<16xf32>
    %9 = vector.shape_cast %8 : vector<16xf32> to vector<16x1xf32>
    %cst_6 = arith.constant 5.120000e+02 : f32
    %10 = vector.broadcast %cst_6 : f32 to vector<16x1xf32>
    %11 = arith.divf %9, %10 : vector<16x1xf32>
    %12 = arith.mulf %6, %6 : vector<16x1xf32>
    %13 = arith.subf %11, %12 : vector<16x1xf32>
    %c0_7 = arith.constant 0 : index
    %c0_8 = arith.constant 0 : index
    %14 = vector.load %arg3[%c0_7, %c0_8] : memref<16x1xf32, #tpu.memory_space<vmem>>, vector<16x1xf32>
    %cst_9 = arith.constant 9.99999974E-6 : f32
    %15 = vector.broadcast %cst_9 : f32 to vector<16x1xf32>
    %16 = arith.addf %13, %15 : vector<16x1xf32>
    %17 = math.rsqrt %16 : vector<16x1xf32>
    %18 = arith.mulf %14, %17 : vector<16x1xf32>
    %c0_10 = arith.constant 0 : index
    %c0_11 = arith.constant 0 : index
    %19 = vector.load %arg4[%c0_10, %c0_11] : memref<16x1xf32, #tpu.memory_space<vmem>>, vector<16x1xf32>
    %20 = arith.mulf %6, %18 : vector<16x1xf32>
    %21 = arith.subf %19, %20 : vector<16x1xf32>
    %22 = vector.broadcast %18 : vector<16x1xf32> to vector<16x512xf32>
    %23 = arith.mulf %2, %22 : vector<16x512xf32>
    %24 = vector.broadcast %21 : vector<16x1xf32> to vector<16x512xf32>
    %25 = arith.addf %23, %24 : vector<16x512xf32>
    %cst_12 = arith.constant 0.000000e+00 : f32
    %26 = vector.broadcast %cst_12 : f32 to vector<16x512xf32>
    %27 = arith.maximumf %25, %26 : vector<16x512xf32>
    %c0_13 = arith.constant 0 : index
    %c0_14 = arith.constant 0 : index
    %28 = vector.load %arg5[%c0_13, %c0_14] : memref<16x512xf32, #tpu.memory_space<vmem>>, vector<16x512xf32>
    tpu.vector_store %arg5[%c0_13, %c0_14], %27 {strides = array<i32>} : memref<16x512xf32, #tpu.memory_space<vmem>>, vector<16x512xf32>,
    return
  }
  func.func @transform_0(%arg0: i32) -> (i32, i32) {
    %c0_i32 = arith.constant 0 : i32
    %c0_i32_0 = arith.constant 0 : i32
    %c0_i32_1 = arith.constant 0 : i32
    return %c0_i32, %c0_i32_0 : i32, i32
  }
  func.func @transform_1(%arg0: i32) -> (i32, i32) {
    %c0_i32 = arith.constant 0 : i32
    %c0_i32_0 = arith.constant 0 : i32
    %c0_i32_1 = arith.constant 0 : i32
    return %c0_i32, %c0_i32_0 : i32, i32
  }
  func.func @transform_2(%arg0: i32) -> (i32, i32) {
    %c0_i32 = arith.constant 0 : i32
    %c0_i32_0 = arith.constant 0 : i32
    %c0_i32_1 = arith.constant 0 : i32
    return %c0_i32, %c0_i32_0 : i32, i32
  }
  func.func @transform_3(%arg0: i32) -> (i32, i32) {
    %c0_i32 = arith.constant 0 : i32
    %c0_i32_0 = arith.constant 0 : i32
    %c0_i32_1 = arith.constant 0 : i32
    return %c0_i32, %c0_i32_0 : i32, i32
  }
  func.func @transform_4(%arg0: i32) -> (i32, i32) {
    %c0_i32 = arith.constant 0 : i32
    %c0_i32_0 = arith.constant 0 : i32
    %c0_i32_1 = arith.constant 0 : i32
    return %c0_i32, %c0_i32_0 : i32, i32
  }
}

module attributes {stable_mosaic.version = 11 : i64} {
  func.func @_convt_bn_relu_kernel(%arg0: i32, %arg1: memref<8x256xbf16, #tpu.memory_space<vmem>>, %arg2: memref<256x2048xbf16, #tpu.memory_space<vmem>>, %arg3: memref<8x1xf32, #tpu.memory_space<vmem>>, %arg4: memref<8x1xf32, #tpu.memory_space<vmem>>, %arg5: memref<8x2048xf32, #tpu.memory_space<vmem>>) attributes {dimension_semantics = [#tpu.dimension_semantics<arbitrary>], iteration_bounds = array<i64: 1>, scalar_prefetch = 0 : i64, scratch_operands = 0 : i64, tpu.core_type = #tpu.core_type<tc>, window_params = [{pipeline_mode = #tpu.pipeline_mode<synchronous>, transform_indices = @transform_0, window_bounds = array<i64: 8, 256>}, {pipeline_mode = #tpu.pipeline_mode<synchronous>, transform_indices = @transform_1, window_bounds = array<i64: 256, 2048>}, {pipeline_mode = #tpu.pipeline_mode<synchronous>, transform_indices = @transform_2, window_bounds = array<i64: 8, 1>}, {pipeline_mode = #tpu.pipeline_mode<synchronous>, transform_indices = @transform_3, window_bounds = array<i64: 8, 1>}, {pipeline_mode = #tpu.pipeline_mode<synchronous>, transform_indices = @transform_4, window_bounds = array<i64: 8, 2048>}]} {
    %c0 = arith.constant 0 : index
    %c0_0 = arith.constant 0 : index
    %0 = vector.load %arg1[%c0, %c0_0] : memref<8x256xbf16, #tpu.memory_space<vmem>>, vector<8x256xbf16>
    %c0_1 = arith.constant 0 : index
    %c0_2 = arith.constant 0 : index
    %1 = vector.load %arg2[%c0_1, %c0_2] : memref<256x2048xbf16, #tpu.memory_space<vmem>>, vector<256x2048xbf16>
    %cst = arith.constant dense<0.000000e+00> : vector<8x2048xf32>
    %2 = tpu.matmul %0, %1, %cst {dimension_numbers = #tpu.dot_dimension_numbers<[1], [0], [0], [1], [0, 0, 1, 1], [], []>} : vector<8x256xbf16>, vector<256x2048xbf16>, vector<8x2048xf32> -> vector<8x2048xf32>
    %cst_3 = arith.constant dense<0.000000e+00> : vector<8xf32>
    %3 = vector.multi_reduction <add>, %2, %cst_3 [1] : vector<8x2048xf32> to vector<8xf32>
    %4 = vector.shape_cast %3 : vector<8xf32> to vector<8x1xf32>
    %cst_4 = arith.constant 2.048000e+03 : f32
    %5 = vector.broadcast %cst_4 : f32 to vector<8x1xf32>
    %6 = arith.divf %4, %5 : vector<8x1xf32>
    %7 = arith.mulf %2, %2 : vector<8x2048xf32>
    %cst_5 = arith.constant dense<0.000000e+00> : vector<8xf32>
    %8 = vector.multi_reduction <add>, %7, %cst_5 [1] : vector<8x2048xf32> to vector<8xf32>
    %9 = vector.shape_cast %8 : vector<8xf32> to vector<8x1xf32>
    %cst_6 = arith.constant 2.048000e+03 : f32
    %10 = vector.broadcast %cst_6 : f32 to vector<8x1xf32>
    %11 = arith.divf %9, %10 : vector<8x1xf32>
    %12 = arith.mulf %6, %6 : vector<8x1xf32>
    %13 = arith.subf %11, %12 : vector<8x1xf32>
    %c0_7 = arith.constant 0 : index
    %c0_8 = arith.constant 0 : index
    %14 = vector.load %arg3[%c0_7, %c0_8] : memref<8x1xf32, #tpu.memory_space<vmem>>, vector<8x1xf32>
    %cst_9 = arith.constant 9.99999974E-6 : f32
    %15 = vector.broadcast %cst_9 : f32 to vector<8x1xf32>
    %16 = arith.addf %13, %15 : vector<8x1xf32>
    %17 = math.rsqrt %16 : vector<8x1xf32>
    %18 = arith.mulf %14, %17 : vector<8x1xf32>
    %c0_10 = arith.constant 0 : index
    %c0_11 = arith.constant 0 : index
    %19 = vector.load %arg4[%c0_10, %c0_11] : memref<8x1xf32, #tpu.memory_space<vmem>>, vector<8x1xf32>
    %20 = arith.mulf %6, %18 : vector<8x1xf32>
    %21 = arith.subf %19, %20 : vector<8x1xf32>
    %22 = vector.broadcast %18 : vector<8x1xf32> to vector<8x2048xf32>
    %23 = arith.mulf %2, %22 : vector<8x2048xf32>
    %24 = vector.broadcast %21 : vector<8x1xf32> to vector<8x2048xf32>
    %25 = arith.addf %23, %24 : vector<8x2048xf32>
    %cst_12 = arith.constant 0.000000e+00 : f32
    %26 = vector.broadcast %cst_12 : f32 to vector<8x2048xf32>
    %27 = arith.maximumf %25, %26 : vector<8x2048xf32>
    %c0_13 = arith.constant 0 : index
    %c0_14 = arith.constant 0 : index
    %28 = vector.load %arg5[%c0_13, %c0_14] : memref<8x2048xf32, #tpu.memory_space<vmem>>, vector<8x2048xf32>
    tpu.vector_store %arg5[%c0_13, %c0_14], %27 {strides = array<i32>} : memref<8x2048xf32, #tpu.memory_space<vmem>>, vector<8x2048xf32>,
    return
  }
  func.func @transform_0(%arg0: i32) -> (i32, i32) {
    %c0_i32 = arith.constant 0 : i32
    %c0_i32_0 = arith.constant 0 : i32
    %c0_i32_1 = arith.constant 0 : i32
    return %c0_i32, %c0_i32_0 : i32, i32
  }
  func.func @transform_1(%arg0: i32) -> (i32, i32) {
    %c0_i32 = arith.constant 0 : i32
    %c0_i32_0 = arith.constant 0 : i32
    %c0_i32_1 = arith.constant 0 : i32
    return %c0_i32, %c0_i32_0 : i32, i32
  }
  func.func @transform_2(%arg0: i32) -> (i32, i32) {
    %c0_i32 = arith.constant 0 : i32
    %c0_i32_0 = arith.constant 0 : i32
    %c0_i32_1 = arith.constant 0 : i32
    return %c0_i32, %c0_i32_0 : i32, i32
  }
  func.func @transform_3(%arg0: i32) -> (i32, i32) {
    %c0_i32 = arith.constant 0 : i32
    %c0_i32_0 = arith.constant 0 : i32
    %c0_i32_1 = arith.constant 0 : i32
    return %c0_i32, %c0_i32_0 : i32, i32
  }
  func.func @transform_4(%arg0: i32) -> (i32, i32) {
    %c0_i32 = arith.constant 0 : i32
    %c0_i32_0 = arith.constant 0 : i32
    %c0_i32_1 = arith.constant 0 : i32
    return %c0_i32, %c0_i32_0 : i32, i32
  }
}

module attributes {stable_mosaic.version = 11 : i64} {
  func.func @_convt_bn_relu_kernel(%arg0: i32, %arg1: memref<8x128xbf16, #tpu.memory_space<vmem>>, %arg2: memref<128x8192xbf16, #tpu.memory_space<vmem>>, %arg3: memref<8x1xf32, #tpu.memory_space<vmem>>, %arg4: memref<8x1xf32, #tpu.memory_space<vmem>>, %arg5: memref<8x8192xf32, #tpu.memory_space<vmem>>) attributes {dimension_semantics = [#tpu.dimension_semantics<arbitrary>], iteration_bounds = array<i64: 1>, scalar_prefetch = 0 : i64, scratch_operands = 0 : i64, tpu.core_type = #tpu.core_type<tc>, window_params = [{pipeline_mode = #tpu.pipeline_mode<synchronous>, transform_indices = @transform_0, window_bounds = array<i64: 8, 128>}, {pipeline_mode = #tpu.pipeline_mode<synchronous>, transform_indices = @transform_1, window_bounds = array<i64: 128, 8192>}, {pipeline_mode = #tpu.pipeline_mode<synchronous>, transform_indices = @transform_2, window_bounds = array<i64: 8, 1>}, {pipeline_mode = #tpu.pipeline_mode<synchronous>, transform_indices = @transform_3, window_bounds = array<i64: 8, 1>}, {pipeline_mode = #tpu.pipeline_mode<synchronous>, transform_indices = @transform_4, window_bounds = array<i64: 8, 8192>}]} {
    %c0 = arith.constant 0 : index
    %c0_0 = arith.constant 0 : index
    %0 = vector.load %arg1[%c0, %c0_0] : memref<8x128xbf16, #tpu.memory_space<vmem>>, vector<8x128xbf16>
    %c0_1 = arith.constant 0 : index
    %c0_2 = arith.constant 0 : index
    %1 = vector.load %arg2[%c0_1, %c0_2] : memref<128x8192xbf16, #tpu.memory_space<vmem>>, vector<128x8192xbf16>
    %cst = arith.constant dense<0.000000e+00> : vector<8x8192xf32>
    %2 = tpu.matmul %0, %1, %cst {dimension_numbers = #tpu.dot_dimension_numbers<[1], [0], [0], [1], [0, 0, 1, 1], [], []>} : vector<8x128xbf16>, vector<128x8192xbf16>, vector<8x8192xf32> -> vector<8x8192xf32>
    %cst_3 = arith.constant dense<0.000000e+00> : vector<8xf32>
    %3 = vector.multi_reduction <add>, %2, %cst_3 [1] : vector<8x8192xf32> to vector<8xf32>
    %4 = vector.shape_cast %3 : vector<8xf32> to vector<8x1xf32>
    %cst_4 = arith.constant 8.192000e+03 : f32
    %5 = vector.broadcast %cst_4 : f32 to vector<8x1xf32>
    %6 = arith.divf %4, %5 : vector<8x1xf32>
    %7 = arith.mulf %2, %2 : vector<8x8192xf32>
    %cst_5 = arith.constant dense<0.000000e+00> : vector<8xf32>
    %8 = vector.multi_reduction <add>, %7, %cst_5 [1] : vector<8x8192xf32> to vector<8xf32>
    %9 = vector.shape_cast %8 : vector<8xf32> to vector<8x1xf32>
    %cst_6 = arith.constant 8.192000e+03 : f32
    %10 = vector.broadcast %cst_6 : f32 to vector<8x1xf32>
    %11 = arith.divf %9, %10 : vector<8x1xf32>
    %12 = arith.mulf %6, %6 : vector<8x1xf32>
    %13 = arith.subf %11, %12 : vector<8x1xf32>
    %c0_7 = arith.constant 0 : index
    %c0_8 = arith.constant 0 : index
    %14 = vector.load %arg3[%c0_7, %c0_8] : memref<8x1xf32, #tpu.memory_space<vmem>>, vector<8x1xf32>
    %cst_9 = arith.constant 9.99999974E-6 : f32
    %15 = vector.broadcast %cst_9 : f32 to vector<8x1xf32>
    %16 = arith.addf %13, %15 : vector<8x1xf32>
    %17 = math.rsqrt %16 : vector<8x1xf32>
    %18 = arith.mulf %14, %17 : vector<8x1xf32>
    %c0_10 = arith.constant 0 : index
    %c0_11 = arith.constant 0 : index
    %19 = vector.load %arg4[%c0_10, %c0_11] : memref<8x1xf32, #tpu.memory_space<vmem>>, vector<8x1xf32>
    %20 = arith.mulf %6, %18 : vector<8x1xf32>
    %21 = arith.subf %19, %20 : vector<8x1xf32>
    %22 = vector.broadcast %18 : vector<8x1xf32> to vector<8x8192xf32>
    %23 = arith.mulf %2, %22 : vector<8x8192xf32>
    %24 = vector.broadcast %21 : vector<8x1xf32> to vector<8x8192xf32>
    %25 = arith.addf %23, %24 : vector<8x8192xf32>
    %cst_12 = arith.constant 0.000000e+00 : f32
    %26 = vector.broadcast %cst_12 : f32 to vector<8x8192xf32>
    %27 = arith.maximumf %25, %26 : vector<8x8192xf32>
    %c0_13 = arith.constant 0 : index
    %c0_14 = arith.constant 0 : index
    %28 = vector.load %arg5[%c0_13, %c0_14] : memref<8x8192xf32, #tpu.memory_space<vmem>>, vector<8x8192xf32>
    tpu.vector_store %arg5[%c0_13, %c0_14], %27 {strides = array<i32>} : memref<8x8192xf32, #tpu.memory_space<vmem>>, vector<8x8192xf32>,
    return
  }
  func.func @transform_0(%arg0: i32) -> (i32, i32) {
    %c0_i32 = arith.constant 0 : i32
    %c0_i32_0 = arith.constant 0 : i32
    %c0_i32_1 = arith.constant 0 : i32
    return %c0_i32, %c0_i32_0 : i32, i32
  }
  func.func @transform_1(%arg0: i32) -> (i32, i32) {
    %c0_i32 = arith.constant 0 : i32
    %c0_i32_0 = arith.constant 0 : i32
    %c0_i32_1 = arith.constant 0 : i32
    return %c0_i32, %c0_i32_0 : i32, i32
  }
  func.func @transform_2(%arg0: i32) -> (i32, i32) {
    %c0_i32 = arith.constant 0 : i32
    %c0_i32_0 = arith.constant 0 : i32
    %c0_i32_1 = arith.constant 0 : i32
    return %c0_i32, %c0_i32_0 : i32, i32
  }
  func.func @transform_3(%arg0: i32) -> (i32, i32) {
    %c0_i32 = arith.constant 0 : i32
    %c0_i32_0 = arith.constant 0 : i32
    %c0_i32_1 = arith.constant 0 : i32
    return %c0_i32, %c0_i32_0 : i32, i32
  }
  func.func @transform_4(%arg0: i32) -> (i32, i32) {
    %c0_i32 = arith.constant 0 : i32
    %c0_i32_0 = arith.constant 0 : i32
    %c0_i32_1 = arith.constant 0 : i32
    return %c0_i32, %c0_i32_0 : i32, i32
  }
}

module attributes {stable_mosaic.version = 11 : i64} {
  func.func @_convt_tanh_kernel(%arg0: i32, %arg1: memref<8x64xbf16, #tpu.memory_space<vmem>>, %arg2: memref<64x8192xbf16, #tpu.memory_space<vmem>>, %arg3: memref<8x8192xf32, #tpu.memory_space<vmem>>) attributes {dimension_semantics = [#tpu.dimension_semantics<parallel>], iteration_bounds = array<i64: 4>, scalar_prefetch = 0 : i64, scratch_operands = 0 : i64, tpu.core_type = #tpu.core_type<tc>, window_params = [{pipeline_mode = #tpu.pipeline_mode<synchronous>, transform_indices = @transform_0, window_bounds = array<i64: 8, 64>}, {transform_indices = @transform_1, window_bounds = array<i64: 64, 8192>}, {transform_indices = @transform_2, window_bounds = array<i64: 8, 8192>}]} {
    %c0 = arith.constant 0 : index
    %c0_0 = arith.constant 0 : index
    %0 = vector.load %arg1[%c0, %c0_0] : memref<8x64xbf16, #tpu.memory_space<vmem>>, vector<8x64xbf16>
    %c0_1 = arith.constant 0 : index
    %c0_2 = arith.constant 0 : index
    %1 = vector.load %arg2[%c0_1, %c0_2] : memref<64x8192xbf16, #tpu.memory_space<vmem>>, vector<64x8192xbf16>
    %cst = arith.constant dense<0.000000e+00> : vector<8x8192xf32>
    %2 = tpu.matmul %0, %1, %cst {dimension_numbers = #tpu.dot_dimension_numbers<[1], [0], [0], [1], [0, 0, 1, 1], [], []>} : vector<8x64xbf16>, vector<64x8192xbf16>, vector<8x8192xf32> -> vector<8x8192xf32>
    %3 = math.tanh %2 : vector<8x8192xf32>
    %c0_3 = arith.constant 0 : index
    %c0_4 = arith.constant 0 : index
    %4 = vector.load %arg3[%c0_3, %c0_4] : memref<8x8192xf32, #tpu.memory_space<vmem>>, vector<8x8192xf32>
    tpu.vector_store %arg3[%c0_3, %c0_4], %3 {strides = array<i32>} : memref<8x8192xf32, #tpu.memory_space<vmem>>, vector<8x8192xf32>,
    return
  }
  func.func @transform_0(%arg0: i32) -> (i32, i32) {
    %c0_i32 = arith.constant 0 : i32
    %c0_i32_0 = arith.constant 0 : i32
    %c0_i32_1 = arith.constant 0 : i32
    return %c0_i32, %c0_i32_0 : i32, i32
  }
  func.func @transform_1(%arg0: i32) -> (i32, i32) {
    %c0_i32 = arith.constant 0 : i32
    %c0_i32_0 = arith.constant 0 : i32
    return %c0_i32, %arg0 : i32, i32
  }
  func.func @transform_2(%arg0: i32) -> (i32, i32) {
    %c0_i32 = arith.constant 0 : i32
    %c0_i32_0 = arith.constant 0 : i32
    return %c0_i32, %arg0 : i32, i32
  }
}

</mosaic_0001>

<llo_original>
// kernel: _lambda_.6
$region0: #{_lambda_.6}
  #allocation0 [shape = 'u32[]', space=smem, size = 0x4, offset = 0x4, fixed_abs, tag = 'smem constant byte address 0x4 - core index']
  #allocation1 [shape = 'u32[72,128]{1,0:T(1,128)}', space=vmem, size = 0x9000, scoped, tag = 'internal scratch']
  %s0 = inlined_call_operand.vmem [shape: bf16[64,256], index: 0, kind: input, shape index: {}]
  %s1 = inlined_call_operand.vmem [shape: bf16[256,32], index: 1, kind: input, shape index: {}]
  %s2 = inlined_call_operand.vmem [shape: f32[64,1], index: 2, kind: input, shape index: {}]
  %s3 = inlined_call_operand.vmem [shape: f32[64,1], index: 3, kind: input, shape index: {}]
  %s4 = inlined_call_operand.vmem [shape: f32[64,32], index: 4, kind: output, shape index: {}]
  %s5 = sld [smem:[#allocation0]]
  $region26: #{_lambda_.6} parent=0
    _
  %s7 = ssub.s32 1, %s5
  %s8 = scalar_select 0, %s7, %s5
  // Predicated region
  $region2: #{_lambda_.6} parent=0 // pred_check
    _
  $region3: #{_lambda_.6} parent=0 // pred_check_branch
    %10 = sbr.rel (0) target = $region5
  $region4: #{_lambda_.6} parent=0 // pred_region
    _
  $region5: #{_lambda_.6} parent=0 // pred_fallthru
    _
  // Predicated region
  $region6: #{_lambda_.6} parent=0 // pred_check
    _
  $region7: #{_lambda_.6} parent=0 // pred_check_branch
    %12 = sbr.rel (0) target = $region9
  $region8: #{_lambda_.6} parent=0 // pred_region
    _
  $region9: #{_lambda_.6} parent=0 // pred_fallthru
    _
  // Predicated region
  $region10: #{_lambda_.6} parent=0 // pred_check
    _
  $region11: #{_lambda_.6} parent=0 // pred_check_branch
    %14 = sbr.rel (0) target = $region13
  $region12: #{_lambda_.6} parent=0 // pred_region
    _
  $region13: #{_lambda_.6} parent=0 // pred_fallthru
    _
  // Predicated region
  $region14: #{_lambda_.6} parent=0 // pred_check
    _
  $region15: #{_lambda_.6} parent=0 // pred_check_branch
    %16 = sbr.rel (0) target = $region17
  $region16: #{_lambda_.6} parent=0 // pred_region
    _
  $region17: #{_lambda_.6} parent=0 // pred_fallthru
    _
  %v17 = vld [vmem:[%s0] sm:$0xff]
  %v18 = vld [vmem:[%s0 + $0x8] sm:$0xff]
  %v19 = vld [vmem:[%s0 + $0x10] sm:$0xff]
  %v20 = vld [vmem:[%s0 + $0x18] sm:$0xff]
  %v21 = vld [vmem:[%s0 + $0x20] sm:$0xff]
  %v22 = vld [vmem:[%s0 + $0x28] sm:$0xff]
  %v23 = vld [vmem:[%s0 + $0x30] sm:$0xff]
  %v24 = vld [vmem:[%s0 + $0x38] sm:$0xff]
  %v25 = vld [vmem:[%s1] sm:$0xf]
  %v26 = vld [vmem:[%s1 + $0x4] sm:$0xf]
  %v27 = vld [vmem:[%s1 + $0x8] sm:$0xf]
  %v28 = vld [vmem:[%s1 + $0xc] sm:$0xf]
  %v29 = vld [vmem:[%s1 + $0x10] sm:$0xf]
  %v30 = vld [vmem:[%s1 + $0x14] sm:$0xf]
  %v31 = vld [vmem:[%s1 + $0x18] sm:$0xf]
  %v32 = vld [vmem:[%s1 + $0x1c] sm:$0xf]
  %v33 = vld [vmem:[%s1 + $0x20] sm:$0xf]
  %v34 = vld [vmem:[%s1 + $0x24] sm:$0xf]
  %v35 = vld [vmem:[%s1 + $0x28] sm:$0xf]
  %v36 = vld [vmem:[%s1 + $0x2c] sm:$0xf]
  %v37 = vld [vmem:[%s1 + $0x30] sm:$0xf]
  %v38 = vld [vmem:[%s1 + $0x34] sm:$0xf]
  %v39 = vld [vmem:[%s1 + $0x38] sm:$0xf]
  %v40 = vld [vmem:[%s1 + $0x3c] sm:$0xf]
  %v41 = vld [vmem:[%s1 + $0x40] sm:$0xf]
  %v42 = vld [vmem:[%s1 + $0x44] sm:$0xf]
  %v43 = vld [vmem:[%s1 + $0x48] sm:$0xf]
  %v44 = vld [vmem:[%s1 + $0x4c] sm:$0xf]
  %v45 = vld [vmem:[%s1 + $0x50] sm:$0xf]
  %v46 = vld [vmem:[%s1 + $0x54] sm:$0xf]
  %v47 = vld [vmem:[%s1 + $0x58] sm:$0xf]
  %v48 = vld [vmem:[%s1 + $0x5c] sm:$0xf]
  %v49 = vld [vmem:[%s1 + $0x60] sm:$0xf]
  %v50 = vld [vmem:[%s1 + $0x64] sm:$0xf]
  %v51 = vld [vmem:[%s1 + $0x68] sm:$0xf]
  %v52 = vld [vmem:[%s1 + $0x6c] sm:$0xf]
  %v53 = vld [vmem:[%s1 + $0x70] sm:$0xf]
  %v54 = vld [vmem:[%s1 + $0x74] sm:$0xf]
  %v55 = vld [vmem:[%s1 + $0x78] sm:$0xf]
  %v56 = vld [vmem:[%s1 + $0x7c] sm:$0xf]
  %v65 = vunpack.c.l.b16 %v17
  %v66 = vunpack.c.h.b16 %v17
  %v67 = vunpack.c.l.b16 %v18
  %v68 = vunpack.c.h.b16 %v18
  %v69 = vunpack.c.l.b16 %v19
  %v70 = vunpack.c.h.b16 %v19
  %v71 = vunpack.c.l.b16 %v20
  %v72 = vunpack.c.h.b16 %v20
  %v73 = vunpack.c.l.b16 %v21
  %v74 = vunpack.c.h.b16 %v21
  %v75 = vunpack.c.l.b16 %v22
  %v76 = vunpack.c.h.b16 %v22
  %v77 = vunpack.c.l.b16 %v23
  %v78 = vunpack.c.h.b16 %v23
  %v79 = vunpack.c.l.b16 %v24
  %v80 = vunpack.c.h.b16 %v24
  %v81 = vpack.c.b16 %v67, %v65
  %v82 = vpack.c.b16 %v68, %v66
  %v83 = vpack.c.b16 %v71, %v69
  %v84 = vpack.c.b16 %v72, %v70
  %v85 = vpack.c.b16 %v75, %v73
  %v86 = vpack.c.b16 %v76, %v74
  %v87 = vpack.c.b16 %v79, %v77
  %v88 = vpack.c.b16 %v80, %v78
  %v129 = vunpack.c.l.b16 %v25
  %v130 = vunpack.c.l.b16 %v26
  %v131 = vunpack.c.l.b16 %v27
  %v132 = vunpack.c.l.b16 %v28
  %v133 = vunpack.c.l.b16 %v29
  %v134 = vunpack.c.l.b16 %v30
  %v135 = vunpack.c.l.b16 %v31
  %v136 = vunpack.c.l.b16 %v32
  %v137 = vunpack.c.l.b16 %v33
  %v138 = vunpack.c.l.b16 %v34
  %v139 = vunpack.c.l.b16 %v35
  %v140 = vunpack.c.l.b16 %v36
  %v141 = vunpack.c.l.b16 %v37
  %v142 = vunpack.c.l.b16 %v38
  %v143 = vunpack.c.l.b16 %v39
  %v144 = vunpack.c.l.b16 %v40
  %v145 = vunpack.c.l.b16 %v41
  %v146 = vunpack.c.l.b16 %v42
  %v147 = vunpack.c.l.b16 %v43
  %v148 = vunpack.c.l.b16 %v44
  %v149 = vunpack.c.l.b16 %v45
  %v150 = vunpack.c.l.b16 %v46
  %v151 = vunpack.c.l.b16 %v47
  %v152 = vunpack.c.l.b16 %v48
  %v153 = vunpack.c.l.b16 %v49
  %v154 = vunpack.c.l.b16 %v50
  %v155 = vunpack.c.l.b16 %v51
  %v156 = vunpack.c.l.b16 %v52
  %v157 = vunpack.c.l.b16 %v53
  %v158 = vunpack.c.l.b16 %v54
  %v159 = vunpack.c.l.b16 %v55
  %v160 = vunpack.c.l.b16 %v56
  %v161 = vpack.c.b16 %v130, %v129
  %v162 = vpack.c.b16 %v132, %v131
  %v163 = vpack.c.b16 %v134, %v133
  %v164 = vpack.c.b16 %v136, %v135
  %v165 = vpack.c.b16 %v138, %v137
  %v166 = vpack.c.b16 %v140, %v139
  %v167 = vpack.c.b16 %v142, %v141
  %v168 = vpack.c.b16 %v144, %v143
  %v169 = vpack.c.b16 %v146, %v145
  %v170 = vpack.c.b16 %v148, %v147
  %v171 = vpack.c.b16 %v150, %v149
  %v172 = vpack.c.b16 %v152, %v151
  %v173 = vpack.c.b16 %v154, %v153
  %v174 = vpack.c.b16 %v156, %v155
  %v175 = vpack.c.b16 %v158, %v157
  %v176 = vpack.c.b16 %v160, %v159
  %193 = vmatpush.bf16.msra.mxu0 %v168
  %194 = vmatpush.bf16.msra.mxu0 %v167
  %195 = vmatpush.bf16.msra.mxu0 %v166
  %196 = vmatpush.bf16.msra.mxu0 %v165
  %197 = vmatpush.bf16.msra.mxu0 %v164
  %198 = vmatpush.bf16.msra.mxu0 %v163
  %199 = vmatpush.bf16.msra.mxu0 %v162
  %200 = vmatpush.bf16.msra.mxu0 %v161
  %201 = vmatmul.bf16.gmra.mxu0 %v81
  %v202 = vpop.f32.mrf.mxu0
  %v203 = vadd.f32 0.0, %v202
  %v204 = vpop.f32.mrf.mxu0
  %v205 = vadd.f32 0.0, %v204
  %206 = vmatmul.bf16.gmra.mxu0 %v83
  %v207 = vpop.f32.mrf.mxu0
  %v208 = vadd.f32 0.0, %v207
  %v209 = vpop.f32.mrf.mxu0
  %v210 = vadd.f32 0.0, %v209
  %211 = vmatmul.bf16.gmra.mxu0 %v85
  %v212 = vpop.f32.mrf.mxu0
  %v213 = vadd.f32 0.0, %v212
  %v214 = vpop.f32.mrf.mxu0
  %v215 = vadd.f32 0.0, %v214
  %216 = vmatmul.bf16.gmra.mxu0 %v87
  %v217 = vpop.f32.mrf.mxu0
  %v218 = vadd.f32 0.0, %v217
  %v219 = vpop.f32.mrf.mxu0
  %v220 = vadd.f32 0.0, %v219
  %221 = vdwg.mxu0
  %222 = vmatpush.bf16.msra.mxu0 %v176
  %223 = vmatpush.bf16.msra.mxu0 %v175
  %224 = vmatpush.bf16.msra.mxu0 %v174
  %225 = vmatpush.bf16.msra.mxu0 %v173
  %226 = vmatpush.bf16.msra.mxu0 %v172
  %227 = vmatpush.bf16.msra.mxu0 %v171
  %228 = vmatpush.bf16.msra.mxu0 %v170
  %229 = vmatpush.bf16.msra.mxu0 %v169
  %230 = vmatmul.bf16.gmra.mxu0 %v82
  %v231 = vpop.f32.mrf.mxu0
  %v232 = vadd.f32 %v203, %v231
  %v233 = vpop.f32.mrf.mxu0
  %v234 = vadd.f32 %v205, %v233
  %235 = vmatmul.bf16.gmra.mxu0 %v84
  %v236 = vpop.f32.mrf.mxu0
  %v237 = vadd.f32 %v208, %v236
  %v238 = vpop.f32.mrf.mxu0
  %v239 = vadd.f32 %v210, %v238
  %240 = vmatmul.bf16.gmra.mxu0 %v86
  %v241 = vpop.f32.mrf.mxu0
  %v242 = vadd.f32 %v213, %v241
  %v243 = vpop.f32.mrf.mxu0
  %v244 = vadd.f32 %v215, %v243
  %245 = vmatmul.bf16.gmra.mxu0 %v88
  %v246 = vpop.f32.mrf.mxu0
  %v247 = vadd.f32 %v218, %v246
  %v248 = vpop.f32.mrf.mxu0
  %v249 = vadd.f32 %v220, %v248
  %250 = vdwg.mxu0
  %vm251 = vcmask 261120
  %v252 = vsel %vm251, %v232, 0.0
  %253 = vadd.xlane.f32.xlu0 %v252
  %v254 = vpop.xlane.xlu0 %253
  %v255 = vsel %vm251, %v234, 0.0
  %256 = vadd.xlane.f32.xlu0 %v255
  %v257 = vpop.xlane.xlu0 %256
  %v258 = vsel %vm251, %v237, 0.0
  %259 = vadd.xlane.f32.xlu0 %v258
  %v260 = vpop.xlane.xlu0 %259
  %v261 = vsel %vm251, %v239, 0.0
  %262 = vadd.xlane.f32.xlu0 %v261
  %v263 = vpop.xlane.xlu0 %262
  %v264 = vsel %vm251, %v242, 0.0
  %265 = vadd.xlane.f32.xlu0 %v264
  %v266 = vpop.xlane.xlu0 %265
  %v267 = vsel %vm251, %v244, 0.0
  %268 = vadd.xlane.f32.xlu0 %v267
  %v269 = vpop.xlane.xlu0 %268
  %v270 = vsel %vm251, %v247, 0.0
  %271 = vadd.xlane.f32.xlu0 %v270
  %v272 = vpop.xlane.xlu0 %271
  %v273 = vsel %vm251, %v249, 0.0
  %274 = vadd.xlane.f32.xlu0 %v273
  %v275 = vpop.xlane.xlu0 %274
  %v276 = vrcp.pop 32.0
  %v277 = vmul.f32 32.0, %v276
  %v278 = vsub.f32 1.0, %v277
  %v279 = vmul.f32 %v276, %v278
  %v280 = vadd.f32 %v276, %v279
  %vm281 = vweird.f32 %v276
  %v282 = vsel %vm281, %v276, %v280
  %v283 = vmul.f32 %v254, %v282
  %v284 = vmul.f32 %v257, %v282
  %v285 = vmul.f32 %v260, %v282
  %v286 = vmul.f32 %v263, %v282
  %v287 = vmul.f32 %v266, %v282
  %v288 = vmul.f32 %v269, %v282
  %v289 = vmul.f32 %v272, %v282
  %v290 = vmul.f32 %v275, %v282
  %v291 = vmul.f32 %v232, %v232
  %v292 = vmul.f32 %v234, %v234
  %v293 = vmul.f32 %v237, %v237
  %v294 = vmul.f32 %v239, %v239
  %v295 = vmul.f32 %v242, %v242
  %v296 = vmul.f32 %v244, %v244
  %v297 = vmul.f32 %v247, %v247
  %v298 = vmul.f32 %v249, %v249
  %v299 = vsel %vm251, %v291, 0.0
  %300 = vadd.xlane.f32.xlu0 %v299
  %v301 = vpop.xlane.xlu0 %300
  %v302 = vsel %vm251, %v292, 0.0
  %303 = vadd.xlane.f32.xlu0 %v302
  %v304 = vpop.xlane.xlu0 %303
  %v305 = vsel %vm251, %v293, 0.0
  %306 = vadd.xlane.f32.xlu0 %v305
  %v307 = vpop.xlane.xlu0 %306
  %v308 = vsel %vm251, %v294, 0.0
  %309 = vadd.xlane.f32.xlu0 %v308
  %v310 = vpop.xlane.xlu0 %309
  %v311 = vsel %vm251, %v295, 0.0
  %312 = vadd.xlane.f32.xlu0 %v311
  %v313 = vpop.xlane.xlu0 %312
  %v314 = vsel %vm251, %v296, 0.0
  %315 = vadd.xlane.f32.xlu0 %v314
  %v316 = vpop.xlane.xlu0 %315
  %v317 = vsel %vm251, %v297, 0.0
  %318 = vadd.xlane.f32.xlu0 %v317
  %v319 = vpop.xlane.xlu0 %318
  %v320 = vsel %vm251, %v298, 0.0
  %321 = vadd.xlane.f32.xlu0 %v320
  %v322 = vpop.xlane.xlu0 %321
  %v323 = vmul.f32 %v301, %v282
  %v324 = vmul.f32 %v304, %v282
  %v325 = vmul.f32 %v307, %v282
  %v326 = vmul.f32 %v310, %v282
  %v327 = vmul.f32 %v313, %v282
  %v328 = vmul.f32 %v316, %v282
  %v329 = vmul.f32 %v319, %v282
  %v330 = vmul.f32 %v322, %v282
  %v331 = vmul.f32 %v283, %v283
  %v332 = vmul.f32 %v284, %v284
  %v333 = vmul.f32 %v285, %v285
  %v334 = vmul.f32 %v286, %v286
  %v335 = vmul.f32 %v287, %v287
  %v336 = vmul.f32 %v288, %v288
  %v337 = vmul.f32 %v289, %v289
  %v338 = vmul.f32 %v290, %v290
  %v339 = vsub.f32 %v323, %v331
  %v340 = vsub.f32 %v324, %v332
  %v341 = vsub.f32 %v325, %v333
  %v342 = vsub.f32 %v326, %v334
  %v343 = vsub.f32 %v327, %v335
  %v344 = vsub.f32 %v328, %v336
  %v345 = vsub.f32 %v329, %v337
  %v346 = vsub.f32 %v330, %v338
  %v347 = vld [vmem:[%s2] sm:$0xff]
  %v348 = vld [vmem:[%s2 + $0x8] sm:$0xff]
  %v349 = vld [vmem:[%s2 + $0x10] sm:$0xff]
  %v350 = vld [vmem:[%s2 + $0x18] sm:$0xff]
  %v351 = vld [vmem:[%s2 + $0x20] sm:$0xff]
  %v352 = vld [vmem:[%s2 + $0x28] sm:$0xff]
  %v353 = vld [vmem:[%s2 + $0x30] sm:$0xff]
  %v354 = vld [vmem:[%s2 + $0x38] sm:$0xff]
  %v355 = vadd.f32 %v339, 1e-05
  %v356 = vadd.f32 %v340, 1e-05
  %v357 = vadd.f32 %v341, 1e-05
  %v358 = vadd.f32 %v342, 1e-05
  %v359 = vadd.f32 %v343, 1e-05
  %v360 = vadd.f32 %v344, 1e-05
  %v361 = vadd.f32 %v345, 1e-05
  %v362 = vadd.f32 %v346, 1e-05
  %v363 = vrsqrt.pop %v355
  %v364 = vmul.f32 %v363, %v355
  %v365 = vmul.f32 %v364, %v363
  %v366 = vmul.f32 0.5, %v365
  %v367 = vsub.f32 1.5, %v366
  %v368 = vmul.f32 %v363, %v367
  %vm369 = vweird.f32 %v355
  %vm370 = vweird.f32 %v363
  %vm371 = vmor %vm369, %vm370
  %v372 = vsel %vm371, %v363, %v368
  %v373 = vrsqrt.pop %v356
  %v374 = vmul.f32 %v373, %v356
  %v375 = vmul.f32 %v374, %v373
  %v376 = vmul.f32 0.5, %v375
  %v377 = vsub.f32 1.5, %v376
  %v378 = vmul.f32 %v373, %v377
  %vm379 = vweird.f32 %v356
  %vm380 = vweird.f32 %v373
  %vm381 = vmor %vm379, %vm380
  %v382 = vsel %vm381, %v373, %v378
  %v383 = vrsqrt.pop %v357
  %v384 = vmul.f32 %v383, %v357
  %v385 = vmul.f32 %v384, %v383
  %v386 = vmul.f32 0.5, %v385
  %v387 = vsub.f32 1.5, %v386
  %v388 = vmul.f32 %v383, %v387
  %vm389 = vweird.f32 %v357
  %vm390 = vweird.f32 %v383
  %vm391 = vmor %vm389, %vm390
  %v392 = vsel %vm391, %v383, %v388
  %v393 = vrsqrt.pop %v358
  %v394 = vmul.f32 %v393, %v358
  %v395 = vmul.f32 %v394, %v393
  %v396 = vmul.f32 0.5, %v395
  %v397 = vsub.f32 1.5, %v396
  %v398 = vmul.f32 %v393, %v397
  %vm399 = vweird.f32 %v358
  %vm400 = vweird.f32 %v393
  %vm401 = vmor %vm399, %vm400
  %v402 = vsel %vm401, %v393, %v398
  %v403 = vrsqrt.pop %v359
  %v404 = vmul.f32 %v403, %v359
  %v405 = vmul.f32 %v404, %v403
  %v406 = vmul.f32 0.5, %v405
  %v407 = vsub.f32 1.5, %v406
  %v408 = vmul.f32 %v403, %v407
  %vm409 = vweird.f32 %v359
  %vm410 = vweird.f32 %v403
  %vm411 = vmor %vm409, %vm410
  %v412 = vsel %vm411, %v403, %v408
  %v413 = vrsqrt.pop %v360
  %v414 = vmul.f32 %v413, %v360
  %v415 = vmul.f32 %v414, %v413
  %v416 = vmul.f32 0.5, %v415
  %v417 = vsub.f32 1.5, %v416
  %v418 = vmul.f32 %v413, %v417
  %vm419 = vweird.f32 %v360
  %vm420 = vweird.f32 %v413
  %vm421 = vmor %vm419, %vm420
  %v422 = vsel %vm421, %v413, %v418
  %v423 = vrsqrt.pop %v361
  %v424 = vmul.f32 %v423, %v361
  %v425 = vmul.f32 %v424, %v423
  %v426 = vmul.f32 0.5, %v425
  %v427 = vsub.f32 1.5, %v426
  %v428 = vmul.f32 %v423, %v427
  %vm429 = vweird.f32 %v361
  %vm430 = vweird.f32 %v423
  %vm431 = vmor %vm429, %vm430
  %v432 = vsel %vm431, %v423, %v428
  %v433 = vrsqrt.pop %v362
  %v434 = vmul.f32 %v433, %v362
  %v435 = vmul.f32 %v434, %v433
  %v436 = vmul.f32 0.5, %v435
  %v437 = vsub.f32 1.5, %v436
  %v438 = vmul.f32 %v433, %v437
  %vm439 = vweird.f32 %v362
  %vm440 = vweird.f32 %v433
  %vm441 = vmor %vm439, %vm440
  %v442 = vsel %vm441, %v433, %v438
  %v443 = vmul.f32 %v347, %v372
  %v444 = vmul.f32 %v348, %v382
  %v445 = vmul.f32 %v349, %v392
  %v446 = vmul.f32 %v350, %v402
  %v447 = vmul.f32 %v351, %v412
  %v448 = vmul.f32 %v352, %v422
  %v449 = vmul.f32 %v353, %v432
  %v450 = vmul.f32 %v354, %v442
  %v451 = vld [vmem:[%s3] sm:$0xff]
  %v452 = vld [vmem:[%s3 + $0x8] sm:$0xff]
  %v453 = vld [vmem:[%s3 + $0x10] sm:$0xff]
  %v454 = vld [vmem:[%s3 + $0x18] sm:$0xff]
  %v455 = vld [vmem:[%s3 + $0x20] sm:$0xff]
  %v456 = vld [vmem:[%s3 + $0x28] sm:$0xff]
  %v457 = vld [vmem:[%s3 + $0x30] sm:$0xff]
  %v458 = vld [vmem:[%s3 + $0x38] sm:$0xff]
  %v459 = vmul.f32 %v283, %v443
  %v460 = vmul.f32 %v284, %v444
  %v461 = vmul.f32 %v285, %v445
  %v462 = vmul.f32 %v286, %v446
  %v463 = vmul.f32 %v287, %v447
  %v464 = vmul.f32 %v288, %v448
  %v465 = vmul.f32 %v289, %v449
  %v466 = vmul.f32 %v290, %v450
  %v467 = vsub.f32 %v451, %v459
  %v468 = vsub.f32 %v452, %v460
  %v469 = vsub.f32 %v453, %v461
  %v470 = vsub.f32 %v454, %v462
  %v471 = vsub.f32 %v455, %v463
  %v472 = vsub.f32 %v456, %v464
  %v473 = vsub.f32 %v457, %v465
  %v474 = vsub.f32 %v458, %v466
  %476 = vset.pattern.permute.xlu0 0
  %477 = vperm.xlu0 %476, %v443
  %v478 = vpop.permute.xlu0 %477
  %481 = vset.pattern.permute.xlu0 0
  %482 = vperm.xlu0 %481, %v444
  %v483 = vpop.permute.xlu0 %482
  %486 = vset.pattern.permute.xlu0 0
  %487 = vperm.xlu0 %486, %v445
  %v488 = vpop.permute.xlu0 %487
  %491 = vset.pattern.permute.xlu0 0
  %492 = vperm.xlu0 %491, %v446
  %v493 = vpop.permute.xlu0 %492
  %496 = vset.pattern.permute.xlu0 0
  %497 = vperm.xlu0 %496, %v447
  %v498 = vpop.permute.xlu0 %497
  %501 = vset.pattern.permute.xlu0 0
  %502 = vperm.xlu0 %501, %v448
  %v503 = vpop.permute.xlu0 %502
  %506 = vset.pattern.permute.xlu0 0
  %507 = vperm.xlu0 %506, %v449
  %v508 = vpop.permute.xlu0 %507
  %511 = vset.pattern.permute.xlu0 0
  %512 = vperm.xlu0 %511, %v450
  %v513 = vpop.permute.xlu0 %512
  %v515 = vmul.f32 %v232, %v478
  %v516 = vmul.f32 %v234, %v483
  %v517 = vmul.f32 %v237, %v488
  %v518 = vmul.f32 %v239, %v493
  %v519 = vmul.f32 %v242, %v498
  %v520 = vmul.f32 %v244, %v503
  %v521 = vmul.f32 %v247, %v508
  %v522 = vmul.f32 %v249, %v513
  %524 = vset.pattern.permute.xlu0 0
  %525 = vperm.xlu0 %524, %v467
  %v526 = vpop.permute.xlu0 %525
  %529 = vset.pattern.permute.xlu0 0
  %530 = vperm.xlu0 %529, %v468
  %v531 = vpop.permute.xlu0 %530
  %534 = vset.pattern.permute.xlu0 0
  %535 = vperm.xlu0 %534, %v469
  %v536 = vpop.permute.xlu0 %535
  %539 = vset.pattern.permute.xlu0 0
  %540 = vperm.xlu0 %539, %v470
  %v541 = vpop.permute.xlu0 %540
  %544 = vset.pattern.permute.xlu0 0
  %545 = vperm.xlu0 %544, %v471
  %v546 = vpop.permute.xlu0 %545
  %549 = vset.pattern.permute.xlu0 0
  %550 = vperm.xlu0 %549, %v472
  %v551 = vpop.permute.xlu0 %550
  %554 = vset.pattern.permute.xlu0 0
  %555 = vperm.xlu0 %554, %v473
  %v556 = vpop.permute.xlu0 %555
  %559 = vset.pattern.permute.xlu0 0
  %560 = vperm.xlu0 %559, %v474
  %v561 = vpop.permute.xlu0 %560
  %v563 = vadd.f32 %v515, %v526
  %v564 = vadd.f32 %v516, %v531
  %v565 = vadd.f32 %v517, %v536
  %v566 = vadd.f32 %v518, %v541
  %v567 = vadd.f32 %v519, %v546
  %v568 = vadd.f32 %v520, %v551
  %v569 = vadd.f32 %v521, %v556
  %v570 = vadd.f32 %v522, %v561
  %v571 = vmax.f32 %v563, 0.0
  %v572 = vmax.f32 %v564, 0.0
  %v573 = vmax.f32 %v565, 0.0
  %v574 = vmax.f32 %v566, 0.0
  %v575 = vmax.f32 %v567, 0.0
  %v576 = vmax.f32 %v568, 0.0
  %v577 = vmax.f32 %v569, 0.0
  %v578 = vmax.f32 %v570, 0.0
  %579 = vst.msk [vmem:[%s4] sm:$0xff] %vm251, %v571
  %580 = vst.msk [vmem:[%s4 + $0x8] sm:$0xff] %vm251, %v572
  %581 = vst.msk [vmem:[%s4 + $0x10] sm:$0xff] %vm251, %v573
  %582 = vst.msk [vmem:[%s4 + $0x18] sm:$0xff] %vm251, %v574
  %583 = vst.msk [vmem:[%s4 + $0x20] sm:$0xff] %vm251, %v575
  %584 = vst.msk [vmem:[%s4 + $0x28] sm:$0xff] %vm251, %v576
  %585 = vst.msk [vmem:[%s4 + $0x30] sm:$0xff] %vm251, %v577
  %586 = vst.msk [vmem:[%s4 + $0x38] sm:$0xff] %vm251, %v578
  // Predicated region
  $region18: #{_lambda_.6} parent=0 // pred_check
    _
  $region19: #{_lambda_.6} parent=0 // pred_check_branch
    %588 = sbr.rel (0) target = $region21
  $region20: #{_lambda_.6} parent=0 // pred_region
    _
  $region21: #{_lambda_.6} parent=0 // pred_fallthru
    _
  // Predicated region
  $region22: #{_lambda_.6} parent=0 // pred_check
    _
  $region23: #{_lambda_.6} parent=0 // pred_check_branch
    %590 = sbr.rel (0) target = $region25
  $region24: #{_lambda_.6} parent=0 // pred_region
    _
  $region25: #{_lambda_.6} parent=0 // pred_fallthru
    _

// kernel: _lambda_.7
$region0: #{_lambda_.7}
  #allocation0 [shape = 'u32[]', space=smem, size = 0x4, offset = 0x4, fixed_abs, tag = 'smem constant byte address 0x4 - core index']
  #allocation1 [shape = 'u32[72,128]{1,0:T(1,128)}', space=vmem, size = 0x9000, scoped, tag = 'internal scratch']
  %s0 = inlined_call_operand.vmem [shape: bf16[32,1024], index: 0, kind: input, shape index: {}]
  %s1 = inlined_call_operand.vmem [shape: bf16[1024,128], index: 1, kind: input, shape index: {}]
  %s2 = inlined_call_operand.vmem [shape: f32[32,1], index: 2, kind: input, shape index: {}]
  %s3 = inlined_call_operand.vmem [shape: f32[32,1], index: 3, kind: input, shape index: {}]
  %s4 = inlined_call_operand.vmem [shape: f32[32,128], index: 4, kind: output, shape index: {}]
  %s5 = sld [smem:[#allocation0]]
  $region26: #{_lambda_.7} parent=0
    _
  %s7 = ssub.s32 1, %s5
  %s8 = scalar_select 0, %s7, %s5
  // Predicated region
  $region2: #{_lambda_.7} parent=0 // pred_check
    _
  $region3: #{_lambda_.7} parent=0 // pred_check_branch
    %10 = sbr.rel (0) target = $region5
  $region4: #{_lambda_.7} parent=0 // pred_region
    _
  $region5: #{_lambda_.7} parent=0 // pred_fallthru
    _
  // Predicated region
  $region6: #{_lambda_.7} parent=0 // pred_check
    _
  $region7: #{_lambda_.7} parent=0 // pred_check_branch
    %12 = sbr.rel (0) target = $region9
  $region8: #{_lambda_.7} parent=0 // pred_region
    _
  $region9: #{_lambda_.7} parent=0 // pred_fallthru
    _
  // Predicated region
  $region10: #{_lambda_.7} parent=0 // pred_check
    _
  $region11: #{_lambda_.7} parent=0 // pred_check_branch
    %14 = sbr.rel (0) target = $region13
  $region12: #{_lambda_.7} parent=0 // pred_region
    _
  $region13: #{_lambda_.7} parent=0 // pred_fallthru
    _
  // Predicated region
  $region14: #{_lambda_.7} parent=0 // pred_check
    _
  $region15: #{_lambda_.7} parent=0 // pred_check_branch
    %16 = sbr.rel (0) target = $region17
  $region16: #{_lambda_.7} parent=0 // pred_region
    _
  $region17: #{_lambda_.7} parent=0 // pred_fallthru
    _
  %v17 = vld [vmem:[%s0] sm:$0xff]
  %v18 = vld [vmem:[%s0 + $0x8] sm:$0xff]
  %v19 = vld [vmem:[%s0 + $0x10] sm:$0xff]
  %v20 = vld [vmem:[%s0 + $0x18] sm:$0xff]
  %v21 = vld [vmem:[%s0 + $0x20] sm:$0xff]
  %v22 = vld [vmem:[%s0 + $0x28] sm:$0xff]
  %v23 = vld [vmem:[%s0 + $0x30] sm:$0xff]
  %v24 = vld [vmem:[%s0 + $0x38] sm:$0xff]
  %v25 = vld [vmem:[%s0 + $0x40] sm:$0xff]
  %v26 = vld [vmem:[%s0 + $0x48] sm:$0xff]
  %v27 = vld [vmem:[%s0 + $0x50] sm:$0xff]
  %v28 = vld [vmem:[%s0 + $0x58] sm:$0xff]
  %v29 = vld [vmem:[%s0 + $0x60] sm:$0xff]
  %v30 = vld [vmem:[%s0 + $0x68] sm:$0xff]
  %v31 = vld [vmem:[%s0 + $0x70] sm:$0xff]
  %v32 = vld [vmem:[%s0 + $0x78] sm:$0xff]
  %v33 = vld [vmem:[%s1] sm:$0xf]
  %v34 = vld [vmem:[%s1 + $0x4] sm:$0xf]
  %v35 = vld [vmem:[%s1 + $0x8] sm:$0xf]
  %v36 = vld [vmem:[%s1 + $0xc] sm:$0xf]
  %v37 = vld [vmem:[%s1 + $0x10] sm:$0xf]
  %v38 = vld [vmem:[%s1 + $0x14] sm:$0xf]
  %v39 = vld [vmem:[%s1 + $0x18] sm:$0xf]
  %v40 = vld [vmem:[%s1 + $0x1c] sm:$0xf]
  %v41 = vld [vmem:[%s1 + $0x20] sm:$0xf]
  %v42 = vld [vmem:[%s1 + $0x24] sm:$0xf]
  %v43 = vld [vmem:[%s1 + $0x28] sm:$0xf]
  %v44 = vld [vmem:[%s1 + $0x2c] sm:$0xf]
  %v45 = vld [vmem:[%s1 + $0x30] sm:$0xf]
  %v46 = vld [vmem:[%s1 + $0x34] sm:$0xf]
  %v47 = vld [vmem:[%s1 + $0x38] sm:$0xf]
  %v48 = vld [vmem:[%s1 + $0x3c] sm:$0xf]
  %v49 = vld [vmem:[%s1 + $0x40] sm:$0xf]
  %v50 = vld [vmem:[%s1 + $0x44] sm:$0xf]
  %v51 = vld [vmem:[%s1 + $0x48] sm:$0xf]
  %v52 = vld [vmem:[%s1 + $0x4c] sm:$0xf]
  %v53 = vld [vmem:[%s1 + $0x50] sm:$0xf]
  %v54 = vld [vmem:[%s1 + $0x54] sm:$0xf]
  %v55 = vld [vmem:[%s1 + $0x58] sm:$0xf]
  %v56 = vld [vmem:[%s1 + $0x5c] sm:$0xf]
  %v57 = vld [vmem:[%s1 + $0x60] sm:$0xf]
  %v58 = vld [vmem:[%s1 + $0x64] sm:$0xf]
  %v59 = vld [vmem:[%s1 + $0x68] sm:$0xf]
  %v60 = vld [vmem:[%s1 + $0x6c] sm:$0xf]
  %v61 = vld [vmem:[%s1 + $0x70] sm:$0xf]
  %v62 = vld [vmem:[%s1 + $0x74] sm:$0xf]
  %v63 = vld [vmem:[%s1 + $0x78] sm:$0xf]
  %v64 = vld [vmem:[%s1 + $0x7c] sm:$0xf]
  %v65 = vld [vmem:[%s1 + $0x80] sm:$0xf]
  %v66 = vld [vmem:[%s1 + $0x84] sm:$0xf]
  %v67 = vld [vmem:[%s1 + $0x88] sm:$0xf]
  %v68 = vld [vmem:[%s1 + $0x8c] sm:$0xf]
  %v69 = vld [vmem:[%s1 + $0x90] sm:$0xf]
  %v70 = vld [vmem:[%s1 + $0x94] sm:$0xf]
  %v71 = vld [vmem:[%s1 + $0x98] sm:$0xf]
  %v72 = vld [vmem:[%s1 + $0x9c] sm:$0xf]
  %v73 = vld [vmem:[%s1 + $0xa0] sm:$0xf]
  %v74 = vld [vmem:[%s1 + $0xa4] sm:$0xf]
  %v75 = vld [vmem:[%s1 + $0xa8] sm:$0xf]
  %v76 = vld [vmem:[%s1 + $0xac] sm:$0xf]
  %v77 = vld [vmem:[%s1 + $0xb0] sm:$0xf]
  %v78 = vld [vmem:[%s1 + $0xb4] sm:$0xf]
  %v79 = vld [vmem:[%s1 + $0xb8] sm:$0xf]
  %v80 = vld [vmem:[%s1 + $0xbc] sm:$0xf]
  %v81 = vld [vmem:[%s1 + $0xc0] sm:$0xf]
  %v82 = vld [vmem:[%s1 + $0xc4] sm:$0xf]
  %v83 = vld [vmem:[%s1 + $0xc8] sm:$0xf]
  %v84 = vld [vmem:[%s1 + $0xcc] sm:$0xf]
  %v85 = vld [vmem:[%s1 + $0xd0] sm:$0xf]
  %v86 = vld [vmem:[%s1 + $0xd4] sm:$0xf]
  %v87 = vld [vmem:[%s1 + $0xd8] sm:$0xf]
  %v88 = vld [vmem:[%s1 + $0xdc] sm:$0xf]
  %v89 = vld [vmem:[%s1 + $0xe0] sm:$0xf]
  %v90 = vld [vmem:[%s1 + $0xe4] sm:$0xf]
  %v91 = vld [vmem:[%s1 + $0xe8] sm:$0xf]
  %v92 = vld [vmem:[%s1 + $0xec] sm:$0xf]
  %v93 = vld [vmem:[%s1 + $0xf0] sm:$0xf]
  %v94 = vld [vmem:[%s1 + $0xf4] sm:$0xf]
  %v95 = vld [vmem:[%s1 + $0xf8] sm:$0xf]
  %v96 = vld [vmem:[%s1 + $0xfc] sm:$0xf]
  %v97 = vld [vmem:[%s1 + $0x100] sm:$0xf]
  %v98 = vld [vmem:[%s1 + $0x104] sm:$0xf]
  %v99 = vld [vmem:[%s1 + $0x108] sm:$0xf]
  %v100 = vld [vmem:[%s1 + $0x10c] sm:$0xf]
  %v101 = vld [vmem:[%s1 + $0x110] sm:$0xf]
  %v102 = vld [vmem:[%s1 + $0x114] sm:$0xf]
  %v103 = vld [vmem:[%s1 + $0x118] sm:$0xf]
  %v104 = vld [vmem:[%s1 + $0x11c] sm:$0xf]
  %v105 = vld [vmem:[%s1 + $0x120] sm:$0xf]
  %v106 = vld [vmem:[%s1 + $0x124] sm:$0xf]
  %v107 = vld [vmem:[%s1 + $0x128] sm:$0xf]
  %v108 = vld [vmem:[%s1 + $0x12c] sm:$0xf]
  %v109 = vld [vmem:[%s1 + $0x130] sm:$0xf]
  %v110 = vld [vmem:[%s1 + $0x134] sm:$0xf]
  %v111 = vld [vmem:[%s1 + $0x138] sm:$0xf]
  %v112 = vld [vmem:[%s1 + $0x13c] sm:$0xf]
  %v113 = vld [vmem:[%s1 + $0x140] sm:$0xf]
  %v114 = vld [vmem:[%s1 + $0x144] sm:$0xf]
  %v115 = vld [vmem:[%s1 + $0x148] sm:$0xf]
  %v116 = vld [vmem:[%s1 + $0x14c] sm:$0xf]
  %v117 = vld [vmem:[%s1 + $0x150] sm:$0xf]
  %v118 = vld [vmem:[%s1 + $0x154] sm:$0xf]
  %v119 = vld [vmem:[%s1 + $0x158] sm:$0xf]
  %v120 = vld [vmem:[%s1 + $0x15c] sm:$0xf]
  %v121 = vld [vmem:[%s1 + $0x160] sm:$0xf]
  %v122 = vld [vmem:[%s1 + $0x164] sm:$0xf]
  %v123 = vld [vmem:[%s1 + $0x168] sm:$0xf]
  %v124 = vld [vmem:[%s1 + $0x16c] sm:$0xf]
  %v125 = vld [vmem:[%s1 + $0x170] sm:$0xf]
  %v126 = vld [vmem:[%s1 + $0x174] sm:$0xf]
  %v127 = vld [vmem:[%s1 + $0x178] sm:$0xf]
  %v128 = vld [vmem:[%s1 + $0x17c] sm:$0xf]
  %v129 = vld [vmem:[%s1 + $0x180] sm:$0xf]
  %v130 = vld [vmem:[%s1 + $0x184] sm:$0xf]
  %v131 = vld [vmem:[%s1 + $0x188] sm:$0xf]
  %v132 = vld [vmem:[%s1 + $0x18c] sm:$0xf]
  %v133 = vld [vmem:[%s1 + $0x190] sm:$0xf]
  %v134 = vld [vmem:[%s1 + $0x194] sm:$0xf]
  %v135 = vld [vmem:[%s1 + $0x198] sm:$0xf]
  %v136 = vld [vmem:[%s1 + $0x19c] sm:$0xf]
  %v137 = vld [vmem:[%s1 + $0x1a0] sm:$0xf]
  %v138 = vld [vmem:[%s1 + $0x1a4] sm:$0xf]
  %v139 = vld [vmem:[%s1 + $0x1a8] sm:$0xf]
  %v140 = vld [vmem:[%s1 + $0x1ac] sm:$0xf]
  %v141 = vld [vmem:[%s1 + $0x1b0] sm:$0xf]
  %v142 = vld [vmem:[%s1 + $0x1b4] sm:$0xf]
  %v143 = vld [vmem:[%s1 + $0x1b8] sm:$0xf]
  %v144 = vld [vmem:[%s1 + $0x1bc] sm:$0xf]
  %v145 = vld [vmem:[%s1 + $0x1c0] sm:$0xf]
  %v146 = vld [vmem:[%s1 + $0x1c4] sm:$0xf]
  %v147 = vld [vmem:[%s1 + $0x1c8] sm:$0xf]
  %v148 = vld [vmem:[%s1 + $0x1cc] sm:$0xf]
  %v149 = vld [vmem:[%s1 + $0x1d0] sm:$0xf]
  %v150 = vld [vmem:[%s1 + $0x1d4] sm:$0xf]
  %v151 = vld [vmem:[%s1 + $0x1d8] sm:$0xf]
  %v152 = vld [vmem:[%s1 + $0x1dc] sm:$0xf]
  %v153 = vld [vmem:[%s1 + $0x1e0] sm:$0xf]
  %v154 = vld [vmem:[%s1 + $0x1e4] sm:$0xf]
  %v155 = vld [vmem:[%s1 + $0x1e8] sm:$0xf]
  %v156 = vld [vmem:[%s1 + $0x1ec] sm:$0xf]
  %v157 = vld [vmem:[%s1 + $0x1f0] sm:$0xf]
  %v158 = vld [vmem:[%s1 + $0x1f4] sm:$0xf]
  %v159 = vld [vmem:[%s1 + $0x1f8] sm:$0xf]
  %v160 = vld [vmem:[%s1 + $0x1fc] sm:$0xf]
  %v177 = vunpack.c.l.b16 %v17
  %v178 = vunpack.c.h.b16 %v17
  %v179 = vunpack.c.l.b16 %v18
  %v180 = vunpack.c.h.b16 %v18
  %v181 = vunpack.c.l.b16 %v19
  %v182 = vunpack.c.h.b16 %v19
  %v183 = vunpack.c.l.b16 %v20
  %v184 = vunpack.c.h.b16 %v20
  %v185 = vunpack.c.l.b16 %v21
  %v186 = vunpack.c.h.b16 %v21
  %v187 = vunpack.c.l.b16 %v22
  %v188 = vunpack.c.h.b16 %v22
  %v189 = vunpack.c.l.b16 %v23
  %v190 = vunpack.c.h.b16 %v23
  %v191 = vunpack.c.l.b16 %v24
  %v192 = vunpack.c.h.b16 %v24
  %v193 = vunpack.c.l.b16 %v25
  %v194 = vunpack.c.h.b16 %v25
  %v195 = vunpack.c.l.b16 %v26
  %v196 = vunpack.c.h.b16 %v26
  %v197 = vunpack.c.l.b16 %v27
  %v198 = vunpack.c.h.b16 %v27
  %v199 = vunpack.c.l.b16 %v28
  %v200 = vunpack.c.h.b16 %v28
  %v201 = vunpack.c.l.b16 %v29
  %v202 = vunpack.c.h.b16 %v29
  %v203 = vunpack.c.l.b16 %v30
  %v204 = vunpack.c.h.b16 %v30
  %v205 = vunpack.c.l.b16 %v31
  %v206 = vunpack.c.h.b16 %v31
  %v207 = vunpack.c.l.b16 %v32
  %v208 = vunpack.c.h.b16 %v32
  %v209 = vpack.c.b16 %v185, %v177
  %v210 = vpack.c.b16 %v186, %v178
  %v211 = vpack.c.b16 %v187, %v179
  %v212 = vpack.c.b16 %v188, %v180
  %v213 = vpack.c.b16 %v189, %v181
  %v214 = vpack.c.b16 %v190, %v182
  %v215 = vpack.c.b16 %v191, %v183
  %v216 = vpack.c.b16 %v192, %v184
  %v217 = vpack.c.b16 %v201, %v193
  %v218 = vpack.c.b16 %v202, %v194
  %v219 = vpack.c.b16 %v203, %v195
  %v220 = vpack.c.b16 %v204, %v196
  %v221 = vpack.c.b16 %v205, %v197
  %v222 = vpack.c.b16 %v206, %v198
  %v223 = vpack.c.b16 %v207, %v199
  %v224 = vpack.c.b16 %v208, %v200
  %v369 = vunpack.c.l.b16 %v33
  %v370 = vunpack.c.l.b16 %v34
  %v371 = vunpack.c.l.b16 %v35
  %v372 = vunpack.c.l.b16 %v36
  %v373 = vunpack.c.l.b16 %v37
  %v374 = vunpack.c.l.b16 %v38
  %v375 = vunpack.c.l.b16 %v39
  %v376 = vunpack.c.l.b16 %v40
  %v377 = vunpack.c.l.b16 %v41
  %v378 = vunpack.c.l.b16 %v42
  %v379 = vunpack.c.l.b16 %v43
  %v380 = vunpack.c.l.b16 %v44
  %v381 = vunpack.c.l.b16 %v45
  %v382 = vunpack.c.l.b16 %v46
  %v383 = vunpack.c.l.b16 %v47
  %v384 = vunpack.c.l.b16 %v48
  %v385 = vunpack.c.l.b16 %v49
  %v386 = vunpack.c.l.b16 %v50
  %v387 = vunpack.c.l.b16 %v51
  %v388 = vunpack.c.l.b16 %v52
  %v389 = vunpack.c.l.b16 %v53
  %v390 = vunpack.c.l.b16 %v54
  %v391 = vunpack.c.l.b16 %v55
  %v392 = vunpack.c.l.b16 %v56
  %v393 = vunpack.c.l.b16 %v57
  %v394 = vunpack.c.l.b16 %v58
  %v395 = vunpack.c.l.b16 %v59
  %v396 = vunpack.c.l.b16 %v60
  %v397 = vunpack.c.l.b16 %v61
  %v398 = vunpack.c.l.b16 %v62
  %v399 = vunpack.c.l.b16 %v63
  %v400 = vunpack.c.l.b16 %v64
  %v401 = vunpack.c.l.b16 %v65
  %v402 = vunpack.c.l.b16 %v66
  %v403 = vunpack.c.l.b16 %v67
  %v404 = vunpack.c.l.b16 %v68
  %v405 = vunpack.c.l.b16 %v69
  %v406 = vunpack.c.l.b16 %v70
  %v407 = vunpack.c.l.b16 %v71
  %v408 = vunpack.c.l.b16 %v72
  %v409 = vunpack.c.l.b16 %v73
  %v410 = vunpack.c.l.b16 %v74
  %v411 = vunpack.c.l.b16 %v75
  %v412 = vunpack.c.l.b16 %v76
  %v413 = vunpack.c.l.b16 %v77
  %v414 = vunpack.c.l.b16 %v78
  %v415 = vunpack.c.l.b16 %v79
  %v416 = vunpack.c.l.b16 %v80
  %v417 = vunpack.c.l.b16 %v81
  %v418 = vunpack.c.l.b16 %v82
  %v419 = vunpack.c.l.b16 %v83
  %v420 = vunpack.c.l.b16 %v84
  %v421 = vunpack.c.l.b16 %v85
  %v422 = vunpack.c.l.b16 %v86
  %v423 = vunpack.c.l.b16 %v87
  %v424 = vunpack.c.l.b16 %v88
  %v425 = vunpack.c.l.b16 %v89
  %v426 = vunpack.c.l.b16 %v90
  %v427 = vunpack.c.l.b16 %v91
  %v428 = vunpack.c.l.b16 %v92
  %v429 = vunpack.c.l.b16 %v93
  %v430 = vunpack.c.l.b16 %v94
  %v431 = vunpack.c.l.b16 %v95
  %v432 = vunpack.c.l.b16 %v96
  %v433 = vunpack.c.l.b16 %v97
  %v434 = vunpack.c.l.b16 %v98
  %v435 = vunpack.c.l.b16 %v99
  %v436 = vunpack.c.l.b16 %v100
  %v437 = vunpack.c.l.b16 %v101
  %v438 = vunpack.c.l.b16 %v102
  %v439 = vunpack.c.l.b16 %v103
  %v440 = vunpack.c.l.b16 %v104
  %v441 = vunpack.c.l.b16 %v105
  %v442 = vunpack.c.l.b16 %v106
  %v443 = vunpack.c.l.b16 %v107
  %v444 = vunpack.c.l.b16 %v108
  %v445 = vunpack.c.l.b16 %v109
  %v446 = vunpack.c.l.b16 %v110
  %v447 = vunpack.c.l.b16 %v111
  %v448 = vunpack.c.l.b16 %v112
  %v449 = vunpack.c.l.b16 %v113
  %v450 = vunpack.c.l.b16 %v114
  %v451 = vunpack.c.l.b16 %v115
  %v452 = vunpack.c.l.b16 %v116
  %v453 = vunpack.c.l.b16 %v117
  %v454 = vunpack.c.l.b16 %v118
  %v455 = vunpack.c.l.b16 %v119
  %v456 = vunpack.c.l.b16 %v120
  %v457 = vunpack.c.l.b16 %v121
  %v458 = vunpack.c.l.b16 %v122
  %v459 = vunpack.c.l.b16 %v123
  %v460 = vunpack.c.l.b16 %v124
  %v461 = vunpack.c.l.b16 %v125
  %v462 = vunpack.c.l.b16 %v126
  %v463 = vunpack.c.l.b16 %v127
  %v464 = vunpack.c.l.b16 %v128
  %v465 = vunpack.c.l.b16 %v129
  %v466 = vunpack.c.l.b16 %v130
  %v467 = vunpack.c.l.b16 %v131
  %v468 = vunpack.c.l.b16 %v132
  %v469 = vunpack.c.l.b16 %v133
  %v470 = vunpack.c.l.b16 %v134
  %v471 = vunpack.c.l.b16 %v135
  %v472 = vunpack.c.l.b16 %v136
  %v473 = vunpack.c.l.b16 %v137
  %v474 = vunpack.c.l.b16 %v138
  %v475 = vunpack.c.l.b16 %v139
  %v476 = vunpack.c.l.b16 %v140
  %v477 = vunpack.c.l.b16 %v141
  %v478 = vunpack.c.l.b16 %v142
  %v479 = vunpack.c.l.b16 %v143
  %v480 = vunpack.c.l.b16 %v144
  %v481 = vunpack.c.l.b16 %v145
  %v482 = vunpack.c.l.b16 %v146
  %v483 = vunpack.c.l.b16 %v147
  %v484 = vunpack.c.l.b16 %v148
  %v485 = vunpack.c.l.b16 %v149
  %v486 = vunpack.c.l.b16 %v150
  %v487 = vunpack.c.l.b16 %v151
  %v488 = vunpack.c.l.b16 %v152
  %v489 = vunpack.c.l.b16 %v153
  %v490 = vunpack.c.l.b16 %v154
  %v491 = vunpack.c.l.b16 %v155
  %v492 = vunpack.c.l.b16 %v156
  %v493 = vunpack.c.l.b16 %v157
  %v494 = vunpack.c.l.b16 %v158
  %v495 = vunpack.c.l.b16 %v159
  %v496 = vunpack.c.l.b16 %v160
  %v497 = vpack.c.b16 %v370, %v369
  %v498 = vpack.c.b16 %v372, %v371
  %v499 = vpack.c.b16 %v374, %v373
  %v500 = vpack.c.b16 %v376, %v375
  %v501 = vpack.c.b16 %v378, %v377
  %v502 = vpack.c.b16 %v380, %v379
  %v503 = vpack.c.b16 %v382, %v381
  %v504 = vpack.c.b16 %v384, %v383
  %v505 = vpack.c.b16 %v386, %v385
  %v506 = vpack.c.b16 %v388, %v387
  %v507 = vpack.c.b16 %v390, %v389
  %v508 = vpack.c.b16 %v392, %v391
  %v509 = vpack.c.b16 %v394, %v393
  %v510 = vpack.c.b16 %v396, %v395
  %v511 = vpack.c.b16 %v398, %v397
  %v512 = vpack.c.b16 %v400, %v399
  %v513 = vpack.c.b16 %v402, %v401
  %v514 = vpack.c.b16 %v404, %v403
  %v515 = vpack.c.b16 %v406, %v405
  %v516 = vpack.c.b16 %v408, %v407
  %v517 = vpack.c.b16 %v410, %v409
  %v518 = vpack.c.b16 %v412, %v411
  %v519 = vpack.c.b16 %v414, %v413
  %v520 = vpack.c.b16 %v416, %v415
  %v521 = vpack.c.b16 %v418, %v417
  %v522 = vpack.c.b16 %v420, %v419
  %v523 = vpack.c.b16 %v422, %v421
  %v524 = vpack.c.b16 %v424, %v423
  %v525 = vpack.c.b16 %v426, %v425
  %v526 = vpack.c.b16 %v428, %v427
  %v527 = vpack.c.b16 %v430, %v429
  %v528 = vpack.c.b16 %v432, %v431
  %v529 = vpack.c.b16 %v434, %v433
  %v530 = vpack.c.b16 %v436, %v435
  %v531 = vpack.c.b16 %v438, %v437
  %v532 = vpack.c.b16 %v440, %v439
  %v533 = vpack.c.b16 %v442, %v441
  %v534 = vpack.c.b16 %v444, %v443
  %v535 = vpack.c.b16 %v446, %v445
  %v536 = vpack.c.b16 %v448, %v447
  %v537 = vpack.c.b16 %v450, %v449
  %v538 = vpack.c.b16 %v452, %v451
  %v539 = vpack.c.b16 %v454, %v453
  %v540 = vpack.c.b16 %v456, %v455
  %v541 = vpack.c.b16 %v458, %v457
  %v542 = vpack.c.b16 %v460, %v459
  %v543 = vpack.c.b16 %v462, %v461
  %v544 = vpack.c.b16 %v464, %v463
  %v545 = vpack.c.b16 %v466, %v465
  %v546 = vpack.c.b16 %v468, %v467
  %v547 = vpack.c.b16 %v470, %v469
  %v548 = vpack.c.b16 %v472, %v471
  %v549 = vpack.c.b16 %v474, %v473
  %v550 = vpack.c.b16 %v476, %v475
  %v551 = vpack.c.b16 %v478, %v477
  %v552 = vpack.c.b16 %v480, %v479
  %v553 = vpack.c.b16 %v482, %v481
  %v554 = vpack.c.b16 %v484, %v483
  %v555 = vpack.c.b16 %v486, %v485
  %v556 = vpack.c.b16 %v488, %v487
  %v557 = vpack.c.b16 %v490, %v489
  %v558 = vpack.c.b16 %v492, %v491
  %v559 = vpack.c.b16 %v494, %v493
  %v560 = vpack.c.b16 %v496, %v495
  %625 = vmatpush.bf16.msra.mxu0 %v504
  %626 = vmatpush.bf16.msra.mxu0 %v503
  %627 = vmatpush.bf16.msra.mxu0 %v502
  %628 = vmatpush.bf16.msra.mxu0 %v501
  %629 = vmatpush.bf16.msra.mxu0 %v500
  %630 = vmatpush.bf16.msra.mxu0 %v499
  %631 = vmatpush.bf16.msra.mxu0 %v498
  %632 = vmatpush.bf16.msra.mxu0 %v497
  %633 = vmatmul.bf16.gmra.mxu0 %v209
  %v634 = vpop.f32.mrf.mxu0
  %v635 = vadd.f32 0.0, %v634
  %v636 = vpop.f32.mrf.mxu0
  %v637 = vadd.f32 0.0, %v636
  %638 = vmatmul.bf16.gmra.mxu0 %v217
  %v639 = vpop.f32.mrf.mxu0
  %v640 = vadd.f32 0.0, %v639
  %v641 = vpop.f32.mrf.mxu0
  %v642 = vadd.f32 0.0, %v641
  %643 = vdwg.mxu0
  %644 = vmatpush.bf16.msra.mxu0 %v512
  %645 = vmatpush.bf16.msra.mxu0 %v511
  %646 = vmatpush.bf16.msra.mxu0 %v510
  %647 = vmatpush.bf16.msra.mxu0 %v509
  %648 = vmatpush.bf16.msra.mxu0 %v508
  %649 = vmatpush.bf16.msra.mxu0 %v507
  %650 = vmatpush.bf16.msra.mxu0 %v506
  %651 = vmatpush.bf16.msra.mxu0 %v505
  %652 = vmatmul.bf16.gmra.mxu0 %v210
  %v653 = vpop.f32.mrf.mxu0
  %v654 = vadd.f32 %v635, %v653
  %v655 = vpop.f32.mrf.mxu0
  %v656 = vadd.f32 %v637, %v655
  %657 = vmatmul.bf16.gmra.mxu0 %v218
  %v658 = vpop.f32.mrf.mxu0
  %v659 = vadd.f32 %v640, %v658
  %v660 = vpop.f32.mrf.mxu0
  %v661 = vadd.f32 %v642, %v660
  %662 = vdwg.mxu0
  %663 = vmatpush.bf16.msra.mxu0 %v520
  %664 = vmatpush.bf16.msra.mxu0 %v519
  %665 = vmatpush.bf16.msra.mxu0 %v518
  %666 = vmatpush.bf16.msra.mxu0 %v517
  %667 = vmatpush.bf16.msra.mxu0 %v516
  %668 = vmatpush.bf16.msra.mxu0 %v515
  %669 = vmatpush.bf16.msra.mxu0 %v514
  %670 = vmatpush.bf16.msra.mxu0 %v513
  %671 = vmatmul.bf16.gmra.mxu0 %v211
  %v672 = vpop.f32.mrf.mxu0
  %v673 = vadd.f32 %v654, %v672
  %v674 = vpop.f32.mrf.mxu0
  %v675 = vadd.f32 %v656, %v674
  %676 = vmatmul.bf16.gmra.mxu0 %v219
  %v677 = vpop.f32.mrf.mxu0
  %v678 = vadd.f32 %v659, %v677
  %v679 = vpop.f32.mrf.mxu0
  %v680 = vadd.f32 %v661, %v679
  %681 = vdwg.mxu0
  %682 = vmatpush.bf16.msra.mxu0 %v528
  %683 = vmatpush.bf16.msra.mxu0 %v527
  %684 = vmatpush.bf16.msra.mxu0 %v526
  %685 = vmatpush.bf16.msra.mxu0 %v525
  %686 = vmatpush.bf16.msra.mxu0 %v524
  %687 = vmatpush.bf16.msra.mxu0 %v523
  %688 = vmatpush.bf16.msra.mxu0 %v522
  %689 = vmatpush.bf16.msra.mxu0 %v521
  %690 = vmatmul.bf16.gmra.mxu0 %v212
  %v691 = vpop.f32.mrf.mxu0
  %v692 = vadd.f32 %v673, %v691
  %v693 = vpop.f32.mrf.mxu0
  %v694 = vadd.f32 %v675, %v693
  %695 = vmatmul.bf16.gmra.mxu0 %v220
  %v696 = vpop.f32.mrf.mxu0
  %v697 = vadd.f32 %v678, %v696
  %v698 = vpop.f32.mrf.mxu0
  %v699 = vadd.f32 %v680, %v698
  %700 = vdwg.mxu0
  %701 = vmatpush.bf16.msra.mxu0 %v536
  %702 = vmatpush.bf16.msra.mxu0 %v535
  %703 = vmatpush.bf16.msra.mxu0 %v534
  %704 = vmatpush.bf16.msra.mxu0 %v533
  %705 = vmatpush.bf16.msra.mxu0 %v532
  %706 = vmatpush.bf16.msra.mxu0 %v531
  %707 = vmatpush.bf16.msra.mxu0 %v530
  %708 = vmatpush.bf16.msra.mxu0 %v529
  %709 = vmatmul.bf16.gmra.mxu0 %v213
  %v710 = vpop.f32.mrf.mxu0
  %v711 = vadd.f32 %v692, %v710
  %v712 = vpop.f32.mrf.mxu0
  %v713 = vadd.f32 %v694, %v712
  %714 = vmatmul.bf16.gmra.mxu0 %v221
  %v715 = vpop.f32.mrf.mxu0
  %v716 = vadd.f32 %v697, %v715
  %v717 = vpop.f32.mrf.mxu0
  %v718 = vadd.f32 %v699, %v717
  %719 = vdwg.mxu0
  %720 = vmatpush.bf16.msra.mxu0 %v544
  %721 = vmatpush.bf16.msra.mxu0 %v543
  %722 = vmatpush.bf16.msra.mxu0 %v542
  %723 = vmatpush.bf16.msra.mxu0 %v541
  %724 = vmatpush.bf16.msra.mxu0 %v540
  %725 = vmatpush.bf16.msra.mxu0 %v539
  %726 = vmatpush.bf16.msra.mxu0 %v538
  %727 = vmatpush.bf16.msra.mxu0 %v537
  %728 = vmatmul.bf16.gmra.mxu0 %v214
  %v729 = vpop.f32.mrf.mxu0
  %v730 = vadd.f32 %v711, %v729
  %v731 = vpop.f32.mrf.mxu0
  %v732 = vadd.f32 %v713, %v731
  %733 = vmatmul.bf16.gmra.mxu0 %v222
  %v734 = vpop.f32.mrf.mxu0
  %v735 = vadd.f32 %v716, %v734
  %v736 = vpop.f32.mrf.mxu0
  %v737 = vadd.f32 %v718, %v736
  %738 = vdwg.mxu0
  %739 = vmatpush.bf16.msra.mxu0 %v552
  %740 = vmatpush.bf16.msra.mxu0 %v551
  %741 = vmatpush.bf16.msra.mxu0 %v550
  %742 = vmatpush.bf16.msra.mxu0 %v549
  %743 = vmatpush.bf16.msra.mxu0 %v548
  %744 = vmatpush.bf16.msra.mxu0 %v547
  %745 = vmatpush.bf16.msra.mxu0 %v546
  %746 = vmatpush.bf16.msra.mxu0 %v545
  %747 = vmatmul.bf16.gmra.mxu0 %v215
  %v748 = vpop.f32.mrf.mxu0
  %v749 = vadd.f32 %v730, %v748
  %v750 = vpop.f32.mrf.mxu0
  %v751 = vadd.f32 %v732, %v750
  %752 = vmatmul.bf16.gmra.mxu0 %v223
  %v753 = vpop.f32.mrf.mxu0
  %v754 = vadd.f32 %v735, %v753
  %v755 = vpop.f32.mrf.mxu0
  %v756 = vadd.f32 %v737, %v755
  %757 = vdwg.mxu0
  %758 = vmatpush.bf16.msra.mxu0 %v560
  %759 = vmatpush.bf16.msra.mxu0 %v559
  %760 = vmatpush.bf16.msra.mxu0 %v558
  %761 = vmatpush.bf16.msra.mxu0 %v557
  %762 = vmatpush.bf16.msra.mxu0 %v556
  %763 = vmatpush.bf16.msra.mxu0 %v555
  %764 = vmatpush.bf16.msra.mxu0 %v554
  %765 = vmatpush.bf16.msra.mxu0 %v553
  %766 = vmatmul.bf16.gmra.mxu0 %v216
  %v767 = vpop.f32.mrf.mxu0
  %v768 = vadd.f32 %v749, %v767
  %v769 = vpop.f32.mrf.mxu0
  %v770 = vadd.f32 %v751, %v769
  %771 = vmatmul.bf16.gmra.mxu0 %v224
  %v772 = vpop.f32.mrf.mxu0
  %v773 = vadd.f32 %v754, %v772
  %v774 = vpop.f32.mrf.mxu0
  %v775 = vadd.f32 %v756, %v774
  %776 = vdwg.mxu0
  %777 = vadd.xlane.f32.xlu0 %v768
  %v778 = vpop.xlane.xlu0 %777
  %779 = vadd.xlane.f32.xlu0 %v770
  %v780 = vpop.xlane.xlu0 %779
  %781 = vadd.xlane.f32.xlu0 %v773
  %v782 = vpop.xlane.xlu0 %781
  %783 = vadd.xlane.f32.xlu0 %v775
  %v784 = vpop.xlane.xlu0 %783
  %v785 = vrcp.pop 128.0
  %v786 = vmul.f32 128.0, %v785
  %v787 = vsub.f32 1.0, %v786
  %v788 = vmul.f32 %v785, %v787
  %v789 = vadd.f32 %v785, %v788
  %vm790 = vweird.f32 %v785
  %v791 = vsel %vm790, %v785, %v789
  %v792 = vmul.f32 %v778, %v791
  %v793 = vmul.f32 %v780, %v791
  %v794 = vmul.f32 %v782, %v791
  %v795 = vmul.f32 %v784, %v791
  %v796 = vmul.f32 %v768, %v768
  %v797 = vmul.f32 %v770, %v770
  %v798 = vmul.f32 %v773, %v773
  %v799 = vmul.f32 %v775, %v775
  %800 = vadd.xlane.f32.xlu0 %v796
  %v801 = vpop.xlane.xlu0 %800
  %802 = vadd.xlane.f32.xlu0 %v797
  %v803 = vpop.xlane.xlu0 %802
  %804 = vadd.xlane.f32.xlu0 %v798
  %v805 = vpop.xlane.xlu0 %804
  %806 = vadd.xlane.f32.xlu0 %v799
  %v807 = vpop.xlane.xlu0 %806
  %v808 = vmul.f32 %v801, %v791
  %v809 = vmul.f32 %v803, %v791
  %v810 = vmul.f32 %v805, %v791
  %v811 = vmul.f32 %v807, %v791
  %v812 = vmul.f32 %v792, %v792
  %v813 = vmul.f32 %v793, %v793
  %v814 = vmul.f32 %v794, %v794
  %v815 = vmul.f32 %v795, %v795
  %v816 = vsub.f32 %v808, %v812
  %v817 = vsub.f32 %v809, %v813
  %v818 = vsub.f32 %v810, %v814
  %v819 = vsub.f32 %v811, %v815
  %v820 = vld [vmem:[%s2] sm:$0xff]
  %v821 = vld [vmem:[%s2 + $0x8] sm:$0xff]
  %v822 = vld [vmem:[%s2 + $0x10] sm:$0xff]
  %v823 = vld [vmem:[%s2 + $0x18] sm:$0xff]
  %v824 = vadd.f32 %v816, 1e-05
  %v825 = vadd.f32 %v817, 1e-05
  %v826 = vadd.f32 %v818, 1e-05
  %v827 = vadd.f32 %v819, 1e-05
  %v828 = vrsqrt.pop %v824
  %v829 = vmul.f32 %v828, %v824
  %v830 = vmul.f32 %v829, %v828
  %v831 = vmul.f32 0.5, %v830
  %v832 = vsub.f32 1.5, %v831
  %v833 = vmul.f32 %v828, %v832
  %vm834 = vweird.f32 %v824
  %vm835 = vweird.f32 %v828
  %vm836 = vmor %vm834, %vm835
  %v837 = vsel %vm836, %v828, %v833
  %v838 = vrsqrt.pop %v825
  %v839 = vmul.f32 %v838, %v825
  %v840 = vmul.f32 %v839, %v838
  %v841 = vmul.f32 0.5, %v840
  %v842 = vsub.f32 1.5, %v841
  %v843 = vmul.f32 %v838, %v842
  %vm844 = vweird.f32 %v825
  %vm845 = vweird.f32 %v838
  %vm846 = vmor %vm844, %vm845
  %v847 = vsel %vm846, %v838, %v843
  %v848 = vrsqrt.pop %v826
  %v849 = vmul.f32 %v848, %v826
  %v850 = vmul.f32 %v849, %v848
  %v851 = vmul.f32 0.5, %v850
  %v852 = vsub.f32 1.5, %v851
  %v853 = vmul.f32 %v848, %v852
  %vm854 = vweird.f32 %v826
  %vm855 = vweird.f32 %v848
  %vm856 = vmor %vm854, %vm855
  %v857 = vsel %vm856, %v848, %v853
  %v858 = vrsqrt.pop %v827
  %v859 = vmul.f32 %v858, %v827
  %v860 = vmul.f32 %v859, %v858
  %v861 = vmul.f32 0.5, %v860
  %v862 = vsub.f32 1.5, %v861
  %v863 = vmul.f32 %v858, %v862
  %vm864 = vweird.f32 %v827
  %vm865 = vweird.f32 %v858
  %vm866 = vmor %vm864, %vm865
  %v867 = vsel %vm866, %v858, %v863
  %v868 = vmul.f32 %v820, %v837
  %v869 = vmul.f32 %v821, %v847
  %v870 = vmul.f32 %v822, %v857
  %v871 = vmul.f32 %v823, %v867
  %v872 = vld [vmem:[%s3] sm:$0xff]
  %v873 = vld [vmem:[%s3 + $0x8] sm:$0xff]
  %v874 = vld [vmem:[%s3 + $0x10] sm:$0xff]
  %v875 = vld [vmem:[%s3 + $0x18] sm:$0xff]
  %v876 = vmul.f32 %v792, %v868
  %v877 = vmul.f32 %v793, %v869
  %v878 = vmul.f32 %v794, %v870
  %v879 = vmul.f32 %v795, %v871
  %v880 = vsub.f32 %v872, %v876
  %v881 = vsub.f32 %v873, %v877
  %v882 = vsub.f32 %v874, %v878
  %v883 = vsub.f32 %v875, %v879
  %885 = vset.pattern.permute.xlu0 0
  %886 = vperm.xlu0 %885, %v868
  %v887 = vpop.permute.xlu0 %886
  %890 = vset.pattern.permute.xlu0 0
  %891 = vperm.xlu0 %890, %v869
  %v892 = vpop.permute.xlu0 %891
  %895 = vset.pattern.permute.xlu0 0
  %896 = vperm.xlu0 %895, %v870
  %v897 = vpop.permute.xlu0 %896
  %900 = vset.pattern.permute.xlu0 0
  %901 = vperm.xlu0 %900, %v871
  %v902 = vpop.permute.xlu0 %901
  %v904 = vmul.f32 %v768, %v887
  %v905 = vmul.f32 %v770, %v892
  %v906 = vmul.f32 %v773, %v897
  %v907 = vmul.f32 %v775, %v902
  %909 = vset.pattern.permute.xlu0 0
  %910 = vperm.xlu0 %909, %v880
  %v911 = vpop.permute.xlu0 %910
  %914 = vset.pattern.permute.xlu0 0
  %915 = vperm.xlu0 %914, %v881
  %v916 = vpop.permute.xlu0 %915
  %919 = vset.pattern.permute.xlu0 0
  %920 = vperm.xlu0 %919, %v882
  %v921 = vpop.permute.xlu0 %920
  %924 = vset.pattern.permute.xlu0 0
  %925 = vperm.xlu0 %924, %v883
  %v926 = vpop.permute.xlu0 %925
  %v928 = vadd.f32 %v904, %v911
  %v929 = vadd.f32 %v905, %v916
  %v930 = vadd.f32 %v906, %v921
  %v931 = vadd.f32 %v907, %v926
  %v932 = vmax.f32 %v928, 0.0
  %v933 = vmax.f32 %v929, 0.0
  %v934 = vmax.f32 %v930, 0.0
  %v935 = vmax.f32 %v931, 0.0
  %936 = vst [vmem:[%s4] sm:$0xff] %v932
  %937 = vst [vmem:[%s4 + $0x8] sm:$0xff] %v933
  %938 = vst [vmem:[%s4 + $0x10] sm:$0xff] %v934
  %939 = vst [vmem:[%s4 + $0x18] sm:$0xff] %v935
  // Predicated region
  $region18: #{_lambda_.7} parent=0 // pred_check
    _
  $region19: #{_lambda_.7} parent=0 // pred_check_branch
    %941 = sbr.rel (0) target = $region21
  $region20: #{_lambda_.7} parent=0 // pred_region
    _
  $region21: #{_lambda_.7} parent=0 // pred_fallthru
    _
  // Predicated region
  $region22: #{_lambda_.7} parent=0 // pred_check
    _
  $region23: #{_lambda_.7} parent=0 // pred_check_branch
    %943 = sbr.rel (0) target = $region25
  $region24: #{_lambda_.7} parent=0 // pred_region
    _
  $region25: #{_lambda_.7} parent=0 // pred_fallthru
    _

// kernel: _lambda_.8
$region0: #{_lambda_.8}
  #allocation0 [shape = 'u32[]', space=smem, size = 0x4, offset = 0x4, fixed_abs, tag = 'smem constant byte address 0x4 - core index']
  #allocation1 [shape = 'u32[72,128]{1,0:T(1,128)}', space=vmem, size = 0x9000, scoped, tag = 'internal scratch']
  %s0 = inlined_call_operand.vmem [shape: bf16[16,512], index: 0, kind: input, shape index: {}]
  %s1 = inlined_call_operand.vmem [shape: bf16[512,512], index: 1, kind: input, shape index: {}]
  %s2 = inlined_call_operand.vmem [shape: f32[16,1], index: 2, kind: input, shape index: {}]
  %s3 = inlined_call_operand.vmem [shape: f32[16,1], index: 3, kind: input, shape index: {}]
  %s4 = inlined_call_operand.vmem [shape: f32[16,512], index: 4, kind: output, shape index: {}]
  %s5 = sld [smem:[#allocation0]]
  $region26: #{_lambda_.8} parent=0
    _
  %s7 = ssub.s32 1, %s5
  %s8 = scalar_select 0, %s7, %s5
  // Predicated region
  $region2: #{_lambda_.8} parent=0 // pred_check
    _
  $region3: #{_lambda_.8} parent=0 // pred_check_branch
    %10 = sbr.rel (0) target = $region5
  $region4: #{_lambda_.8} parent=0 // pred_region
    _
  $region5: #{_lambda_.8} parent=0 // pred_fallthru
    _
  // Predicated region
  $region6: #{_lambda_.8} parent=0 // pred_check
    _
  $region7: #{_lambda_.8} parent=0 // pred_check_branch
    %12 = sbr.rel (0) target = $region9
  $region8: #{_lambda_.8} parent=0 // pred_region
    _
  $region9: #{_lambda_.8} parent=0 // pred_fallthru
    _
  // Predicated region
  $region10: #{_lambda_.8} parent=0 // pred_check
    _
  $region11: #{_lambda_.8} parent=0 // pred_check_branch
    %14 = sbr.rel (0) target = $region13
  $region12: #{_lambda_.8} parent=0 // pred_region
    _
  $region13: #{_lambda_.8} parent=0 // pred_fallthru
    _
  // Predicated region
  $region14: #{_lambda_.8} parent=0 // pred_check
    _
  $region15: #{_lambda_.8} parent=0 // pred_check_branch
    %16 = sbr.rel (0) target = $region17
  $region16: #{_lambda_.8} parent=0 // pred_region
    _
  $region17: #{_lambda_.8} parent=0 // pred_fallthru
    _
  %v17 = vld [vmem:[%s0] sm:$0xff]
  %v18 = vld [vmem:[%s0 + $0x8] sm:$0xff]
  %v19 = vld [vmem:[%s0 + $0x10] sm:$0xff]
  %v20 = vld [vmem:[%s0 + $0x18] sm:$0xff]
  %v21 = vld [vmem:[%s1] sm:$0xff]
  %v22 = vld [vmem:[%s1 + $0x8] sm:$0xff]
  %v23 = vld [vmem:[%s1 + $0x10] sm:$0xff]
  %v24 = vld [vmem:[%s1 + $0x18] sm:$0xff]
  %v25 = vld [vmem:[%s1 + $0x20] sm:$0xff]
  %v26 = vld [vmem:[%s1 + $0x28] sm:$0xff]
  %v27 = vld [vmem:[%s1 + $0x30] sm:$0xff]
  %v28 = vld [vmem:[%s1 + $0x38] sm:$0xff]
  %v29 = vld [vmem:[%s1 + $0x40] sm:$0xff]
  %v30 = vld [vmem:[%s1 + $0x48] sm:$0xff]
  %v31 = vld [vmem:[%s1 + $0x50] sm:$0xff]
  %v32 = vld [vmem:[%s1 + $0x58] sm:$0xff]
  %v33 = vld [vmem:[%s1 + $0x60] sm:$0xff]
  %v34 = vld [vmem:[%s1 + $0x68] sm:$0xff]
  %v35 = vld [vmem:[%s1 + $0x70] sm:$0xff]
  %v36 = vld [vmem:[%s1 + $0x78] sm:$0xff]
  %v37 = vld [vmem:[%s1 + $0x80] sm:$0xff]
  %v38 = vld [vmem:[%s1 + $0x88] sm:$0xff]
  %v39 = vld [vmem:[%s1 + $0x90] sm:$0xff]
  %v40 = vld [vmem:[%s1 + $0x98] sm:$0xff]
  %v41 = vld [vmem:[%s1 + $0xa0] sm:$0xff]
  %v42 = vld [vmem:[%s1 + $0xa8] sm:$0xff]
  %v43 = vld [vmem:[%s1 + $0xb0] sm:$0xff]
  %v44 = vld [vmem:[%s1 + $0xb8] sm:$0xff]
  %v45 = vld [vmem:[%s1 + $0xc0] sm:$0xff]
  %v46 = vld [vmem:[%s1 + $0xc8] sm:$0xff]
  %v47 = vld [vmem:[%s1 + $0xd0] sm:$0xff]
  %v48 = vld [vmem:[%s1 + $0xd8] sm:$0xff]
  %v49 = vld [vmem:[%s1 + $0xe0] sm:$0xff]
  %v50 = vld [vmem:[%s1 + $0xe8] sm:$0xff]
  %v51 = vld [vmem:[%s1 + $0xf0] sm:$0xff]
  %v52 = vld [vmem:[%s1 + $0xf8] sm:$0xff]
  %v53 = vld [vmem:[%s1 + $0x100] sm:$0xff]
  %v54 = vld [vmem:[%s1 + $0x108] sm:$0xff]
  %v55 = vld [vmem:[%s1 + $0x110] sm:$0xff]
  %v56 = vld [vmem:[%s1 + $0x118] sm:$0xff]
  %v57 = vld [vmem:[%s1 + $0x120] sm:$0xff]
  %v58 = vld [vmem:[%s1 + $0x128] sm:$0xff]
  %v59 = vld [vmem:[%s1 + $0x130] sm:$0xff]
  %v60 = vld [vmem:[%s1 + $0x138] sm:$0xff]
  %v61 = vld [vmem:[%s1 + $0x140] sm:$0xff]
  %v62 = vld [vmem:[%s1 + $0x148] sm:$0xff]
  %v63 = vld [vmem:[%s1 + $0x150] sm:$0xff]
  %v64 = vld [vmem:[%s1 + $0x158] sm:$0xff]
  %v65 = vld [vmem:[%s1 + $0x160] sm:$0xff]
  %v66 = vld [vmem:[%s1 + $0x168] sm:$0xff]
  %v67 = vld [vmem:[%s1 + $0x170] sm:$0xff]
  %v68 = vld [vmem:[%s1 + $0x178] sm:$0xff]
  %v69 = vld [vmem:[%s1 + $0x180] sm:$0xff]
  %v70 = vld [vmem:[%s1 + $0x188] sm:$0xff]
  %v71 = vld [vmem:[%s1 + $0x190] sm:$0xff]
  %v72 = vld [vmem:[%s1 + $0x198] sm:$0xff]
  %v73 = vld [vmem:[%s1 + $0x1a0] sm:$0xff]
  %v74 = vld [vmem:[%s1 + $0x1a8] sm:$0xff]
  %v75 = vld [vmem:[%s1 + $0x1b0] sm:$0xff]
  %v76 = vld [vmem:[%s1 + $0x1b8] sm:$0xff]
  %v77 = vld [vmem:[%s1 + $0x1c0] sm:$0xff]
  %v78 = vld [vmem:[%s1 + $0x1c8] sm:$0xff]
  %v79 = vld [vmem:[%s1 + $0x1d0] sm:$0xff]
  %v80 = vld [vmem:[%s1 + $0x1d8] sm:$0xff]
  %v81 = vld [vmem:[%s1 + $0x1e0] sm:$0xff]
  %v82 = vld [vmem:[%s1 + $0x1e8] sm:$0xff]
  %v83 = vld [vmem:[%s1 + $0x1f0] sm:$0xff]
  %v84 = vld [vmem:[%s1 + $0x1f8] sm:$0xff]
  %v85 = vld [vmem:[%s1 + $0x200] sm:$0xff]
  %v86 = vld [vmem:[%s1 + $0x208] sm:$0xff]
  %v87 = vld [vmem:[%s1 + $0x210] sm:$0xff]
  %v88 = vld [vmem:[%s1 + $0x218] sm:$0xff]
  %v89 = vld [vmem:[%s1 + $0x220] sm:$0xff]
  %v90 = vld [vmem:[%s1 + $0x228] sm:$0xff]
  %v91 = vld [vmem:[%s1 + $0x230] sm:$0xff]
  %v92 = vld [vmem:[%s1 + $0x238] sm:$0xff]
  %v93 = vld [vmem:[%s1 + $0x240] sm:$0xff]
  %v94 = vld [vmem:[%s1 + $0x248] sm:$0xff]
  %v95 = vld [vmem:[%s1 + $0x250] sm:$0xff]
  %v96 = vld [vmem:[%s1 + $0x258] sm:$0xff]
  %v97 = vld [vmem:[%s1 + $0x260] sm:$0xff]
  %v98 = vld [vmem:[%s1 + $0x268] sm:$0xff]
  %v99 = vld [vmem:[%s1 + $0x270] sm:$0xff]
  %v100 = vld [vmem:[%s1 + $0x278] sm:$0xff]
  %v101 = vld [vmem:[%s1 + $0x280] sm:$0xff]
  %v102 = vld [vmem:[%s1 + $0x288] sm:$0xff]
  %v103 = vld [vmem:[%s1 + $0x290] sm:$0xff]
  %v104 = vld [vmem:[%s1 + $0x298] sm:$0xff]
  %v105 = vld [vmem:[%s1 + $0x2a0] sm:$0xff]
  %v106 = vld [vmem:[%s1 + $0x2a8] sm:$0xff]
  %v107 = vld [vmem:[%s1 + $0x2b0] sm:$0xff]
  %v108 = vld [vmem:[%s1 + $0x2b8] sm:$0xff]
  %v109 = vld [vmem:[%s1 + $0x2c0] sm:$0xff]
  %v110 = vld [vmem:[%s1 + $0x2c8] sm:$0xff]
  %v111 = vld [vmem:[%s1 + $0x2d0] sm:$0xff]
  %v112 = vld [vmem:[%s1 + $0x2d8] sm:$0xff]
  %v113 = vld [vmem:[%s1 + $0x2e0] sm:$0xff]
  %v114 = vld [vmem:[%s1 + $0x2e8] sm:$0xff]
  %v115 = vld [vmem:[%s1 + $0x2f0] sm:$0xff]
  %v116 = vld [vmem:[%s1 + $0x2f8] sm:$0xff]
  %v117 = vld [vmem:[%s1 + $0x300] sm:$0xff]
  %v118 = vld [vmem:[%s1 + $0x308] sm:$0xff]
  %v119 = vld [vmem:[%s1 + $0x310] sm:$0xff]
  %v120 = vld [vmem:[%s1 + $0x318] sm:$0xff]
  %v121 = vld [vmem:[%s1 + $0x320] sm:$0xff]
  %v122 = vld [vmem:[%s1 + $0x328] sm:$0xff]
  %v123 = vld [vmem:[%s1 + $0x330] sm:$0xff]
  %v124 = vld [vmem:[%s1 + $0x338] sm:$0xff]
  %v125 = vld [vmem:[%s1 + $0x340] sm:$0xff]
  %v126 = vld [vmem:[%s1 + $0x348] sm:$0xff]
  %v127 = vld [vmem:[%s1 + $0x350] sm:$0xff]
  %v128 = vld [vmem:[%s1 + $0x358] sm:$0xff]
  %v129 = vld [vmem:[%s1 + $0x360] sm:$0xff]
  %v130 = vld [vmem:[%s1 + $0x368] sm:$0xff]
  %v131 = vld [vmem:[%s1 + $0x370] sm:$0xff]
  %v132 = vld [vmem:[%s1 + $0x378] sm:$0xff]
  %v133 = vld [vmem:[%s1 + $0x380] sm:$0xff]
  %v134 = vld [vmem:[%s1 + $0x388] sm:$0xff]
  %v135 = vld [vmem:[%s1 + $0x390] sm:$0xff]
  %v136 = vld [vmem:[%s1 + $0x398] sm:$0xff]
  %v137 = vld [vmem:[%s1 + $0x3a0] sm:$0xff]
  %v138 = vld [vmem:[%s1 + $0x3a8] sm:$0xff]
  %v139 = vld [vmem:[%s1 + $0x3b0] sm:$0xff]
  %v140 = vld [vmem:[%s1 + $0x3b8] sm:$0xff]
  %v141 = vld [vmem:[%s1 + $0x3c0] sm:$0xff]
  %v142 = vld [vmem:[%s1 + $0x3c8] sm:$0xff]
  %v143 = vld [vmem:[%s1 + $0x3d0] sm:$0xff]
  %v144 = vld [vmem:[%s1 + $0x3d8] sm:$0xff]
  %v145 = vld [vmem:[%s1 + $0x3e0] sm:$0xff]
  %v146 = vld [vmem:[%s1 + $0x3e8] sm:$0xff]
  %v147 = vld [vmem:[%s1 + $0x3f0] sm:$0xff]
  %v148 = vld [vmem:[%s1 + $0x3f8] sm:$0xff]
  %v153 = vunpack.c.l.b16 %v17
  %v154 = vunpack.c.h.b16 %v17
  %v155 = vunpack.c.l.b16 %v18
  %v156 = vunpack.c.h.b16 %v18
  %v157 = vunpack.c.l.b16 %v19
  %v158 = vunpack.c.h.b16 %v19
  %v159 = vunpack.c.l.b16 %v20
  %v160 = vunpack.c.h.b16 %v20
  %v161 = vpack.c.b16 %v157, %v153
  %v162 = vpack.c.b16 %v158, %v154
  %v163 = vpack.c.b16 %v159, %v155
  %v164 = vpack.c.b16 %v160, %v156
  %v297 = vunpack.c.l.b16 %v21
  %v298 = vunpack.c.h.b16 %v21
  %v299 = vunpack.c.l.b16 %v22
  %v300 = vunpack.c.h.b16 %v22
  %v301 = vunpack.c.l.b16 %v23
  %v302 = vunpack.c.h.b16 %v23
  %v303 = vunpack.c.l.b16 %v24
  %v304 = vunpack.c.h.b16 %v24
  %v305 = vunpack.c.l.b16 %v25
  %v306 = vunpack.c.h.b16 %v25
  %v307 = vunpack.c.l.b16 %v26
  %v308 = vunpack.c.h.b16 %v26
  %v309 = vunpack.c.l.b16 %v27
  %v310 = vunpack.c.h.b16 %v27
  %v311 = vunpack.c.l.b16 %v28
  %v312 = vunpack.c.h.b16 %v28
  %v313 = vunpack.c.l.b16 %v29
  %v314 = vunpack.c.h.b16 %v29
  %v315 = vunpack.c.l.b16 %v30
  %v316 = vunpack.c.h.b16 %v30
  %v317 = vunpack.c.l.b16 %v31
  %v318 = vunpack.c.h.b16 %v31
  %v319 = vunpack.c.l.b16 %v32
  %v320 = vunpack.c.h.b16 %v32
  %v321 = vunpack.c.l.b16 %v33
  %v322 = vunpack.c.h.b16 %v33
  %v323 = vunpack.c.l.b16 %v34
  %v324 = vunpack.c.h.b16 %v34
  %v325 = vunpack.c.l.b16 %v35
  %v326 = vunpack.c.h.b16 %v35
  %v327 = vunpack.c.l.b16 %v36
  %v328 = vunpack.c.h.b16 %v36
  %v329 = vunpack.c.l.b16 %v37
  %v330 = vunpack.c.h.b16 %v37
  %v331 = vunpack.c.l.b16 %v38
  %v332 = vunpack.c.h.b16 %v38
  %v333 = vunpack.c.l.b16 %v39
  %v334 = vunpack.c.h.b16 %v39
  %v335 = vunpack.c.l.b16 %v40
  %v336 = vunpack.c.h.b16 %v40
  %v337 = vunpack.c.l.b16 %v41
  %v338 = vunpack.c.h.b16 %v41
  %v339 = vunpack.c.l.b16 %v42
  %v340 = vunpack.c.h.b16 %v42
  %v341 = vunpack.c.l.b16 %v43
  %v342 = vunpack.c.h.b16 %v43
  %v343 = vunpack.c.l.b16 %v44
  %v344 = vunpack.c.h.b16 %v44
  %v345 = vunpack.c.l.b16 %v45
  %v346 = vunpack.c.h.b16 %v45
  %v347 = vunpack.c.l.b16 %v46
  %v348 = vunpack.c.h.b16 %v46
  %v349 = vunpack.c.l.b16 %v47
  %v350 = vunpack.c.h.b16 %v47
  %v351 = vunpack.c.l.b16 %v48
  %v352 = vunpack.c.h.b16 %v48
  %v353 = vunpack.c.l.b16 %v49
  %v354 = vunpack.c.h.b16 %v49
  %v355 = vunpack.c.l.b16 %v50
  %v356 = vunpack.c.h.b16 %v50
  %v357 = vunpack.c.l.b16 %v51
  %v358 = vunpack.c.h.b16 %v51
  %v359 = vunpack.c.l.b16 %v52
  %v360 = vunpack.c.h.b16 %v52
  %v361 = vunpack.c.l.b16 %v53
  %v362 = vunpack.c.h.b16 %v53
  %v363 = vunpack.c.l.b16 %v54
  %v364 = vunpack.c.h.b16 %v54
  %v365 = vunpack.c.l.b16 %v55
  %v366 = vunpack.c.h.b16 %v55
  %v367 = vunpack.c.l.b16 %v56
  %v368 = vunpack.c.h.b16 %v56
  %v369 = vunpack.c.l.b16 %v57
  %v370 = vunpack.c.h.b16 %v57
  %v371 = vunpack.c.l.b16 %v58
  %v372 = vunpack.c.h.b16 %v58
  %v373 = vunpack.c.l.b16 %v59
  %v374 = vunpack.c.h.b16 %v59
  %v375 = vunpack.c.l.b16 %v60
  %v376 = vunpack.c.h.b16 %v60
  %v377 = vunpack.c.l.b16 %v61
  %v378 = vunpack.c.h.b16 %v61
  %v379 = vunpack.c.l.b16 %v62
  %v380 = vunpack.c.h.b16 %v62
  %v381 = vunpack.c.l.b16 %v63
  %v382 = vunpack.c.h.b16 %v63
  %v383 = vunpack.c.l.b16 %v64
  %v384 = vunpack.c.h.b16 %v64
  %v385 = vunpack.c.l.b16 %v65
  %v386 = vunpack.c.h.b16 %v65
  %v387 = vunpack.c.l.b16 %v66
  %v388 = vunpack.c.h.b16 %v66
  %v389 = vunpack.c.l.b16 %v67
  %v390 = vunpack.c.h.b16 %v67
  %v391 = vunpack.c.l.b16 %v68
  %v392 = vunpack.c.h.b16 %v68
  %v393 = vunpack.c.l.b16 %v69
  %v394 = vunpack.c.h.b16 %v69
  %v395 = vunpack.c.l.b16 %v70
  %v396 = vunpack.c.h.b16 %v70
  %v397 = vunpack.c.l.b16 %v71
  %v398 = vunpack.c.h.b16 %v71
  %v399 = vunpack.c.l.b16 %v72
  %v400 = vunpack.c.h.b16 %v72
  %v401 = vunpack.c.l.b16 %v73
  %v402 = vunpack.c.h.b16 %v73
  %v403 = vunpack.c.l.b16 %v74
  %v404 = vunpack.c.h.b16 %v74
  %v405 = vunpack.c.l.b16 %v75
  %v406 = vunpack.c.h.b16 %v75
  %v407 = vunpack.c.l.b16 %v76
  %v408 = vunpack.c.h.b16 %v76
  %v409 = vunpack.c.l.b16 %v77
  %v410 = vunpack.c.h.b16 %v77
  %v411 = vunpack.c.l.b16 %v78
  %v412 = vunpack.c.h.b16 %v78
  %v413 = vunpack.c.l.b16 %v79
  %v414 = vunpack.c.h.b16 %v79
  %v415 = vunpack.c.l.b16 %v80
  %v416 = vunpack.c.h.b16 %v80
  %v417 = vunpack.c.l.b16 %v81
  %v418 = vunpack.c.h.b16 %v81
  %v419 = vunpack.c.l.b16 %v82
  %v420 = vunpack.c.h.b16 %v82
  %v421 = vunpack.c.l.b16 %v83
  %v422 = vunpack.c.h.b16 %v83
  %v423 = vunpack.c.l.b16 %v84
  %v424 = vunpack.c.h.b16 %v84
  %v425 = vunpack.c.l.b16 %v85
  %v426 = vunpack.c.h.b16 %v85
  %v427 = vunpack.c.l.b16 %v86
  %v428 = vunpack.c.h.b16 %v86
  %v429 = vunpack.c.l.b16 %v87
  %v430 = vunpack.c.h.b16 %v87
  %v431 = vunpack.c.l.b16 %v88
  %v432 = vunpack.c.h.b16 %v88
  %v433 = vunpack.c.l.b16 %v89
  %v434 = vunpack.c.h.b16 %v89
  %v435 = vunpack.c.l.b16 %v90
  %v436 = vunpack.c.h.b16 %v90
  %v437 = vunpack.c.l.b16 %v91
  %v438 = vunpack.c.h.b16 %v91
  %v439 = vunpack.c.l.b16 %v92
  %v440 = vunpack.c.h.b16 %v92
  %v441 = vunpack.c.l.b16 %v93
  %v442 = vunpack.c.h.b16 %v93
  %v443 = vunpack.c.l.b16 %v94
  %v444 = vunpack.c.h.b16 %v94
  %v445 = vunpack.c.l.b16 %v95
  %v446 = vunpack.c.h.b16 %v95
  %v447 = vunpack.c.l.b16 %v96
  %v448 = vunpack.c.h.b16 %v96
  %v449 = vunpack.c.l.b16 %v97
  %v450 = vunpack.c.h.b16 %v97
  %v451 = vunpack.c.l.b16 %v98
  %v452 = vunpack.c.h.b16 %v98
  %v453 = vunpack.c.l.b16 %v99
  %v454 = vunpack.c.h.b16 %v99
  %v455 = vunpack.c.l.b16 %v100
  %v456 = vunpack.c.h.b16 %v100
  %v457 = vunpack.c.l.b16 %v101
  %v458 = vunpack.c.h.b16 %v101
  %v459 = vunpack.c.l.b16 %v102
  %v460 = vunpack.c.h.b16 %v102
  %v461 = vunpack.c.l.b16 %v103
  %v462 = vunpack.c.h.b16 %v103
  %v463 = vunpack.c.l.b16 %v104
  %v464 = vunpack.c.h.b16 %v104
  %v465 = vunpack.c.l.b16 %v105
  %v466 = vunpack.c.h.b16 %v105
  %v467 = vunpack.c.l.b16 %v106
  %v468 = vunpack.c.h.b16 %v106
  %v469 = vunpack.c.l.b16 %v107
  %v470 = vunpack.c.h.b16 %v107
  %v471 = vunpack.c.l.b16 %v108
  %v472 = vunpack.c.h.b16 %v108
  %v473 = vunpack.c.l.b16 %v109
  %v474 = vunpack.c.h.b16 %v109
  %v475 = vunpack.c.l.b16 %v110
  %v476 = vunpack.c.h.b16 %v110
  %v477 = vunpack.c.l.b16 %v111
  %v478 = vunpack.c.h.b16 %v111
  %v479 = vunpack.c.l.b16 %v112
  %v480 = vunpack.c.h.b16 %v112
  %v481 = vunpack.c.l.b16 %v113
  %v482 = vunpack.c.h.b16 %v113
  %v483 = vunpack.c.l.b16 %v114
  %v484 = vunpack.c.h.b16 %v114
  %v485 = vunpack.c.l.b16 %v115
  %v486 = vunpack.c.h.b16 %v115
  %v487 = vunpack.c.l.b16 %v116
  %v488 = vunpack.c.h.b16 %v116
  %v489 = vunpack.c.l.b16 %v117
  %v490 = vunpack.c.h.b16 %v117
  %v491 = vunpack.c.l.b16 %v118
  %v492 = vunpack.c.h.b16 %v118
  %v493 = vunpack.c.l.b16 %v119
  %v494 = vunpack.c.h.b16 %v119
  %v495 = vunpack.c.l.b16 %v120
  %v496 = vunpack.c.h.b16 %v120
  %v497 = vunpack.c.l.b16 %v121
  %v498 = vunpack.c.h.b16 %v121
  %v499 = vunpack.c.l.b16 %v122
  %v500 = vunpack.c.h.b16 %v122
  %v501 = vunpack.c.l.b16 %v123
  %v502 = vunpack.c.h.b16 %v123
  %v503 = vunpack.c.l.b16 %v124
  %v504 = vunpack.c.h.b16 %v124
  %v505 = vunpack.c.l.b16 %v125
  %v506 = vunpack.c.h.b16 %v125
  %v507 = vunpack.c.l.b16 %v126
  %v508 = vunpack.c.h.b16 %v126
  %v509 = vunpack.c.l.b16 %v127
  %v510 = vunpack.c.h.b16 %v127
  %v511 = vunpack.c.l.b16 %v128
  %v512 = vunpack.c.h.b16 %v128
  %v513 = vunpack.c.l.b16 %v129
  %v514 = vunpack.c.h.b16 %v129
  %v515 = vunpack.c.l.b16 %v130
  %v516 = vunpack.c.h.b16 %v130
  %v517 = vunpack.c.l.b16 %v131
  %v518 = vunpack.c.h.b16 %v131
  %v519 = vunpack.c.l.b16 %v132
  %v520 = vunpack.c.h.b16 %v132
  %v521 = vunpack.c.l.b16 %v133
  %v522 = vunpack.c.h.b16 %v133
  %v523 = vunpack.c.l.b16 %v134
  %v524 = vunpack.c.h.b16 %v134
  %v525 = vunpack.c.l.b16 %v135
  %v526 = vunpack.c.h.b16 %v135
  %v527 = vunpack.c.l.b16 %v136
  %v528 = vunpack.c.h.b16 %v136
  %v529 = vunpack.c.l.b16 %v137
  %v530 = vunpack.c.h.b16 %v137
  %v531 = vunpack.c.l.b16 %v138
  %v532 = vunpack.c.h.b16 %v138
  %v533 = vunpack.c.l.b16 %v139
  %v534 = vunpack.c.h.b16 %v139
  %v535 = vunpack.c.l.b16 %v140
  %v536 = vunpack.c.h.b16 %v140
  %v537 = vunpack.c.l.b16 %v141
  %v538 = vunpack.c.h.b16 %v141
  %v539 = vunpack.c.l.b16 %v142
  %v540 = vunpack.c.h.b16 %v142
  %v541 = vunpack.c.l.b16 %v143
  %v542 = vunpack.c.h.b16 %v143
  %v543 = vunpack.c.l.b16 %v144
  %v544 = vunpack.c.h.b16 %v144
  %v545 = vunpack.c.l.b16 %v145
  %v546 = vunpack.c.h.b16 %v145
  %v547 = vunpack.c.l.b16 %v146
  %v548 = vunpack.c.h.b16 %v146
  %v549 = vunpack.c.l.b16 %v147
  %v550 = vunpack.c.h.b16 %v147
  %v551 = vunpack.c.l.b16 %v148
  %v552 = vunpack.c.h.b16 %v148
  %v553 = vpack.c.b16 %v301, %v297
  %v554 = vpack.c.b16 %v302, %v298
  %v555 = vpack.c.b16 %v303, %v299
  %v556 = vpack.c.b16 %v304, %v300
  %v557 = vpack.c.b16 %v309, %v305
  %v558 = vpack.c.b16 %v310, %v306
  %v559 = vpack.c.b16 %v311, %v307
  %v560 = vpack.c.b16 %v312, %v308
  %v561 = vpack.c.b16 %v317, %v313
  %v562 = vpack.c.b16 %v318, %v314
  %v563 = vpack.c.b16 %v319, %v315
  %v564 = vpack.c.b16 %v320, %v316
  %v565 = vpack.c.b16 %v325, %v321
  %v566 = vpack.c.b16 %v326, %v322
  %v567 = vpack.c.b16 %v327, %v323
  %v568 = vpack.c.b16 %v328, %v324
  %v569 = vpack.c.b16 %v333, %v329
  %v570 = vpack.c.b16 %v334, %v330
  %v571 = vpack.c.b16 %v335, %v331
  %v572 = vpack.c.b16 %v336, %v332
  %v573 = vpack.c.b16 %v341, %v337
  %v574 = vpack.c.b16 %v342, %v338
  %v575 = vpack.c.b16 %v343, %v339
  %v576 = vpack.c.b16 %v344, %v340
  %v577 = vpack.c.b16 %v349, %v345
  %v578 = vpack.c.b16 %v350, %v346
  %v579 = vpack.c.b16 %v351, %v347
  %v580 = vpack.c.b16 %v352, %v348
  %v581 = vpack.c.b16 %v357, %v353
  %v582 = vpack.c.b16 %v358, %v354
  %v583 = vpack.c.b16 %v359, %v355
  %v584 = vpack.c.b16 %v360, %v356
  %v585 = vpack.c.b16 %v365, %v361
  %v586 = vpack.c.b16 %v366, %v362
  %v587 = vpack.c.b16 %v367, %v363
  %v588 = vpack.c.b16 %v368, %v364
  %v589 = vpack.c.b16 %v373, %v369
  %v590 = vpack.c.b16 %v374, %v370
  %v591 = vpack.c.b16 %v375, %v371
  %v592 = vpack.c.b16 %v376, %v372
  %v593 = vpack.c.b16 %v381, %v377
  %v594 = vpack.c.b16 %v382, %v378
  %v595 = vpack.c.b16 %v383, %v379
  %v596 = vpack.c.b16 %v384, %v380
  %v597 = vpack.c.b16 %v389, %v385
  %v598 = vpack.c.b16 %v390, %v386
  %v599 = vpack.c.b16 %v391, %v387
  %v600 = vpack.c.b16 %v392, %v388
  %v601 = vpack.c.b16 %v397, %v393
  %v602 = vpack.c.b16 %v398, %v394
  %v603 = vpack.c.b16 %v399, %v395
  %v604 = vpack.c.b16 %v400, %v396
  %v605 = vpack.c.b16 %v405, %v401
  %v606 = vpack.c.b16 %v406, %v402
  %v607 = vpack.c.b16 %v407, %v403
  %v608 = vpack.c.b16 %v408, %v404
  %v609 = vpack.c.b16 %v413, %v409
  %v610 = vpack.c.b16 %v414, %v410
  %v611 = vpack.c.b16 %v415, %v411
  %v612 = vpack.c.b16 %v416, %v412
  %v613 = vpack.c.b16 %v421, %v417
  %v614 = vpack.c.b16 %v422, %v418
  %v615 = vpack.c.b16 %v423, %v419
  %v616 = vpack.c.b16 %v424, %v420
  %v617 = vpack.c.b16 %v429, %v425
  %v618 = vpack.c.b16 %v430, %v426
  %v619 = vpack.c.b16 %v431, %v427
  %v620 = vpack.c.b16 %v432, %v428
  %v621 = vpack.c.b16 %v437, %v433
  %v622 = vpack.c.b16 %v438, %v434
  %v623 = vpack.c.b16 %v439, %v435
  %v624 = vpack.c.b16 %v440, %v436
  %v625 = vpack.c.b16 %v445, %v441
  %v626 = vpack.c.b16 %v446, %v442
  %v627 = vpack.c.b16 %v447, %v443
  %v628 = vpack.c.b16 %v448, %v444
  %v629 = vpack.c.b16 %v453, %v449
  %v630 = vpack.c.b16 %v454, %v450
  %v631 = vpack.c.b16 %v455, %v451
  %v632 = vpack.c.b16 %v456, %v452
  %v633 = vpack.c.b16 %v461, %v457
  %v634 = vpack.c.b16 %v462, %v458
  %v635 = vpack.c.b16 %v463, %v459
  %v636 = vpack.c.b16 %v464, %v460
  %v637 = vpack.c.b16 %v469, %v465
  %v638 = vpack.c.b16 %v470, %v466
  %v639 = vpack.c.b16 %v471, %v467
  %v640 = vpack.c.b16 %v472, %v468
  %v641 = vpack.c.b16 %v477, %v473
  %v642 = vpack.c.b16 %v478, %v474
  %v643 = vpack.c.b16 %v479, %v475
  %v644 = vpack.c.b16 %v480, %v476
  %v645 = vpack.c.b16 %v485, %v481
  %v646 = vpack.c.b16 %v486, %v482
  %v647 = vpack.c.b16 %v487, %v483
  %v648 = vpack.c.b16 %v488, %v484
  %v649 = vpack.c.b16 %v493, %v489
  %v650 = vpack.c.b16 %v494, %v490
  %v651 = vpack.c.b16 %v495, %v491
  %v652 = vpack.c.b16 %v496, %v492
  %v653 = vpack.c.b16 %v501, %v497
  %v654 = vpack.c.b16 %v502, %v498
  %v655 = vpack.c.b16 %v503, %v499
  %v656 = vpack.c.b16 %v504, %v500
  %v657 = vpack.c.b16 %v509, %v505
  %v658 = vpack.c.b16 %v510, %v506
  %v659 = vpack.c.b16 %v511, %v507
  %v660 = vpack.c.b16 %v512, %v508
  %v661 = vpack.c.b16 %v517, %v513
  %v662 = vpack.c.b16 %v518, %v514
  %v663 = vpack.c.b16 %v519, %v515
  %v664 = vpack.c.b16 %v520, %v516
  %v665 = vpack.c.b16 %v525, %v521
  %v666 = vpack.c.b16 %v526, %v522
  %v667 = vpack.c.b16 %v527, %v523
  %v668 = vpack.c.b16 %v528, %v524
  %v669 = vpack.c.b16 %v533, %v529
  %v670 = vpack.c.b16 %v534, %v530
  %v671 = vpack.c.b16 %v535, %v531
  %v672 = vpack.c.b16 %v536, %v532
  %v673 = vpack.c.b16 %v541, %v537
  %v674 = vpack.c.b16 %v542, %v538
  %v675 = vpack.c.b16 %v543, %v539
  %v676 = vpack.c.b16 %v544, %v540
  %v677 = vpack.c.b16 %v549, %v545
  %v678 = vpack.c.b16 %v550, %v546
  %v679 = vpack.c.b16 %v551, %v547
  %v680 = vpack.c.b16 %v552, %v548
  %809 = vmatpush.bf16.msra.mxu0 %v581
  %810 = vmatpush.bf16.msra.mxu0 %v577
  %811 = vmatpush.bf16.msra.mxu0 %v573
  %812 = vmatpush.bf16.msra.mxu0 %v569
  %813 = vmatpush.bf16.msra.mxu0 %v565
  %814 = vmatpush.bf16.msra.mxu0 %v561
  %815 = vmatpush.bf16.msra.mxu0 %v557
  %816 = vmatpush.bf16.msra.mxu0 %v553
  %817 = vmatmul.bf16.gmra.mxu0 %v161
  %v818 = vpop.f32.mrf.mxu0
  %v819 = vadd.f32 0.0, %v818
  %v820 = vpop.f32.mrf.mxu0
  %v821 = vadd.f32 0.0, %v820
  %822 = vdwg.mxu0
  %823 = vmatpush.bf16.msra.mxu0 %v613
  %824 = vmatpush.bf16.msra.mxu0 %v609
  %825 = vmatpush.bf16.msra.mxu0 %v605
  %826 = vmatpush.bf16.msra.mxu0 %v601
  %827 = vmatpush.bf16.msra.mxu0 %v597
  %828 = vmatpush.bf16.msra.mxu0 %v593
  %829 = vmatpush.bf16.msra.mxu0 %v589
  %830 = vmatpush.bf16.msra.mxu0 %v585
  %831 = vmatmul.bf16.gmra.mxu0 %v162
  %v832 = vpop.f32.mrf.mxu0
  %v833 = vadd.f32 %v819, %v832
  %v834 = vpop.f32.mrf.mxu0
  %v835 = vadd.f32 %v821, %v834
  %836 = vdwg.mxu0
  %837 = vmatpush.bf16.msra.mxu0 %v645
  %838 = vmatpush.bf16.msra.mxu0 %v641
  %839 = vmatpush.bf16.msra.mxu0 %v637
  %840 = vmatpush.bf16.msra.mxu0 %v633
  %841 = vmatpush.bf16.msra.mxu0 %v629
  %842 = vmatpush.bf16.msra.mxu0 %v625
  %843 = vmatpush.bf16.msra.mxu0 %v621
  %844 = vmatpush.bf16.msra.mxu0 %v617
  %845 = vmatmul.bf16.gmra.mxu0 %v163
  %v846 = vpop.f32.mrf.mxu0
  %v847 = vadd.f32 %v833, %v846
  %v848 = vpop.f32.mrf.mxu0
  %v849 = vadd.f32 %v835, %v848
  %850 = vdwg.mxu0
  %851 = vmatpush.bf16.msra.mxu0 %v677
  %852 = vmatpush.bf16.msra.mxu0 %v673
  %853 = vmatpush.bf16.msra.mxu0 %v669
  %854 = vmatpush.bf16.msra.mxu0 %v665
  %855 = vmatpush.bf16.msra.mxu0 %v661
  %856 = vmatpush.bf16.msra.mxu0 %v657
  %857 = vmatpush.bf16.msra.mxu0 %v653
  %858 = vmatpush.bf16.msra.mxu0 %v649
  %859 = vmatmul.bf16.gmra.mxu0 %v164
  %v860 = vpop.f32.mrf.mxu0
  %v861 = vadd.f32 %v847, %v860
  %v862 = vpop.f32.mrf.mxu0
  %v863 = vadd.f32 %v849, %v862
  %864 = vdwg.mxu0
  %865 = vmatpush.bf16.msra.mxu0 %v582
  %866 = vmatpush.bf16.msra.mxu0 %v578
  %867 = vmatpush.bf16.msra.mxu0 %v574
  %868 = vmatpush.bf16.msra.mxu0 %v570
  %869 = vmatpush.bf16.msra.mxu0 %v566
  %870 = vmatpush.bf16.msra.mxu0 %v562
  %871 = vmatpush.bf16.msra.mxu0 %v558
  %872 = vmatpush.bf16.msra.mxu0 %v554
  %873 = vmatmul.bf16.gmra.mxu0 %v161
  %v874 = vpop.f32.mrf.mxu0
  %v875 = vadd.f32 0.0, %v874
  %v876 = vpop.f32.mrf.mxu0
  %v877 = vadd.f32 0.0, %v876
  %878 = vdwg.mxu0
  %879 = vmatpush.bf16.msra.mxu0 %v614
  %880 = vmatpush.bf16.msra.mxu0 %v610
  %881 = vmatpush.bf16.msra.mxu0 %v606
  %882 = vmatpush.bf16.msra.mxu0 %v602
  %883 = vmatpush.bf16.msra.mxu0 %v598
  %884 = vmatpush.bf16.msra.mxu0 %v594
  %885 = vmatpush.bf16.msra.mxu0 %v590
  %886 = vmatpush.bf16.msra.mxu0 %v586
  %887 = vmatmul.bf16.gmra.mxu0 %v162
  %v888 = vpop.f32.mrf.mxu0
  %v889 = vadd.f32 %v875, %v888
  %v890 = vpop.f32.mrf.mxu0
  %v891 = vadd.f32 %v877, %v890
  %892 = vdwg.mxu0
  %893 = vmatpush.bf16.msra.mxu0 %v646
  %894 = vmatpush.bf16.msra.mxu0 %v642
  %895 = vmatpush.bf16.msra.mxu0 %v638
  %896 = vmatpush.bf16.msra.mxu0 %v634
  %897 = vmatpush.bf16.msra.mxu0 %v630
  %898 = vmatpush.bf16.msra.mxu0 %v626
  %899 = vmatpush.bf16.msra.mxu0 %v622
  %900 = vmatpush.bf16.msra.mxu0 %v618
  %901 = vmatmul.bf16.gmra.mxu0 %v163
  %v902 = vpop.f32.mrf.mxu0
  %v903 = vadd.f32 %v889, %v902
  %v904 = vpop.f32.mrf.mxu0
  %v905 = vadd.f32 %v891, %v904
  %906 = vdwg.mxu0
  %907 = vmatpush.bf16.msra.mxu0 %v678
  %908 = vmatpush.bf16.msra.mxu0 %v674
  %909 = vmatpush.bf16.msra.mxu0 %v670
  %910 = vmatpush.bf16.msra.mxu0 %v666
  %911 = vmatpush.bf16.msra.mxu0 %v662
  %912 = vmatpush.bf16.msra.mxu0 %v658
  %913 = vmatpush.bf16.msra.mxu0 %v654
  %914 = vmatpush.bf16.msra.mxu0 %v650
  %915 = vmatmul.bf16.gmra.mxu0 %v164
  %v916 = vpop.f32.mrf.mxu0
  %v917 = vadd.f32 %v903, %v916
  %v918 = vpop.f32.mrf.mxu0
  %v919 = vadd.f32 %v905, %v918
  %920 = vdwg.mxu0
  %921 = vmatpush.bf16.msra.mxu0 %v583
  %922 = vmatpush.bf16.msra.mxu0 %v579
  %923 = vmatpush.bf16.msra.mxu0 %v575
  %924 = vmatpush.bf16.msra.mxu0 %v571
  %925 = vmatpush.bf16.msra.mxu0 %v567
  %926 = vmatpush.bf16.msra.mxu0 %v563
  %927 = vmatpush.bf16.msra.mxu0 %v559
  %928 = vmatpush.bf16.msra.mxu0 %v555
  %929 = vmatmul.bf16.gmra.mxu0 %v161
  %v930 = vpop.f32.mrf.mxu0
  %v931 = vadd.f32 0.0, %v930
  %v932 = vpop.f32.mrf.mxu0
  %v933 = vadd.f32 0.0, %v932
  %934 = vdwg.mxu0
  %935 = vmatpush.bf16.msra.mxu0 %v615
  %936 = vmatpush.bf16.msra.mxu0 %v611
  %937 = vmatpush.bf16.msra.mxu0 %v607
  %938 = vmatpush.bf16.msra.mxu0 %v603
  %939 = vmatpush.bf16.msra.mxu0 %v599
  %940 = vmatpush.bf16.msra.mxu0 %v595
  %941 = vmatpush.bf16.msra.mxu0 %v591
  %942 = vmatpush.bf16.msra.mxu0 %v587
  %943 = vmatmul.bf16.gmra.mxu0 %v162
  %v944 = vpop.f32.mrf.mxu0
  %v945 = vadd.f32 %v931, %v944
  %v946 = vpop.f32.mrf.mxu0
  %v947 = vadd.f32 %v933, %v946
  %948 = vdwg.mxu0
  %949 = vmatpush.bf16.msra.mxu0 %v647
  %950 = vmatpush.bf16.msra.mxu0 %v643
  %951 = vmatpush.bf16.msra.mxu0 %v639
  %952 = vmatpush.bf16.msra.mxu0 %v635
  %953 = vmatpush.bf16.msra.mxu0 %v631
  %954 = vmatpush.bf16.msra.mxu0 %v627
  %955 = vmatpush.bf16.msra.mxu0 %v623
  %956 = vmatpush.bf16.msra.mxu0 %v619
  %957 = vmatmul.bf16.gmra.mxu0 %v163
  %v958 = vpop.f32.mrf.mxu0
  %v959 = vadd.f32 %v945, %v958
  %v960 = vpop.f32.mrf.mxu0
  %v961 = vadd.f32 %v947, %v960
  %962 = vdwg.mxu0
  %963 = vmatpush.bf16.msra.mxu0 %v679
  %964 = vmatpush.bf16.msra.mxu0 %v675
  %965 = vmatpush.bf16.msra.mxu0 %v671
  %966 = vmatpush.bf16.msra.mxu0 %v667
  %967 = vmatpush.bf16.msra.mxu0 %v663
  %968 = vmatpush.bf16.msra.mxu0 %v659
  %969 = vmatpush.bf16.msra.mxu0 %v655
  %970 = vmatpush.bf16.msra.mxu0 %v651
  %971 = vmatmul.bf16.gmra.mxu0 %v164
  %v972 = vpop.f32.mrf.mxu0
  %v973 = vadd.f32 %v959, %v972
  %v974 = vpop.f32.mrf.mxu0
  %v975 = vadd.f32 %v961, %v974
  %976 = vdwg.mxu0
  %977 = vmatpush.bf16.msra.mxu0 %v584
  %978 = vmatpush.bf16.msra.mxu0 %v580
  %979 = vmatpush.bf16.msra.mxu0 %v576
  %980 = vmatpush.bf16.msra.mxu0 %v572
  %981 = vmatpush.bf16.msra.mxu0 %v568
  %982 = vmatpush.bf16.msra.mxu0 %v564
  %983 = vmatpush.bf16.msra.mxu0 %v560
  %984 = vmatpush.bf16.msra.mxu0 %v556
  %985 = vmatmul.bf16.gmra.mxu0 %v161
  %v986 = vpop.f32.mrf.mxu0
  %v987 = vadd.f32 0.0, %v986
  %v988 = vpop.f32.mrf.mxu0
  %v989 = vadd.f32 0.0, %v988
  %990 = vdwg.mxu0
  %991 = vmatpush.bf16.msra.mxu0 %v616
  %992 = vmatpush.bf16.msra.mxu0 %v612
  %993 = vmatpush.bf16.msra.mxu0 %v608
  %994 = vmatpush.bf16.msra.mxu0 %v604
  %995 = vmatpush.bf16.msra.mxu0 %v600
  %996 = vmatpush.bf16.msra.mxu0 %v596
  %997 = vmatpush.bf16.msra.mxu0 %v592
  %998 = vmatpush.bf16.msra.mxu0 %v588
  %999 = vmatmul.bf16.gmra.mxu0 %v162
  %v1000 = vpop.f32.mrf.mxu0
  %v1001 = vadd.f32 %v987, %v1000
  %v1002 = vpop.f32.mrf.mxu0
  %v1003 = vadd.f32 %v989, %v1002
  %1004 = vdwg.mxu0
  %1005 = vmatpush.bf16.msra.mxu0 %v648
  %1006 = vmatpush.bf16.msra.mxu0 %v644
  %1007 = vmatpush.bf16.msra.mxu0 %v640
  %1008 = vmatpush.bf16.msra.mxu0 %v636
  %1009 = vmatpush.bf16.msra.mxu0 %v632
  %1010 = vmatpush.bf16.msra.mxu0 %v628
  %1011 = vmatpush.bf16.msra.mxu0 %v624
  %1012 = vmatpush.bf16.msra.mxu0 %v620
  %1013 = vmatmul.bf16.gmra.mxu0 %v163
  %v1014 = vpop.f32.mrf.mxu0
  %v1015 = vadd.f32 %v1001, %v1014
  %v1016 = vpop.f32.mrf.mxu0
  %v1017 = vadd.f32 %v1003, %v1016
  %1018 = vdwg.mxu0
  %1019 = vmatpush.bf16.msra.mxu0 %v680
  %1020 = vmatpush.bf16.msra.mxu0 %v676
  %1021 = vmatpush.bf16.msra.mxu0 %v672
  %1022 = vmatpush.bf16.msra.mxu0 %v668
  %1023 = vmatpush.bf16.msra.mxu0 %v664
  %1024 = vmatpush.bf16.msra.mxu0 %v660
  %1025 = vmatpush.bf16.msra.mxu0 %v656
  %1026 = vmatpush.bf16.msra.mxu0 %v652
  %1027 = vmatmul.bf16.gmra.mxu0 %v164
  %v1028 = vpop.f32.mrf.mxu0
  %v1029 = vadd.f32 %v1015, %v1028
  %v1030 = vpop.f32.mrf.mxu0
  %v1031 = vadd.f32 %v1017, %v1030
  %1032 = vdwg.mxu0
  %v1033 = vadd.f32 %v861, %v917
  %v1034 = vadd.f32 %v1033, %v973
  %v1035 = vadd.f32 %v1034, %v1029
  %1036 = vadd.xlane.f32.xlu0 %v1035
  %v1037 = vpop.xlane.xlu0 %1036
  %v1038 = vadd.f32 %v863, %v919
  %v1039 = vadd.f32 %v1038, %v975
  %v1040 = vadd.f32 %v1039, %v1031
  %1041 = vadd.xlane.f32.xlu0 %v1040
  %v1042 = vpop.xlane.xlu0 %1041
  %v1043 = vrcp.pop 512.0
  %v1044 = vmul.f32 512.0, %v1043
  %v1045 = vsub.f32 1.0, %v1044
  %v1046 = vmul.f32 %v1043, %v1045
  %v1047 = vadd.f32 %v1043, %v1046
  %vm1048 = vweird.f32 %v1043
  %v1049 = vsel %vm1048, %v1043, %v1047
  %v1050 = vmul.f32 %v1037, %v1049
  %v1051 = vmul.f32 %v1042, %v1049
  %v1052 = vmul.f32 %v861, %v861
  %v1053 = vmul.f32 %v917, %v917
  %v1054 = vmul.f32 %v973, %v973
  %v1055 = vmul.f32 %v1029, %v1029
  %v1056 = vmul.f32 %v863, %v863
  %v1057 = vmul.f32 %v919, %v919
  %v1058 = vmul.f32 %v975, %v975
  %v1059 = vmul.f32 %v1031, %v1031
  %v1060 = vadd.f32 %v1052, %v1053
  %v1061 = vadd.f32 %v1060, %v1054
  %v1062 = vadd.f32 %v1061, %v1055
  %1063 = vadd.xlane.f32.xlu0 %v1062
  %v1064 = vpop.xlane.xlu0 %1063
  %v1065 = vadd.f32 %v1056, %v1057
  %v1066 = vadd.f32 %v1065, %v1058
  %v1067 = vadd.f32 %v1066, %v1059
  %1068 = vadd.xlane.f32.xlu0 %v1067
  %v1069 = vpop.xlane.xlu0 %1068
  %v1070 = vmul.f32 %v1064, %v1049
  %v1071 = vmul.f32 %v1069, %v1049
  %v1072 = vmul.f32 %v1050, %v1050
  %v1073 = vmul.f32 %v1051, %v1051
  %v1074 = vsub.f32 %v1070, %v1072
  %v1075 = vsub.f32 %v1071, %v1073
  %v1076 = vld [vmem:[%s2] sm:$0xff]
  %v1077 = vld [vmem:[%s2 + $0x8] sm:$0xff]
  %v1078 = vadd.f32 %v1074, 1e-05
  %v1079 = vadd.f32 %v1075, 1e-05
  %v1080 = vrsqrt.pop %v1078
  %v1081 = vmul.f32 %v1080, %v1078
  %v1082 = vmul.f32 %v1081, %v1080
  %v1083 = vmul.f32 0.5, %v1082
  %v1084 = vsub.f32 1.5, %v1083
  %v1085 = vmul.f32 %v1080, %v1084
  %vm1086 = vweird.f32 %v1078
  %vm1087 = vweird.f32 %v1080
  %vm1088 = vmor %vm1086, %vm1087
  %v1089 = vsel %vm1088, %v1080, %v1085
  %v1090 = vrsqrt.pop %v1079
  %v1091 = vmul.f32 %v1090, %v1079
  %v1092 = vmul.f32 %v1091, %v1090
  %v1093 = vmul.f32 0.5, %v1092
  %v1094 = vsub.f32 1.5, %v1093
  %v1095 = vmul.f32 %v1090, %v1094
  %vm1096 = vweird.f32 %v1079
  %vm1097 = vweird.f32 %v1090
  %vm1098 = vmor %vm1096, %vm1097
  %v1099 = vsel %vm1098, %v1090, %v1095
  %v1100 = vmul.f32 %v1076, %v1089
  %v1101 = vmul.f32 %v1077, %v1099
  %v1102 = vld [vmem:[%s3] sm:$0xff]
  %v1103 = vld [vmem:[%s3 + $0x8] sm:$0xff]
  %v1104 = vmul.f32 %v1050, %v1100
  %v1105 = vmul.f32 %v1051, %v1101
  %v1106 = vsub.f32 %v1102, %v1104
  %v1107 = vsub.f32 %v1103, %v1105
  %1109 = vset.pattern.permute.xlu0 0
  %1110 = vperm.xlu0 %1109, %v1100
  %v1111 = vpop.permute.xlu0 %1110
  %1114 = vset.pattern.permute.xlu0 0
  %1115 = vperm.xlu0 %1114, %v1101
  %v1116 = vpop.permute.xlu0 %1115
  %v1118 = vmul.f32 %v861, %v1111
  %v1119 = vmul.f32 %v917, %v1111
  %v1120 = vmul.f32 %v973, %v1111
  %v1121 = vmul.f32 %v1029, %v1111
  %v1122 = vmul.f32 %v863, %v1116
  %v1123 = vmul.f32 %v919, %v1116
  %v1124 = vmul.f32 %v975, %v1116
  %v1125 = vmul.f32 %v1031, %v1116
  %1127 = vset.pattern.permute.xlu0 0
  %1128 = vperm.xlu0 %1127, %v1106
  %v1129 = vpop.permute.xlu0 %1128
  %1132 = vset.pattern.permute.xlu0 0
  %1133 = vperm.xlu0 %1132, %v1107
  %v1134 = vpop.permute.xlu0 %1133
  %v1136 = vadd.f32 %v1118, %v1129
  %v1137 = vadd.f32 %v1119, %v1129
  %v1138 = vadd.f32 %v1120, %v1129
  %v1139 = vadd.f32 %v1121, %v1129
  %v1140 = vadd.f32 %v1122, %v1134
  %v1141 = vadd.f32 %v1123, %v1134
  %v1142 = vadd.f32 %v1124, %v1134
  %v1143 = vadd.f32 %v1125, %v1134
  %v1144 = vmax.f32 %v1136, 0.0
  %v1145 = vmax.f32 %v1137, 0.0
  %v1146 = vmax.f32 %v1138, 0.0
  %v1147 = vmax.f32 %v1139, 0.0
  %v1148 = vmax.f32 %v1140, 0.0
  %v1149 = vmax.f32 %v1141, 0.0
  %v1150 = vmax.f32 %v1142, 0.0
  %v1151 = vmax.f32 %v1143, 0.0
  %1152 = vst [vmem:[%s4] sm:$0xff] %v1144
  %1153 = vst [vmem:[%s4 + $0x8] sm:$0xff] %v1145
  %1154 = vst [vmem:[%s4 + $0x10] sm:$0xff] %v1146
  %1155 = vst [vmem:[%s4 + $0x18] sm:$0xff] %v1147
  %1156 = vst [vmem:[%s4 + $0x20] sm:$0xff] %v1148
  %1157 = vst [vmem:[%s4 + $0x28] sm:$0xff] %v1149
  %1158 = vst [vmem:[%s4 + $0x30] sm:$0xff] %v1150
  %1159 = vst [vmem:[%s4 + $0x38] sm:$0xff] %v1151
  // Predicated region
  $region18: #{_lambda_.8} parent=0 // pred_check
    _
  $region19: #{_lambda_.8} parent=0 // pred_check_branch
    %1161 = sbr.rel (0) target = $region21
  $region20: #{_lambda_.8} parent=0 // pred_region
    _
  $region21: #{_lambda_.8} parent=0 // pred_fallthru
    _
  // Predicated region
  $region22: #{_lambda_.8} parent=0 // pred_check
    _
  $region23: #{_lambda_.8} parent=0 // pred_check_branch
    %1163 = sbr.rel (0) target = $region25
  $region24: #{_lambda_.8} parent=0 // pred_region
    _
  $region25: #{_lambda_.8} parent=0 // pred_fallthru
    _

// kernel: _lambda_.9
$region0: #{_lambda_.9}
  #allocation0 [shape = 'u32[]', space=smem, size = 0x4, offset = 0x4, fixed_abs, tag = 'smem constant byte address 0x4 - core index']
  #allocation1 [shape = 'u32[72,128]{1,0:T(1,128)}', space=vmem, size = 0x9000, scoped, tag = 'internal scratch']
  %s0 = inlined_call_operand.vmem [shape: bf16[8,256], index: 0, kind: input, shape index: {}]
  %s1 = inlined_call_operand.vmem [shape: bf16[256,2048], index: 1, kind: input, shape index: {}]
  %s2 = inlined_call_operand.vmem [shape: f32[8,1], index: 2, kind: input, shape index: {}]
  %s3 = inlined_call_operand.vmem [shape: f32[8,1], index: 3, kind: input, shape index: {}]
  %s4 = inlined_call_operand.vmem [shape: f32[8,2048], index: 4, kind: output, shape index: {}]
  %s5 = sld [smem:[#allocation0]]
  $region26: #{_lambda_.9} parent=0
    _
  %s7 = ssub.s32 1, %s5
  %s8 = scalar_select 0, %s7, %s5
  // Predicated region
  $region2: #{_lambda_.9} parent=0 // pred_check
    _
  $region3: #{_lambda_.9} parent=0 // pred_check_branch
    %10 = sbr.rel (0) target = $region5
  $region4: #{_lambda_.9} parent=0 // pred_region
    _
  $region5: #{_lambda_.9} parent=0 // pred_fallthru
    _
  // Predicated region
  $region6: #{_lambda_.9} parent=0 // pred_check
    _
  $region7: #{_lambda_.9} parent=0 // pred_check_branch
    %12 = sbr.rel (0) target = $region9
  $region8: #{_lambda_.9} parent=0 // pred_region
    _
  $region9: #{_lambda_.9} parent=0 // pred_fallthru
    _
  // Predicated region
  $region10: #{_lambda_.9} parent=0 // pred_check
    _
  $region11: #{_lambda_.9} parent=0 // pred_check_branch
    %14 = sbr.rel (0) target = $region13
  $region12: #{_lambda_.9} parent=0 // pred_region
    _
  $region13: #{_lambda_.9} parent=0 // pred_fallthru
    _
  // Predicated region
  $region14: #{_lambda_.9} parent=0 // pred_check
    _
  $region15: #{_lambda_.9} parent=0 // pred_check_branch
    %16 = sbr.rel (0) target = $region17
  $region16: #{_lambda_.9} parent=0 // pred_region
    _
  $region17: #{_lambda_.9} parent=0 // pred_fallthru
    _
  %v17 = vld [vmem:[%s0] sm:$0xff]
  %v18 = vld [vmem:[%s1] sm:$0xff]
  %v19 = vld [vmem:[%s1 + $0x8] sm:$0xff]
  %v20 = vld [vmem:[%s1 + $0x10] sm:$0xff]
  %v21 = vld [vmem:[%s1 + $0x18] sm:$0xff]
  %v22 = vld [vmem:[%s1 + $0x20] sm:$0xff]
  %v23 = vld [vmem:[%s1 + $0x28] sm:$0xff]
  %v24 = vld [vmem:[%s1 + $0x30] sm:$0xff]
  %v25 = vld [vmem:[%s1 + $0x38] sm:$0xff]
  %v26 = vld [vmem:[%s1 + $0x40] sm:$0xff]
  %v27 = vld [vmem:[%s1 + $0x48] sm:$0xff]
  %v28 = vld [vmem:[%s1 + $0x50] sm:$0xff]
  %v29 = vld [vmem:[%s1 + $0x58] sm:$0xff]
  %v30 = vld [vmem:[%s1 + $0x60] sm:$0xff]
  %v31 = vld [vmem:[%s1 + $0x68] sm:$0xff]
  %v32 = vld [vmem:[%s1 + $0x70] sm:$0xff]
  %v33 = vld [vmem:[%s1 + $0x78] sm:$0xff]
  %v34 = vld [vmem:[%s1 + $0x80] sm:$0xff]
  %v35 = vld [vmem:[%s1 + $0x88] sm:$0xff]
  %v36 = vld [vmem:[%s1 + $0x90] sm:$0xff]
  %v37 = vld [vmem:[%s1 + $0x98] sm:$0xff]
  %v38 = vld [vmem:[%s1 + $0xa0] sm:$0xff]
  %v39 = vld [vmem:[%s1 + $0xa8] sm:$0xff]
  %v40 = vld [vmem:[%s1 + $0xb0] sm:$0xff]
  %v41 = vld [vmem:[%s1 + $0xb8] sm:$0xff]
  %v42 = vld [vmem:[%s1 + $0xc0] sm:$0xff]
  %v43 = vld [vmem:[%s1 + $0xc8] sm:$0xff]
  %v44 = vld [vmem:[%s1 + $0xd0] sm:$0xff]
  %v45 = vld [vmem:[%s1 + $0xd8] sm:$0xff]
  %v46 = vld [vmem:[%s1 + $0xe0] sm:$0xff]
  %v47 = vld [vmem:[%s1 + $0xe8] sm:$0xff]
  %v48 = vld [vmem:[%s1 + $0xf0] sm:$0xff]
  %v49 = vld [vmem:[%s1 + $0xf8] sm:$0xff]
  %v50 = vld [vmem:[%s1 + $0x100] sm:$0xff]
  %v51 = vld [vmem:[%s1 + $0x108] sm:$0xff]
  %v52 = vld [vmem:[%s1 + $0x110] sm:$0xff]
  %v53 = vld [vmem:[%s1 + $0x118] sm:$0xff]
  %v54 = vld [vmem:[%s1 + $0x120] sm:$0xff]
  %v55 = vld [vmem:[%s1 + $0x128] sm:$0xff]
  %v56 = vld [vmem:[%s1 + $0x130] sm:$0xff]
  %v57 = vld [vmem:[%s1 + $0x138] sm:$0xff]
  %v58 = vld [vmem:[%s1 + $0x140] sm:$0xff]
  %v59 = vld [vmem:[%s1 + $0x148] sm:$0xff]
  %v60 = vld [vmem:[%s1 + $0x150] sm:$0xff]
  %v61 = vld [vmem:[%s1 + $0x158] sm:$0xff]
  %v62 = vld [vmem:[%s1 + $0x160] sm:$0xff]
  %v63 = vld [vmem:[%s1 + $0x168] sm:$0xff]
  %v64 = vld [vmem:[%s1 + $0x170] sm:$0xff]
  %v65 = vld [vmem:[%s1 + $0x178] sm:$0xff]
  %v66 = vld [vmem:[%s1 + $0x180] sm:$0xff]
  %v67 = vld [vmem:[%s1 + $0x188] sm:$0xff]
  %v68 = vld [vmem:[%s1 + $0x190] sm:$0xff]
  %v69 = vld [vmem:[%s1 + $0x198] sm:$0xff]
  %v70 = vld [vmem:[%s1 + $0x1a0] sm:$0xff]
  %v71 = vld [vmem:[%s1 + $0x1a8] sm:$0xff]
  %v72 = vld [vmem:[%s1 + $0x1b0] sm:$0xff]
  %v73 = vld [vmem:[%s1 + $0x1b8] sm:$0xff]
  %v74 = vld [vmem:[%s1 + $0x1c0] sm:$0xff]
  %v75 = vld [vmem:[%s1 + $0x1c8] sm:$0xff]
  %v76 = vld [vmem:[%s1 + $0x1d0] sm:$0xff]
  %v77 = vld [vmem:[%s1 + $0x1d8] sm:$0xff]
  %v78 = vld [vmem:[%s1 + $0x1e0] sm:$0xff]
  %v79 = vld [vmem:[%s1 + $0x1e8] sm:$0xff]
  %v80 = vld [vmem:[%s1 + $0x1f0] sm:$0xff]
  %v81 = vld [vmem:[%s1 + $0x1f8] sm:$0xff]
  %v82 = vld [vmem:[%s1 + $0x200] sm:$0xff]
  %v83 = vld [vmem:[%s1 + $0x208] sm:$0xff]
  %v84 = vld [vmem:[%s1 + $0x210] sm:$0xff]
  %v85 = vld [vmem:[%s1 + $0x218] sm:$0xff]
  %v86 = vld [vmem:[%s1 + $0x220] sm:$0xff]
  %v87 = vld [vmem:[%s1 + $0x228] sm:$0xff]
  %v88 = vld [vmem:[%s1 + $0x230] sm:$0xff]
  %v89 = vld [vmem:[%s1 + $0x238] sm:$0xff]
  %v90 = vld [vmem:[%s1 + $0x240] sm:$0xff]
  %v91 = vld [vmem:[%s1 + $0x248] sm:$0xff]
  %v92 = vld [vmem:[%s1 + $0x250] sm:$0xff]
  %v93 = vld [vmem:[%s1 + $0x258] sm:$0xff]
  %v94 = vld [vmem:[%s1 + $0x260] sm:$0xff]
  %v95 = vld [vmem:[%s1 + $0x268] sm:$0xff]
  %v96 = vld [vmem:[%s1 + $0x270] sm:$0xff]
  %v97 = vld [vmem:[%s1 + $0x278] sm:$0xff]
  %v98 = vld [vmem:[%s1 + $0x280] sm:$0xff]
  %v99 = vld [vmem:[%s1 + $0x288] sm:$0xff]
  %v100 = vld [vmem:[%s1 + $0x290] sm:$0xff]
  %v101 = vld [vmem:[%s1 + $0x298] sm:$0xff]
  %v102 = vld [vmem:[%s1 + $0x2a0] sm:$0xff]
  %v103 = vld [vmem:[%s1 + $0x2a8] sm:$0xff]
  %v104 = vld [vmem:[%s1 + $0x2b0] sm:$0xff]
  %v105 = vld [vmem:[%s1 + $0x2b8] sm:$0xff]
  %v106 = vld [vmem:[%s1 + $0x2c0] sm:$0xff]
  %v107 = vld [vmem:[%s1 + $0x2c8] sm:$0xff]
  %v108 = vld [vmem:[%s1 + $0x2d0] sm:$0xff]
  %v109 = vld [vmem:[%s1 + $0x2d8] sm:$0xff]
  %v110 = vld [vmem:[%s1 + $0x2e0] sm:$0xff]
  %v111 = vld [vmem:[%s1 + $0x2e8] sm:$0xff]
  %v112 = vld [vmem:[%s1 + $0x2f0] sm:$0xff]
  %v113 = vld [vmem:[%s1 + $0x2f8] sm:$0xff]
  %v114 = vld [vmem:[%s1 + $0x300] sm:$0xff]
  %v115 = vld [vmem:[%s1 + $0x308] sm:$0xff]
  %v116 = vld [vmem:[%s1 + $0x310] sm:$0xff]
  %v117 = vld [vmem:[%s1 + $0x318] sm:$0xff]
  %v118 = vld [vmem:[%s1 + $0x320] sm:$0xff]
  %v119 = vld [vmem:[%s1 + $0x328] sm:$0xff]
  %v120 = vld [vmem:[%s1 + $0x330] sm:$0xff]
  %v121 = vld [vmem:[%s1 + $0x338] sm:$0xff]
  %v122 = vld [vmem:[%s1 + $0x340] sm:$0xff]
  %v123 = vld [vmem:[%s1 + $0x348] sm:$0xff]
  %v124 = vld [vmem:[%s1 + $0x350] sm:$0xff]
  %v125 = vld [vmem:[%s1 + $0x358] sm:$0xff]
  %v126 = vld [vmem:[%s1 + $0x360] sm:$0xff]
  %v127 = vld [vmem:[%s1 + $0x368] sm:$0xff]
  %v128 = vld [vmem:[%s1 + $0x370] sm:$0xff]
  %v129 = vld [vmem:[%s1 + $0x378] sm:$0xff]
  %v130 = vld [vmem:[%s1 + $0x380] sm:$0xff]
  %v131 = vld [vmem:[%s1 + $0x388] sm:$0xff]
  %v132 = vld [vmem:[%s1 + $0x390] sm:$0xff]
  %v133 = vld [vmem:[%s1 + $0x398] sm:$0xff]
  %v134 = vld [vmem:[%s1 + $0x3a0] sm:$0xff]
  %v135 = vld [vmem:[%s1 + $0x3a8] sm:$0xff]
  %v136 = vld [vmem:[%s1 + $0x3b0] sm:$0xff]
  %v137 = vld [vmem:[%s1 + $0x3b8] sm:$0xff]
  %v138 = vld [vmem:[%s1 + $0x3c0] sm:$0xff]
  %v139 = vld [vmem:[%s1 + $0x3c8] sm:$0xff]
  %v140 = vld [vmem:[%s1 + $0x3d0] sm:$0xff]
  %v141 = vld [vmem:[%s1 + $0x3d8] sm:$0xff]
  %v142 = vld [vmem:[%s1 + $0x3e0] sm:$0xff]
  %v143 = vld [vmem:[%s1 + $0x3e8] sm:$0xff]
  %v144 = vld [vmem:[%s1 + $0x3f0] sm:$0xff]
  %v145 = vld [vmem:[%s1 + $0x3f8] sm:$0xff]
  %v146 = vld [vmem:[%s1 + $0x400] sm:$0xff]
  %v147 = vld [vmem:[%s1 + $0x408] sm:$0xff]
  %v148 = vld [vmem:[%s1 + $0x410] sm:$0xff]
  %v149 = vld [vmem:[%s1 + $0x418] sm:$0xff]
  %v150 = vld [vmem:[%s1 + $0x420] sm:$0xff]
  %v151 = vld [vmem:[%s1 + $0x428] sm:$0xff]
  %v152 = vld [vmem:[%s1 + $0x430] sm:$0xff]
  %v153 = vld [vmem:[%s1 + $0x438] sm:$0xff]
  %v154 = vld [vmem:[%s1 + $0x440] sm:$0xff]
  %v155 = vld [vmem:[%s1 + $0x448] sm:$0xff]
  %v156 = vld [vmem:[%s1 + $0x450] sm:$0xff]
  %v157 = vld [vmem:[%s1 + $0x458] sm:$0xff]
  %v158 = vld [vmem:[%s1 + $0x460] sm:$0xff]
  %v159 = vld [vmem:[%s1 + $0x468] sm:$0xff]
  %v160 = vld [vmem:[%s1 + $0x470] sm:$0xff]
  %v161 = vld [vmem:[%s1 + $0x478] sm:$0xff]
  %v162 = vld [vmem:[%s1 + $0x480] sm:$0xff]
  %v163 = vld [vmem:[%s1 + $0x488] sm:$0xff]
  %v164 = vld [vmem:[%s1 + $0x490] sm:$0xff]
  %v165 = vld [vmem:[%s1 + $0x498] sm:$0xff]
  %v166 = vld [vmem:[%s1 + $0x4a0] sm:$0xff]
  %v167 = vld [vmem:[%s1 + $0x4a8] sm:$0xff]
  %v168 = vld [vmem:[%s1 + $0x4b0] sm:$0xff]
  %v169 = vld [vmem:[%s1 + $0x4b8] sm:$0xff]
  %v170 = vld [vmem:[%s1 + $0x4c0] sm:$0xff]
  %v171 = vld [vmem:[%s1 + $0x4c8] sm:$0xff]
  %v172 = vld [vmem:[%s1 + $0x4d0] sm:$0xff]
  %v173 = vld [vmem:[%s1 + $0x4d8] sm:$0xff]
  %v174 = vld [vmem:[%s1 + $0x4e0] sm:$0xff]
  %v175 = vld [vmem:[%s1 + $0x4e8] sm:$0xff]
  %v176 = vld [vmem:[%s1 + $0x4f0] sm:$0xff]
  %v177 = vld [vmem:[%s1 + $0x4f8] sm:$0xff]
  %v178 = vld [vmem:[%s1 + $0x500] sm:$0xff]
  %v179 = vld [vmem:[%s1 + $0x508] sm:$0xff]
  %v180 = vld [vmem:[%s1 + $0x510] sm:$0xff]
  %v181 = vld [vmem:[%s1 + $0x518] sm:$0xff]
  %v182 = vld [vmem:[%s1 + $0x520] sm:$0xff]
  %v183 = vld [vmem:[%s1 + $0x528] sm:$0xff]
  %v184 = vld [vmem:[%s1 + $0x530] sm:$0xff]
  %v185 = vld [vmem:[%s1 + $0x538] sm:$0xff]
  %v186 = vld [vmem:[%s1 + $0x540] sm:$0xff]
  %v187 = vld [vmem:[%s1 + $0x548] sm:$0xff]
  %v188 = vld [vmem:[%s1 + $0x550] sm:$0xff]
  %v189 = vld [vmem:[%s1 + $0x558] sm:$0xff]
  %v190 = vld [vmem:[%s1 + $0x560] sm:$0xff]
  %v191 = vld [vmem:[%s1 + $0x568] sm:$0xff]
  %v192 = vld [vmem:[%s1 + $0x570] sm:$0xff]
  %v193 = vld [vmem:[%s1 + $0x578] sm:$0xff]
  %v194 = vld [vmem:[%s1 + $0x580] sm:$0xff]
  %v195 = vld [vmem:[%s1 + $0x588] sm:$0xff]
  %v196 = vld [vmem:[%s1 + $0x590] sm:$0xff]
  %v197 = vld [vmem:[%s1 + $0x598] sm:$0xff]
  %v198 = vld [vmem:[%s1 + $0x5a0] sm:$0xff]
  %v199 = vld [vmem:[%s1 + $0x5a8] sm:$0xff]
  %v200 = vld [vmem:[%s1 + $0x5b0] sm:$0xff]
  %v201 = vld [vmem:[%s1 + $0x5b8] sm:$0xff]
  %v202 = vld [vmem:[%s1 + $0x5c0] sm:$0xff]
  %v203 = vld [vmem:[%s1 + $0x5c8] sm:$0xff]
  %v204 = vld [vmem:[%s1 + $0x5d0] sm:$0xff]
  %v205 = vld [vmem:[%s1 + $0x5d8] sm:$0xff]
  %v206 = vld [vmem:[%s1 + $0x5e0] sm:$0xff]
  %v207 = vld [vmem:[%s1 + $0x5e8] sm:$0xff]
  %v208 = vld [vmem:[%s1 + $0x5f0] sm:$0xff]
  %v209 = vld [vmem:[%s1 + $0x5f8] sm:$0xff]
  %v210 = vld [vmem:[%s1 + $0x600] sm:$0xff]
  %v211 = vld [vmem:[%s1 + $0x608] sm:$0xff]
  %v212 = vld [vmem:[%s1 + $0x610] sm:$0xff]
  %v213 = vld [vmem:[%s1 + $0x618] sm:$0xff]
  %v214 = vld [vmem:[%s1 + $0x620] sm:$0xff]
  %v215 = vld [vmem:[%s1 + $0x628] sm:$0xff]
  %v216 = vld [vmem:[%s1 + $0x630] sm:$0xff]
  %v217 = vld [vmem:[%s1 + $0x638] sm:$0xff]
  %v218 = vld [vmem:[%s1 + $0x640] sm:$0xff]
  %v219 = vld [vmem:[%s1 + $0x648] sm:$0xff]
  %v220 = vld [vmem:[%s1 + $0x650] sm:$0xff]
  %v221 = vld [vmem:[%s1 + $0x658] sm:$0xff]
  %v222 = vld [vmem:[%s1 + $0x660] sm:$0xff]
  %v223 = vld [vmem:[%s1 + $0x668] sm:$0xff]
  %v224 = vld [vmem:[%s1 + $0x670] sm:$0xff]
  %v225 = vld [vmem:[%s1 + $0x678] sm:$0xff]
  %v226 = vld [vmem:[%s1 + $0x680] sm:$0xff]
  %v227 = vld [vmem:[%s1 + $0x688] sm:$0xff]
  %v228 = vld [vmem:[%s1 + $0x690] sm:$0xff]
  %v229 = vld [vmem:[%s1 + $0x698] sm:$0xff]
  %v230 = vld [vmem:[%s1 + $0x6a0] sm:$0xff]
  %v231 = vld [vmem:[%s1 + $0x6a8] sm:$0xff]
  %v232 = vld [vmem:[%s1 + $0x6b0] sm:$0xff]
  %v233 = vld [vmem:[%s1 + $0x6b8] sm:$0xff]
  %v234 = vld [vmem:[%s1 + $0x6c0] sm:$0xff]
  %v235 = vld [vmem:[%s1 + $0x6c8] sm:$0xff]
  %v236 = vld [vmem:[%s1 + $0x6d0] sm:$0xff]
  %v237 = vld [vmem:[%s1 + $0x6d8] sm:$0xff]
  %v238 = vld [vmem:[%s1 + $0x6e0] sm:$0xff]
  %v239 = vld [vmem:[%s1 + $0x6e8] sm:$0xff]
  %v240 = vld [vmem:[%s1 + $0x6f0] sm:$0xff]
  %v241 = vld [vmem:[%s1 + $0x6f8] sm:$0xff]
  %v242 = vld [vmem:[%s1 + $0x700] sm:$0xff]
  %v243 = vld [vmem:[%s1 + $0x708] sm:$0xff]
  %v244 = vld [vmem:[%s1 + $0x710] sm:$0xff]
  %v245 = vld [vmem:[%s1 + $0x718] sm:$0xff]
  %v246 = vld [vmem:[%s1 + $0x720] sm:$0xff]
  %v247 = vld [vmem:[%s1 + $0x728] sm:$0xff]
  %v248 = vld [vmem:[%s1 + $0x730] sm:$0xff]
  %v249 = vld [vmem:[%s1 + $0x738] sm:$0xff]
  %v250 = vld [vmem:[%s1 + $0x740] sm:$0xff]
  %v251 = vld [vmem:[%s1 + $0x748] sm:$0xff]
  %v252 = vld [vmem:[%s1 + $0x750] sm:$0xff]
  %v253 = vld [vmem:[%s1 + $0x758] sm:$0xff]
  %v254 = vld [vmem:[%s1 + $0x760] sm:$0xff]
  %v255 = vld [vmem:[%s1 + $0x768] sm:$0xff]
  %v256 = vld [vmem:[%s1 + $0x770] sm:$0xff]
  %v257 = vld [vmem:[%s1 + $0x778] sm:$0xff]
  %v258 = vld [vmem:[%s1 + $0x780] sm:$0xff]
  %v259 = vld [vmem:[%s1 + $0x788] sm:$0xff]
  %v260 = vld [vmem:[%s1 + $0x790] sm:$0xff]
  %v261 = vld [vmem:[%s1 + $0x798] sm:$0xff]
  %v262 = vld [vmem:[%s1 + $0x7a0] sm:$0xff]
  %v263 = vld [vmem:[%s1 + $0x7a8] sm:$0xff]
  %v264 = vld [vmem:[%s1 + $0x7b0] sm:$0xff]
  %v265 = vld [vmem:[%s1 + $0x7b8] sm:$0xff]
  %v266 = vld [vmem:[%s1 + $0x7c0] sm:$0xff]
  %v267 = vld [vmem:[%s1 + $0x7c8] sm:$0xff]
  %v268 = vld [vmem:[%s1 + $0x7d0] sm:$0xff]
  %v269 = vld [vmem:[%s1 + $0x7d8] sm:$0xff]
  %v270 = vld [vmem:[%s1 + $0x7e0] sm:$0xff]
  %v271 = vld [vmem:[%s1 + $0x7e8] sm:$0xff]
  %v272 = vld [vmem:[%s1 + $0x7f0] sm:$0xff]
  %v273 = vld [vmem:[%s1 + $0x7f8] sm:$0xff]
  %v275 = vunpack.c.l.b16 %v17
  %v276 = vunpack.c.h.b16 %v17
  %v277 = vpack.c.b16 %v275, %v275
  %v278 = vpack.c.b16 %v276, %v276
  %v537 = vunpack.c.l.b16 %v18
  %v538 = vunpack.c.h.b16 %v18
  %v539 = vunpack.c.l.b16 %v19
  %v540 = vunpack.c.h.b16 %v19
  %v541 = vunpack.c.l.b16 %v20
  %v542 = vunpack.c.h.b16 %v20
  %v543 = vunpack.c.l.b16 %v21
  %v544 = vunpack.c.h.b16 %v21
  %v545 = vunpack.c.l.b16 %v22
  %v546 = vunpack.c.h.b16 %v22
  %v547 = vunpack.c.l.b16 %v23
  %v548 = vunpack.c.h.b16 %v23
  %v549 = vunpack.c.l.b16 %v24
  %v550 = vunpack.c.h.b16 %v24
  %v551 = vunpack.c.l.b16 %v25
  %v552 = vunpack.c.h.b16 %v25
  %v553 = vunpack.c.l.b16 %v26
  %v554 = vunpack.c.h.b16 %v26
  %v555 = vunpack.c.l.b16 %v27
  %v556 = vunpack.c.h.b16 %v27
  %v557 = vunpack.c.l.b16 %v28
  %v558 = vunpack.c.h.b16 %v28
  %v559 = vunpack.c.l.b16 %v29
  %v560 = vunpack.c.h.b16 %v29
  %v561 = vunpack.c.l.b16 %v30
  %v562 = vunpack.c.h.b16 %v30
  %v563 = vunpack.c.l.b16 %v31
  %v564 = vunpack.c.h.b16 %v31
  %v565 = vunpack.c.l.b16 %v32
  %v566 = vunpack.c.h.b16 %v32
  %v567 = vunpack.c.l.b16 %v33
  %v568 = vunpack.c.h.b16 %v33
  %v569 = vunpack.c.l.b16 %v34
  %v570 = vunpack.c.h.b16 %v34
  %v571 = vunpack.c.l.b16 %v35
  %v572 = vunpack.c.h.b16 %v35
  %v573 = vunpack.c.l.b16 %v36
  %v574 = vunpack.c.h.b16 %v36
  %v575 = vunpack.c.l.b16 %v37
  %v576 = vunpack.c.h.b16 %v37
  %v577 = vunpack.c.l.b16 %v38
  %v578 = vunpack.c.h.b16 %v38
  %v579 = vunpack.c.l.b16 %v39
  %v580 = vunpack.c.h.b16 %v39
  %v581 = vunpack.c.l.b16 %v40
  %v582 = vunpack.c.h.b16 %v40
  %v583 = vunpack.c.l.b16 %v41
  %v584 = vunpack.c.h.b16 %v41
  %v585 = vunpack.c.l.b16 %v42
  %v586 = vunpack.c.h.b16 %v42
  %v587 = vunpack.c.l.b16 %v43
  %v588 = vunpack.c.h.b16 %v43
  %v589 = vunpack.c.l.b16 %v44
  %v590 = vunpack.c.h.b16 %v44
  %v591 = vunpack.c.l.b16 %v45
  %v592 = vunpack.c.h.b16 %v45
  %v593 = vunpack.c.l.b16 %v46
  %v594 = vunpack.c.h.b16 %v46
  %v595 = vunpack.c.l.b16 %v47
  %v596 = vunpack.c.h.b16 %v47
  %v597 = vunpack.c.l.b16 %v48
  %v598 = vunpack.c.h.b16 %v48
  %v599 = vunpack.c.l.b16 %v49
  %v600 = vunpack.c.h.b16 %v49
  %v601 = vunpack.c.l.b16 %v50
  %v602 = vunpack.c.h.b16 %v50
  %v603 = vunpack.c.l.b16 %v51
  %v604 = vunpack.c.h.b16 %v51
  %v605 = vunpack.c.l.b16 %v52
  %v606 = vunpack.c.h.b16 %v52
  %v607 = vunpack.c.l.b16 %v53
  %v608 = vunpack.c.h.b16 %v53
  %v609 = vunpack.c.l.b16 %v54
  %v610 = vunpack.c.h.b16 %v54
  %v611 = vunpack.c.l.b16 %v55
  %v612 = vunpack.c.h.b16 %v55
  %v613 = vunpack.c.l.b16 %v56
  %v614 = vunpack.c.h.b16 %v56
  %v615 = vunpack.c.l.b16 %v57
  %v616 = vunpack.c.h.b16 %v57
  %v617 = vunpack.c.l.b16 %v58
  %v618 = vunpack.c.h.b16 %v58
  %v619 = vunpack.c.l.b16 %v59
  %v620 = vunpack.c.h.b16 %v59
  %v621 = vunpack.c.l.b16 %v60
  %v622 = vunpack.c.h.b16 %v60
  %v623 = vunpack.c.l.b16 %v61
  %v624 = vunpack.c.h.b16 %v61
  %v625 = vunpack.c.l.b16 %v62
  %v626 = vunpack.c.h.b16 %v62
  %v627 = vunpack.c.l.b16 %v63
  %v628 = vunpack.c.h.b16 %v63
  %v629 = vunpack.c.l.b16 %v64
  %v630 = vunpack.c.h.b16 %v64
  %v631 = vunpack.c.l.b16 %v65
  %v632 = vunpack.c.h.b16 %v65
  %v633 = vunpack.c.l.b16 %v66
  %v634 = vunpack.c.h.b16 %v66
  %v635 = vunpack.c.l.b16 %v67
  %v636 = vunpack.c.h.b16 %v67
  %v637 = vunpack.c.l.b16 %v68
  %v638 = vunpack.c.h.b16 %v68
  %v639 = vunpack.c.l.b16 %v69
  %v640 = vunpack.c.h.b16 %v69
  %v641 = vunpack.c.l.b16 %v70
  %v642 = vunpack.c.h.b16 %v70
  %v643 = vunpack.c.l.b16 %v71
  %v644 = vunpack.c.h.b16 %v71
  %v645 = vunpack.c.l.b16 %v72
  %v646 = vunpack.c.h.b16 %v72
  %v647 = vunpack.c.l.b16 %v73
  %v648 = vunpack.c.h.b16 %v73
  %v649 = vunpack.c.l.b16 %v74
  %v650 = vunpack.c.h.b16 %v74
  %v651 = vunpack.c.l.b16 %v75
  %v652 = vunpack.c.h.b16 %v75
  %v653 = vunpack.c.l.b16 %v76
  %v654 = vunpack.c.h.b16 %v76
  %v655 = vunpack.c.l.b16 %v77
  %v656 = vunpack.c.h.b16 %v77
  %v657 = vunpack.c.l.b16 %v78
  %v658 = vunpack.c.h.b16 %v78
  %v659 = vunpack.c.l.b16 %v79
  %v660 = vunpack.c.h.b16 %v79
  %v661 = vunpack.c.l.b16 %v80
  %v662 = vunpack.c.h.b16 %v80
  %v663 = vunpack.c.l.b16 %v81
  %v664 = vunpack.c.h.b16 %v81
  %v665 = vunpack.c.l.b16 %v82
  %v666 = vunpack.c.h.b16 %v82
  %v667 = vunpack.c.l.b16 %v83
  %v668 = vunpack.c.h.b16 %v83
  %v669 = vunpack.c.l.b16 %v84
  %v670 = vunpack.c.h.b16 %v84
  %v671 = vunpack.c.l.b16 %v85
  %v672 = vunpack.c.h.b16 %v85
  %v673 = vunpack.c.l.b16 %v86
  %v674 = vunpack.c.h.b16 %v86
  %v675 = vunpack.c.l.b16 %v87
  %v676 = vunpack.c.h.b16 %v87
  %v677 = vunpack.c.l.b16 %v88
  %v678 = vunpack.c.h.b16 %v88
  %v679 = vunpack.c.l.b16 %v89
  %v680 = vunpack.c.h.b16 %v89
  %v681 = vunpack.c.l.b16 %v90
  %v682 = vunpack.c.h.b16 %v90
  %v683 = vunpack.c.l.b16 %v91
  %v684 = vunpack.c.h.b16 %v91
  %v685 = vunpack.c.l.b16 %v92
  %v686 = vunpack.c.h.b16 %v92
  %v687 = vunpack.c.l.b16 %v93
  %v688 = vunpack.c.h.b16 %v93
  %v689 = vunpack.c.l.b16 %v94
  %v690 = vunpack.c.h.b16 %v94
  %v691 = vunpack.c.l.b16 %v95
  %v692 = vunpack.c.h.b16 %v95
  %v693 = vunpack.c.l.b16 %v96
  %v694 = vunpack.c.h.b16 %v96
  %v695 = vunpack.c.l.b16 %v97
  %v696 = vunpack.c.h.b16 %v97
  %v697 = vunpack.c.l.b16 %v98
  %v698 = vunpack.c.h.b16 %v98
  %v699 = vunpack.c.l.b16 %v99
  %v700 = vunpack.c.h.b16 %v99
  %v701 = vunpack.c.l.b16 %v100
  %v702 = vunpack.c.h.b16 %v100
  %v703 = vunpack.c.l.b16 %v101
  %v704 = vunpack.c.h.b16 %v101
  %v705 = vunpack.c.l.b16 %v102
  %v706 = vunpack.c.h.b16 %v102
  %v707 = vunpack.c.l.b16 %v103
  %v708 = vunpack.c.h.b16 %v103
  %v709 = vunpack.c.l.b16 %v104
  %v710 = vunpack.c.h.b16 %v104
  %v711 = vunpack.c.l.b16 %v105
  %v712 = vunpack.c.h.b16 %v105
  %v713 = vunpack.c.l.b16 %v106
  %v714 = vunpack.c.h.b16 %v106
  %v715 = vunpack.c.l.b16 %v107
  %v716 = vunpack.c.h.b16 %v107
  %v717 = vunpack.c.l.b16 %v108
  %v718 = vunpack.c.h.b16 %v108
  %v719 = vunpack.c.l.b16 %v109
  %v720 = vunpack.c.h.b16 %v109
  %v721 = vunpack.c.l.b16 %v110
  %v722 = vunpack.c.h.b16 %v110
  %v723 = vunpack.c.l.b16 %v111
  %v724 = vunpack.c.h.b16 %v111
  %v725 = vunpack.c.l.b16 %v112
  %v726 = vunpack.c.h.b16 %v112
  %v727 = vunpack.c.l.b16 %v113
  %v728 = vunpack.c.h.b16 %v113
  %v729 = vunpack.c.l.b16 %v114
  %v730 = vunpack.c.h.b16 %v114
  %v731 = vunpack.c.l.b16 %v115
  %v732 = vunpack.c.h.b16 %v115
  %v733 = vunpack.c.l.b16 %v116
  %v734 = vunpack.c.h.b16 %v116
  %v735 = vunpack.c.l.b16 %v117
  %v736 = vunpack.c.h.b16 %v117
  %v737 = vunpack.c.l.b16 %v118
  %v738 = vunpack.c.h.b16 %v118
  %v739 = vunpack.c.l.b16 %v119
  %v740 = vunpack.c.h.b16 %v119
  %v741 = vunpack.c.l.b16 %v120
  %v742 = vunpack.c.h.b16 %v120
  %v743 = vunpack.c.l.b16 %v121
  %v744 = vunpack.c.h.b16 %v121
  %v745 = vunpack.c.l.b16 %v122
  %v746 = vunpack.c.h.b16 %v122
  %v747 = vunpack.c.l.b16 %v123
  %v748 = vunpack.c.h.b16 %v123
  %v749 = vunpack.c.l.b16 %v124
  %v750 = vunpack.c.h.b16 %v124
  %v751 = vunpack.c.l.b16 %v125
  %v752 = vunpack.c.h.b16 %v125
  %v753 = vunpack.c.l.b16 %v126
  %v754 = vunpack.c.h.b16 %v126
  %v755 = vunpack.c.l.b16 %v127
  %v756 = vunpack.c.h.b16 %v127
  %v757 = vunpack.c.l.b16 %v128
  %v758 = vunpack.c.h.b16 %v128
  %v759 = vunpack.c.l.b16 %v129
  %v760 = vunpack.c.h.b16 %v129
  %v761 = vunpack.c.l.b16 %v130
  %v762 = vunpack.c.h.b16 %v130
  %v763 = vunpack.c.l.b16 %v131
  %v764 = vunpack.c.h.b16 %v131
  %v765 = vunpack.c.l.b16 %v132
  %v766 = vunpack.c.h.b16 %v132
  %v767 = vunpack.c.l.b16 %v133
  %v768 = vunpack.c.h.b16 %v133
  %v769 = vunpack.c.l.b16 %v134
  %v770 = vunpack.c.h.b16 %v134
  %v771 = vunpack.c.l.b16 %v135
  %v772 = vunpack.c.h.b16 %v135
  %v773 = vunpack.c.l.b16 %v136
  %v774 = vunpack.c.h.b16 %v136
  %v775 = vunpack.c.l.b16 %v137
  %v776 = vunpack.c.h.b16 %v137
  %v777 = vunpack.c.l.b16 %v138
  %v778 = vunpack.c.h.b16 %v138
  %v779 = vunpack.c.l.b16 %v139
  %v780 = vunpack.c.h.b16 %v139
  %v781 = vunpack.c.l.b16 %v140
  %v782 = vunpack.c.h.b16 %v140
  %v783 = vunpack.c.l.b16 %v141
  %v784 = vunpack.c.h.b16 %v141
  %v785 = vunpack.c.l.b16 %v142
  %v786 = vunpack.c.h.b16 %v142
  %v787 = vunpack.c.l.b16 %v143
  %v788 = vunpack.c.h.b16 %v143
  %v789 = vunpack.c.l.b16 %v144
  %v790 = vunpack.c.h.b16 %v144
  %v791 = vunpack.c.l.b16 %v145
  %v792 = vunpack.c.h.b16 %v145
  %v793 = vunpack.c.l.b16 %v146
  %v794 = vunpack.c.h.b16 %v146
  %v795 = vunpack.c.l.b16 %v147
  %v796 = vunpack.c.h.b16 %v147
  %v797 = vunpack.c.l.b16 %v148
  %v798 = vunpack.c.h.b16 %v148
  %v799 = vunpack.c.l.b16 %v149
  %v800 = vunpack.c.h.b16 %v149
  %v801 = vunpack.c.l.b16 %v150
  %v802 = vunpack.c.h.b16 %v150
  %v803 = vunpack.c.l.b16 %v151
  %v804 = vunpack.c.h.b16 %v151
  %v805 = vunpack.c.l.b16 %v152
  %v806 = vunpack.c.h.b16 %v152
  %v807 = vunpack.c.l.b16 %v153
  %v808 = vunpack.c.h.b16 %v153
  %v809 = vunpack.c.l.b16 %v154
  %v810 = vunpack.c.h.b16 %v154
  %v811 = vunpack.c.l.b16 %v155
  %v812 = vunpack.c.h.b16 %v155
  %v813 = vunpack.c.l.b16 %v156
  %v814 = vunpack.c.h.b16 %v156
  %v815 = vunpack.c.l.b16 %v157
  %v816 = vunpack.c.h.b16 %v157
  %v817 = vunpack.c.l.b16 %v158
  %v818 = vunpack.c.h.b16 %v158
  %v819 = vunpack.c.l.b16 %v159
  %v820 = vunpack.c.h.b16 %v159
  %v821 = vunpack.c.l.b16 %v160
  %v822 = vunpack.c.h.b16 %v160
  %v823 = vunpack.c.l.b16 %v161
  %v824 = vunpack.c.h.b16 %v161
  %v825 = vunpack.c.l.b16 %v162
  %v826 = vunpack.c.h.b16 %v162
  %v827 = vunpack.c.l.b16 %v163
  %v828 = vunpack.c.h.b16 %v163
  %v829 = vunpack.c.l.b16 %v164
  %v830 = vunpack.c.h.b16 %v164
  %v831 = vunpack.c.l.b16 %v165
  %v832 = vunpack.c.h.b16 %v165
  %v833 = vunpack.c.l.b16 %v166
  %v834 = vunpack.c.h.b16 %v166
  %v835 = vunpack.c.l.b16 %v167
  %v836 = vunpack.c.h.b16 %v167
  %v837 = vunpack.c.l.b16 %v168
  %v838 = vunpack.c.h.b16 %v168
  %v839 = vunpack.c.l.b16 %v169
  %v840 = vunpack.c.h.b16 %v169
  %v841 = vunpack.c.l.b16 %v170
  %v842 = vunpack.c.h.b16 %v170
  %v843 = vunpack.c.l.b16 %v171
  %v844 = vunpack.c.h.b16 %v171
  %v845 = vunpack.c.l.b16 %v172
  %v846 = vunpack.c.h.b16 %v172
  %v847 = vunpack.c.l.b16 %v173
  %v848 = vunpack.c.h.b16 %v173
  %v849 = vunpack.c.l.b16 %v174
  %v850 = vunpack.c.h.b16 %v174
  %v851 = vunpack.c.l.b16 %v175
  %v852 = vunpack.c.h.b16 %v175
  %v853 = vunpack.c.l.b16 %v176
  %v854 = vunpack.c.h.b16 %v176
  %v855 = vunpack.c.l.b16 %v177
  %v856 = vunpack.c.h.b16 %v177
  %v857 = vunpack.c.l.b16 %v178
  %v858 = vunpack.c.h.b16 %v178
  %v859 = vunpack.c.l.b16 %v179
  %v860 = vunpack.c.h.b16 %v179
  %v861 = vunpack.c.l.b16 %v180
  %v862 = vunpack.c.h.b16 %v180
  %v863 = vunpack.c.l.b16 %v181
  %v864 = vunpack.c.h.b16 %v181
  %v865 = vunpack.c.l.b16 %v182
  %v866 = vunpack.c.h.b16 %v182
  %v867 = vunpack.c.l.b16 %v183
  %v868 = vunpack.c.h.b16 %v183
  %v869 = vunpack.c.l.b16 %v184
  %v870 = vunpack.c.h.b16 %v184
  %v871 = vunpack.c.l.b16 %v185
  %v872 = vunpack.c.h.b16 %v185
  %v873 = vunpack.c.l.b16 %v186
  %v874 = vunpack.c.h.b16 %v186
  %v875 = vunpack.c.l.b16 %v187
  %v876 = vunpack.c.h.b16 %v187
  %v877 = vunpack.c.l.b16 %v188
  %v878 = vunpack.c.h.b16 %v188
  %v879 = vunpack.c.l.b16 %v189
  %v880 = vunpack.c.h.b16 %v189
  %v881 = vunpack.c.l.b16 %v190
  %v882 = vunpack.c.h.b16 %v190
  %v883 = vunpack.c.l.b16 %v191
  %v884 = vunpack.c.h.b16 %v191
  %v885 = vunpack.c.l.b16 %v192
  %v886 = vunpack.c.h.b16 %v192
  %v887 = vunpack.c.l.b16 %v193
  %v888 = vunpack.c.h.b16 %v193
  %v889 = vunpack.c.l.b16 %v194
  %v890 = vunpack.c.h.b16 %v194
  %v891 = vunpack.c.l.b16 %v195
  %v892 = vunpack.c.h.b16 %v195
  %v893 = vunpack.c.l.b16 %v196
  %v894 = vunpack.c.h.b16 %v196
  %v895 = vunpack.c.l.b16 %v197
  %v896 = vunpack.c.h.b16 %v197
  %v897 = vunpack.c.l.b16 %v198
  %v898 = vunpack.c.h.b16 %v198
  %v899 = vunpack.c.l.b16 %v199
  %v900 = vunpack.c.h.b16 %v199
  %v901 = vunpack.c.l.b16 %v200
  %v902 = vunpack.c.h.b16 %v200
  %v903 = vunpack.c.l.b16 %v201
  %v904 = vunpack.c.h.b16 %v201
  %v905 = vunpack.c.l.b16 %v202
  %v906 = vunpack.c.h.b16 %v202
  %v907 = vunpack.c.l.b16 %v203
  %v908 = vunpack.c.h.b16 %v203
  %v909 = vunpack.c.l.b16 %v204
  %v910 = vunpack.c.h.b16 %v204
  %v911 = vunpack.c.l.b16 %v205
  %v912 = vunpack.c.h.b16 %v205
  %v913 = vunpack.c.l.b16 %v206
  %v914 = vunpack.c.h.b16 %v206
  %v915 = vunpack.c.l.b16 %v207
  %v916 = vunpack.c.h.b16 %v207
  %v917 = vunpack.c.l.b16 %v208
  %v918 = vunpack.c.h.b16 %v208
  %v919 = vunpack.c.l.b16 %v209
  %v920 = vunpack.c.h.b16 %v209
  %v921 = vunpack.c.l.b16 %v210
  %v922 = vunpack.c.h.b16 %v210
  %v923 = vunpack.c.l.b16 %v211
  %v924 = vunpack.c.h.b16 %v211
  %v925 = vunpack.c.l.b16 %v212
  %v926 = vunpack.c.h.b16 %v212
  %v927 = vunpack.c.l.b16 %v213
  %v928 = vunpack.c.h.b16 %v213
  %v929 = vunpack.c.l.b16 %v214
  %v930 = vunpack.c.h.b16 %v214
  %v931 = vunpack.c.l.b16 %v215
  %v932 = vunpack.c.h.b16 %v215
  %v933 = vunpack.c.l.b16 %v216
  %v934 = vunpack.c.h.b16 %v216
  %v935 = vunpack.c.l.b16 %v217
  %v936 = vunpack.c.h.b16 %v217
  %v937 = vunpack.c.l.b16 %v218
  %v938 = vunpack.c.h.b16 %v218
  %v939 = vunpack.c.l.b16 %v219
  %v940 = vunpack.c.h.b16 %v219
  %v941 = vunpack.c.l.b16 %v220
  %v942 = vunpack.c.h.b16 %v220
  %v943 = vunpack.c.l.b16 %v221
  %v944 = vunpack.c.h.b16 %v221
  %v945 = vunpack.c.l.b16 %v222
  %v946 = vunpack.c.h.b16 %v222
  %v947 = vunpack.c.l.b16 %v223
  %v948 = vunpack.c.h.b16 %v223
  %v949 = vunpack.c.l.b16 %v224
  %v950 = vunpack.c.h.b16 %v224
  %v951 = vunpack.c.l.b16 %v225
  %v952 = vunpack.c.h.b16 %v225
  %v953 = vunpack.c.l.b16 %v226
  %v954 = vunpack.c.h.b16 %v226
  %v955 = vunpack.c.l.b16 %v227
  %v956 = vunpack.c.h.b16 %v227
  %v957 = vunpack.c.l.b16 %v228
  %v958 = vunpack.c.h.b16 %v228
  %v959 = vunpack.c.l.b16 %v229
  %v960 = vunpack.c.h.b16 %v229
  %v961 = vunpack.c.l.b16 %v230
  %v962 = vunpack.c.h.b16 %v230
  %v963 = vunpack.c.l.b16 %v231
  %v964 = vunpack.c.h.b16 %v231
  %v965 = vunpack.c.l.b16 %v232
  %v966 = vunpack.c.h.b16 %v232
  %v967 = vunpack.c.l.b16 %v233
  %v968 = vunpack.c.h.b16 %v233
  %v969 = vunpack.c.l.b16 %v234
  %v970 = vunpack.c.h.b16 %v234
  %v971 = vunpack.c.l.b16 %v235
  %v972 = vunpack.c.h.b16 %v235
  %v973 = vunpack.c.l.b16 %v236
  %v974 = vunpack.c.h.b16 %v236
  %v975 = vunpack.c.l.b16 %v237
  %v976 = vunpack.c.h.b16 %v237
  %v977 = vunpack.c.l.b16 %v238
  %v978 = vunpack.c.h.b16 %v238
  %v979 = vunpack.c.l.b16 %v239
  %v980 = vunpack.c.h.b16 %v239
  %v981 = vunpack.c.l.b16 %v240
  %v982 = vunpack.c.h.b16 %v240
  %v983 = vunpack.c.l.b16 %v241
  %v984 = vunpack.c.h.b16 %v241
  %v985 = vunpack.c.l.b16 %v242
  %v986 = vunpack.c.h.b16 %v242
  %v987 = vunpack.c.l.b16 %v243
  %v988 = vunpack.c.h.b16 %v243
  %v989 = vunpack.c.l.b16 %v244
  %v990 = vunpack.c.h.b16 %v244
  %v991 = vunpack.c.l.b16 %v245
  %v992 = vunpack.c.h.b16 %v245
  %v993 = vunpack.c.l.b16 %v246
  %v994 = vunpack.c.h.b16 %v246
  %v995 = vunpack.c.l.b16 %v247
  %v996 = vunpack.c.h.b16 %v247
  %v997 = vunpack.c.l.b16 %v248
  %v998 = vunpack.c.h.b16 %v248
  %v999 = vunpack.c.l.b16 %v249
  %v1000 = vunpack.c.h.b16 %v249
  %v1001 = vunpack.c.l.b16 %v250
  %v1002 = vunpack.c.h.b16 %v250
  %v1003 = vunpack.c.l.b16 %v251
  %v1004 = vunpack.c.h.b16 %v251
  %v1005 = vunpack.c.l.b16 %v252
  %v1006 = vunpack.c.h.b16 %v252
  %v1007 = vunpack.c.l.b16 %v253
  %v1008 = vunpack.c.h.b16 %v253
  %v1009 = vunpack.c.l.b16 %v254
  %v1010 = vunpack.c.h.b16 %v254
  %v1011 = vunpack.c.l.b16 %v255
  %v1012 = vunpack.c.h.b16 %v255
  %v1013 = vunpack.c.l.b16 %v256
  %v1014 = vunpack.c.h.b16 %v256
  %v1015 = vunpack.c.l.b16 %v257
  %v1016 = vunpack.c.h.b16 %v257
  %v1017 = vunpack.c.l.b16 %v258
  %v1018 = vunpack.c.h.b16 %v258
  %v1019 = vunpack.c.l.b16 %v259
  %v1020 = vunpack.c.h.b16 %v259
  %v1021 = vunpack.c.l.b16 %v260
  %v1022 = vunpack.c.h.b16 %v260
  %v1023 = vunpack.c.l.b16 %v261
  %v1024 = vunpack.c.h.b16 %v261
  %v1025 = vunpack.c.l.b16 %v262
  %v1026 = vunpack.c.h.b16 %v262
  %v1027 = vunpack.c.l.b16 %v263
  %v1028 = vunpack.c.h.b16 %v263
  %v1029 = vunpack.c.l.b16 %v264
  %v1030 = vunpack.c.h.b16 %v264
  %v1031 = vunpack.c.l.b16 %v265
  %v1032 = vunpack.c.h.b16 %v265
  %v1033 = vunpack.c.l.b16 %v266
  %v1034 = vunpack.c.h.b16 %v266
  %v1035 = vunpack.c.l.b16 %v267
  %v1036 = vunpack.c.h.b16 %v267
  %v1037 = vunpack.c.l.b16 %v268
  %v1038 = vunpack.c.h.b16 %v268
  %v1039 = vunpack.c.l.b16 %v269
  %v1040 = vunpack.c.h.b16 %v269
  %v1041 = vunpack.c.l.b16 %v270
  %v1042 = vunpack.c.h.b16 %v270
  %v1043 = vunpack.c.l.b16 %v271
  %v1044 = vunpack.c.h.b16 %v271
  %v1045 = vunpack.c.l.b16 %v272
  %v1046 = vunpack.c.h.b16 %v272
  %v1047 = vunpack.c.l.b16 %v273
  %v1048 = vunpack.c.h.b16 %v273
  %v1049 = vpack.c.b16 %v553, %v537
  %v1050 = vpack.c.b16 %v554, %v538
  %v1051 = vpack.c.b16 %v555, %v539
  %v1052 = vpack.c.b16 %v556, %v540
  %v1053 = vpack.c.b16 %v557, %v541
  %v1054 = vpack.c.b16 %v558, %v542
  %v1055 = vpack.c.b16 %v559, %v543
  %v1056 = vpack.c.b16 %v560, %v544
  %v1057 = vpack.c.b16 %v561, %v545
  %v1058 = vpack.c.b16 %v562, %v546
  %v1059 = vpack.c.b16 %v563, %v547
  %v1060 = vpack.c.b16 %v564, %v548
  %v1061 = vpack.c.b16 %v565, %v549
  %v1062 = vpack.c.b16 %v566, %v550
  %v1063 = vpack.c.b16 %v567, %v551
  %v1064 = vpack.c.b16 %v568, %v552
  %v1065 = vpack.c.b16 %v585, %v569
  %v1066 = vpack.c.b16 %v586, %v570
  %v1067 = vpack.c.b16 %v587, %v571
  %v1068 = vpack.c.b16 %v588, %v572
  %v1069 = vpack.c.b16 %v589, %v573
  %v1070 = vpack.c.b16 %v590, %v574
  %v1071 = vpack.c.b16 %v591, %v575
  %v1072 = vpack.c.b16 %v592, %v576
  %v1073 = vpack.c.b16 %v593, %v577
  %v1074 = vpack.c.b16 %v594, %v578
  %v1075 = vpack.c.b16 %v595, %v579
  %v1076 = vpack.c.b16 %v596, %v580
  %v1077 = vpack.c.b16 %v597, %v581
  %v1078 = vpack.c.b16 %v598, %v582
  %v1079 = vpack.c.b16 %v599, %v583
  %v1080 = vpack.c.b16 %v600, %v584
  %v1081 = vpack.c.b16 %v617, %v601
  %v1082 = vpack.c.b16 %v618, %v602
  %v1083 = vpack.c.b16 %v619, %v603
  %v1084 = vpack.c.b16 %v620, %v604
  %v1085 = vpack.c.b16 %v621, %v605
  %v1086 = vpack.c.b16 %v622, %v606
  %v1087 = vpack.c.b16 %v623, %v607
  %v1088 = vpack.c.b16 %v624, %v608
  %v1089 = vpack.c.b16 %v625, %v609
  %v1090 = vpack.c.b16 %v626, %v610
  %v1091 = vpack.c.b16 %v627, %v611
  %v1092 = vpack.c.b16 %v628, %v612
  %v1093 = vpack.c.b16 %v629, %v613
  %v1094 = vpack.c.b16 %v630, %v614
  %v1095 = vpack.c.b16 %v631, %v615
  %v1096 = vpack.c.b16 %v632, %v616
  %v1097 = vpack.c.b16 %v649, %v633
  %v1098 = vpack.c.b16 %v650, %v634
  %v1099 = vpack.c.b16 %v651, %v635
  %v1100 = vpack.c.b16 %v652, %v636
  %v1101 = vpack.c.b16 %v653, %v637
  %v1102 = vpack.c.b16 %v654, %v638
  %v1103 = vpack.c.b16 %v655, %v639
  %v1104 = vpack.c.b16 %v656, %v640
  %v1105 = vpack.c.b16 %v657, %v641
  %v1106 = vpack.c.b16 %v658, %v642
  %v1107 = vpack.c.b16 %v659, %v643
  %v1108 = vpack.c.b16 %v660, %v644
  %v1109 = vpack.c.b16 %v661, %v645
  %v1110 = vpack.c.b16 %v662, %v646
  %v1111 = vpack.c.b16 %v663, %v647
  %v1112 = vpack.c.b16 %v664, %v648
  %v1113 = vpack.c.b16 %v681, %v665
  %v1114 = vpack.c.b16 %v682, %v666
  %v1115 = vpack.c.b16 %v683, %v667
  %v1116 = vpack.c.b16 %v684, %v668
  %v1117 = vpack.c.b16 %v685, %v669
  %v1118 = vpack.c.b16 %v686, %v670
  %v1119 = vpack.c.b16 %v687, %v671
  %v1120 = vpack.c.b16 %v688, %v672
  %v1121 = vpack.c.b16 %v689, %v673
  %v1122 = vpack.c.b16 %v690, %v674
  %v1123 = vpack.c.b16 %v691, %v675
  %v1124 = vpack.c.b16 %v692, %v676
  %v1125 = vpack.c.b16 %v693, %v677
  %v1126 = vpack.c.b16 %v694, %v678
  %v1127 = vpack.c.b16 %v695, %v679
  %v1128 = vpack.c.b16 %v696, %v680
  %v1129 = vpack.c.b16 %v713, %v697
  %v1130 = vpack.c.b16 %v714, %v698
  %v1131 = vpack.c.b16 %v715, %v699
  %v1132 = vpack.c.b16 %v716, %v700
  %v1133 = vpack.c.b16 %v717, %v701
  %v1134 = vpack.c.b16 %v718, %v702
  %v1135 = vpack.c.b16 %v719, %v703
  %v1136 = vpack.c.b16 %v720, %v704
  %v1137 = vpack.c.b16 %v721, %v705
  %v1138 = vpack.c.b16 %v722, %v706
  %v1139 = vpack.c.b16 %v723, %v707
  %v1140 = vpack.c.b16 %v724, %v708
  %v1141 = vpack.c.b16 %v725, %v709
  %v1142 = vpack.c.b16 %v726, %v710
  %v1143 = vpack.c.b16 %v727, %v711
  %v1144 = vpack.c.b16 %v728, %v712
  %v1145 = vpack.c.b16 %v745, %v729
  %v1146 = vpack.c.b16 %v746, %v730
  %v1147 = vpack.c.b16 %v747, %v731
  %v1148 = vpack.c.b16 %v748, %v732
  %v1149 = vpack.c.b16 %v749, %v733
  %v1150 = vpack.c.b16 %v750, %v734
  %v1151 = vpack.c.b16 %v751, %v735
  %v1152 = vpack.c.b16 %v752, %v736
  %v1153 = vpack.c.b16 %v753, %v737
  %v1154 = vpack.c.b16 %v754, %v738
  %v1155 = vpack.c.b16 %v755, %v739
  %v1156 = vpack.c.b16 %v756, %v740
  %v1157 = vpack.c.b16 %v757, %v741
  %v1158 = vpack.c.b16 %v758, %v742
  %v1159 = vpack.c.b16 %v759, %v743
  %v1160 = vpack.c.b16 %v760, %v744
  %v1161 = vpack.c.b16 %v777, %v761
  %v1162 = vpack.c.b16 %v778, %v762
  %v1163 = vpack.c.b16 %v779, %v763
  %v1164 = vpack.c.b16 %v780, %v764
  %v1165 = vpack.c.b16 %v781, %v765
  %v1166 = vpack.c.b16 %v782, %v766
  %v1167 = vpack.c.b16 %v783, %v767
  %v1168 = vpack.c.b16 %v784, %v768
  %v1169 = vpack.c.b16 %v785, %v769
  %v1170 = vpack.c.b16 %v786, %v770
  %v1171 = vpack.c.b16 %v787, %v771
  %v1172 = vpack.c.b16 %v788, %v772
  %v1173 = vpack.c.b16 %v789, %v773
  %v1174 = vpack.c.b16 %v790, %v774
  %v1175 = vpack.c.b16 %v791, %v775
  %v1176 = vpack.c.b16 %v792, %v776
  %v1177 = vpack.c.b16 %v809, %v793
  %v1178 = vpack.c.b16 %v810, %v794
  %v1179 = vpack.c.b16 %v811, %v795
  %v1180 = vpack.c.b16 %v812, %v796
  %v1181 = vpack.c.b16 %v813, %v797
  %v1182 = vpack.c.b16 %v814, %v798
  %v1183 = vpack.c.b16 %v815, %v799
  %v1184 = vpack.c.b16 %v816, %v800
  %v1185 = vpack.c.b16 %v817, %v801
  %v1186 = vpack.c.b16 %v818, %v802
  %v1187 = vpack.c.b16 %v819, %v803
  %v1188 = vpack.c.b16 %v820, %v804
  %v1189 = vpack.c.b16 %v821, %v805
  %v1190 = vpack.c.b16 %v822, %v806
  %v1191 = vpack.c.b16 %v823, %v807
  %v1192 = vpack.c.b16 %v824, %v808
  %v1193 = vpack.c.b16 %v841, %v825
  %v1194 = vpack.c.b16 %v842, %v826
  %v1195 = vpack.c.b16 %v843, %v827
  %v1196 = vpack.c.b16 %v844, %v828
  %v1197 = vpack.c.b16 %v845, %v829
  %v1198 = vpack.c.b16 %v846, %v830
  %v1199 = vpack.c.b16 %v847, %v831
  %v1200 = vpack.c.b16 %v848, %v832
  %v1201 = vpack.c.b16 %v849, %v833
  %v1202 = vpack.c.b16 %v850, %v834
  %v1203 = vpack.c.b16 %v851, %v835
  %v1204 = vpack.c.b16 %v852, %v836
  %v1205 = vpack.c.b16 %v853, %v837
  %v1206 = vpack.c.b16 %v854, %v838
  %v1207 = vpack.c.b16 %v855, %v839
  %v1208 = vpack.c.b16 %v856, %v840
  %v1209 = vpack.c.b16 %v873, %v857
  %v1210 = vpack.c.b16 %v874, %v858
  %v1211 = vpack.c.b16 %v875, %v859
  %v1212 = vpack.c.b16 %v876, %v860
  %v1213 = vpack.c.b16 %v877, %v861
  %v1214 = vpack.c.b16 %v878, %v862
  %v1215 = vpack.c.b16 %v879, %v863
  %v1216 = vpack.c.b16 %v880, %v864
  %v1217 = vpack.c.b16 %v881, %v865
  %v1218 = vpack.c.b16 %v882, %v866
  %v1219 = vpack.c.b16 %v883, %v867
  %v1220 = vpack.c.b16 %v884, %v868
  %v1221 = vpack.c.b16 %v885, %v869
  %v1222 = vpack.c.b16 %v886, %v870
  %v1223 = vpack.c.b16 %v887, %v871
  %v1224 = vpack.c.b16 %v888, %v872
  %v1225 = vpack.c.b16 %v905, %v889
  %v1226 = vpack.c.b16 %v906, %v890
  %v1227 = vpack.c.b16 %v907, %v891
  %v1228 = vpack.c.b16 %v908, %v892
  %v1229 = vpack.c.b16 %v909, %v893
  %v1230 = vpack.c.b16 %v910, %v894
  %v1231 = vpack.c.b16 %v911, %v895
  %v1232 = vpack.c.b16 %v912, %v896
  %v1233 = vpack.c.b16 %v913, %v897
  %v1234 = vpack.c.b16 %v914, %v898
  %v1235 = vpack.c.b16 %v915, %v899
  %v1236 = vpack.c.b16 %v916, %v900
  %v1237 = vpack.c.b16 %v917, %v901
  %v1238 = vpack.c.b16 %v918, %v902
  %v1239 = vpack.c.b16 %v919, %v903
  %v1240 = vpack.c.b16 %v920, %v904
  %v1241 = vpack.c.b16 %v937, %v921
  %v1242 = vpack.c.b16 %v938, %v922
  %v1243 = vpack.c.b16 %v939, %v923
  %v1244 = vpack.c.b16 %v940, %v924
  %v1245 = vpack.c.b16 %v941, %v925
  %v1246 = vpack.c.b16 %v942, %v926
  %v1247 = vpack.c.b16 %v943, %v927
  %v1248 = vpack.c.b16 %v944, %v928
  %v1249 = vpack.c.b16 %v945, %v929
  %v1250 = vpack.c.b16 %v946, %v930
  %v1251 = vpack.c.b16 %v947, %v931
  %v1252 = vpack.c.b16 %v948, %v932
  %v1253 = vpack.c.b16 %v949, %v933
  %v1254 = vpack.c.b16 %v950, %v934
  %v1255 = vpack.c.b16 %v951, %v935
  %v1256 = vpack.c.b16 %v952, %v936
  %v1257 = vpack.c.b16 %v969, %v953
  %v1258 = vpack.c.b16 %v970, %v954
  %v1259 = vpack.c.b16 %v971, %v955
  %v1260 = vpack.c.b16 %v972, %v956
  %v1261 = vpack.c.b16 %v973, %v957
  %v1262 = vpack.c.b16 %v974, %v958
  %v1263 = vpack.c.b16 %v975, %v959
  %v1264 = vpack.c.b16 %v976, %v960
  %v1265 = vpack.c.b16 %v977, %v961
  %v1266 = vpack.c.b16 %v978, %v962
  %v1267 = vpack.c.b16 %v979, %v963
  %v1268 = vpack.c.b16 %v980, %v964
  %v1269 = vpack.c.b16 %v981, %v965
  %v1270 = vpack.c.b16 %v982, %v966
  %v1271 = vpack.c.b16 %v983, %v967
  %v1272 = vpack.c.b16 %v984, %v968
  %v1273 = vpack.c.b16 %v1001, %v985
  %v1274 = vpack.c.b16 %v1002, %v986
  %v1275 = vpack.c.b16 %v1003, %v987
  %v1276 = vpack.c.b16 %v1004, %v988
  %v1277 = vpack.c.b16 %v1005, %v989
  %v1278 = vpack.c.b16 %v1006, %v990
  %v1279 = vpack.c.b16 %v1007, %v991
  %v1280 = vpack.c.b16 %v1008, %v992
  %v1281 = vpack.c.b16 %v1009, %v993
  %v1282 = vpack.c.b16 %v1010, %v994
  %v1283 = vpack.c.b16 %v1011, %v995
  %v1284 = vpack.c.b16 %v1012, %v996
  %v1285 = vpack.c.b16 %v1013, %v997
  %v1286 = vpack.c.b16 %v1014, %v998
  %v1287 = vpack.c.b16 %v1015, %v999
  %v1288 = vpack.c.b16 %v1016, %v1000
  %v1289 = vpack.c.b16 %v1033, %v1017
  %v1290 = vpack.c.b16 %v1034, %v1018
  %v1291 = vpack.c.b16 %v1035, %v1019
  %v1292 = vpack.c.b16 %v1036, %v1020
  %v1293 = vpack.c.b16 %v1037, %v1021
  %v1294 = vpack.c.b16 %v1038, %v1022
  %v1295 = vpack.c.b16 %v1039, %v1023
  %v1296 = vpack.c.b16 %v1040, %v1024
  %v1297 = vpack.c.b16 %v1041, %v1025
  %v1298 = vpack.c.b16 %v1042, %v1026
  %v1299 = vpack.c.b16 %v1043, %v1027
  %v1300 = vpack.c.b16 %v1044, %v1028
  %v1301 = vpack.c.b16 %v1045, %v1029
  %v1302 = vpack.c.b16 %v1046, %v1030
  %v1303 = vpack.c.b16 %v1047, %v1031
  %v1304 = vpack.c.b16 %v1048, %v1032
  %1561 = vmatpush.bf16.msra.mxu0 %v1161
  %1562 = vmatpush.bf16.msra.mxu0 %v1145
  %1563 = vmatpush.bf16.msra.mxu0 %v1129
  %1564 = vmatpush.bf16.msra.mxu0 %v1113
  %1565 = vmatpush.bf16.msra.mxu0 %v1097
  %1566 = vmatpush.bf16.msra.mxu0 %v1081
  %1567 = vmatpush.bf16.msra.mxu0 %v1065
  %1568 = vmatpush.bf16.msra.mxu0 %v1049
  %1569 = vmatmul.bf16.gmra.mxu0 %v277
  %v1570 = vpop.f32.mrf.mxu0
  %v1571 = vadd.f32 0.0, %v1570
  %v1572 = vpop.f32.mrf.mxu0
  %1573 = vdwg.mxu0
  %1574 = vmatpush.bf16.msra.mxu0 %v1289
  %1575 = vmatpush.bf16.msra.mxu0 %v1273
  %1576 = vmatpush.bf16.msra.mxu0 %v1257
  %1577 = vmatpush.bf16.msra.mxu0 %v1241
  %1578 = vmatpush.bf16.msra.mxu0 %v1225
  %1579 = vmatpush.bf16.msra.mxu0 %v1209
  %1580 = vmatpush.bf16.msra.mxu0 %v1193
  %1581 = vmatpush.bf16.msra.mxu0 %v1177
  %1582 = vmatmul.bf16.gmra.mxu0 %v278
  %v1583 = vpop.f32.mrf.mxu0
  %v1584 = vadd.f32 %v1571, %v1583
  %v1585 = vpop.f32.mrf.mxu0
  %1586 = vdwg.mxu0
  %1587 = vmatpush.bf16.msra.mxu0 %v1162
  %1588 = vmatpush.bf16.msra.mxu0 %v1146
  %1589 = vmatpush.bf16.msra.mxu0 %v1130
  %1590 = vmatpush.bf16.msra.mxu0 %v1114
  %1591 = vmatpush.bf16.msra.mxu0 %v1098
  %1592 = vmatpush.bf16.msra.mxu0 %v1082
  %1593 = vmatpush.bf16.msra.mxu0 %v1066
  %1594 = vmatpush.bf16.msra.mxu0 %v1050
  %1595 = vmatmul.bf16.gmra.mxu0 %v277
  %v1596 = vpop.f32.mrf.mxu0
  %v1597 = vadd.f32 0.0, %v1596
  %v1598 = vpop.f32.mrf.mxu0
  %1599 = vdwg.mxu0
  %1600 = vmatpush.bf16.msra.mxu0 %v1290
  %1601 = vmatpush.bf16.msra.mxu0 %v1274
  %1602 = vmatpush.bf16.msra.mxu0 %v1258
  %1603 = vmatpush.bf16.msra.mxu0 %v1242
  %1604 = vmatpush.bf16.msra.mxu0 %v1226
  %1605 = vmatpush.bf16.msra.mxu0 %v1210
  %1606 = vmatpush.bf16.msra.mxu0 %v1194
  %1607 = vmatpush.bf16.msra.mxu0 %v1178
  %1608 = vmatmul.bf16.gmra.mxu0 %v278
  %v1609 = vpop.f32.mrf.mxu0
  %v1610 = vadd.f32 %v1597, %v1609
  %v1611 = vpop.f32.mrf.mxu0
  %1612 = vdwg.mxu0
  %1613 = vmatpush.bf16.msra.mxu0 %v1163
  %1614 = vmatpush.bf16.msra.mxu0 %v1147
  %1615 = vmatpush.bf16.msra.mxu0 %v1131
  %1616 = vmatpush.bf16.msra.mxu0 %v1115
  %1617 = vmatpush.bf16.msra.mxu0 %v1099
  %1618 = vmatpush.bf16.msra.mxu0 %v1083
  %1619 = vmatpush.bf16.msra.mxu0 %v1067
  %1620 = vmatpush.bf16.msra.mxu0 %v1051
  %1621 = vmatmul.bf16.gmra.mxu0 %v277
  %v1622 = vpop.f32.mrf.mxu0
  %v1623 = vadd.f32 0.0, %v1622
  %v1624 = vpop.f32.mrf.mxu0
  %1625 = vdwg.mxu0
  %1626 = vmatpush.bf16.msra.mxu0 %v1291
  %1627 = vmatpush.bf16.msra.mxu0 %v1275
  %1628 = vmatpush.bf16.msra.mxu0 %v1259
  %1629 = vmatpush.bf16.msra.mxu0 %v1243
  %1630 = vmatpush.bf16.msra.mxu0 %v1227
  %1631 = vmatpush.bf16.msra.mxu0 %v1211
  %1632 = vmatpush.bf16.msra.mxu0 %v1195
  %1633 = vmatpush.bf16.msra.mxu0 %v1179
  %1634 = vmatmul.bf16.gmra.mxu0 %v278
  %v1635 = vpop.f32.mrf.mxu0
  %v1636 = vadd.f32 %v1623, %v1635
  %v1637 = vpop.f32.mrf.mxu0
  %1638 = vdwg.mxu0
  %1639 = vmatpush.bf16.msra.mxu0 %v1164
  %1640 = vmatpush.bf16.msra.mxu0 %v1148
  %1641 = vmatpush.bf16.msra.mxu0 %v1132
  %1642 = vmatpush.bf16.msra.mxu0 %v1116
  %1643 = vmatpush.bf16.msra.mxu0 %v1100
  %1644 = vmatpush.bf16.msra.mxu0 %v1084
  %1645 = vmatpush.bf16.msra.mxu0 %v1068
  %1646 = vmatpush.bf16.msra.mxu0 %v1052
  %1647 = vmatmul.bf16.gmra.mxu0 %v277
  %v1648 = vpop.f32.mrf.mxu0
  %v1649 = vadd.f32 0.0, %v1648
  %v1650 = vpop.f32.mrf.mxu0
  %1651 = vdwg.mxu0
  %1652 = vmatpush.bf16.msra.mxu0 %v1292
  %1653 = vmatpush.bf16.msra.mxu0 %v1276
  %1654 = vmatpush.bf16.msra.mxu0 %v1260
  %1655 = vmatpush.bf16.msra.mxu0 %v1244
  %1656 = vmatpush.bf16.msra.mxu0 %v1228
  %1657 = vmatpush.bf16.msra.mxu0 %v1212
  %1658 = vmatpush.bf16.msra.mxu0 %v1196
  %1659 = vmatpush.bf16.msra.mxu0 %v1180
  %1660 = vmatmul.bf16.gmra.mxu0 %v278
  %v1661 = vpop.f32.mrf.mxu0
  %v1662 = vadd.f32 %v1649, %v1661
  %v1663 = vpop.f32.mrf.mxu0
  %1664 = vdwg.mxu0
  %1665 = vmatpush.bf16.msra.mxu0 %v1165
  %1666 = vmatpush.bf16.msra.mxu0 %v1149
  %1667 = vmatpush.bf16.msra.mxu0 %v1133
  %1668 = vmatpush.bf16.msra.mxu0 %v1117
  %1669 = vmatpush.bf16.msra.mxu0 %v1101
  %1670 = vmatpush.bf16.msra.mxu0 %v1085
  %1671 = vmatpush.bf16.msra.mxu0 %v1069
  %1672 = vmatpush.bf16.msra.mxu0 %v1053
  %1673 = vmatmul.bf16.gmra.mxu0 %v277
  %v1674 = vpop.f32.mrf.mxu0
  %v1675 = vadd.f32 0.0, %v1674
  %v1676 = vpop.f32.mrf.mxu0
  %1677 = vdwg.mxu0
  %1678 = vmatpush.bf16.msra.mxu0 %v1293
  %1679 = vmatpush.bf16.msra.mxu0 %v1277
  %1680 = vmatpush.bf16.msra.mxu0 %v1261
  %1681 = vmatpush.bf16.msra.mxu0 %v1245
  %1682 = vmatpush.bf16.msra.mxu0 %v1229
  %1683 = vmatpush.bf16.msra.mxu0 %v1213
  %1684 = vmatpush.bf16.msra.mxu0 %v1197
  %1685 = vmatpush.bf16.msra.mxu0 %v1181
  %1686 = vmatmul.bf16.gmra.mxu0 %v278
  %v1687 = vpop.f32.mrf.mxu0
  %v1688 = vadd.f32 %v1675, %v1687
  %v1689 = vpop.f32.mrf.mxu0
  %1690 = vdwg.mxu0
  %1691 = vmatpush.bf16.msra.mxu0 %v1166
  %1692 = vmatpush.bf16.msra.mxu0 %v1150
  %1693 = vmatpush.bf16.msra.mxu0 %v1134
  %1694 = vmatpush.bf16.msra.mxu0 %v1118
  %1695 = vmatpush.bf16.msra.mxu0 %v1102
  %1696 = vmatpush.bf16.msra.mxu0 %v1086
  %1697 = vmatpush.bf16.msra.mxu0 %v1070
  %1698 = vmatpush.bf16.msra.mxu0 %v1054
  %1699 = vmatmul.bf16.gmra.mxu0 %v277
  %v1700 = vpop.f32.mrf.mxu0
  %v1701 = vadd.f32 0.0, %v1700
  %v1702 = vpop.f32.mrf.mxu0
  %1703 = vdwg.mxu0
  %1704 = vmatpush.bf16.msra.mxu0 %v1294
  %1705 = vmatpush.bf16.msra.mxu0 %v1278
  %1706 = vmatpush.bf16.msra.mxu0 %v1262
  %1707 = vmatpush.bf16.msra.mxu0 %v1246
  %1708 = vmatpush.bf16.msra.mxu0 %v1230
  %1709 = vmatpush.bf16.msra.mxu0 %v1214
  %1710 = vmatpush.bf16.msra.mxu0 %v1198
  %1711 = vmatpush.bf16.msra.mxu0 %v1182
  %1712 = vmatmul.bf16.gmra.mxu0 %v278
  %v1713 = vpop.f32.mrf.mxu0
  %v1714 = vadd.f32 %v1701, %v1713
  %v1715 = vpop.f32.mrf.mxu0
  %1716 = vdwg.mxu0
  %1717 = vmatpush.bf16.msra.mxu0 %v1167
  %1718 = vmatpush.bf16.msra.mxu0 %v1151
  %1719 = vmatpush.bf16.msra.mxu0 %v1135
  %1720 = vmatpush.bf16.msra.mxu0 %v1119
  %1721 = vmatpush.bf16.msra.mxu0 %v1103
  %1722 = vmatpush.bf16.msra.mxu0 %v1087
  %1723 = vmatpush.bf16.msra.mxu0 %v1071
  %1724 = vmatpush.bf16.msra.mxu0 %v1055
  %1725 = vmatmul.bf16.gmra.mxu0 %v277
  %v1726 = vpop.f32.mrf.mxu0
  %v1727 = vadd.f32 0.0, %v1726
  %v1728 = vpop.f32.mrf.mxu0
  %1729 = vdwg.mxu0
  %1730 = vmatpush.bf16.msra.mxu0 %v1295
  %1731 = vmatpush.bf16.msra.mxu0 %v1279
  %1732 = vmatpush.bf16.msra.mxu0 %v1263
  %1733 = vmatpush.bf16.msra.mxu0 %v1247
  %1734 = vmatpush.bf16.msra.mxu0 %v1231
  %1735 = vmatpush.bf16.msra.mxu0 %v1215
  %1736 = vmatpush.bf16.msra.mxu0 %v1199
  %1737 = vmatpush.bf16.msra.mxu0 %v1183
  %1738 = vmatmul.bf16.gmra.mxu0 %v278
  %v1739 = vpop.f32.mrf.mxu0
  %v1740 = vadd.f32 %v1727, %v1739
  %v1741 = vpop.f32.mrf.mxu0
  %1742 = vdwg.mxu0
  %1743 = vmatpush.bf16.msra.mxu0 %v1168
  %1744 = vmatpush.bf16.msra.mxu0 %v1152
  %1745 = vmatpush.bf16.msra.mxu0 %v1136
  %1746 = vmatpush.bf16.msra.mxu0 %v1120
  %1747 = vmatpush.bf16.msra.mxu0 %v1104
  %1748 = vmatpush.bf16.msra.mxu0 %v1088
  %1749 = vmatpush.bf16.msra.mxu0 %v1072
  %1750 = vmatpush.bf16.msra.mxu0 %v1056
  %1751 = vmatmul.bf16.gmra.mxu0 %v277
  %v1752 = vpop.f32.mrf.mxu0
  %v1753 = vadd.f32 0.0, %v1752
  %v1754 = vpop.f32.mrf.mxu0
  %1755 = vdwg.mxu0
  %1756 = vmatpush.bf16.msra.mxu0 %v1296
  %1757 = vmatpush.bf16.msra.mxu0 %v1280
  %1758 = vmatpush.bf16.msra.mxu0 %v1264
  %1759 = vmatpush.bf16.msra.mxu0 %v1248
  %1760 = vmatpush.bf16.msra.mxu0 %v1232
  %1761 = vmatpush.bf16.msra.mxu0 %v1216
  %1762 = vmatpush.bf16.msra.mxu0 %v1200
  %1763 = vmatpush.bf16.msra.mxu0 %v1184
  %1764 = vmatmul.bf16.gmra.mxu0 %v278
  %v1765 = vpop.f32.mrf.mxu0
  %v1766 = vadd.f32 %v1753, %v1765
  %v1767 = vpop.f32.mrf.mxu0
  %1768 = vdwg.mxu0
  %1769 = vmatpush.bf16.msra.mxu0 %v1169
  %1770 = vmatpush.bf16.msra.mxu0 %v1153
  %1771 = vmatpush.bf16.msra.mxu0 %v1137
  %1772 = vmatpush.bf16.msra.mxu0 %v1121
  %1773 = vmatpush.bf16.msra.mxu0 %v1105
  %1774 = vmatpush.bf16.msra.mxu0 %v1089
  %1775 = vmatpush.bf16.msra.mxu0 %v1073
  %1776 = vmatpush.bf16.msra.mxu0 %v1057
  %1777 = vmatmul.bf16.gmra.mxu0 %v277
  %v1778 = vpop.f32.mrf.mxu0
  %v1779 = vadd.f32 0.0, %v1778
  %v1780 = vpop.f32.mrf.mxu0
  %1781 = vdwg.mxu0
  %1782 = vmatpush.bf16.msra.mxu0 %v1297
  %1783 = vmatpush.bf16.msra.mxu0 %v1281
  %1784 = vmatpush.bf16.msra.mxu0 %v1265
  %1785 = vmatpush.bf16.msra.mxu0 %v1249
  %1786 = vmatpush.bf16.msra.mxu0 %v1233
  %1787 = vmatpush.bf16.msra.mxu0 %v1217
  %1788 = vmatpush.bf16.msra.mxu0 %v1201
  %1789 = vmatpush.bf16.msra.mxu0 %v1185
  %1790 = vmatmul.bf16.gmra.mxu0 %v278
  %v1791 = vpop.f32.mrf.mxu0
  %v1792 = vadd.f32 %v1779, %v1791
  %v1793 = vpop.f32.mrf.mxu0
  %1794 = vdwg.mxu0
  %1795 = vmatpush.bf16.msra.mxu0 %v1170
  %1796 = vmatpush.bf16.msra.mxu0 %v1154
  %1797 = vmatpush.bf16.msra.mxu0 %v1138
  %1798 = vmatpush.bf16.msra.mxu0 %v1122
  %1799 = vmatpush.bf16.msra.mxu0 %v1106
  %1800 = vmatpush.bf16.msra.mxu0 %v1090
  %1801 = vmatpush.bf16.msra.mxu0 %v1074
  %1802 = vmatpush.bf16.msra.mxu0 %v1058
  %1803 = vmatmul.bf16.gmra.mxu0 %v277
  %v1804 = vpop.f32.mrf.mxu0
  %v1805 = vadd.f32 0.0, %v1804
  %v1806 = vpop.f32.mrf.mxu0
  %1807 = vdwg.mxu0
  %1808 = vmatpush.bf16.msra.mxu0 %v1298
  %1809 = vmatpush.bf16.msra.mxu0 %v1282
  %1810 = vmatpush.bf16.msra.mxu0 %v1266
  %1811 = vmatpush.bf16.msra.mxu0 %v1250
  %1812 = vmatpush.bf16.msra.mxu0 %v1234
  %1813 = vmatpush.bf16.msra.mxu0 %v1218
  %1814 = vmatpush.bf16.msra.mxu0 %v1202
  %1815 = vmatpush.bf16.msra.mxu0 %v1186
  %1816 = vmatmul.bf16.gmra.mxu0 %v278
  %v1817 = vpop.f32.mrf.mxu0
  %v1818 = vadd.f32 %v1805, %v1817
  %v1819 = vpop.f32.mrf.mxu0
  %1820 = vdwg.mxu0
  %1821 = vmatpush.bf16.msra.mxu0 %v1171
  %1822 = vmatpush.bf16.msra.mxu0 %v1155
  %1823 = vmatpush.bf16.msra.mxu0 %v1139
  %1824 = vmatpush.bf16.msra.mxu0 %v1123
  %1825 = vmatpush.bf16.msra.mxu0 %v1107
  %1826 = vmatpush.bf16.msra.mxu0 %v1091
  %1827 = vmatpush.bf16.msra.mxu0 %v1075
  %1828 = vmatpush.bf16.msra.mxu0 %v1059
  %1829 = vmatmul.bf16.gmra.mxu0 %v277
  %v1830 = vpop.f32.mrf.mxu0
  %v1831 = vadd.f32 0.0, %v1830
  %v1832 = vpop.f32.mrf.mxu0
  %1833 = vdwg.mxu0
  %1834 = vmatpush.bf16.msra.mxu0 %v1299
  %1835 = vmatpush.bf16.msra.mxu0 %v1283
  %1836 = vmatpush.bf16.msra.mxu0 %v1267
  %1837 = vmatpush.bf16.msra.mxu0 %v1251
  %1838 = vmatpush.bf16.msra.mxu0 %v1235
  %1839 = vmatpush.bf16.msra.mxu0 %v1219
  %1840 = vmatpush.bf16.msra.mxu0 %v1203
  %1841 = vmatpush.bf16.msra.mxu0 %v1187
  %1842 = vmatmul.bf16.gmra.mxu0 %v278
  %v1843 = vpop.f32.mrf.mxu0
  %v1844 = vadd.f32 %v1831, %v1843
  %v1845 = vpop.f32.mrf.mxu0
  %1846 = vdwg.mxu0
  %1847 = vmatpush.bf16.msra.mxu0 %v1172
  %1848 = vmatpush.bf16.msra.mxu0 %v1156
  %1849 = vmatpush.bf16.msra.mxu0 %v1140
  %1850 = vmatpush.bf16.msra.mxu0 %v1124
  %1851 = vmatpush.bf16.msra.mxu0 %v1108
  %1852 = vmatpush.bf16.msra.mxu0 %v1092
  %1853 = vmatpush.bf16.msra.mxu0 %v1076
  %1854 = vmatpush.bf16.msra.mxu0 %v1060
  %1855 = vmatmul.bf16.gmra.mxu0 %v277
  %v1856 = vpop.f32.mrf.mxu0
  %v1857 = vadd.f32 0.0, %v1856
  %v1858 = vpop.f32.mrf.mxu0
  %1859 = vdwg.mxu0
  %1860 = vmatpush.bf16.msra.mxu0 %v1300
  %1861 = vmatpush.bf16.msra.mxu0 %v1284
  %1862 = vmatpush.bf16.msra.mxu0 %v1268
  %1863 = vmatpush.bf16.msra.mxu0 %v1252
  %1864 = vmatpush.bf16.msra.mxu0 %v1236
  %1865 = vmatpush.bf16.msra.mxu0 %v1220
  %1866 = vmatpush.bf16.msra.mxu0 %v1204
  %1867 = vmatpush.bf16.msra.mxu0 %v1188
  %1868 = vmatmul.bf16.gmra.mxu0 %v278
  %v1869 = vpop.f32.mrf.mxu0
  %v1870 = vadd.f32 %v1857, %v1869
  %v1871 = vpop.f32.mrf.mxu0
  %1872 = vdwg.mxu0
  %1873 = vmatpush.bf16.msra.mxu0 %v1173
  %1874 = vmatpush.bf16.msra.mxu0 %v1157
  %1875 = vmatpush.bf16.msra.mxu0 %v1141
  %1876 = vmatpush.bf16.msra.mxu0 %v1125
  %1877 = vmatpush.bf16.msra.mxu0 %v1109
  %1878 = vmatpush.bf16.msra.mxu0 %v1093
  %1879 = vmatpush.bf16.msra.mxu0 %v1077
  %1880 = vmatpush.bf16.msra.mxu0 %v1061
  %1881 = vmatmul.bf16.gmra.mxu0 %v277
  %v1882 = vpop.f32.mrf.mxu0
  %v1883 = vadd.f32 0.0, %v1882
  %v1884 = vpop.f32.mrf.mxu0
  %1885 = vdwg.mxu0
  %1886 = vmatpush.bf16.msra.mxu0 %v1301
  %1887 = vmatpush.bf16.msra.mxu0 %v1285
  %1888 = vmatpush.bf16.msra.mxu0 %v1269
  %1889 = vmatpush.bf16.msra.mxu0 %v1253
  %1890 = vmatpush.bf16.msra.mxu0 %v1237
  %1891 = vmatpush.bf16.msra.mxu0 %v1221
  %1892 = vmatpush.bf16.msra.mxu0 %v1205
  %1893 = vmatpush.bf16.msra.mxu0 %v1189
  %1894 = vmatmul.bf16.gmra.mxu0 %v278
  %v1895 = vpop.f32.mrf.mxu0
  %v1896 = vadd.f32 %v1883, %v1895
  %v1897 = vpop.f32.mrf.mxu0
  %1898 = vdwg.mxu0
  %1899 = vmatpush.bf16.msra.mxu0 %v1174
  %1900 = vmatpush.bf16.msra.mxu0 %v1158
  %1901 = vmatpush.bf16.msra.mxu0 %v1142
  %1902 = vmatpush.bf16.msra.mxu0 %v1126
  %1903 = vmatpush.bf16.msra.mxu0 %v1110
  %1904 = vmatpush.bf16.msra.mxu0 %v1094
  %1905 = vmatpush.bf16.msra.mxu0 %v1078
  %1906 = vmatpush.bf16.msra.mxu0 %v1062
  %1907 = vmatmul.bf16.gmra.mxu0 %v277
  %v1908 = vpop.f32.mrf.mxu0
  %v1909 = vadd.f32 0.0, %v1908
  %v1910 = vpop.f32.mrf.mxu0
  %1911 = vdwg.mxu0
  %1912 = vmatpush.bf16.msra.mxu0 %v1302
  %1913 = vmatpush.bf16.msra.mxu0 %v1286
  %1914 = vmatpush.bf16.msra.mxu0 %v1270
  %1915 = vmatpush.bf16.msra.mxu0 %v1254
  %1916 = vmatpush.bf16.msra.mxu0 %v1238
  %1917 = vmatpush.bf16.msra.mxu0 %v1222
  %1918 = vmatpush.bf16.msra.mxu0 %v1206
  %1919 = vmatpush.bf16.msra.mxu0 %v1190
  %1920 = vmatmul.bf16.gmra.mxu0 %v278
  %v1921 = vpop.f32.mrf.mxu0
  %v1922 = vadd.f32 %v1909, %v1921
  %v1923 = vpop.f32.mrf.mxu0
  %1924 = vdwg.mxu0
  %1925 = vmatpush.bf16.msra.mxu0 %v1175
  %1926 = vmatpush.bf16.msra.mxu0 %v1159
  %1927 = vmatpush.bf16.msra.mxu0 %v1143
  %1928 = vmatpush.bf16.msra.mxu0 %v1127
  %1929 = vmatpush.bf16.msra.mxu0 %v1111
  %1930 = vmatpush.bf16.msra.mxu0 %v1095
  %1931 = vmatpush.bf16.msra.mxu0 %v1079
  %1932 = vmatpush.bf16.msra.mxu0 %v1063
  %1933 = vmatmul.bf16.gmra.mxu0 %v277
  %v1934 = vpop.f32.mrf.mxu0
  %v1935 = vadd.f32 0.0, %v1934
  %v1936 = vpop.f32.mrf.mxu0
  %1937 = vdwg.mxu0
  %1938 = vmatpush.bf16.msra.mxu0 %v1303
  %1939 = vmatpush.bf16.msra.mxu0 %v1287
  %1940 = vmatpush.bf16.msra.mxu0 %v1271
  %1941 = vmatpush.bf16.msra.mxu0 %v1255
  %1942 = vmatpush.bf16.msra.mxu0 %v1239
  %1943 = vmatpush.bf16.msra.mxu0 %v1223
  %1944 = vmatpush.bf16.msra.mxu0 %v1207
  %1945 = vmatpush.bf16.msra.mxu0 %v1191
  %1946 = vmatmul.bf16.gmra.mxu0 %v278
  %v1947 = vpop.f32.mrf.mxu0
  %v1948 = vadd.f32 %v1935, %v1947
  %v1949 = vpop.f32.mrf.mxu0
  %1950 = vdwg.mxu0
  %1951 = vmatpush.bf16.msra.mxu0 %v1176
  %1952 = vmatpush.bf16.msra.mxu0 %v1160
  %1953 = vmatpush.bf16.msra.mxu0 %v1144
  %1954 = vmatpush.bf16.msra.mxu0 %v1128
  %1955 = vmatpush.bf16.msra.mxu0 %v1112
  %1956 = vmatpush.bf16.msra.mxu0 %v1096
  %1957 = vmatpush.bf16.msra.mxu0 %v1080
  %1958 = vmatpush.bf16.msra.mxu0 %v1064
  %1959 = vmatmul.bf16.gmra.mxu0 %v277
  %v1960 = vpop.f32.mrf.mxu0
  %v1961 = vadd.f32 0.0, %v1960
  %v1962 = vpop.f32.mrf.mxu0
  %1963 = vdwg.mxu0
  %1964 = vmatpush.bf16.msra.mxu0 %v1304
  %1965 = vmatpush.bf16.msra.mxu0 %v1288
  %1966 = vmatpush.bf16.msra.mxu0 %v1272
  %1967 = vmatpush.bf16.msra.mxu0 %v1256
  %1968 = vmatpush.bf16.msra.mxu0 %v1240
  %1969 = vmatpush.bf16.msra.mxu0 %v1224
  %1970 = vmatpush.bf16.msra.mxu0 %v1208
  %1971 = vmatpush.bf16.msra.mxu0 %v1192
  %1972 = vmatmul.bf16.gmra.mxu0 %v278
  %v1973 = vpop.f32.mrf.mxu0
  %v1974 = vadd.f32 %v1961, %v1973
  %v1975 = vpop.f32.mrf.mxu0
  %1976 = vdwg.mxu0
  %v1977 = vadd.f32 %v1584, %v1610
  %v1978 = vadd.f32 %v1977, %v1636
  %v1979 = vadd.f32 %v1978, %v1662
  %v1980 = vadd.f32 %v1979, %v1688
  %v1981 = vadd.f32 %v1980, %v1714
  %v1982 = vadd.f32 %v1981, %v1740
  %v1983 = vadd.f32 %v1982, %v1766
  %v1984 = vadd.f32 %v1983, %v1792
  %v1985 = vadd.f32 %v1984, %v1818
  %v1986 = vadd.f32 %v1985, %v1844
  %v1987 = vadd.f32 %v1986, %v1870
  %v1988 = vadd.f32 %v1987, %v1896
  %v1989 = vadd.f32 %v1988, %v1922
  %v1990 = vadd.f32 %v1989, %v1948
  %v1991 = vadd.f32 %v1990, %v1974
  %1992 = vadd.xlane.f32.xlu0 %v1991
  %v1993 = vpop.xlane.xlu0 %1992
  %v1994 = vrcp.pop 2048.0
  %v1995 = vmul.f32 2048.0, %v1994
  %v1996 = vsub.f32 1.0, %v1995
  %v1997 = vmul.f32 %v1994, %v1996
  %v1998 = vadd.f32 %v1994, %v1997
  %vm1999 = vweird.f32 %v1994
  %v2000 = vsel %vm1999, %v1994, %v1998
  %v2001 = vmul.f32 %v1993, %v2000
  %v2002 = vmul.f32 %v1584, %v1584
  %v2003 = vmul.f32 %v1610, %v1610
  %v2004 = vmul.f32 %v1636, %v1636
  %v2005 = vmul.f32 %v1662, %v1662
  %v2006 = vmul.f32 %v1688, %v1688
  %v2007 = vmul.f32 %v1714, %v1714
  %v2008 = vmul.f32 %v1740, %v1740
  %v2009 = vmul.f32 %v1766, %v1766
  %v2010 = vmul.f32 %v1792, %v1792
  %v2011 = vmul.f32 %v1818, %v1818
  %v2012 = vmul.f32 %v1844, %v1844
  %v2013 = vmul.f32 %v1870, %v1870
  %v2014 = vmul.f32 %v1896, %v1896
  %v2015 = vmul.f32 %v1922, %v1922
  %v2016 = vmul.f32 %v1948, %v1948
  %v2017 = vmul.f32 %v1974, %v1974
  %v2018 = vadd.f32 %v2002, %v2003
  %v2019 = vadd.f32 %v2018, %v2004
  %v2020 = vadd.f32 %v2019, %v2005
  %v2021 = vadd.f32 %v2020, %v2006
  %v2022 = vadd.f32 %v2021, %v2007
  %v2023 = vadd.f32 %v2022, %v2008
  %v2024 = vadd.f32 %v2023, %v2009
  %v2025 = vadd.f32 %v2024, %v2010
  %v2026 = vadd.f32 %v2025, %v2011
  %v2027 = vadd.f32 %v2026, %v2012
  %v2028 = vadd.f32 %v2027, %v2013
  %v2029 = vadd.f32 %v2028, %v2014
  %v2030 = vadd.f32 %v2029, %v2015
  %v2031 = vadd.f32 %v2030, %v2016
  %v2032 = vadd.f32 %v2031, %v2017
  %2033 = vadd.xlane.f32.xlu0 %v2032
  %v2034 = vpop.xlane.xlu0 %2033
  %v2035 = vmul.f32 %v2034, %v2000
  %v2036 = vmul.f32 %v2001, %v2001
  %v2037 = vsub.f32 %v2035, %v2036
  %v2038 = vld [vmem:[%s2] sm:$0xff]
  %v2039 = vadd.f32 %v2037, 1e-05
  %v2040 = vrsqrt.pop %v2039
  %v2041 = vmul.f32 %v2040, %v2039
  %v2042 = vmul.f32 %v2041, %v2040
  %v2043 = vmul.f32 0.5, %v2042
  %v2044 = vsub.f32 1.5, %v2043
  %v2045 = vmul.f32 %v2040, %v2044
  %vm2046 = vweird.f32 %v2039
  %vm2047 = vweird.f32 %v2040
  %vm2048 = vmor %vm2046, %vm2047
  %v2049 = vsel %vm2048, %v2040, %v2045
  %v2050 = vmul.f32 %v2038, %v2049
  %v2051 = vld [vmem:[%s3] sm:$0xff]
  %v2052 = vmul.f32 %v2001, %v2050
  %v2053 = vsub.f32 %v2051, %v2052
  %2055 = vset.pattern.permute.xlu0 0
  %2056 = vperm.xlu0 %2055, %v2050
  %v2057 = vpop.permute.xlu0 %2056
  %v2059 = vmul.f32 %v1584, %v2057
  %v2060 = vmul.f32 %v1610, %v2057
  %v2061 = vmul.f32 %v1636, %v2057
  %v2062 = vmul.f32 %v1662, %v2057
  %v2063 = vmul.f32 %v1688, %v2057
  %v2064 = vmul.f32 %v1714, %v2057
  %v2065 = vmul.f32 %v1740, %v2057
  %v2066 = vmul.f32 %v1766, %v2057
  %v2067 = vmul.f32 %v1792, %v2057
  %v2068 = vmul.f32 %v1818, %v2057
  %v2069 = vmul.f32 %v1844, %v2057
  %v2070 = vmul.f32 %v1870, %v2057
  %v2071 = vmul.f32 %v1896, %v2057
  %v2072 = vmul.f32 %v1922, %v2057
  %v2073 = vmul.f32 %v1948, %v2057
  %v2074 = vmul.f32 %v1974, %v2057
  %2076 = vset.pattern.permute.xlu0 0
  %2077 = vperm.xlu0 %2076, %v2053
  %v2078 = vpop.permute.xlu0 %2077
  %v2080 = vadd.f32 %v2059, %v2078
  %v2081 = vadd.f32 %v2060, %v2078
  %v2082 = vadd.f32 %v2061, %v2078
  %v2083 = vadd.f32 %v2062, %v2078
  %v2084 = vadd.f32 %v2063, %v2078
  %v2085 = vadd.f32 %v2064, %v2078
  %v2086 = vadd.f32 %v2065, %v2078
  %v2087 = vadd.f32 %v2066, %v2078
  %v2088 = vadd.f32 %v2067, %v2078
  %v2089 = vadd.f32 %v2068, %v2078
  %v2090 = vadd.f32 %v2069, %v2078
  %v2091 = vadd.f32 %v2070, %v2078
  %v2092 = vadd.f32 %v2071, %v2078
  %v2093 = vadd.f32 %v2072, %v2078
  %v2094 = vadd.f32 %v2073, %v2078
  %v2095 = vadd.f32 %v2074, %v2078
  %v2096 = vmax.f32 %v2080, 0.0
  %v2097 = vmax.f32 %v2081, 0.0
  %v2098 = vmax.f32 %v2082, 0.0
  %v2099 = vmax.f32 %v2083, 0.0
  %v2100 = vmax.f32 %v2084, 0.0
  %v2101 = vmax.f32 %v2085, 0.0
  %v2102 = vmax.f32 %v2086, 0.0
  %v2103 = vmax.f32 %v2087, 0.0
  %v2104 = vmax.f32 %v2088, 0.0
  %v2105 = vmax.f32 %v2089, 0.0
  %v2106 = vmax.f32 %v2090, 0.0
  %v2107 = vmax.f32 %v2091, 0.0
  %v2108 = vmax.f32 %v2092, 0.0
  %v2109 = vmax.f32 %v2093, 0.0
  %v2110 = vmax.f32 %v2094, 0.0
  %v2111 = vmax.f32 %v2095, 0.0
  %2112 = vst [vmem:[%s4] sm:$0xff] %v2096
  %2113 = vst [vmem:[%s4 + $0x8] sm:$0xff] %v2097
  %2114 = vst [vmem:[%s4 + $0x10] sm:$0xff] %v2098
  %2115 = vst [vmem:[%s4 + $0x18] sm:$0xff] %v2099
  %2116 = vst [vmem:[%s4 + $0x20] sm:$0xff] %v2100
  %2117 = vst [vmem:[%s4 + $0x28] sm:$0xff] %v2101
  %2118 = vst [vmem:[%s4 + $0x30] sm:$0xff] %v2102
  %2119 = vst [vmem:[%s4 + $0x38] sm:$0xff] %v2103
  %2120 = vst [vmem:[%s4 + $0x40] sm:$0xff] %v2104
  %2121 = vst [vmem:[%s4 + $0x48] sm:$0xff] %v2105
  %2122 = vst [vmem:[%s4 + $0x50] sm:$0xff] %v2106
  %2123 = vst [vmem:[%s4 + $0x58] sm:$0xff] %v2107
  %2124 = vst [vmem:[%s4 + $0x60] sm:$0xff] %v2108
  %2125 = vst [vmem:[%s4 + $0x68] sm:$0xff] %v2109
  %2126 = vst [vmem:[%s4 + $0x70] sm:$0xff] %v2110
  %2127 = vst [vmem:[%s4 + $0x78] sm:$0xff] %v2111
  // Predicated region
  $region18: #{_lambda_.9} parent=0 // pred_check
    _
  $region19: #{_lambda_.9} parent=0 // pred_check_branch
    %2129 = sbr.rel (0) target = $region21
  $region20: #{_lambda_.9} parent=0 // pred_region
    _
  $region21: #{_lambda_.9} parent=0 // pred_fallthru
    _
  // Predicated region
  $region22: #{_lambda_.9} parent=0 // pred_check
    _
  $region23: #{_lambda_.9} parent=0 // pred_check_branch
    %2131 = sbr.rel (0) target = $region25
  $region24: #{_lambda_.9} parent=0 // pred_region
    _
  $region25: #{_lambda_.9} parent=0 // pred_fallthru
    _

// kernel: _lambda_.10
$region0: #{_lambda_.10}
  #allocation0 [shape = 'u32[]', space=smem, size = 0x4, offset = 0x4, fixed_abs, tag = 'smem constant byte address 0x4 - core index']
  #allocation1 [shape = 'u32[72,128]{1,0:T(1,128)}', space=vmem, size = 0x9000, scoped, tag = 'internal scratch']
  %s0 = inlined_call_operand.vmem [shape: bf16[8,128], index: 0, kind: input, shape index: {}]
  %s1 = inlined_call_operand.vmem [shape: bf16[128,8192], index: 1, kind: input, shape index: {}]
  %s2 = inlined_call_operand.vmem [shape: f32[8,1], index: 2, kind: input, shape index: {}]
  %s3 = inlined_call_operand.vmem [shape: f32[8,1], index: 3, kind: input, shape index: {}]
  %s4 = inlined_call_operand.vmem [shape: f32[8,8192], index: 4, kind: output, shape index: {}]
  %s5 = sld [smem:[#allocation0]]
  $region26: #{_lambda_.10} parent=0
    _
  %s7 = ssub.s32 1, %s5
  %s8 = scalar_select 0, %s7, %s5
  // Predicated region
  $region2: #{_lambda_.10} parent=0 // pred_check
    _
  $region3: #{_lambda_.10} parent=0 // pred_check_branch
    %10 = sbr.rel (0) target = $region5
  $region4: #{_lambda_.10} parent=0 // pred_region
    _
  $region5: #{_lambda_.10} parent=0 // pred_fallthru
    _
  // Predicated region
  $region6: #{_lambda_.10} parent=0 // pred_check
    _
  $region7: #{_lambda_.10} parent=0 // pred_check_branch
    %12 = sbr.rel (0) target = $region9
  $region8: #{_lambda_.10} parent=0 // pred_region
    _
  $region9: #{_lambda_.10} parent=0 // pred_fallthru
    _
  // Predicated region
  $region10: #{_lambda_.10} parent=0 // pred_check
    _
  $region11: #{_lambda_.10} parent=0 // pred_check_branch
    %14 = sbr.rel (0) target = $region13
  $region12: #{_lambda_.10} parent=0 // pred_region
    _
  $region13: #{_lambda_.10} parent=0 // pred_fallthru
    _
  // Predicated region
  $region14: #{_lambda_.10} parent=0 // pred_check
    _
  $region15: #{_lambda_.10} parent=0 // pred_check_branch
    %16 = sbr.rel (0) target = $region17
  $region16: #{_lambda_.10} parent=0 // pred_region
    _
  $region17: #{_lambda_.10} parent=0 // pred_fallthru
    _
  %v17 = vld [vmem:[%s0] sm:$0xf]
  %v18 = vld [vmem:[%s1] sm:$0xff]
  %v19 = vld [vmem:[%s1 + $0x8] sm:$0xff]
  %v20 = vld [vmem:[%s1 + $0x10] sm:$0xff]
  %v21 = vld [vmem:[%s1 + $0x18] sm:$0xff]
  %v22 = vld [vmem:[%s1 + $0x20] sm:$0xff]
  %v23 = vld [vmem:[%s1 + $0x28] sm:$0xff]
  %v24 = vld [vmem:[%s1 + $0x30] sm:$0xff]
  %v25 = vld [vmem:[%s1 + $0x38] sm:$0xff]
  %v26 = vld [vmem:[%s1 + $0x40] sm:$0xff]
  %v27 = vld [vmem:[%s1 + $0x48] sm:$0xff]
  %v28 = vld [vmem:[%s1 + $0x50] sm:$0xff]
  %v29 = vld [vmem:[%s1 + $0x58] sm:$0xff]
  %v30 = vld [vmem:[%s1 + $0x60] sm:$0xff]
  %v31 = vld [vmem:[%s1 + $0x68] sm:$0xff]
  %v32 = vld [vmem:[%s1 + $0x70] sm:$0xff]
  %v33 = vld [vmem:[%s1 + $0x78] sm:$0xff]
  %v34 = vld [vmem:[%s1 + $0x80] sm:$0xff]
  %v35 = vld [vmem:[%s1 + $0x88] sm:$0xff]
  %v36 = vld [vmem:[%s1 + $0x90] sm:$0xff]
  %v37 = vld [vmem:[%s1 + $0x98] sm:$0xff]
  %v38 = vld [vmem:[%s1 + $0xa0] sm:$0xff]
  %v39 = vld [vmem:[%s1 + $0xa8] sm:$0xff]
  %v40 = vld [vmem:[%s1 + $0xb0] sm:$0xff]
  %v41 = vld [vmem:[%s1 + $0xb8] sm:$0xff]
  %v42 = vld [vmem:[%s1 + $0xc0] sm:$0xff]
  %v43 = vld [vmem:[%s1 + $0xc8] sm:$0xff]
  %v44 = vld [vmem:[%s1 + $0xd0] sm:$0xff]
  %v45 = vld [vmem:[%s1 + $0xd8] sm:$0xff]
  %v46 = vld [vmem:[%s1 + $0xe0] sm:$0xff]
  %v47 = vld [vmem:[%s1 + $0xe8] sm:$0xff]
  %v48 = vld [vmem:[%s1 + $0xf0] sm:$0xff]
  %v49 = vld [vmem:[%s1 + $0xf8] sm:$0xff]
  %v50 = vld [vmem:[%s1 + $0x100] sm:$0xff]
  %v51 = vld [vmem:[%s1 + $0x108] sm:$0xff]
  %v52 = vld [vmem:[%s1 + $0x110] sm:$0xff]
  %v53 = vld [vmem:[%s1 + $0x118] sm:$0xff]
  %v54 = vld [vmem:[%s1 + $0x120] sm:$0xff]
  %v55 = vld [vmem:[%s1 + $0x128] sm:$0xff]
  %v56 = vld [vmem:[%s1 + $0x130] sm:$0xff]
  %v57 = vld [vmem:[%s1 + $0x138] sm:$0xff]
  %v58 = vld [vmem:[%s1 + $0x140] sm:$0xff]
  %v59 = vld [vmem:[%s1 + $0x148] sm:$0xff]
  %v60 = vld [vmem:[%s1 + $0x150] sm:$0xff]
  %v61 = vld [vmem:[%s1 + $0x158] sm:$0xff]
  %v62 = vld [vmem:[%s1 + $0x160] sm:$0xff]
  %v63 = vld [vmem:[%s1 + $0x168] sm:$0xff]
  %v64 = vld [vmem:[%s1 + $0x170] sm:$0xff]
  %v65 = vld [vmem:[%s1 + $0x178] sm:$0xff]
  %v66 = vld [vmem:[%s1 + $0x180] sm:$0xff]
  %v67 = vld [vmem:[%s1 + $0x188] sm:$0xff]
  %v68 = vld [vmem:[%s1 + $0x190] sm:$0xff]
  %v69 = vld [vmem:[%s1 + $0x198] sm:$0xff]
  %v70 = vld [vmem:[%s1 + $0x1a0] sm:$0xff]
  %v71 = vld [vmem:[%s1 + $0x1a8] sm:$0xff]
  %v72 = vld [vmem:[%s1 + $0x1b0] sm:$0xff]
  %v73 = vld [vmem:[%s1 + $0x1b8] sm:$0xff]
  %v74 = vld [vmem:[%s1 + $0x1c0] sm:$0xff]
  %v75 = vld [vmem:[%s1 + $0x1c8] sm:$0xff]
  %v76 = vld [vmem:[%s1 + $0x1d0] sm:$0xff]
  %v77 = vld [vmem:[%s1 + $0x1d8] sm:$0xff]
  %v78 = vld [vmem:[%s1 + $0x1e0] sm:$0xff]
  %v79 = vld [vmem:[%s1 + $0x1e8] sm:$0xff]
  %v80 = vld [vmem:[%s1 + $0x1f0] sm:$0xff]
  %v81 = vld [vmem:[%s1 + $0x1f8] sm:$0xff]
  %v82 = vld [vmem:[%s1 + $0x200] sm:$0xff]
  %v83 = vld [vmem:[%s1 + $0x208] sm:$0xff]
  %v84 = vld [vmem:[%s1 + $0x210] sm:$0xff]
  %v85 = vld [vmem:[%s1 + $0x218] sm:$0xff]
  %v86 = vld [vmem:[%s1 + $0x220] sm:$0xff]
  %v87 = vld [vmem:[%s1 + $0x228] sm:$0xff]
  %v88 = vld [vmem:[%s1 + $0x230] sm:$0xff]
  %v89 = vld [vmem:[%s1 + $0x238] sm:$0xff]
  %v90 = vld [vmem:[%s1 + $0x240] sm:$0xff]
  %v91 = vld [vmem:[%s1 + $0x248] sm:$0xff]
  %v92 = vld [vmem:[%s1 + $0x250] sm:$0xff]
  %v93 = vld [vmem:[%s1 + $0x258] sm:$0xff]
  %v94 = vld [vmem:[%s1 + $0x260] sm:$0xff]
  %v95 = vld [vmem:[%s1 + $0x268] sm:$0xff]
  %v96 = vld [vmem:[%s1 + $0x270] sm:$0xff]
  %v97 = vld [vmem:[%s1 + $0x278] sm:$0xff]
  %v98 = vld [vmem:[%s1 + $0x280] sm:$0xff]
  %v99 = vld [vmem:[%s1 + $0x288] sm:$0xff]
  %v100 = vld [vmem:[%s1 + $0x290] sm:$0xff]
  %v101 = vld [vmem:[%s1 + $0x298] sm:$0xff]
  %v102 = vld [vmem:[%s1 + $0x2a0] sm:$0xff]
  %v103 = vld [vmem:[%s1 + $0x2a8] sm:$0xff]
  %v104 = vld [vmem:[%s1 + $0x2b0] sm:$0xff]
  %v105 = vld [vmem:[%s1 + $0x2b8] sm:$0xff]
  %v106 = vld [vmem:[%s1 + $0x2c0] sm:$0xff]
  %v107 = vld [vmem:[%s1 + $0x2c8] sm:$0xff]
  %v108 = vld [vmem:[%s1 + $0x2d0] sm:$0xff]
  %v109 = vld [vmem:[%s1 + $0x2d8] sm:$0xff]
  %v110 = vld [vmem:[%s1 + $0x2e0] sm:$0xff]
  %v111 = vld [vmem:[%s1 + $0x2e8] sm:$0xff]
  %v112 = vld [vmem:[%s1 + $0x2f0] sm:$0xff]
  %v113 = vld [vmem:[%s1 + $0x2f8] sm:$0xff]
  %v114 = vld [vmem:[%s1 + $0x300] sm:$0xff]
  %v115 = vld [vmem:[%s1 + $0x308] sm:$0xff]
  %v116 = vld [vmem:[%s1 + $0x310] sm:$0xff]
  %v117 = vld [vmem:[%s1 + $0x318] sm:$0xff]
  %v118 = vld [vmem:[%s1 + $0x320] sm:$0xff]
  %v119 = vld [vmem:[%s1 + $0x328] sm:$0xff]
  %v120 = vld [vmem:[%s1 + $0x330] sm:$0xff]
  %v121 = vld [vmem:[%s1 + $0x338] sm:$0xff]
  %v122 = vld [vmem:[%s1 + $0x340] sm:$0xff]
  %v123 = vld [vmem:[%s1 + $0x348] sm:$0xff]
  %v124 = vld [vmem:[%s1 + $0x350] sm:$0xff]
  %v125 = vld [vmem:[%s1 + $0x358] sm:$0xff]
  %v126 = vld [vmem:[%s1 + $0x360] sm:$0xff]
  %v127 = vld [vmem:[%s1 + $0x368] sm:$0xff]
  %v128 = vld [vmem:[%s1 + $0x370] sm:$0xff]
  %v129 = vld [vmem:[%s1 + $0x378] sm:$0xff]
  %v130 = vld [vmem:[%s1 + $0x380] sm:$0xff]
  %v131 = vld [vmem:[%s1 + $0x388] sm:$0xff]
  %v132 = vld [vmem:[%s1 + $0x390] sm:$0xff]
  %v133 = vld [vmem:[%s1 + $0x398] sm:$0xff]
  %v134 = vld [vmem:[%s1 + $0x3a0] sm:$0xff]
  %v135 = vld [vmem:[%s1 + $0x3a8] sm:$0xff]
  %v136 = vld [vmem:[%s1 + $0x3b0] sm:$0xff]
  %v137 = vld [vmem:[%s1 + $0x3b8] sm:$0xff]
  %v138 = vld [vmem:[%s1 + $0x3c0] sm:$0xff]
  %v139 = vld [vmem:[%s1 + $0x3c8] sm:$0xff]
  %v140 = vld [vmem:[%s1 + $0x3d0] sm:$0xff]
  %v141 = vld [vmem:[%s1 + $0x3d8] sm:$0xff]
  %v142 = vld [vmem:[%s1 + $0x3e0] sm:$0xff]
  %v143 = vld [vmem:[%s1 + $0x3e8] sm:$0xff]
  %v144 = vld [vmem:[%s1 + $0x3f0] sm:$0xff]
  %v145 = vld [vmem:[%s1 + $0x3f8] sm:$0xff]
  %v146 = vld [vmem:[%s1 + $0x400] sm:$0xff]
  %v147 = vld [vmem:[%s1 + $0x408] sm:$0xff]
  %v148 = vld [vmem:[%s1 + $0x410] sm:$0xff]
  %v149 = vld [vmem:[%s1 + $0x418] sm:$0xff]
  %v150 = vld [vmem:[%s1 + $0x420] sm:$0xff]
  %v151 = vld [vmem:[%s1 + $0x428] sm:$0xff]
  %v152 = vld [vmem:[%s1 + $0x430] sm:$0xff]
  %v153 = vld [vmem:[%s1 + $0x438] sm:$0xff]
  %v154 = vld [vmem:[%s1 + $0x440] sm:$0xff]
  %v155 = vld [vmem:[%s1 + $0x448] sm:$0xff]
  %v156 = vld [vmem:[%s1 + $0x450] sm:$0xff]
  %v157 = vld [vmem:[%s1 + $0x458] sm:$0xff]
  %v158 = vld [vmem:[%s1 + $0x460] sm:$0xff]
  %v159 = vld [vmem:[%s1 + $0x468] sm:$0xff]
  %v160 = vld [vmem:[%s1 + $0x470] sm:$0xff]
  %v161 = vld [vmem:[%s1 + $0x478] sm:$0xff]
  %v162 = vld [vmem:[%s1 + $0x480] sm:$0xff]
  %v163 = vld [vmem:[%s1 + $0x488] sm:$0xff]
  %v164 = vld [vmem:[%s1 + $0x490] sm:$0xff]
  %v165 = vld [vmem:[%s1 + $0x498] sm:$0xff]
  %v166 = vld [vmem:[%s1 + $0x4a0] sm:$0xff]
  %v167 = vld [vmem:[%s1 + $0x4a8] sm:$0xff]
  %v168 = vld [vmem:[%s1 + $0x4b0] sm:$0xff]
  %v169 = vld [vmem:[%s1 + $0x4b8] sm:$0xff]
  %v170 = vld [vmem:[%s1 + $0x4c0] sm:$0xff]
  %v171 = vld [vmem:[%s1 + $0x4c8] sm:$0xff]
  %v172 = vld [vmem:[%s1 + $0x4d0] sm:$0xff]
  %v173 = vld [vmem:[%s1 + $0x4d8] sm:$0xff]
  %v174 = vld [vmem:[%s1 + $0x4e0] sm:$0xff]
  %v175 = vld [vmem:[%s1 + $0x4e8] sm:$0xff]
  %v176 = vld [vmem:[%s1 + $0x4f0] sm:$0xff]
  %v177 = vld [vmem:[%s1 + $0x4f8] sm:$0xff]
  %v178 = vld [vmem:[%s1 + $0x500] sm:$0xff]
  %v179 = vld [vmem:[%s1 + $0x508] sm:$0xff]
  %v180 = vld [vmem:[%s1 + $0x510] sm:$0xff]
  %v181 = vld [vmem:[%s1 + $0x518] sm:$0xff]
  %v182 = vld [vmem:[%s1 + $0x520] sm:$0xff]
  %v183 = vld [vmem:[%s1 + $0x528] sm:$0xff]
  %v184 = vld [vmem:[%s1 + $0x530] sm:$0xff]
  %v185 = vld [vmem:[%s1 + $0x538] sm:$0xff]
  %v186 = vld [vmem:[%s1 + $0x540] sm:$0xff]
  %v187 = vld [vmem:[%s1 + $0x548] sm:$0xff]
  %v188 = vld [vmem:[%s1 + $0x550] sm:$0xff]
  %v189 = vld [vmem:[%s1 + $0x558] sm:$0xff]
  %v190 = vld [vmem:[%s1 + $0x560] sm:$0xff]
  %v191 = vld [vmem:[%s1 + $0x568] sm:$0xff]
  %v192 = vld [vmem:[%s1 + $0x570] sm:$0xff]
  %v193 = vld [vmem:[%s1 + $0x578] sm:$0xff]
  %v194 = vld [vmem:[%s1 + $0x580] sm:$0xff]
  %v195 = vld [vmem:[%s1 + $0x588] sm:$0xff]
  %v196 = vld [vmem:[%s1 + $0x590] sm:$0xff]
  %v197 = vld [vmem:[%s1 + $0x598] sm:$0xff]
  %v198 = vld [vmem:[%s1 + $0x5a0] sm:$0xff]
  %v199 = vld [vmem:[%s1 + $0x5a8] sm:$0xff]
  %v200 = vld [vmem:[%s1 + $0x5b0] sm:$0xff]
  %v201 = vld [vmem:[%s1 + $0x5b8] sm:$0xff]
  %v202 = vld [vmem:[%s1 + $0x5c0] sm:$0xff]
  %v203 = vld [vmem:[%s1 + $0x5c8] sm:$0xff]
  %v204 = vld [vmem:[%s1 + $0x5d0] sm:$0xff]
  %v205 = vld [vmem:[%s1 + $0x5d8] sm:$0xff]
  %v206 = vld [vmem:[%s1 + $0x5e0] sm:$0xff]
  %v207 = vld [vmem:[%s1 + $0x5e8] sm:$0xff]
  %v208 = vld [vmem:[%s1 + $0x5f0] sm:$0xff]
  %v209 = vld [vmem:[%s1 + $0x5f8] sm:$0xff]
  %v210 = vld [vmem:[%s1 + $0x600] sm:$0xff]
  %v211 = vld [vmem:[%s1 + $0x608] sm:$0xff]
  %v212 = vld [vmem:[%s1 + $0x610] sm:$0xff]
  %v213 = vld [vmem:[%s1 + $0x618] sm:$0xff]
  %v214 = vld [vmem:[%s1 + $0x620] sm:$0xff]
  %v215 = vld [vmem:[%s1 + $0x628] sm:$0xff]
  %v216 = vld [vmem:[%s1 + $0x630] sm:$0xff]
  %v217 = vld [vmem:[%s1 + $0x638] sm:$0xff]
  %v218 = vld [vmem:[%s1 + $0x640] sm:$0xff]
  %v219 = vld [vmem:[%s1 + $0x648] sm:$0xff]
  %v220 = vld [vmem:[%s1 + $0x650] sm:$0xff]
  %v221 = vld [vmem:[%s1 + $0x658] sm:$0xff]
  %v222 = vld [vmem:[%s1 + $0x660] sm:$0xff]
  %v223 = vld [vmem:[%s1 + $0x668] sm:$0xff]
  %v224 = vld [vmem:[%s1 + $0x670] sm:$0xff]
  %v225 = vld [vmem:[%s1 + $0x678] sm:$0xff]
  %v226 = vld [vmem:[%s1 + $0x680] sm:$0xff]
  %v227 = vld [vmem:[%s1 + $0x688] sm:$0xff]
  %v228 = vld [vmem:[%s1 + $0x690] sm:$0xff]
  %v229 = vld [vmem:[%s1 + $0x698] sm:$0xff]
  %v230 = vld [vmem:[%s1 + $0x6a0] sm:$0xff]
  %v231 = vld [vmem:[%s1 + $0x6a8] sm:$0xff]
  %v232 = vld [vmem:[%s1 + $0x6b0] sm:$0xff]
  %v233 = vld [vmem:[%s1 + $0x6b8] sm:$0xff]
  %v234 = vld [vmem:[%s1 + $0x6c0] sm:$0xff]
  %v235 = vld [vmem:[%s1 + $0x6c8] sm:$0xff]
  %v236 = vld [vmem:[%s1 + $0x6d0] sm:$0xff]
  %v237 = vld [vmem:[%s1 + $0x6d8] sm:$0xff]
  %v238 = vld [vmem:[%s1 + $0x6e0] sm:$0xff]
  %v239 = vld [vmem:[%s1 + $0x6e8] sm:$0xff]
  %v240 = vld [vmem:[%s1 + $0x6f0] sm:$0xff]
  %v241 = vld [vmem:[%s1 + $0x6f8] sm:$0xff]
  %v242 = vld [vmem:[%s1 + $0x700] sm:$0xff]
  %v243 = vld [vmem:[%s1 + $0x708] sm:$0xff]
  %v244 = vld [vmem:[%s1 + $0x710] sm:$0xff]
  %v245 = vld [vmem:[%s1 + $0x718] sm:$0xff]
  %v246 = vld [vmem:[%s1 + $0x720] sm:$0xff]
  %v247 = vld [vmem:[%s1 + $0x728] sm:$0xff]
  %v248 = vld [vmem:[%s1 + $0x730] sm:$0xff]
  %v249 = vld [vmem:[%s1 + $0x738] sm:$0xff]
  %v250 = vld [vmem:[%s1 + $0x740] sm:$0xff]
  %v251 = vld [vmem:[%s1 + $0x748] sm:$0xff]
  %v252 = vld [vmem:[%s1 + $0x750] sm:$0xff]
  %v253 = vld [vmem:[%s1 + $0x758] sm:$0xff]
  %v254 = vld [vmem:[%s1 + $0x760] sm:$0xff]
  %v255 = vld [vmem:[%s1 + $0x768] sm:$0xff]
  %v256 = vld [vmem:[%s1 + $0x770] sm:$0xff]
  %v257 = vld [vmem:[%s1 + $0x778] sm:$0xff]
  %v258 = vld [vmem:[%s1 + $0x780] sm:$0xff]
  %v259 = vld [vmem:[%s1 + $0x788] sm:$0xff]
  %v260 = vld [vmem:[%s1 + $0x790] sm:$0xff]
  %v261 = vld [vmem:[%s1 + $0x798] sm:$0xff]
  %v262 = vld [vmem:[%s1 + $0x7a0] sm:$0xff]
  %v263 = vld [vmem:[%s1 + $0x7a8] sm:$0xff]
  %v264 = vld [vmem:[%s1 + $0x7b0] sm:$0xff]
  %v265 = vld [vmem:[%s1 + $0x7b8] sm:$0xff]
  %v266 = vld [vmem:[%s1 + $0x7c0] sm:$0xff]
  %v267 = vld [vmem:[%s1 + $0x7c8] sm:$0xff]
  %v268 = vld [vmem:[%s1 + $0x7d0] sm:$0xff]
  %v269 = vld [vmem:[%s1 + $0x7d8] sm:$0xff]
  %v270 = vld [vmem:[%s1 + $0x7e0] sm:$0xff]
  %v271 = vld [vmem:[%s1 + $0x7e8] sm:$0xff]
  %v272 = vld [vmem:[%s1 + $0x7f0] sm:$0xff]
  %v273 = vld [vmem:[%s1 + $0x7f8] sm:$0xff]
  %v274 = vld [vmem:[%s1 + $0x800] sm:$0xff]
  %v275 = vld [vmem:[%s1 + $0x808] sm:$0xff]
  %v276 = vld [vmem:[%s1 + $0x810] sm:$0xff]
  %v277 = vld [vmem:[%s1 + $0x818] sm:$0xff]
  %v278 = vld [vmem:[%s1 + $0x820] sm:$0xff]
  %v279 = vld [vmem:[%s1 + $0x828] sm:$0xff]
  %v280 = vld [vmem:[%s1 + $0x830] sm:$0xff]
  %v281 = vld [vmem:[%s1 + $0x838] sm:$0xff]
  %v282 = vld [vmem:[%s1 + $0x840] sm:$0xff]
  %v283 = vld [vmem:[%s1 + $0x848] sm:$0xff]
  %v284 = vld [vmem:[%s1 + $0x850] sm:$0xff]
  %v285 = vld [vmem:[%s1 + $0x858] sm:$0xff]
  %v286 = vld [vmem:[%s1 + $0x860] sm:$0xff]
  %v287 = vld [vmem:[%s1 + $0x868] sm:$0xff]
  %v288 = vld [vmem:[%s1 + $0x870] sm:$0xff]
  %v289 = vld [vmem:[%s1 + $0x878] sm:$0xff]
  %v290 = vld [vmem:[%s1 + $0x880] sm:$0xff]
  %v291 = vld [vmem:[%s1 + $0x888] sm:$0xff]
  %v292 = vld [vmem:[%s1 + $0x890] sm:$0xff]
  %v293 = vld [vmem:[%s1 + $0x898] sm:$0xff]
  %v294 = vld [vmem:[%s1 + $0x8a0] sm:$0xff]
  %v295 = vld [vmem:[%s1 + $0x8a8] sm:$0xff]
  %v296 = vld [vmem:[%s1 + $0x8b0] sm:$0xff]
  %v297 = vld [vmem:[%s1 + $0x8b8] sm:$0xff]
  %v298 = vld [vmem:[%s1 + $0x8c0] sm:$0xff]
  %v299 = vld [vmem:[%s1 + $0x8c8] sm:$0xff]
  %v300 = vld [vmem:[%s1 + $0x8d0] sm:$0xff]
  %v301 = vld [vmem:[%s1 + $0x8d8] sm:$0xff]
  %v302 = vld [vmem:[%s1 + $0x8e0] sm:$0xff]
  %v303 = vld [vmem:[%s1 + $0x8e8] sm:$0xff]
  %v304 = vld [vmem:[%s1 + $0x8f0] sm:$0xff]
  %v305 = vld [vmem:[%s1 + $0x8f8] sm:$0xff]
  %v306 = vld [vmem:[%s1 + $0x900] sm:$0xff]
  %v307 = vld [vmem:[%s1 + $0x908] sm:$0xff]
  %v308 = vld [vmem:[%s1 + $0x910] sm:$0xff]
  %v309 = vld [vmem:[%s1 + $0x918] sm:$0xff]
  %v310 = vld [vmem:[%s1 + $0x920] sm:$0xff]
  %v311 = vld [vmem:[%s1 + $0x928] sm:$0xff]
  %v312 = vld [vmem:[%s1 + $0x930] sm:$0xff]
  %v313 = vld [vmem:[%s1 + $0x938] sm:$0xff]
  %v314 = vld [vmem:[%s1 + $0x940] sm:$0xff]
  %v315 = vld [vmem:[%s1 + $0x948] sm:$0xff]
  %v316 = vld [vmem:[%s1 + $0x950] sm:$0xff]
  %v317 = vld [vmem:[%s1 + $0x958] sm:$0xff]
  %v318 = vld [vmem:[%s1 + $0x960] sm:$0xff]
  %v319 = vld [vmem:[%s1 + $0x968] sm:$0xff]
  %v320 = vld [vmem:[%s1 + $0x970] sm:$0xff]
  %v321 = vld [vmem:[%s1 + $0x978] sm:$0xff]
  %v322 = vld [vmem:[%s1 + $0x980] sm:$0xff]
  %v323 = vld [vmem:[%s1 + $0x988] sm:$0xff]
  %v324 = vld [vmem:[%s1 + $0x990] sm:$0xff]
  %v325 = vld [vmem:[%s1 + $0x998] sm:$0xff]
  %v326 = vld [vmem:[%s1 + $0x9a0] sm:$0xff]
  %v327 = vld [vmem:[%s1 + $0x9a8] sm:$0xff]
  %v328 = vld [vmem:[%s1 + $0x9b0] sm:$0xff]
  %v329 = vld [vmem:[%s1 + $0x9b8] sm:$0xff]
  %v330 = vld [vmem:[%s1 + $0x9c0] sm:$0xff]
  %v331 = vld [vmem:[%s1 + $0x9c8] sm:$0xff]
  %v332 = vld [vmem:[%s1 + $0x9d0] sm:$0xff]
  %v333 = vld [vmem:[%s1 + $0x9d8] sm:$0xff]
  %v334 = vld [vmem:[%s1 + $0x9e0] sm:$0xff]
  %v335 = vld [vmem:[%s1 + $0x9e8] sm:$0xff]
  %v336 = vld [vmem:[%s1 + $0x9f0] sm:$0xff]
  %v337 = vld [vmem:[%s1 + $0x9f8] sm:$0xff]
  %v338 = vld [vmem:[%s1 + $0xa00] sm:$0xff]
  %v339 = vld [vmem:[%s1 + $0xa08] sm:$0xff]
  %v340 = vld [vmem:[%s1 + $0xa10] sm:$0xff]
  %v341 = vld [vmem:[%s1 + $0xa18] sm:$0xff]
  %v342 = vld [vmem:[%s1 + $0xa20] sm:$0xff]
  %v343 = vld [vmem:[%s1 + $0xa28] sm:$0xff]
  %v344 = vld [vmem:[%s1 + $0xa30] sm:$0xff]
  %v345 = vld [vmem:[%s1 + $0xa38] sm:$0xff]
  %v346 = vld [vmem:[%s1 + $0xa40] sm:$0xff]
  %v347 = vld [vmem:[%s1 + $0xa48] sm:$0xff]
  %v348 = vld [vmem:[%s1 + $0xa50] sm:$0xff]
  %v349 = vld [vmem:[%s1 + $0xa58] sm:$0xff]
  %v350 = vld [vmem:[%s1 + $0xa60] sm:$0xff]
  %v351 = vld [vmem:[%s1 + $0xa68] sm:$0xff]
  %v352 = vld [vmem:[%s1 + $0xa70] sm:$0xff]
  %v353 = vld [vmem:[%s1 + $0xa78] sm:$0xff]
  %v354 = vld [vmem:[%s1 + $0xa80] sm:$0xff]
  %v355 = vld [vmem:[%s1 + $0xa88] sm:$0xff]
  %v356 = vld [vmem:[%s1 + $0xa90] sm:$0xff]
  %v357 = vld [vmem:[%s1 + $0xa98] sm:$0xff]
  %v358 = vld [vmem:[%s1 + $0xaa0] sm:$0xff]
  %v359 = vld [vmem:[%s1 + $0xaa8] sm:$0xff]
  %v360 = vld [vmem:[%s1 + $0xab0] sm:$0xff]
  %v361 = vld [vmem:[%s1 + $0xab8] sm:$0xff]
  %v362 = vld [vmem:[%s1 + $0xac0] sm:$0xff]
  %v363 = vld [vmem:[%s1 + $0xac8] sm:$0xff]
  %v364 = vld [vmem:[%s1 + $0xad0] sm:$0xff]
  %v365 = vld [vmem:[%s1 + $0xad8] sm:$0xff]
  %v366 = vld [vmem:[%s1 + $0xae0] sm:$0xff]
  %v367 = vld [vmem:[%s1 + $0xae8] sm:$0xff]
  %v368 = vld [vmem:[%s1 + $0xaf0] sm:$0xff]
  %v369 = vld [vmem:[%s1 + $0xaf8] sm:$0xff]
  %v370 = vld [vmem:[%s1 + $0xb00] sm:$0xff]
  %v371 = vld [vmem:[%s1 + $0xb08] sm:$0xff]
  %v372 = vld [vmem:[%s1 + $0xb10] sm:$0xff]
  %v373 = vld [vmem:[%s1 + $0xb18] sm:$0xff]
  %v374 = vld [vmem:[%s1 + $0xb20] sm:$0xff]
  %v375 = vld [vmem:[%s1 + $0xb28] sm:$0xff]
  %v376 = vld [vmem:[%s1 + $0xb30] sm:$0xff]
  %v377 = vld [vmem:[%s1 + $0xb38] sm:$0xff]
  %v378 = vld [vmem:[%s1 + $0xb40] sm:$0xff]
  %v379 = vld [vmem:[%s1 + $0xb48] sm:$0xff]
  %v380 = vld [vmem:[%s1 + $0xb50] sm:$0xff]
  %v381 = vld [vmem:[%s1 + $0xb58] sm:$0xff]
  %v382 = vld [vmem:[%s1 + $0xb60] sm:$0xff]
  %v383 = vld [vmem:[%s1 + $0xb68] sm:$0xff]
  %v384 = vld [vmem:[%s1 + $0xb70] sm:$0xff]
  %v385 = vld [vmem:[%s1 + $0xb78] sm:$0xff]
  %v386 = vld [vmem:[%s1 + $0xb80] sm:$0xff]
  %v387 = vld [vmem:[%s1 + $0xb88] sm:$0xff]
  %v388 = vld [vmem:[%s1 + $0xb90] sm:$0xff]
  %v389 = vld [vmem:[%s1 + $0xb98] sm:$0xff]
  %v390 = vld [vmem:[%s1 + $0xba0] sm:$0xff]
  %v391 = vld [vmem:[%s1 + $0xba8] sm:$0xff]
  %v392 = vld [vmem:[%s1 + $0xbb0] sm:$0xff]
  %v393 = vld [vmem:[%s1 + $0xbb8] sm:$0xff]
  %v394 = vld [vmem:[%s1 + $0xbc0] sm:$0xff]
  %v395 = vld [vmem:[%s1 + $0xbc8] sm:$0xff]
  %v396 = vld [vmem:[%s1 + $0xbd0] sm:$0xff]
  %v397 = vld [vmem:[%s1 + $0xbd8] sm:$0xff]
  %v398 = vld [vmem:[%s1 + $0xbe0] sm:$0xff]
  %v399 = vld [vmem:[%s1 + $0xbe8] sm:$0xff]
  %v400 = vld [vmem:[%s1 + $0xbf0] sm:$0xff]
  %v401 = vld [vmem:[%s1 + $0xbf8] sm:$0xff]
  %v402 = vld [vmem:[%s1 + $0xc00] sm:$0xff]
  %v403 = vld [vmem:[%s1 + $0xc08] sm:$0xff]
  %v404 = vld [vmem:[%s1 + $0xc10] sm:$0xff]
  %v405 = vld [vmem:[%s1 + $0xc18] sm:$0xff]
  %v406 = vld [vmem:[%s1 + $0xc20] sm:$0xff]
  %v407 = vld [vmem:[%s1 + $0xc28] sm:$0xff]
  %v408 = vld [vmem:[%s1 + $0xc30] sm:$0xff]
  %v409 = vld [vmem:[%s1 + $0xc38] sm:$0xff]
  %v410 = vld [vmem:[%s1 + $0xc40] sm:$0xff]
  %v411 = vld [vmem:[%s1 + $0xc48] sm:$0xff]
  %v412 = vld [vmem:[%s1 + $0xc50] sm:$0xff]
  %v413 = vld [vmem:[%s1 + $0xc58] sm:$0xff]
  %v414 = vld [vmem:[%s1 + $0xc60] sm:$0xff]
  %v415 = vld [vmem:[%s1 + $0xc68] sm:$0xff]
  %v416 = vld [vmem:[%s1 + $0xc70] sm:$0xff]
  %v417 = vld [vmem:[%s1 + $0xc78] sm:$0xff]
  %v418 = vld [vmem:[%s1 + $0xc80] sm:$0xff]
  %v419 = vld [vmem:[%s1 + $0xc88] sm:$0xff]
  %v420 = vld [vmem:[%s1 + $0xc90] sm:$0xff]
  %v421 = vld [vmem:[%s1 + $0xc98] sm:$0xff]
  %v422 = vld [vmem:[%s1 + $0xca0] sm:$0xff]
  %v423 = vld [vmem:[%s1 + $0xca8] sm:$0xff]
  %v424 = vld [vmem:[%s1 + $0xcb0] sm:$0xff]
  %v425 = vld [vmem:[%s1 + $0xcb8] sm:$0xff]
  %v426 = vld [vmem:[%s1 + $0xcc0] sm:$0xff]
  %v427 = vld [vmem:[%s1 + $0xcc8] sm:$0xff]
  %v428 = vld [vmem:[%s1 + $0xcd0] sm:$0xff]
  %v429 = vld [vmem:[%s1 + $0xcd8] sm:$0xff]
  %v430 = vld [vmem:[%s1 + $0xce0] sm:$0xff]
  %v431 = vld [vmem:[%s1 + $0xce8] sm:$0xff]
  %v432 = vld [vmem:[%s1 + $0xcf0] sm:$0xff]
  %v433 = vld [vmem:[%s1 + $0xcf8] sm:$0xff]
  %v434 = vld [vmem:[%s1 + $0xd00] sm:$0xff]
  %v435 = vld [vmem:[%s1 + $0xd08] sm:$0xff]
  %v436 = vld [vmem:[%s1 + $0xd10] sm:$0xff]
  %v437 = vld [vmem:[%s1 + $0xd18] sm:$0xff]
  %v438 = vld [vmem:[%s1 + $0xd20] sm:$0xff]
  %v439 = vld [vmem:[%s1 + $0xd28] sm:$0xff]
  %v440 = vld [vmem:[%s1 + $0xd30] sm:$0xff]
  %v441 = vld [vmem:[%s1 + $0xd38] sm:$0xff]
  %v442 = vld [vmem:[%s1 + $0xd40] sm:$0xff]
  %v443 = vld [vmem:[%s1 + $0xd48] sm:$0xff]
  %v444 = vld [vmem:[%s1 + $0xd50] sm:$0xff]
  %v445 = vld [vmem:[%s1 + $0xd58] sm:$0xff]
  %v446 = vld [vmem:[%s1 + $0xd60] sm:$0xff]
  %v447 = vld [vmem:[%s1 + $0xd68] sm:$0xff]
  %v448 = vld [vmem:[%s1 + $0xd70] sm:$0xff]
  %v449 = vld [vmem:[%s1 + $0xd78] sm:$0xff]
  %v450 = vld [vmem:[%s1 + $0xd80] sm:$0xff]
  %v451 = vld [vmem:[%s1 + $0xd88] sm:$0xff]
  %v452 = vld [vmem:[%s1 + $0xd90] sm:$0xff]
  %v453 = vld [vmem:[%s1 + $0xd98] sm:$0xff]
  %v454 = vld [vmem:[%s1 + $0xda0] sm:$0xff]
  %v455 = vld [vmem:[%s1 + $0xda8] sm:$0xff]
  %v456 = vld [vmem:[%s1 + $0xdb0] sm:$0xff]
  %v457 = vld [vmem:[%s1 + $0xdb8] sm:$0xff]
  %v458 = vld [vmem:[%s1 + $0xdc0] sm:$0xff]
  %v459 = vld [vmem:[%s1 + $0xdc8] sm:$0xff]
  %v460 = vld [vmem:[%s1 + $0xdd0] sm:$0xff]
  %v461 = vld [vmem:[%s1 + $0xdd8] sm:$0xff]
  %v462 = vld [vmem:[%s1 + $0xde0] sm:$0xff]
  %v463 = vld [vmem:[%s1 + $0xde8] sm:$0xff]
  %v464 = vld [vmem:[%s1 + $0xdf0] sm:$0xff]
  %v465 = vld [vmem:[%s1 + $0xdf8] sm:$0xff]
  %v466 = vld [vmem:[%s1 + $0xe00] sm:$0xff]
  %v467 = vld [vmem:[%s1 + $0xe08] sm:$0xff]
  %v468 = vld [vmem:[%s1 + $0xe10] sm:$0xff]
  %v469 = vld [vmem:[%s1 + $0xe18] sm:$0xff]
  %v470 = vld [vmem:[%s1 + $0xe20] sm:$0xff]
  %v471 = vld [vmem:[%s1 + $0xe28] sm:$0xff]
  %v472 = vld [vmem:[%s1 + $0xe30] sm:$0xff]
  %v473 = vld [vmem:[%s1 + $0xe38] sm:$0xff]
  %v474 = vld [vmem:[%s1 + $0xe40] sm:$0xff]
  %v475 = vld [vmem:[%s1 + $0xe48] sm:$0xff]
  %v476 = vld [vmem:[%s1 + $0xe50] sm:$0xff]
  %v477 = vld [vmem:[%s1 + $0xe58] sm:$0xff]
  %v478 = vld [vmem:[%s1 + $0xe60] sm:$0xff]
  %v479 = vld [vmem:[%s1 + $0xe68] sm:$0xff]
  %v480 = vld [vmem:[%s1 + $0xe70] sm:$0xff]
  %v481 = vld [vmem:[%s1 + $0xe78] sm:$0xff]
  %v482 = vld [vmem:[%s1 + $0xe80] sm:$0xff]
  %v483 = vld [vmem:[%s1 + $0xe88] sm:$0xff]
  %v484 = vld [vmem:[%s1 + $0xe90] sm:$0xff]
  %v485 = vld [vmem:[%s1 + $0xe98] sm:$0xff]
  %v486 = vld [vmem:[%s1 + $0xea0] sm:$0xff]
  %v487 = vld [vmem:[%s1 + $0xea8] sm:$0xff]
  %v488 = vld [vmem:[%s1 + $0xeb0] sm:$0xff]
  %v489 = vld [vmem:[%s1 + $0xeb8] sm:$0xff]
  %v490 = vld [vmem:[%s1 + $0xec0] sm:$0xff]
  %v491 = vld [vmem:[%s1 + $0xec8] sm:$0xff]
  %v492 = vld [vmem:[%s1 + $0xed0] sm:$0xff]
  %v493 = vld [vmem:[%s1 + $0xed8] sm:$0xff]
  %v494 = vld [vmem:[%s1 + $0xee0] sm:$0xff]
  %v495 = vld [vmem:[%s1 + $0xee8] sm:$0xff]
  %v496 = vld [vmem:[%s1 + $0xef0] sm:$0xff]
  %v497 = vld [vmem:[%s1 + $0xef8] sm:$0xff]
  %v498 = vld [vmem:[%s1 + $0xf00] sm:$0xff]
  %v499 = vld [vmem:[%s1 + $0xf08] sm:$0xff]
  %v500 = vld [vmem:[%s1 + $0xf10] sm:$0xff]
  %v501 = vld [vmem:[%s1 + $0xf18] sm:$0xff]
  %v502 = vld [vmem:[%s1 + $0xf20] sm:$0xff]
  %v503 = vld [vmem:[%s1 + $0xf28] sm:$0xff]
  %v504 = vld [vmem:[%s1 + $0xf30] sm:$0xff]
  %v505 = vld [vmem:[%s1 + $0xf38] sm:$0xff]
  %v506 = vld [vmem:[%s1 + $0xf40] sm:$0xff]
  %v507 = vld [vmem:[%s1 + $0xf48] sm:$0xff]
  %v508 = vld [vmem:[%s1 + $0xf50] sm:$0xff]
  %v509 = vld [vmem:[%s1 + $0xf58] sm:$0xff]
  %v510 = vld [vmem:[%s1 + $0xf60] sm:$0xff]
  %v511 = vld [vmem:[%s1 + $0xf68] sm:$0xff]
  %v512 = vld [vmem:[%s1 + $0xf70] sm:$0xff]
  %v513 = vld [vmem:[%s1 + $0xf78] sm:$0xff]
  %v514 = vld [vmem:[%s1 + $0xf80] sm:$0xff]
  %v515 = vld [vmem:[%s1 + $0xf88] sm:$0xff]
  %v516 = vld [vmem:[%s1 + $0xf90] sm:$0xff]
  %v517 = vld [vmem:[%s1 + $0xf98] sm:$0xff]
  %v518 = vld [vmem:[%s1 + $0xfa0] sm:$0xff]
  %v519 = vld [vmem:[%s1 + $0xfa8] sm:$0xff]
  %v520 = vld [vmem:[%s1 + $0xfb0] sm:$0xff]
  %v521 = vld [vmem:[%s1 + $0xfb8] sm:$0xff]
  %v522 = vld [vmem:[%s1 + $0xfc0] sm:$0xff]
  %v523 = vld [vmem:[%s1 + $0xfc8] sm:$0xff]
  %v524 = vld [vmem:[%s1 + $0xfd0] sm:$0xff]
  %v525 = vld [vmem:[%s1 + $0xfd8] sm:$0xff]
  %v526 = vld [vmem:[%s1 + $0xfe0] sm:$0xff]
  %v527 = vld [vmem:[%s1 + $0xfe8] sm:$0xff]
  %v528 = vld [vmem:[%s1 + $0xff0] sm:$0xff]
  %v529 = vld [vmem:[%s1 + $0xff8] sm:$0xff]
  %v1042 = vunpack.c.l.b16 %v18
  %v1043 = vunpack.c.h.b16 %v18
  %v1044 = vunpack.c.l.b16 %v19
  %v1045 = vunpack.c.h.b16 %v19
  %v1046 = vunpack.c.l.b16 %v20
  %v1047 = vunpack.c.h.b16 %v20
  %v1048 = vunpack.c.l.b16 %v21
  %v1049 = vunpack.c.h.b16 %v21
  %v1050 = vunpack.c.l.b16 %v22
  %v1051 = vunpack.c.h.b16 %v22
  %v1052 = vunpack.c.l.b16 %v23
  %v1053 = vunpack.c.h.b16 %v23
  %v1054 = vunpack.c.l.b16 %v24
  %v1055 = vunpack.c.h.b16 %v24
  %v1056 = vunpack.c.l.b16 %v25
  %v1057 = vunpack.c.h.b16 %v25
  %v1058 = vunpack.c.l.b16 %v26
  %v1059 = vunpack.c.h.b16 %v26
  %v1060 = vunpack.c.l.b16 %v27
  %v1061 = vunpack.c.h.b16 %v27
  %v1062 = vunpack.c.l.b16 %v28
  %v1063 = vunpack.c.h.b16 %v28
  %v1064 = vunpack.c.l.b16 %v29
  %v1065 = vunpack.c.h.b16 %v29
  %v1066 = vunpack.c.l.b16 %v30
  %v1067 = vunpack.c.h.b16 %v30
  %v1068 = vunpack.c.l.b16 %v31
  %v1069 = vunpack.c.h.b16 %v31
  %v1070 = vunpack.c.l.b16 %v32
  %v1071 = vunpack.c.h.b16 %v32
  %v1072 = vunpack.c.l.b16 %v33
  %v1073 = vunpack.c.h.b16 %v33
  %v1074 = vunpack.c.l.b16 %v34
  %v1075 = vunpack.c.h.b16 %v34
  %v1076 = vunpack.c.l.b16 %v35
  %v1077 = vunpack.c.h.b16 %v35
  %v1078 = vunpack.c.l.b16 %v36
  %v1079 = vunpack.c.h.b16 %v36
  %v1080 = vunpack.c.l.b16 %v37
  %v1081 = vunpack.c.h.b16 %v37
  %v1082 = vunpack.c.l.b16 %v38
  %v1083 = vunpack.c.h.b16 %v38
  %v1084 = vunpack.c.l.b16 %v39
  %v1085 = vunpack.c.h.b16 %v39
  %v1086 = vunpack.c.l.b16 %v40
  %v1087 = vunpack.c.h.b16 %v40
  %v1088 = vunpack.c.l.b16 %v41
  %v1089 = vunpack.c.h.b16 %v41
  %v1090 = vunpack.c.l.b16 %v42
  %v1091 = vunpack.c.h.b16 %v42
  %v1092 = vunpack.c.l.b16 %v43
  %v1093 = vunpack.c.h.b16 %v43
  %v1094 = vunpack.c.l.b16 %v44
  %v1095 = vunpack.c.h.b16 %v44
  %v1096 = vunpack.c.l.b16 %v45
  %v1097 = vunpack.c.h.b16 %v45
  %v1098 = vunpack.c.l.b16 %v46
  %v1099 = vunpack.c.h.b16 %v46
  %v1100 = vunpack.c.l.b16 %v47
  %v1101 = vunpack.c.h.b16 %v47
  %v1102 = vunpack.c.l.b16 %v48
  %v1103 = vunpack.c.h.b16 %v48
  %v1104 = vunpack.c.l.b16 %v49
  %v1105 = vunpack.c.h.b16 %v49
  %v1106 = vunpack.c.l.b16 %v50
  %v1107 = vunpack.c.h.b16 %v50
  %v1108 = vunpack.c.l.b16 %v51
  %v1109 = vunpack.c.h.b16 %v51
  %v1110 = vunpack.c.l.b16 %v52
  %v1111 = vunpack.c.h.b16 %v52
  %v1112 = vunpack.c.l.b16 %v53
  %v1113 = vunpack.c.h.b16 %v53
  %v1114 = vunpack.c.l.b16 %v54
  %v1115 = vunpack.c.h.b16 %v54
  %v1116 = vunpack.c.l.b16 %v55
  %v1117 = vunpack.c.h.b16 %v55
  %v1118 = vunpack.c.l.b16 %v56
  %v1119 = vunpack.c.h.b16 %v56
  %v1120 = vunpack.c.l.b16 %v57
  %v1121 = vunpack.c.h.b16 %v57
  %v1122 = vunpack.c.l.b16 %v58
  %v1123 = vunpack.c.h.b16 %v58
  %v1124 = vunpack.c.l.b16 %v59
  %v1125 = vunpack.c.h.b16 %v59
  %v1126 = vunpack.c.l.b16 %v60
  %v1127 = vunpack.c.h.b16 %v60
  %v1128 = vunpack.c.l.b16 %v61
  %v1129 = vunpack.c.h.b16 %v61
  %v1130 = vunpack.c.l.b16 %v62
  %v1131 = vunpack.c.h.b16 %v62
  %v1132 = vunpack.c.l.b16 %v63
  %v1133 = vunpack.c.h.b16 %v63
  %v1134 = vunpack.c.l.b16 %v64
  %v1135 = vunpack.c.h.b16 %v64
  %v1136 = vunpack.c.l.b16 %v65
  %v1137 = vunpack.c.h.b16 %v65
  %v1138 = vunpack.c.l.b16 %v66
  %v1139 = vunpack.c.h.b16 %v66
  %v1140 = vunpack.c.l.b16 %v67
  %v1141 = vunpack.c.h.b16 %v67
  %v1142 = vunpack.c.l.b16 %v68
  %v1143 = vunpack.c.h.b16 %v68
  %v1144 = vunpack.c.l.b16 %v69
  %v1145 = vunpack.c.h.b16 %v69
  %v1146 = vunpack.c.l.b16 %v70
  %v1147 = vunpack.c.h.b16 %v70
  %v1148 = vunpack.c.l.b16 %v71
  %v1149 = vunpack.c.h.b16 %v71
  %v1150 = vunpack.c.l.b16 %v72
  %v1151 = vunpack.c.h.b16 %v72
  %v1152 = vunpack.c.l.b16 %v73
  %v1153 = vunpack.c.h.b16 %v73
  %v1154 = vunpack.c.l.b16 %v74
  %v1155 = vunpack.c.h.b16 %v74
  %v1156 = vunpack.c.l.b16 %v75
  %v1157 = vunpack.c.h.b16 %v75
  %v1158 = vunpack.c.l.b16 %v76
  %v1159 = vunpack.c.h.b16 %v76
  %v1160 = vunpack.c.l.b16 %v77
  %v1161 = vunpack.c.h.b16 %v77
  %v1162 = vunpack.c.l.b16 %v78
  %v1163 = vunpack.c.h.b16 %v78
  %v1164 = vunpack.c.l.b16 %v79
  %v1165 = vunpack.c.h.b16 %v79
  %v1166 = vunpack.c.l.b16 %v80
  %v1167 = vunpack.c.h.b16 %v80
  %v1168 = vunpack.c.l.b16 %v81
  %v1169 = vunpack.c.h.b16 %v81
  %v1170 = vunpack.c.l.b16 %v82
  %v1171 = vunpack.c.h.b16 %v82
  %v1172 = vunpack.c.l.b16 %v83
  %v1173 = vunpack.c.h.b16 %v83
  %v1174 = vunpack.c.l.b16 %v84
  %v1175 = vunpack.c.h.b16 %v84
  %v1176 = vunpack.c.l.b16 %v85
  %v1177 = vunpack.c.h.b16 %v85
  %v1178 = vunpack.c.l.b16 %v86
  %v1179 = vunpack.c.h.b16 %v86
  %v1180 = vunpack.c.l.b16 %v87
  %v1181 = vunpack.c.h.b16 %v87
  %v1182 = vunpack.c.l.b16 %v88
  %v1183 = vunpack.c.h.b16 %v88
  %v1184 = vunpack.c.l.b16 %v89
  %v1185 = vunpack.c.h.b16 %v89
  %v1186 = vunpack.c.l.b16 %v90
  %v1187 = vunpack.c.h.b16 %v90
  %v1188 = vunpack.c.l.b16 %v91
  %v1189 = vunpack.c.h.b16 %v91
  %v1190 = vunpack.c.l.b16 %v92
  %v1191 = vunpack.c.h.b16 %v92
  %v1192 = vunpack.c.l.b16 %v93
  %v1193 = vunpack.c.h.b16 %v93
  %v1194 = vunpack.c.l.b16 %v94
  %v1195 = vunpack.c.h.b16 %v94
  %v1196 = vunpack.c.l.b16 %v95
  %v1197 = vunpack.c.h.b16 %v95
  %v1198 = vunpack.c.l.b16 %v96
  %v1199 = vunpack.c.h.b16 %v96
  %v1200 = vunpack.c.l.b16 %v97
  %v1201 = vunpack.c.h.b16 %v97
  %v1202 = vunpack.c.l.b16 %v98
  %v1203 = vunpack.c.h.b16 %v98
  %v1204 = vunpack.c.l.b16 %v99
  %v1205 = vunpack.c.h.b16 %v99
  %v1206 = vunpack.c.l.b16 %v100
  %v1207 = vunpack.c.h.b16 %v100
  %v1208 = vunpack.c.l.b16 %v101
  %v1209 = vunpack.c.h.b16 %v101
  %v1210 = vunpack.c.l.b16 %v102
  %v1211 = vunpack.c.h.b16 %v102
  %v1212 = vunpack.c.l.b16 %v103
  %v1213 = vunpack.c.h.b16 %v103
  %v1214 = vunpack.c.l.b16 %v104
  %v1215 = vunpack.c.h.b16 %v104
  %v1216 = vunpack.c.l.b16 %v105
  %v1217 = vunpack.c.h.b16 %v105
  %v1218 = vunpack.c.l.b16 %v106
  %v1219 = vunpack.c.h.b16 %v106
  %v1220 = vunpack.c.l.b16 %v107
  %v1221 = vunpack.c.h.b16 %v107
  %v1222 = vunpack.c.l.b16 %v108
  %v1223 = vunpack.c.h.b16 %v108
  %v1224 = vunpack.c.l.b16 %v109
  %v1225 = vunpack.c.h.b16 %v109
  %v1226 = vunpack.c.l.b16 %v110
  %v1227 = vunpack.c.h.b16 %v110
  %v1228 = vunpack.c.l.b16 %v111
  %v1229 = vunpack.c.h.b16 %v111
  %v1230 = vunpack.c.l.b16 %v112
  %v1231 = vunpack.c.h.b16 %v112
  %v1232 = vunpack.c.l.b16 %v113
  %v1233 = vunpack.c.h.b16 %v113
  %v1234 = vunpack.c.l.b16 %v114
  %v1235 = vunpack.c.h.b16 %v114
  %v1236 = vunpack.c.l.b16 %v115
  %v1237 = vunpack.c.h.b16 %v115
  %v1238 = vunpack.c.l.b16 %v116
  %v1239 = vunpack.c.h.b16 %v116
  %v1240 = vunpack.c.l.b16 %v117
  %v1241 = vunpack.c.h.b16 %v117
  %v1242 = vunpack.c.l.b16 %v118
  %v1243 = vunpack.c.h.b16 %v118
  %v1244 = vunpack.c.l.b16 %v119
  %v1245 = vunpack.c.h.b16 %v119
  %v1246 = vunpack.c.l.b16 %v120
  %v1247 = vunpack.c.h.b16 %v120
  %v1248 = vunpack.c.l.b16 %v121
  %v1249 = vunpack.c.h.b16 %v121
  %v1250 = vunpack.c.l.b16 %v122
  %v1251 = vunpack.c.h.b16 %v122
  %v1252 = vunpack.c.l.b16 %v123
  %v1253 = vunpack.c.h.b16 %v123
  %v1254 = vunpack.c.l.b16 %v124
  %v1255 = vunpack.c.h.b16 %v124
  %v1256 = vunpack.c.l.b16 %v125
  %v1257 = vunpack.c.h.b16 %v125
  %v1258 = vunpack.c.l.b16 %v126
  %v1259 = vunpack.c.h.b16 %v126
  %v1260 = vunpack.c.l.b16 %v127
  %v1261 = vunpack.c.h.b16 %v127
  %v1262 = vunpack.c.l.b16 %v128
  %v1263 = vunpack.c.h.b16 %v128
  %v1264 = vunpack.c.l.b16 %v129
  %v1265 = vunpack.c.h.b16 %v129
  %v1266 = vunpack.c.l.b16 %v130
  %v1267 = vunpack.c.h.b16 %v130
  %v1268 = vunpack.c.l.b16 %v131
  %v1269 = vunpack.c.h.b16 %v131
  %v1270 = vunpack.c.l.b16 %v132
  %v1271 = vunpack.c.h.b16 %v132
  %v1272 = vunpack.c.l.b16 %v133
  %v1273 = vunpack.c.h.b16 %v133
  %v1274 = vunpack.c.l.b16 %v134
  %v1275 = vunpack.c.h.b16 %v134
  %v1276 = vunpack.c.l.b16 %v135
  %v1277 = vunpack.c.h.b16 %v135
  %v1278 = vunpack.c.l.b16 %v136
  %v1279 = vunpack.c.h.b16 %v136
  %v1280 = vunpack.c.l.b16 %v137
  %v1281 = vunpack.c.h.b16 %v137
  %v1282 = vunpack.c.l.b16 %v138
  %v1283 = vunpack.c.h.b16 %v138
  %v1284 = vunpack.c.l.b16 %v139
  %v1285 = vunpack.c.h.b16 %v139
  %v1286 = vunpack.c.l.b16 %v140
  %v1287 = vunpack.c.h.b16 %v140
  %v1288 = vunpack.c.l.b16 %v141
  %v1289 = vunpack.c.h.b16 %v141
  %v1290 = vunpack.c.l.b16 %v142
  %v1291 = vunpack.c.h.b16 %v142
  %v1292 = vunpack.c.l.b16 %v143
  %v1293 = vunpack.c.h.b16 %v143
  %v1294 = vunpack.c.l.b16 %v144
  %v1295 = vunpack.c.h.b16 %v144
  %v1296 = vunpack.c.l.b16 %v145
  %v1297 = vunpack.c.h.b16 %v145
  %v1298 = vunpack.c.l.b16 %v146
  %v1299 = vunpack.c.h.b16 %v146
  %v1300 = vunpack.c.l.b16 %v147
  %v1301 = vunpack.c.h.b16 %v147
  %v1302 = vunpack.c.l.b16 %v148
  %v1303 = vunpack.c.h.b16 %v148
  %v1304 = vunpack.c.l.b16 %v149
  %v1305 = vunpack.c.h.b16 %v149
  %v1306 = vunpack.c.l.b16 %v150
  %v1307 = vunpack.c.h.b16 %v150
  %v1308 = vunpack.c.l.b16 %v151
  %v1309 = vunpack.c.h.b16 %v151
  %v1310 = vunpack.c.l.b16 %v152
  %v1311 = vunpack.c.h.b16 %v152
  %v1312 = vunpack.c.l.b16 %v153
  %v1313 = vunpack.c.h.b16 %v153
  %v1314 = vunpack.c.l.b16 %v154
  %v1315 = vunpack.c.h.b16 %v154
  %v1316 = vunpack.c.l.b16 %v155
  %v1317 = vunpack.c.h.b16 %v155
  %v1318 = vunpack.c.l.b16 %v156
  %v1319 = vunpack.c.h.b16 %v156
  %v1320 = vunpack.c.l.b16 %v157
  %v1321 = vunpack.c.h.b16 %v157
  %v1322 = vunpack.c.l.b16 %v158
  %v1323 = vunpack.c.h.b16 %v158
  %v1324 = vunpack.c.l.b16 %v159
  %v1325 = vunpack.c.h.b16 %v159
  %v1326 = vunpack.c.l.b16 %v160
  %v1327 = vunpack.c.h.b16 %v160
  %v1328 = vunpack.c.l.b16 %v161
  %v1329 = vunpack.c.h.b16 %v161
  %v1330 = vunpack.c.l.b16 %v162
  %v1331 = vunpack.c.h.b16 %v162
  %v1332 = vunpack.c.l.b16 %v163
  %v1333 = vunpack.c.h.b16 %v163
  %v1334 = vunpack.c.l.b16 %v164
  %v1335 = vunpack.c.h.b16 %v164
  %v1336 = vunpack.c.l.b16 %v165
  %v1337 = vunpack.c.h.b16 %v165
  %v1338 = vunpack.c.l.b16 %v166
  %v1339 = vunpack.c.h.b16 %v166
  %v1340 = vunpack.c.l.b16 %v167
  %v1341 = vunpack.c.h.b16 %v167
  %v1342 = vunpack.c.l.b16 %v168
  %v1343 = vunpack.c.h.b16 %v168
  %v1344 = vunpack.c.l.b16 %v169
  %v1345 = vunpack.c.h.b16 %v169
  %v1346 = vunpack.c.l.b16 %v170
  %v1347 = vunpack.c.h.b16 %v170
  %v1348 = vunpack.c.l.b16 %v171
  %v1349 = vunpack.c.h.b16 %v171
  %v1350 = vunpack.c.l.b16 %v172
  %v1351 = vunpack.c.h.b16 %v172
  %v1352 = vunpack.c.l.b16 %v173
  %v1353 = vunpack.c.h.b16 %v173
  %v1354 = vunpack.c.l.b16 %v174
  %v1355 = vunpack.c.h.b16 %v174
  %v1356 = vunpack.c.l.b16 %v175
  %v1357 = vunpack.c.h.b16 %v175
  %v1358 = vunpack.c.l.b16 %v176
  %v1359 = vunpack.c.h.b16 %v176
  %v1360 = vunpack.c.l.b16 %v177
  %v1361 = vunpack.c.h.b16 %v177
  %v1362 = vunpack.c.l.b16 %v178
  %v1363 = vunpack.c.h.b16 %v178
  %v1364 = vunpack.c.l.b16 %v179
  %v1365 = vunpack.c.h.b16 %v179
  %v1366 = vunpack.c.l.b16 %v180
  %v1367 = vunpack.c.h.b16 %v180
  %v1368 = vunpack.c.l.b16 %v181
  %v1369 = vunpack.c.h.b16 %v181
  %v1370 = vunpack.c.l.b16 %v182
  %v1371 = vunpack.c.h.b16 %v182
  %v1372 = vunpack.c.l.b16 %v183
  %v1373 = vunpack.c.h.b16 %v183
  %v1374 = vunpack.c.l.b16 %v184
  %v1375 = vunpack.c.h.b16 %v184
  %v1376 = vunpack.c.l.b16 %v185
  %v1377 = vunpack.c.h.b16 %v185
  %v1378 = vunpack.c.l.b16 %v186
  %v1379 = vunpack.c.h.b16 %v186
  %v1380 = vunpack.c.l.b16 %v187
  %v1381 = vunpack.c.h.b16 %v187
  %v1382 = vunpack.c.l.b16 %v188
  %v1383 = vunpack.c.h.b16 %v188
  %v1384 = vunpack.c.l.b16 %v189
  %v1385 = vunpack.c.h.b16 %v189
  %v1386 = vunpack.c.l.b16 %v190
  %v1387 = vunpack.c.h.b16 %v190
  %v1388 = vunpack.c.l.b16 %v191
  %v1389 = vunpack.c.h.b16 %v191
  %v1390 = vunpack.c.l.b16 %v192
  %v1391 = vunpack.c.h.b16 %v192
  %v1392 = vunpack.c.l.b16 %v193
  %v1393 = vunpack.c.h.b16 %v193
  %v1394 = vunpack.c.l.b16 %v194
  %v1395 = vunpack.c.h.b16 %v194
  %v1396 = vunpack.c.l.b16 %v195
  %v1397 = vunpack.c.h.b16 %v195
  %v1398 = vunpack.c.l.b16 %v196
  %v1399 = vunpack.c.h.b16 %v196
  %v1400 = vunpack.c.l.b16 %v197
  %v1401 = vunpack.c.h.b16 %v197
  %v1402 = vunpack.c.l.b16 %v198
  %v1403 = vunpack.c.h.b16 %v198
  %v1404 = vunpack.c.l.b16 %v199
  %v1405 = vunpack.c.h.b16 %v199
  %v1406 = vunpack.c.l.b16 %v200
  %v1407 = vunpack.c.h.b16 %v200
  %v1408 = vunpack.c.l.b16 %v201
  %v1409 = vunpack.c.h.b16 %v201
  %v1410 = vunpack.c.l.b16 %v202
  %v1411 = vunpack.c.h.b16 %v202
  %v1412 = vunpack.c.l.b16 %v203
  %v1413 = vunpack.c.h.b16 %v203
  %v1414 = vunpack.c.l.b16 %v204
  %v1415 = vunpack.c.h.b16 %v204
  %v1416 = vunpack.c.l.b16 %v205
  %v1417 = vunpack.c.h.b16 %v205
  %v1418 = vunpack.c.l.b16 %v206
  %v1419 = vunpack.c.h.b16 %v206
  %v1420 = vunpack.c.l.b16 %v207
  %v1421 = vunpack.c.h.b16 %v207
  %v1422 = vunpack.c.l.b16 %v208
  %v1423 = vunpack.c.h.b16 %v208
  %v1424 = vunpack.c.l.b16 %v209
  %v1425 = vunpack.c.h.b16 %v209
  %v1426 = vunpack.c.l.b16 %v210
  %v1427 = vunpack.c.h.b16 %v210
  %v1428 = vunpack.c.l.b16 %v211
  %v1429 = vunpack.c.h.b16 %v211
  %v1430 = vunpack.c.l.b16 %v212
  %v1431 = vunpack.c.h.b16 %v212
  %v1432 = vunpack.c.l.b16 %v213
  %v1433 = vunpack.c.h.b16 %v213
  %v1434 = vunpack.c.l.b16 %v214
  %v1435 = vunpack.c.h.b16 %v214
  %v1436 = vunpack.c.l.b16 %v215
  %v1437 = vunpack.c.h.b16 %v215
  %v1438 = vunpack.c.l.b16 %v216
  %v1439 = vunpack.c.h.b16 %v216
  %v1440 = vunpack.c.l.b16 %v217
  %v1441 = vunpack.c.h.b16 %v217
  %v1442 = vunpack.c.l.b16 %v218
  %v1443 = vunpack.c.h.b16 %v218
  %v1444 = vunpack.c.l.b16 %v219
  %v1445 = vunpack.c.h.b16 %v219
  %v1446 = vunpack.c.l.b16 %v220
  %v1447 = vunpack.c.h.b16 %v220
  %v1448 = vunpack.c.l.b16 %v221
  %v1449 = vunpack.c.h.b16 %v221
  %v1450 = vunpack.c.l.b16 %v222
  %v1451 = vunpack.c.h.b16 %v222
  %v1452 = vunpack.c.l.b16 %v223
  %v1453 = vunpack.c.h.b16 %v223
  %v1454 = vunpack.c.l.b16 %v224
  %v1455 = vunpack.c.h.b16 %v224
  %v1456 = vunpack.c.l.b16 %v225
  %v1457 = vunpack.c.h.b16 %v225
  %v1458 = vunpack.c.l.b16 %v226
  %v1459 = vunpack.c.h.b16 %v226
  %v1460 = vunpack.c.l.b16 %v227
  %v1461 = vunpack.c.h.b16 %v227
  %v1462 = vunpack.c.l.b16 %v228
  %v1463 = vunpack.c.h.b16 %v228
  %v1464 = vunpack.c.l.b16 %v229
  %v1465 = vunpack.c.h.b16 %v229
  %v1466 = vunpack.c.l.b16 %v230
  %v1467 = vunpack.c.h.b16 %v230
  %v1468 = vunpack.c.l.b16 %v231
  %v1469 = vunpack.c.h.b16 %v231
  %v1470 = vunpack.c.l.b16 %v232
  %v1471 = vunpack.c.h.b16 %v232
  %v1472 = vunpack.c.l.b16 %v233
  %v1473 = vunpack.c.h.b16 %v233
  %v1474 = vunpack.c.l.b16 %v234
  %v1475 = vunpack.c.h.b16 %v234
  %v1476 = vunpack.c.l.b16 %v235
  %v1477 = vunpack.c.h.b16 %v235
  %v1478 = vunpack.c.l.b16 %v236
  %v1479 = vunpack.c.h.b16 %v236
  %v1480 = vunpack.c.l.b16 %v237
  %v1481 = vunpack.c.h.b16 %v237
  %v1482 = vunpack.c.l.b16 %v238
  %v1483 = vunpack.c.h.b16 %v238
  %v1484 = vunpack.c.l.b16 %v239
  %v1485 = vunpack.c.h.b16 %v239
  %v1486 = vunpack.c.l.b16 %v240
  %v1487 = vunpack.c.h.b16 %v240
  %v1488 = vunpack.c.l.b16 %v241
  %v1489 = vunpack.c.h.b16 %v241
  %v1490 = vunpack.c.l.b16 %v242
  %v1491 = vunpack.c.h.b16 %v242
  %v1492 = vunpack.c.l.b16 %v243
  %v1493 = vunpack.c.h.b16 %v243
  %v1494 = vunpack.c.l.b16 %v244
  %v1495 = vunpack.c.h.b16 %v244
  %v1496 = vunpack.c.l.b16 %v245
  %v1497 = vunpack.c.h.b16 %v245
  %v1498 = vunpack.c.l.b16 %v246
  %v1499 = vunpack.c.h.b16 %v246
  %v1500 = vunpack.c.l.b16 %v247
  %v1501 = vunpack.c.h.b16 %v247
  %v1502 = vunpack.c.l.b16 %v248
  %v1503 = vunpack.c.h.b16 %v248
  %v1504 = vunpack.c.l.b16 %v249
  %v1505 = vunpack.c.h.b16 %v249
  %v1506 = vunpack.c.l.b16 %v250
  %v1507 = vunpack.c.h.b16 %v250
  %v1508 = vunpack.c.l.b16 %v251
  %v1509 = vunpack.c.h.b16 %v251
  %v1510 = vunpack.c.l.b16 %v252
  %v1511 = vunpack.c.h.b16 %v252
  %v1512 = vunpack.c.l.b16 %v253
  %v1513 = vunpack.c.h.b16 %v253
  %v1514 = vunpack.c.l.b16 %v254
  %v1515 = vunpack.c.h.b16 %v254
  %v1516 = vunpack.c.l.b16 %v255
  %v1517 = vunpack.c.h.b16 %v255
  %v1518 = vunpack.c.l.b16 %v256
  %v1519 = vunpack.c.h.b16 %v256
  %v1520 = vunpack.c.l.b16 %v257
  %v1521 = vunpack.c.h.b16 %v257
  %v1522 = vunpack.c.l.b16 %v258
  %v1523 = vunpack.c.h.b16 %v258
  %v1524 = vunpack.c.l.b16 %v259
  %v1525 = vunpack.c.h.b16 %v259
  %v1526 = vunpack.c.l.b16 %v260
  %v1527 = vunpack.c.h.b16 %v260
  %v1528 = vunpack.c.l.b16 %v261
  %v1529 = vunpack.c.h.b16 %v261
  %v1530 = vunpack.c.l.b16 %v262
  %v1531 = vunpack.c.h.b16 %v262
  %v1532 = vunpack.c.l.b16 %v263
  %v1533 = vunpack.c.h.b16 %v263
  %v1534 = vunpack.c.l.b16 %v264
  %v1535 = vunpack.c.h.b16 %v264
  %v1536 = vunpack.c.l.b16 %v265
  %v1537 = vunpack.c.h.b16 %v265
  %v1538 = vunpack.c.l.b16 %v266
  %v1539 = vunpack.c.h.b16 %v266
  %v1540 = vunpack.c.l.b16 %v267
  %v1541 = vunpack.c.h.b16 %v267
  %v1542 = vunpack.c.l.b16 %v268
  %v1543 = vunpack.c.h.b16 %v268
  %v1544 = vunpack.c.l.b16 %v269
  %v1545 = vunpack.c.h.b16 %v269
  %v1546 = vunpack.c.l.b16 %v270
  %v1547 = vunpack.c.h.b16 %v270
  %v1548 = vunpack.c.l.b16 %v271
  %v1549 = vunpack.c.h.b16 %v271
  %v1550 = vunpack.c.l.b16 %v272
  %v1551 = vunpack.c.h.b16 %v272
  %v1552 = vunpack.c.l.b16 %v273
  %v1553 = vunpack.c.h.b16 %v273
  %v1554 = vunpack.c.l.b16 %v274
  %v1555 = vunpack.c.h.b16 %v274
  %v1556 = vunpack.c.l.b16 %v275
  %v1557 = vunpack.c.h.b16 %v275
  %v1558 = vunpack.c.l.b16 %v276
  %v1559 = vunpack.c.h.b16 %v276
  %v1560 = vunpack.c.l.b16 %v277
  %v1561 = vunpack.c.h.b16 %v277
  %v1562 = vunpack.c.l.b16 %v278
  %v1563 = vunpack.c.h.b16 %v278
  %v1564 = vunpack.c.l.b16 %v279
  %v1565 = vunpack.c.h.b16 %v279
  %v1566 = vunpack.c.l.b16 %v280
  %v1567 = vunpack.c.h.b16 %v280
  %v1568 = vunpack.c.l.b16 %v281
  %v1569 = vunpack.c.h.b16 %v281
  %v1570 = vunpack.c.l.b16 %v282
  %v1571 = vunpack.c.h.b16 %v282
  %v1572 = vunpack.c.l.b16 %v283
  %v1573 = vunpack.c.h.b16 %v283
  %v1574 = vunpack.c.l.b16 %v284
  %v1575 = vunpack.c.h.b16 %v284
  %v1576 = vunpack.c.l.b16 %v285
  %v1577 = vunpack.c.h.b16 %v285
  %v1578 = vunpack.c.l.b16 %v286
  %v1579 = vunpack.c.h.b16 %v286
  %v1580 = vunpack.c.l.b16 %v287
  %v1581 = vunpack.c.h.b16 %v287
  %v1582 = vunpack.c.l.b16 %v288
  %v1583 = vunpack.c.h.b16 %v288
  %v1584 = vunpack.c.l.b16 %v289
  %v1585 = vunpack.c.h.b16 %v289
  %v1586 = vunpack.c.l.b16 %v290
  %v1587 = vunpack.c.h.b16 %v290
  %v1588 = vunpack.c.l.b16 %v291
  %v1589 = vunpack.c.h.b16 %v291
  %v1590 = vunpack.c.l.b16 %v292
  %v1591 = vunpack.c.h.b16 %v292
  %v1592 = vunpack.c.l.b16 %v293
  %v1593 = vunpack.c.h.b16 %v293
  %v1594 = vunpack.c.l.b16 %v294
  %v1595 = vunpack.c.h.b16 %v294
  %v1596 = vunpack.c.l.b16 %v295
  %v1597 = vunpack.c.h.b16 %v295
  %v1598 = vunpack.c.l.b16 %v296
  %v1599 = vunpack.c.h.b16 %v296
  %v1600 = vunpack.c.l.b16 %v297
  %v1601 = vunpack.c.h.b16 %v297
  %v1602 = vunpack.c.l.b16 %v298
  %v1603 = vunpack.c.h.b16 %v298
  %v1604 = vunpack.c.l.b16 %v299
  %v1605 = vunpack.c.h.b16 %v299
  %v1606 = vunpack.c.l.b16 %v300
  %v1607 = vunpack.c.h.b16 %v300
  %v1608 = vunpack.c.l.b16 %v301
  %v1609 = vunpack.c.h.b16 %v301
  %v1610 = vunpack.c.l.b16 %v302
  %v1611 = vunpack.c.h.b16 %v302
  %v1612 = vunpack.c.l.b16 %v303
  %v1613 = vunpack.c.h.b16 %v303
  %v1614 = vunpack.c.l.b16 %v304
  %v1615 = vunpack.c.h.b16 %v304
  %v1616 = vunpack.c.l.b16 %v305
  %v1617 = vunpack.c.h.b16 %v305
  %v1618 = vunpack.c.l.b16 %v306
  %v1619 = vunpack.c.h.b16 %v306
  %v1620 = vunpack.c.l.b16 %v307
  %v1621 = vunpack.c.h.b16 %v307
  %v1622 = vunpack.c.l.b16 %v308
  %v1623 = vunpack.c.h.b16 %v308
  %v1624 = vunpack.c.l.b16 %v309
  %v1625 = vunpack.c.h.b16 %v309
  %v1626 = vunpack.c.l.b16 %v310
  %v1627 = vunpack.c.h.b16 %v310
  %v1628 = vunpack.c.l.b16 %v311
  %v1629 = vunpack.c.h.b16 %v311
  %v1630 = vunpack.c.l.b16 %v312
  %v1631 = vunpack.c.h.b16 %v312
  %v1632 = vunpack.c.l.b16 %v313
  %v1633 = vunpack.c.h.b16 %v313
  %v1634 = vunpack.c.l.b16 %v314
  %v1635 = vunpack.c.h.b16 %v314
  %v1636 = vunpack.c.l.b16 %v315
  %v1637 = vunpack.c.h.b16 %v315
  %v1638 = vunpack.c.l.b16 %v316
  %v1639 = vunpack.c.h.b16 %v316
  %v1640 = vunpack.c.l.b16 %v317
  %v1641 = vunpack.c.h.b16 %v317
  %v1642 = vunpack.c.l.b16 %v318
  %v1643 = vunpack.c.h.b16 %v318
  %v1644 = vunpack.c.l.b16 %v319
  %v1645 = vunpack.c.h.b16 %v319
  %v1646 = vunpack.c.l.b16 %v320
  %v1647 = vunpack.c.h.b16 %v320
  %v1648 = vunpack.c.l.b16 %v321
  %v1649 = vunpack.c.h.b16 %v321
  %v1650 = vunpack.c.l.b16 %v322
  %v1651 = vunpack.c.h.b16 %v322
  %v1652 = vunpack.c.l.b16 %v323
  %v1653 = vunpack.c.h.b16 %v323
  %v1654 = vunpack.c.l.b16 %v324
  %v1655 = vunpack.c.h.b16 %v324
  %v1656 = vunpack.c.l.b16 %v325
  %v1657 = vunpack.c.h.b16 %v325
  %v1658 = vunpack.c.l.b16 %v326
  %v1659 = vunpack.c.h.b16 %v326
  %v1660 = vunpack.c.l.b16 %v327
  %v1661 = vunpack.c.h.b16 %v327
  %v1662 = vunpack.c.l.b16 %v328
  %v1663 = vunpack.c.h.b16 %v328
  %v1664 = vunpack.c.l.b16 %v329
  %v1665 = vunpack.c.h.b16 %v329
  %v1666 = vunpack.c.l.b16 %v330
  %v1667 = vunpack.c.h.b16 %v330
  %v1668 = vunpack.c.l.b16 %v331
  %v1669 = vunpack.c.h.b16 %v331
  %v1670 = vunpack.c.l.b16 %v332
  %v1671 = vunpack.c.h.b16 %v332
  %v1672 = vunpack.c.l.b16 %v333
  %v1673 = vunpack.c.h.b16 %v333
  %v1674 = vunpack.c.l.b16 %v334
  %v1675 = vunpack.c.h.b16 %v334
  %v1676 = vunpack.c.l.b16 %v335
  %v1677 = vunpack.c.h.b16 %v335
  %v1678 = vunpack.c.l.b16 %v336
  %v1679 = vunpack.c.h.b16 %v336
  %v1680 = vunpack.c.l.b16 %v337
  %v1681 = vunpack.c.h.b16 %v337
  %v1682 = vunpack.c.l.b16 %v338
  %v1683 = vunpack.c.h.b16 %v338
  %v1684 = vunpack.c.l.b16 %v339
  %v1685 = vunpack.c.h.b16 %v339
  %v1686 = vunpack.c.l.b16 %v340
  %v1687 = vunpack.c.h.b16 %v340
  %v1688 = vunpack.c.l.b16 %v341
  %v1689 = vunpack.c.h.b16 %v341
  %v1690 = vunpack.c.l.b16 %v342
  %v1691 = vunpack.c.h.b16 %v342
  %v1692 = vunpack.c.l.b16 %v343
  %v1693 = vunpack.c.h.b16 %v343
  %v1694 = vunpack.c.l.b16 %v344
  %v1695 = vunpack.c.h.b16 %v344
  %v1696 = vunpack.c.l.b16 %v345
  %v1697 = vunpack.c.h.b16 %v345
  %v1698 = vunpack.c.l.b16 %v346
  %v1699 = vunpack.c.h.b16 %v346
  %v1700 = vunpack.c.l.b16 %v347
  %v1701 = vunpack.c.h.b16 %v347
  %v1702 = vunpack.c.l.b16 %v348
  %v1703 = vunpack.c.h.b16 %v348
  %v1704 = vunpack.c.l.b16 %v349
  %v1705 = vunpack.c.h.b16 %v349
  %v1706 = vunpack.c.l.b16 %v350
  %v1707 = vunpack.c.h.b16 %v350
  %v1708 = vunpack.c.l.b16 %v351
  %v1709 = vunpack.c.h.b16 %v351
  %v1710 = vunpack.c.l.b16 %v352
  %v1711 = vunpack.c.h.b16 %v352
  %v1712 = vunpack.c.l.b16 %v353
  %v1713 = vunpack.c.h.b16 %v353
  %v1714 = vunpack.c.l.b16 %v354
  %v1715 = vunpack.c.h.b16 %v354
  %v1716 = vunpack.c.l.b16 %v355
  %v1717 = vunpack.c.h.b16 %v355
  %v1718 = vunpack.c.l.b16 %v356
  %v1719 = vunpack.c.h.b16 %v356
  %v1720 = vunpack.c.l.b16 %v357
  %v1721 = vunpack.c.h.b16 %v357
  %v1722 = vunpack.c.l.b16 %v358
  %v1723 = vunpack.c.h.b16 %v358
  %v1724 = vunpack.c.l.b16 %v359
  %v1725 = vunpack.c.h.b16 %v359
  %v1726 = vunpack.c.l.b16 %v360
  %v1727 = vunpack.c.h.b16 %v360
  %v1728 = vunpack.c.l.b16 %v361
  %v1729 = vunpack.c.h.b16 %v361
  %v1730 = vunpack.c.l.b16 %v362
  %v1731 = vunpack.c.h.b16 %v362
  %v1732 = vunpack.c.l.b16 %v363
  %v1733 = vunpack.c.h.b16 %v363
  %v1734 = vunpack.c.l.b16 %v364
  %v1735 = vunpack.c.h.b16 %v364
  %v1736 = vunpack.c.l.b16 %v365
  %v1737 = vunpack.c.h.b16 %v365
  %v1738 = vunpack.c.l.b16 %v366
  %v1739 = vunpack.c.h.b16 %v366
  %v1740 = vunpack.c.l.b16 %v367
  %v1741 = vunpack.c.h.b16 %v367
  %v1742 = vunpack.c.l.b16 %v368
  %v1743 = vunpack.c.h.b16 %v368
  %v1744 = vunpack.c.l.b16 %v369
  %v1745 = vunpack.c.h.b16 %v369
  %v1746 = vunpack.c.l.b16 %v370
  %v1747 = vunpack.c.h.b16 %v370
  %v1748 = vunpack.c.l.b16 %v371
  %v1749 = vunpack.c.h.b16 %v371
  %v1750 = vunpack.c.l.b16 %v372
  %v1751 = vunpack.c.h.b16 %v372
  %v1752 = vunpack.c.l.b16 %v373
  %v1753 = vunpack.c.h.b16 %v373
  %v1754 = vunpack.c.l.b16 %v374
  %v1755 = vunpack.c.h.b16 %v374
  %v1756 = vunpack.c.l.b16 %v375
  %v1757 = vunpack.c.h.b16 %v375
  %v1758 = vunpack.c.l.b16 %v376
  %v1759 = vunpack.c.h.b16 %v376
  %v1760 = vunpack.c.l.b16 %v377
  %v1761 = vunpack.c.h.b16 %v377
  %v1762 = vunpack.c.l.b16 %v378
  %v1763 = vunpack.c.h.b16 %v378
  %v1764 = vunpack.c.l.b16 %v379
  %v1765 = vunpack.c.h.b16 %v379
  %v1766 = vunpack.c.l.b16 %v380
  %v1767 = vunpack.c.h.b16 %v380
  %v1768 = vunpack.c.l.b16 %v381
  %v1769 = vunpack.c.h.b16 %v381
  %v1770 = vunpack.c.l.b16 %v382
  %v1771 = vunpack.c.h.b16 %v382
  %v1772 = vunpack.c.l.b16 %v383
  %v1773 = vunpack.c.h.b16 %v383
  %v1774 = vunpack.c.l.b16 %v384
  %v1775 = vunpack.c.h.b16 %v384
  %v1776 = vunpack.c.l.b16 %v385
  %v1777 = vunpack.c.h.b16 %v385
  %v1778 = vunpack.c.l.b16 %v386
  %v1779 = vunpack.c.h.b16 %v386
  %v1780 = vunpack.c.l.b16 %v387
  %v1781 = vunpack.c.h.b16 %v387
  %v1782 = vunpack.c.l.b16 %v388
  %v1783 = vunpack.c.h.b16 %v388
  %v1784 = vunpack.c.l.b16 %v389
  %v1785 = vunpack.c.h.b16 %v389
  %v1786 = vunpack.c.l.b16 %v390
  %v1787 = vunpack.c.h.b16 %v390
  %v1788 = vunpack.c.l.b16 %v391
  %v1789 = vunpack.c.h.b16 %v391
  %v1790 = vunpack.c.l.b16 %v392
  %v1791 = vunpack.c.h.b16 %v392
  %v1792 = vunpack.c.l.b16 %v393
  %v1793 = vunpack.c.h.b16 %v393
  %v1794 = vunpack.c.l.b16 %v394
  %v1795 = vunpack.c.h.b16 %v394
  %v1796 = vunpack.c.l.b16 %v395
  %v1797 = vunpack.c.h.b16 %v395
  %v1798 = vunpack.c.l.b16 %v396
  %v1799 = vunpack.c.h.b16 %v396
  %v1800 = vunpack.c.l.b16 %v397
  %v1801 = vunpack.c.h.b16 %v397
  %v1802 = vunpack.c.l.b16 %v398
  %v1803 = vunpack.c.h.b16 %v398
  %v1804 = vunpack.c.l.b16 %v399
  %v1805 = vunpack.c.h.b16 %v399
  %v1806 = vunpack.c.l.b16 %v400
  %v1807 = vunpack.c.h.b16 %v400
  %v1808 = vunpack.c.l.b16 %v401
  %v1809 = vunpack.c.h.b16 %v401
  %v1810 = vunpack.c.l.b16 %v402
  %v1811 = vunpack.c.h.b16 %v402
  %v1812 = vunpack.c.l.b16 %v403
  %v1813 = vunpack.c.h.b16 %v403
  %v1814 = vunpack.c.l.b16 %v404
  %v1815 = vunpack.c.h.b16 %v404
  %v1816 = vunpack.c.l.b16 %v405
  %v1817 = vunpack.c.h.b16 %v405
  %v1818 = vunpack.c.l.b16 %v406
  %v1819 = vunpack.c.h.b16 %v406
  %v1820 = vunpack.c.l.b16 %v407
  %v1821 = vunpack.c.h.b16 %v407
  %v1822 = vunpack.c.l.b16 %v408
  %v1823 = vunpack.c.h.b16 %v408
  %v1824 = vunpack.c.l.b16 %v409
  %v1825 = vunpack.c.h.b16 %v409
  %v1826 = vunpack.c.l.b16 %v410
  %v1827 = vunpack.c.h.b16 %v410
  %v1828 = vunpack.c.l.b16 %v411
  %v1829 = vunpack.c.h.b16 %v411
  %v1830 = vunpack.c.l.b16 %v412
  %v1831 = vunpack.c.h.b16 %v412
  %v1832 = vunpack.c.l.b16 %v413
  %v1833 = vunpack.c.h.b16 %v413
  %v1834 = vunpack.c.l.b16 %v414
  %v1835 = vunpack.c.h.b16 %v414
  %v1836 = vunpack.c.l.b16 %v415
  %v1837 = vunpack.c.h.b16 %v415
  %v1838 = vunpack.c.l.b16 %v416
  %v1839 = vunpack.c.h.b16 %v416
  %v1840 = vunpack.c.l.b16 %v417
  %v1841 = vunpack.c.h.b16 %v417
  %v1842 = vunpack.c.l.b16 %v418
  %v1843 = vunpack.c.h.b16 %v418
  %v1844 = vunpack.c.l.b16 %v419
  %v1845 = vunpack.c.h.b16 %v419
  %v1846 = vunpack.c.l.b16 %v420
  %v1847 = vunpack.c.h.b16 %v420
  %v1848 = vunpack.c.l.b16 %v421
  %v1849 = vunpack.c.h.b16 %v421
  %v1850 = vunpack.c.l.b16 %v422
  %v1851 = vunpack.c.h.b16 %v422
  %v1852 = vunpack.c.l.b16 %v423
  %v1853 = vunpack.c.h.b16 %v423
  %v1854 = vunpack.c.l.b16 %v424
  %v1855 = vunpack.c.h.b16 %v424
  %v1856 = vunpack.c.l.b16 %v425
  %v1857 = vunpack.c.h.b16 %v425
  %v1858 = vunpack.c.l.b16 %v426
  %v1859 = vunpack.c.h.b16 %v426
  %v1860 = vunpack.c.l.b16 %v427
  %v1861 = vunpack.c.h.b16 %v427
  %v1862 = vunpack.c.l.b16 %v428
  %v1863 = vunpack.c.h.b16 %v428
  %v1864 = vunpack.c.l.b16 %v429
  %v1865 = vunpack.c.h.b16 %v429
  %v1866 = vunpack.c.l.b16 %v430
  %v1867 = vunpack.c.h.b16 %v430
  %v1868 = vunpack.c.l.b16 %v431
  %v1869 = vunpack.c.h.b16 %v431
  %v1870 = vunpack.c.l.b16 %v432
  %v1871 = vunpack.c.h.b16 %v432
  %v1872 = vunpack.c.l.b16 %v433
  %v1873 = vunpack.c.h.b16 %v433
  %v1874 = vunpack.c.l.b16 %v434
  %v1875 = vunpack.c.h.b16 %v434
  %v1876 = vunpack.c.l.b16 %v435
  %v1877 = vunpack.c.h.b16 %v435
  %v1878 = vunpack.c.l.b16 %v436
  %v1879 = vunpack.c.h.b16 %v436
  %v1880 = vunpack.c.l.b16 %v437
  %v1881 = vunpack.c.h.b16 %v437
  %v1882 = vunpack.c.l.b16 %v438
  %v1883 = vunpack.c.h.b16 %v438
  %v1884 = vunpack.c.l.b16 %v439
  %v1885 = vunpack.c.h.b16 %v439
  %v1886 = vunpack.c.l.b16 %v440
  %v1887 = vunpack.c.h.b16 %v440
  %v1888 = vunpack.c.l.b16 %v441
  %v1889 = vunpack.c.h.b16 %v441
  %v1890 = vunpack.c.l.b16 %v442
  %v1891 = vunpack.c.h.b16 %v442
  %v1892 = vunpack.c.l.b16 %v443
  %v1893 = vunpack.c.h.b16 %v443
  %v1894 = vunpack.c.l.b16 %v444
  %v1895 = vunpack.c.h.b16 %v444
  %v1896 = vunpack.c.l.b16 %v445
  %v1897 = vunpack.c.h.b16 %v445
  %v1898 = vunpack.c.l.b16 %v446
  %v1899 = vunpack.c.h.b16 %v446
  %v1900 = vunpack.c.l.b16 %v447
  %v1901 = vunpack.c.h.b16 %v447
  %v1902 = vunpack.c.l.b16 %v448
  %v1903 = vunpack.c.h.b16 %v448
  %v1904 = vunpack.c.l.b16 %v449
  %v1905 = vunpack.c.h.b16 %v449
  %v1906 = vunpack.c.l.b16 %v450
  %v1907 = vunpack.c.h.b16 %v450
  %v1908 = vunpack.c.l.b16 %v451
  %v1909 = vunpack.c.h.b16 %v451
  %v1910 = vunpack.c.l.b16 %v452
  %v1911 = vunpack.c.h.b16 %v452
  %v1912 = vunpack.c.l.b16 %v453
  %v1913 = vunpack.c.h.b16 %v453
  %v1914 = vunpack.c.l.b16 %v454
  %v1915 = vunpack.c.h.b16 %v454
  %v1916 = vunpack.c.l.b16 %v455
  %v1917 = vunpack.c.h.b16 %v455
  %v1918 = vunpack.c.l.b16 %v456
  %v1919 = vunpack.c.h.b16 %v456
  %v1920 = vunpack.c.l.b16 %v457
  %v1921 = vunpack.c.h.b16 %v457
  %v1922 = vunpack.c.l.b16 %v458
  %v1923 = vunpack.c.h.b16 %v458
  %v1924 = vunpack.c.l.b16 %v459
  %v1925 = vunpack.c.h.b16 %v459
  %v1926 = vunpack.c.l.b16 %v460
  %v1927 = vunpack.c.h.b16 %v460
  %v1928 = vunpack.c.l.b16 %v461
  %v1929 = vunpack.c.h.b16 %v461
  %v1930 = vunpack.c.l.b16 %v462
  %v1931 = vunpack.c.h.b16 %v462
  %v1932 = vunpack.c.l.b16 %v463
  %v1933 = vunpack.c.h.b16 %v463
  %v1934 = vunpack.c.l.b16 %v464
  %v1935 = vunpack.c.h.b16 %v464
  %v1936 = vunpack.c.l.b16 %v465
  %v1937 = vunpack.c.h.b16 %v465
  %v1938 = vunpack.c.l.b16 %v466
  %v1939 = vunpack.c.h.b16 %v466
  %v1940 = vunpack.c.l.b16 %v467
  %v1941 = vunpack.c.h.b16 %v467
  %v1942 = vunpack.c.l.b16 %v468
  %v1943 = vunpack.c.h.b16 %v468
  %v1944 = vunpack.c.l.b16 %v469
  %v1945 = vunpack.c.h.b16 %v469
  %v1946 = vunpack.c.l.b16 %v470
  %v1947 = vunpack.c.h.b16 %v470
  %v1948 = vunpack.c.l.b16 %v471
  %v1949 = vunpack.c.h.b16 %v471
  %v1950 = vunpack.c.l.b16 %v472
  %v1951 = vunpack.c.h.b16 %v472
  %v1952 = vunpack.c.l.b16 %v473
  %v1953 = vunpack.c.h.b16 %v473
  %v1954 = vunpack.c.l.b16 %v474
  %v1955 = vunpack.c.h.b16 %v474
  %v1956 = vunpack.c.l.b16 %v475
  %v1957 = vunpack.c.h.b16 %v475
  %v1958 = vunpack.c.l.b16 %v476
  %v1959 = vunpack.c.h.b16 %v476
  %v1960 = vunpack.c.l.b16 %v477
  %v1961 = vunpack.c.h.b16 %v477
  %v1962 = vunpack.c.l.b16 %v478
  %v1963 = vunpack.c.h.b16 %v478
  %v1964 = vunpack.c.l.b16 %v479
  %v1965 = vunpack.c.h.b16 %v479
  %v1966 = vunpack.c.l.b16 %v480
  %v1967 = vunpack.c.h.b16 %v480
  %v1968 = vunpack.c.l.b16 %v481
  %v1969 = vunpack.c.h.b16 %v481
  %v1970 = vunpack.c.l.b16 %v482
  %v1971 = vunpack.c.h.b16 %v482
  %v1972 = vunpack.c.l.b16 %v483
  %v1973 = vunpack.c.h.b16 %v483
  %v1974 = vunpack.c.l.b16 %v484
  %v1975 = vunpack.c.h.b16 %v484
  %v1976 = vunpack.c.l.b16 %v485
  %v1977 = vunpack.c.h.b16 %v485
  %v1978 = vunpack.c.l.b16 %v486
  %v1979 = vunpack.c.h.b16 %v486
  %v1980 = vunpack.c.l.b16 %v487
  %v1981 = vunpack.c.h.b16 %v487
  %v1982 = vunpack.c.l.b16 %v488
  %v1983 = vunpack.c.h.b16 %v488
  %v1984 = vunpack.c.l.b16 %v489
  %v1985 = vunpack.c.h.b16 %v489
  %v1986 = vunpack.c.l.b16 %v490
  %v1987 = vunpack.c.h.b16 %v490
  %v1988 = vunpack.c.l.b16 %v491
  %v1989 = vunpack.c.h.b16 %v491
  %v1990 = vunpack.c.l.b16 %v492
  %v1991 = vunpack.c.h.b16 %v492
  %v1992 = vunpack.c.l.b16 %v493
  %v1993 = vunpack.c.h.b16 %v493
  %v1994 = vunpack.c.l.b16 %v494
  %v1995 = vunpack.c.h.b16 %v494
  %v1996 = vunpack.c.l.b16 %v495
  %v1997 = vunpack.c.h.b16 %v495
  %v1998 = vunpack.c.l.b16 %v496
  %v1999 = vunpack.c.h.b16 %v496
  %v2000 = vunpack.c.l.b16 %v497
  %v2001 = vunpack.c.h.b16 %v497
  %v2002 = vunpack.c.l.b16 %v498
  %v2003 = vunpack.c.h.b16 %v498
  %v2004 = vunpack.c.l.b16 %v499
  %v2005 = vunpack.c.h.b16 %v499
  %v2006 = vunpack.c.l.b16 %v500
  %v2007 = vunpack.c.h.b16 %v500
  %v2008 = vunpack.c.l.b16 %v501
  %v2009 = vunpack.c.h.b16 %v501
  %v2010 = vunpack.c.l.b16 %v502
  %v2011 = vunpack.c.h.b16 %v502
  %v2012 = vunpack.c.l.b16 %v503
  %v2013 = vunpack.c.h.b16 %v503
  %v2014 = vunpack.c.l.b16 %v504
  %v2015 = vunpack.c.h.b16 %v504
  %v2016 = vunpack.c.l.b16 %v505
  %v2017 = vunpack.c.h.b16 %v505
  %v2018 = vunpack.c.l.b16 %v506
  %v2019 = vunpack.c.h.b16 %v506
  %v2020 = vunpack.c.l.b16 %v507
  %v2021 = vunpack.c.h.b16 %v507
  %v2022 = vunpack.c.l.b16 %v508
  %v2023 = vunpack.c.h.b16 %v508
  %v2024 = vunpack.c.l.b16 %v509
  %v2025 = vunpack.c.h.b16 %v509
  %v2026 = vunpack.c.l.b16 %v510
  %v2027 = vunpack.c.h.b16 %v510
  %v2028 = vunpack.c.l.b16 %v511
  %v2029 = vunpack.c.h.b16 %v511
  %v2030 = vunpack.c.l.b16 %v512
  %v2031 = vunpack.c.h.b16 %v512
  %v2032 = vunpack.c.l.b16 %v513
  %v2033 = vunpack.c.h.b16 %v513
  %v2034 = vunpack.c.l.b16 %v514
  %v2035 = vunpack.c.h.b16 %v514
  %v2036 = vunpack.c.l.b16 %v515
  %v2037 = vunpack.c.h.b16 %v515
  %v2038 = vunpack.c.l.b16 %v516
  %v2039 = vunpack.c.h.b16 %v516
  %v2040 = vunpack.c.l.b16 %v517
  %v2041 = vunpack.c.h.b16 %v517
  %v2042 = vunpack.c.l.b16 %v518
  %v2043 = vunpack.c.h.b16 %v518
  %v2044 = vunpack.c.l.b16 %v519
  %v2045 = vunpack.c.h.b16 %v519
  %v2046 = vunpack.c.l.b16 %v520
  %v2047 = vunpack.c.h.b16 %v520
  %v2048 = vunpack.c.l.b16 %v521
  %v2049 = vunpack.c.h.b16 %v521
  %v2050 = vunpack.c.l.b16 %v522
  %v2051 = vunpack.c.h.b16 %v522
  %v2052 = vunpack.c.l.b16 %v523
  %v2053 = vunpack.c.h.b16 %v523
  %v2054 = vunpack.c.l.b16 %v524
  %v2055 = vunpack.c.h.b16 %v524
  %v2056 = vunpack.c.l.b16 %v525
  %v2057 = vunpack.c.h.b16 %v525
  %v2058 = vunpack.c.l.b16 %v526
  %v2059 = vunpack.c.h.b16 %v526
  %v2060 = vunpack.c.l.b16 %v527
  %v2061 = vunpack.c.h.b16 %v527
  %v2062 = vunpack.c.l.b16 %v528
  %v2063 = vunpack.c.h.b16 %v528
  %v2064 = vunpack.c.l.b16 %v529
  %v2065 = vunpack.c.h.b16 %v529
  %v2066 = vpack.c.b16 %v1106, %v1042
  %v2067 = vpack.c.b16 %v1107, %v1043
  %v2068 = vpack.c.b16 %v1108, %v1044
  %v2069 = vpack.c.b16 %v1109, %v1045
  %v2070 = vpack.c.b16 %v1110, %v1046
  %v2071 = vpack.c.b16 %v1111, %v1047
  %v2072 = vpack.c.b16 %v1112, %v1048
  %v2073 = vpack.c.b16 %v1113, %v1049
  %v2074 = vpack.c.b16 %v1114, %v1050
  %v2075 = vpack.c.b16 %v1115, %v1051
  %v2076 = vpack.c.b16 %v1116, %v1052
  %v2077 = vpack.c.b16 %v1117, %v1053
  %v2078 = vpack.c.b16 %v1118, %v1054
  %v2079 = vpack.c.b16 %v1119, %v1055
  %v2080 = vpack.c.b16 %v1120, %v1056
  %v2081 = vpack.c.b16 %v1121, %v1057
  %v2082 = vpack.c.b16 %v1122, %v1058
  %v2083 = vpack.c.b16 %v1123, %v1059
  %v2084 = vpack.c.b16 %v1124, %v1060
  %v2085 = vpack.c.b16 %v1125, %v1061
  %v2086 = vpack.c.b16 %v1126, %v1062
  %v2087 = vpack.c.b16 %v1127, %v1063
  %v2088 = vpack.c.b16 %v1128, %v1064
  %v2089 = vpack.c.b16 %v1129, %v1065
  %v2090 = vpack.c.b16 %v1130, %v1066
  %v2091 = vpack.c.b16 %v1131, %v1067
  %v2092 = vpack.c.b16 %v1132, %v1068
  %v2093 = vpack.c.b16 %v1133, %v1069
  %v2094 = vpack.c.b16 %v1134, %v1070
  %v2095 = vpack.c.b16 %v1135, %v1071
  %v2096 = vpack.c.b16 %v1136, %v1072
  %v2097 = vpack.c.b16 %v1137, %v1073
  %v2098 = vpack.c.b16 %v1138, %v1074
  %v2099 = vpack.c.b16 %v1139, %v1075
  %v2100 = vpack.c.b16 %v1140, %v1076
  %v2101 = vpack.c.b16 %v1141, %v1077
  %v2102 = vpack.c.b16 %v1142, %v1078
  %v2103 = vpack.c.b16 %v1143, %v1079
  %v2104 = vpack.c.b16 %v1144, %v1080
  %v2105 = vpack.c.b16 %v1145, %v1081
  %v2106 = vpack.c.b16 %v1146, %v1082
  %v2107 = vpack.c.b16 %v1147, %v1083
  %v2108 = vpack.c.b16 %v1148, %v1084
  %v2109 = vpack.c.b16 %v1149, %v1085
  %v2110 = vpack.c.b16 %v1150, %v1086
  %v2111 = vpack.c.b16 %v1151, %v1087
  %v2112 = vpack.c.b16 %v1152, %v1088
  %v2113 = vpack.c.b16 %v1153, %v1089
  %v2114 = vpack.c.b16 %v1154, %v1090
  %v2115 = vpack.c.b16 %v1155, %v1091
  %v2116 = vpack.c.b16 %v1156, %v1092
  %v2117 = vpack.c.b16 %v1157, %v1093
  %v2118 = vpack.c.b16 %v1158, %v1094
  %v2119 = vpack.c.b16 %v1159, %v1095
  %v2120 = vpack.c.b16 %v1160, %v1096
  %v2121 = vpack.c.b16 %v1161, %v1097
  %v2122 = vpack.c.b16 %v1162, %v1098
  %v2123 = vpack.c.b16 %v1163, %v1099
  %v2124 = vpack.c.b16 %v1164, %v1100
  %v2125 = vpack.c.b16 %v1165, %v1101
  %v2126 = vpack.c.b16 %v1166, %v1102
  %v2127 = vpack.c.b16 %v1167, %v1103
  %v2128 = vpack.c.b16 %v1168, %v1104
  %v2129 = vpack.c.b16 %v1169, %v1105
  %v2130 = vpack.c.b16 %v1234, %v1170
  %v2131 = vpack.c.b16 %v1235, %v1171
  %v2132 = vpack.c.b16 %v1236, %v1172
  %v2133 = vpack.c.b16 %v1237, %v1173
  %v2134 = vpack.c.b16 %v1238, %v1174
  %v2135 = vpack.c.b16 %v1239, %v1175
  %v2136 = vpack.c.b16 %v1240, %v1176
  %v2137 = vpack.c.b16 %v1241, %v1177
  %v2138 = vpack.c.b16 %v1242, %v1178
  %v2139 = vpack.c.b16 %v1243, %v1179
  %v2140 = vpack.c.b16 %v1244, %v1180
  %v2141 = vpack.c.b16 %v1245, %v1181
  %v2142 = vpack.c.b16 %v1246, %v1182
  %v2143 = vpack.c.b16 %v1247, %v1183
  %v2144 = vpack.c.b16 %v1248, %v1184
  %v2145 = vpack.c.b16 %v1249, %v1185
  %v2146 = vpack.c.b16 %v1250, %v1186
  %v2147 = vpack.c.b16 %v1251, %v1187
  %v2148 = vpack.c.b16 %v1252, %v1188
  %v2149 = vpack.c.b16 %v1253, %v1189
  %v2150 = vpack.c.b16 %v1254, %v1190
  %v2151 = vpack.c.b16 %v1255, %v1191
  %v2152 = vpack.c.b16 %v1256, %v1192
  %v2153 = vpack.c.b16 %v1257, %v1193
  %v2154 = vpack.c.b16 %v1258, %v1194
  %v2155 = vpack.c.b16 %v1259, %v1195
  %v2156 = vpack.c.b16 %v1260, %v1196
  %v2157 = vpack.c.b16 %v1261, %v1197
  %v2158 = vpack.c.b16 %v1262, %v1198
  %v2159 = vpack.c.b16 %v1263, %v1199
  %v2160 = vpack.c.b16 %v1264, %v1200
  %v2161 = vpack.c.b16 %v1265, %v1201
  %v2162 = vpack.c.b16 %v1266, %v1202
  %v2163 = vpack.c.b16 %v1267, %v1203
  %v2164 = vpack.c.b16 %v1268, %v1204
  %v2165 = vpack.c.b16 %v1269, %v1205
  %v2166 = vpack.c.b16 %v1270, %v1206
  %v2167 = vpack.c.b16 %v1271, %v1207
  %v2168 = vpack.c.b16 %v1272, %v1208
  %v2169 = vpack.c.b16 %v1273, %v1209
  %v2170 = vpack.c.b16 %v1274, %v1210
  %v2171 = vpack.c.b16 %v1275, %v1211
  %v2172 = vpack.c.b16 %v1276, %v1212
  %v2173 = vpack.c.b16 %v1277, %v1213
  %v2174 = vpack.c.b16 %v1278, %v1214
  %v2175 = vpack.c.b16 %v1279, %v1215
  %v2176 = vpack.c.b16 %v1280, %v1216
  %v2177 = vpack.c.b16 %v1281, %v1217
  %v2178 = vpack.c.b16 %v1282, %v1218
  %v2179 = vpack.c.b16 %v1283, %v1219
  %v2180 = vpack.c.b16 %v1284, %v1220
  %v2181 = vpack.c.b16 %v1285, %v1221
  %v2182 = vpack.c.b16 %v1286, %v1222
  %v2183 = vpack.c.b16 %v1287, %v1223
  %v2184 = vpack.c.b16 %v1288, %v1224
  %v2185 = vpack.c.b16 %v1289, %v1225
  %v2186 = vpack.c.b16 %v1290, %v1226
  %v2187 = vpack.c.b16 %v1291, %v1227
  %v2188 = vpack.c.b16 %v1292, %v1228
  %v2189 = vpack.c.b16 %v1293, %v1229
  %v2190 = vpack.c.b16 %v1294, %v1230
  %v2191 = vpack.c.b16 %v1295, %v1231
  %v2192 = vpack.c.b16 %v1296, %v1232
  %v2193 = vpack.c.b16 %v1297, %v1233
  %v2194 = vpack.c.b16 %v1362, %v1298
  %v2195 = vpack.c.b16 %v1363, %v1299
  %v2196 = vpack.c.b16 %v1364, %v1300
  %v2197 = vpack.c.b16 %v1365, %v1301
  %v2198 = vpack.c.b16 %v1366, %v1302
  %v2199 = vpack.c.b16 %v1367, %v1303
  %v2200 = vpack.c.b16 %v1368, %v1304
  %v2201 = vpack.c.b16 %v1369, %v1305
  %v2202 = vpack.c.b16 %v1370, %v1306
  %v2203 = vpack.c.b16 %v1371, %v1307
  %v2204 = vpack.c.b16 %v1372, %v1308
  %v2205 = vpack.c.b16 %v1373, %v1309
  %v2206 = vpack.c.b16 %v1374, %v1310
  %v2207 = vpack.c.b16 %v1375, %v1311
  %v2208 = vpack.c.b16 %v1376, %v1312
  %v2209 = vpack.c.b16 %v1377, %v1313
  %v2210 = vpack.c.b16 %v1378, %v1314
  %v2211 = vpack.c.b16 %v1379, %v1315
  %v2212 = vpack.c.b16 %v1380, %v1316
  %v2213 = vpack.c.b16 %v1381, %v1317
  %v2214 = vpack.c.b16 %v1382, %v1318
  %v2215 = vpack.c.b16 %v1383, %v1319
  %v2216 = vpack.c.b16 %v1384, %v1320
  %v2217 = vpack.c.b16 %v1385, %v1321
  %v2218 = vpack.c.b16 %v1386, %v1322
  %v2219 = vpack.c.b16 %v1387, %v1323
  %v2220 = vpack.c.b16 %v1388, %v1324
  %v2221 = vpack.c.b16 %v1389, %v1325
  %v2222 = vpack.c.b16 %v1390, %v1326
  %v2223 = vpack.c.b16 %v1391, %v1327
  %v2224 = vpack.c.b16 %v1392, %v1328
  %v2225 = vpack.c.b16 %v1393, %v1329
  %v2226 = vpack.c.b16 %v1394, %v1330
  %v2227 = vpack.c.b16 %v1395, %v1331
  %v2228 = vpack.c.b16 %v1396, %v1332
  %v2229 = vpack.c.b16 %v1397, %v1333
  %v2230 = vpack.c.b16 %v1398, %v1334
  %v2231 = vpack.c.b16 %v1399, %v1335
  %v2232 = vpack.c.b16 %v1400, %v1336
  %v2233 = vpack.c.b16 %v1401, %v1337
  %v2234 = vpack.c.b16 %v1402, %v1338
  %v2235 = vpack.c.b16 %v1403, %v1339
  %v2236 = vpack.c.b16 %v1404, %v1340
  %v2237 = vpack.c.b16 %v1405, %v1341
  %v2238 = vpack.c.b16 %v1406, %v1342
  %v2239 = vpack.c.b16 %v1407, %v1343
  %v2240 = vpack.c.b16 %v1408, %v1344
  %v2241 = vpack.c.b16 %v1409, %v1345
  %v2242 = vpack.c.b16 %v1410, %v1346
  %v2243 = vpack.c.b16 %v1411, %v1347
  %v2244 = vpack.c.b16 %v1412, %v1348
  %v2245 = vpack.c.b16 %v1413, %v1349
  %v2246 = vpack.c.b16 %v1414, %v1350
  %v2247 = vpack.c.b16 %v1415, %v1351
  %v2248 = vpack.c.b16 %v1416, %v1352
  %v2249 = vpack.c.b16 %v1417, %v1353
  %v2250 = vpack.c.b16 %v1418, %v1354
  %v2251 = vpack.c.b16 %v1419, %v1355
  %v2252 = vpack.c.b16 %v1420, %v1356
  %v2253 = vpack.c.b16 %v1421, %v1357
  %v2254 = vpack.c.b16 %v1422, %v1358
  %v2255 = vpack.c.b16 %v1423, %v1359
  %v2256 = vpack.c.b16 %v1424, %v1360
  %v2257 = vpack.c.b16 %v1425, %v1361
  %v2258 = vpack.c.b16 %v1490, %v1426
  %v2259 = vpack.c.b16 %v1491, %v1427
  %v2260 = vpack.c.b16 %v1492, %v1428
  %v2261 = vpack.c.b16 %v1493, %v1429
  %v2262 = vpack.c.b16 %v1494, %v1430
  %v2263 = vpack.c.b16 %v1495, %v1431
  %v2264 = vpack.c.b16 %v1496, %v1432
  %v2265 = vpack.c.b16 %v1497, %v1433
  %v2266 = vpack.c.b16 %v1498, %v1434
  %v2267 = vpack.c.b16 %v1499, %v1435
  %v2268 = vpack.c.b16 %v1500, %v1436
  %v2269 = vpack.c.b16 %v1501, %v1437
  %v2270 = vpack.c.b16 %v1502, %v1438
  %v2271 = vpack.c.b16 %v1503, %v1439
  %v2272 = vpack.c.b16 %v1504, %v1440
  %v2273 = vpack.c.b16 %v1505, %v1441
  %v2274 = vpack.c.b16 %v1506, %v1442
  %v2275 = vpack.c.b16 %v1507, %v1443
  %v2276 = vpack.c.b16 %v1508, %v1444
  %v2277 = vpack.c.b16 %v1509, %v1445
  %v2278 = vpack.c.b16 %v1510, %v1446
  %v2279 = vpack.c.b16 %v1511, %v1447
  %v2280 = vpack.c.b16 %v1512, %v1448
  %v2281 = vpack.c.b16 %v1513, %v1449
  %v2282 = vpack.c.b16 %v1514, %v1450
  %v2283 = vpack.c.b16 %v1515, %v1451
  %v2284 = vpack.c.b16 %v1516, %v1452
  %v2285 = vpack.c.b16 %v1517, %v1453
  %v2286 = vpack.c.b16 %v1518, %v1454
  %v2287 = vpack.c.b16 %v1519, %v1455
  %v2288 = vpack.c.b16 %v1520, %v1456
  %v2289 = vpack.c.b16 %v1521, %v1457
  %v2290 = vpack.c.b16 %v1522, %v1458
  %v2291 = vpack.c.b16 %v1523, %v1459
  %v2292 = vpack.c.b16 %v1524, %v1460
  %v2293 = vpack.c.b16 %v1525, %v1461
  %v2294 = vpack.c.b16 %v1526, %v1462
  %v2295 = vpack.c.b16 %v1527, %v1463
  %v2296 = vpack.c.b16 %v1528, %v1464
  %v2297 = vpack.c.b16 %v1529, %v1465
  %v2298 = vpack.c.b16 %v1530, %v1466
  %v2299 = vpack.c.b16 %v1531, %v1467
  %v2300 = vpack.c.b16 %v1532, %v1468
  %v2301 = vpack.c.b16 %v1533, %v1469
  %v2302 = vpack.c.b16 %v1534, %v1470
  %v2303 = vpack.c.b16 %v1535, %v1471
  %v2304 = vpack.c.b16 %v1536, %v1472
  %v2305 = vpack.c.b16 %v1537, %v1473
  %v2306 = vpack.c.b16 %v1538, %v1474
  %v2307 = vpack.c.b16 %v1539, %v1475
  %v2308 = vpack.c.b16 %v1540, %v1476
  %v2309 = vpack.c.b16 %v1541, %v1477
  %v2310 = vpack.c.b16 %v1542, %v1478
  %v2311 = vpack.c.b16 %v1543, %v1479
  %v2312 = vpack.c.b16 %v1544, %v1480
  %v2313 = vpack.c.b16 %v1545, %v1481
  %v2314 = vpack.c.b16 %v1546, %v1482
  %v2315 = vpack.c.b16 %v1547, %v1483
  %v2316 = vpack.c.b16 %v1548, %v1484
  %v2317 = vpack.c.b16 %v1549, %v1485
  %v2318 = vpack.c.b16 %v1550, %v1486
  %v2319 = vpack.c.b16 %v1551, %v1487
  %v2320 = vpack.c.b16 %v1552, %v1488
  %v2321 = vpack.c.b16 %v1553, %v1489
  %v2322 = vpack.c.b16 %v1618, %v1554
  %v2323 = vpack.c.b16 %v1619, %v1555
  %v2324 = vpack.c.b16 %v1620, %v1556
  %v2325 = vpack.c.b16 %v1621, %v1557
  %v2326 = vpack.c.b16 %v1622, %v1558
  %v2327 = vpack.c.b16 %v1623, %v1559
  %v2328 = vpack.c.b16 %v1624, %v1560
  %v2329 = vpack.c.b16 %v1625, %v1561
  %v2330 = vpack.c.b16 %v1626, %v1562
  %v2331 = vpack.c.b16 %v1627, %v1563
  %v2332 = vpack.c.b16 %v1628, %v1564
  %v2333 = vpack.c.b16 %v1629, %v1565
  %v2334 = vpack.c.b16 %v1630, %v1566
  %v2335 = vpack.c.b16 %v1631, %v1567
  %v2336 = vpack.c.b16 %v1632, %v1568
  %v2337 = vpack.c.b16 %v1633, %v1569
  %v2338 = vpack.c.b16 %v1634, %v1570
  %v2339 = vpack.c.b16 %v1635, %v1571
  %v2340 = vpack.c.b16 %v1636, %v1572
  %v2341 = vpack.c.b16 %v1637, %v1573
  %v2342 = vpack.c.b16 %v1638, %v1574
  %v2343 = vpack.c.b16 %v1639, %v1575
  %v2344 = vpack.c.b16 %v1640, %v1576
  %v2345 = vpack.c.b16 %v1641, %v1577
  %v2346 = vpack.c.b16 %v1642, %v1578
  %v2347 = vpack.c.b16 %v1643, %v1579
  %v2348 = vpack.c.b16 %v1644, %v1580
  %v2349 = vpack.c.b16 %v1645, %v1581
  %v2350 = vpack.c.b16 %v1646, %v1582
  %v2351 = vpack.c.b16 %v1647, %v1583
  %v2352 = vpack.c.b16 %v1648, %v1584
  %v2353 = vpack.c.b16 %v1649, %v1585
  %v2354 = vpack.c.b16 %v1650, %v1586
  %v2355 = vpack.c.b16 %v1651, %v1587
  %v2356 = vpack.c.b16 %v1652, %v1588
  %v2357 = vpack.c.b16 %v1653, %v1589
  %v2358 = vpack.c.b16 %v1654, %v1590
  %v2359 = vpack.c.b16 %v1655, %v1591
  %v2360 = vpack.c.b16 %v1656, %v1592
  %v2361 = vpack.c.b16 %v1657, %v1593
  %v2362 = vpack.c.b16 %v1658, %v1594
  %v2363 = vpack.c.b16 %v1659, %v1595
  %v2364 = vpack.c.b16 %v1660, %v1596
  %v2365 = vpack.c.b16 %v1661, %v1597
  %v2366 = vpack.c.b16 %v1662, %v1598
  %v2367 = vpack.c.b16 %v1663, %v1599
  %v2368 = vpack.c.b16 %v1664, %v1600
  %v2369 = vpack.c.b16 %v1665, %v1601
  %v2370 = vpack.c.b16 %v1666, %v1602
  %v2371 = vpack.c.b16 %v1667, %v1603
  %v2372 = vpack.c.b16 %v1668, %v1604
  %v2373 = vpack.c.b16 %v1669, %v1605
  %v2374 = vpack.c.b16 %v1670, %v1606
  %v2375 = vpack.c.b16 %v1671, %v1607
  %v2376 = vpack.c.b16 %v1672, %v1608
  %v2377 = vpack.c.b16 %v1673, %v1609
  %v2378 = vpack.c.b16 %v1674, %v1610
  %v2379 = vpack.c.b16 %v1675, %v1611
  %v2380 = vpack.c.b16 %v1676, %v1612
  %v2381 = vpack.c.b16 %v1677, %v1613
  %v2382 = vpack.c.b16 %v1678, %v1614
  %v2383 = vpack.c.b16 %v1679, %v1615
  %v2384 = vpack.c.b16 %v1680, %v1616
  %v2385 = vpack.c.b16 %v1681, %v1617
  %v2386 = vpack.c.b16 %v1746, %v1682
  %v2387 = vpack.c.b16 %v1747, %v1683
  %v2388 = vpack.c.b16 %v1748, %v1684
  %v2389 = vpack.c.b16 %v1749, %v1685
  %v2390 = vpack.c.b16 %v1750, %v1686
  %v2391 = vpack.c.b16 %v1751, %v1687
  %v2392 = vpack.c.b16 %v1752, %v1688
  %v2393 = vpack.c.b16 %v1753, %v1689
  %v2394 = vpack.c.b16 %v1754, %v1690
  %v2395 = vpack.c.b16 %v1755, %v1691
  %v2396 = vpack.c.b16 %v1756, %v1692
  %v2397 = vpack.c.b16 %v1757, %v1693
  %v2398 = vpack.c.b16 %v1758, %v1694
  %v2399 = vpack.c.b16 %v1759, %v1695
  %v2400 = vpack.c.b16 %v1760, %v1696
  %v2401 = vpack.c.b16 %v1761, %v1697
  %v2402 = vpack.c.b16 %v1762, %v1698
  %v2403 = vpack.c.b16 %v1763, %v1699
  %v2404 = vpack.c.b16 %v1764, %v1700
  %v2405 = vpack.c.b16 %v1765, %v1701
  %v2406 = vpack.c.b16 %v1766, %v1702
  %v2407 = vpack.c.b16 %v1767, %v1703
  %v2408 = vpack.c.b16 %v1768, %v1704
  %v2409 = vpack.c.b16 %v1769, %v1705
  %v2410 = vpack.c.b16 %v1770, %v1706
  %v2411 = vpack.c.b16 %v1771, %v1707
  %v2412 = vpack.c.b16 %v1772, %v1708
  %v2413 = vpack.c.b16 %v1773, %v1709
  %v2414 = vpack.c.b16 %v1774, %v1710
  %v2415 = vpack.c.b16 %v1775, %v1711
  %v2416 = vpack.c.b16 %v1776, %v1712
  %v2417 = vpack.c.b16 %v1777, %v1713
  %v2418 = vpack.c.b16 %v1778, %v1714
  %v2419 = vpack.c.b16 %v1779, %v1715
  %v2420 = vpack.c.b16 %v1780, %v1716
  %v2421 = vpack.c.b16 %v1781, %v1717
  %v2422 = vpack.c.b16 %v1782, %v1718
  %v2423 = vpack.c.b16 %v1783, %v1719
  %v2424 = vpack.c.b16 %v1784, %v1720
  %v2425 = vpack.c.b16 %v1785, %v1721
  %v2426 = vpack.c.b16 %v1786, %v1722
  %v2427 = vpack.c.b16 %v1787, %v1723
  %v2428 = vpack.c.b16 %v1788, %v1724
  %v2429 = vpack.c.b16 %v1789, %v1725
  %v2430 = vpack.c.b16 %v1790, %v1726
  %v2431 = vpack.c.b16 %v1791, %v1727
  %v2432 = vpack.c.b16 %v1792, %v1728
  %v2433 = vpack.c.b16 %v1793, %v1729
  %v2434 = vpack.c.b16 %v1794, %v1730
  %v2435 = vpack.c.b16 %v1795, %v1731
  %v2436 = vpack.c.b16 %v1796, %v1732
  %v2437 = vpack.c.b16 %v1797, %v1733
  %v2438 = vpack.c.b16 %v1798, %v1734
  %v2439 = vpack.c.b16 %v1799, %v1735
  %v2440 = vpack.c.b16 %v1800, %v1736
  %v2441 = vpack.c.b16 %v1801, %v1737
  %v2442 = vpack.c.b16 %v1802, %v1738
  %v2443 = vpack.c.b16 %v1803, %v1739
  %v2444 = vpack.c.b16 %v1804, %v1740
  %v2445 = vpack.c.b16 %v1805, %v1741
  %v2446 = vpack.c.b16 %v1806, %v1742
  %v2447 = vpack.c.b16 %v1807, %v1743
  %v2448 = vpack.c.b16 %v1808, %v1744
  %v2449 = vpack.c.b16 %v1809, %v1745
  %v2450 = vpack.c.b16 %v1874, %v1810
  %v2451 = vpack.c.b16 %v1875, %v1811
  %v2452 = vpack.c.b16 %v1876, %v1812
  %v2453 = vpack.c.b16 %v1877, %v1813
  %v2454 = vpack.c.b16 %v1878, %v1814
  %v2455 = vpack.c.b16 %v1879, %v1815
  %v2456 = vpack.c.b16 %v1880, %v1816
  %v2457 = vpack.c.b16 %v1881, %v1817
  %v2458 = vpack.c.b16 %v1882, %v1818
  %v2459 = vpack.c.b16 %v1883, %v1819
  %v2460 = vpack.c.b16 %v1884, %v1820
  %v2461 = vpack.c.b16 %v1885, %v1821
  %v2462 = vpack.c.b16 %v1886, %v1822
  %v2463 = vpack.c.b16 %v1887, %v1823
  %v2464 = vpack.c.b16 %v1888, %v1824
  %v2465 = vpack.c.b16 %v1889, %v1825
  %v2466 = vpack.c.b16 %v1890, %v1826
  %v2467 = vpack.c.b16 %v1891, %v1827
  %v2468 = vpack.c.b16 %v1892, %v1828
  %v2469 = vpack.c.b16 %v1893, %v1829
  %v2470 = vpack.c.b16 %v1894, %v1830
  %v2471 = vpack.c.b16 %v1895, %v1831
  %v2472 = vpack.c.b16 %v1896, %v1832
  %v2473 = vpack.c.b16 %v1897, %v1833
  %v2474 = vpack.c.b16 %v1898, %v1834
  %v2475 = vpack.c.b16 %v1899, %v1835
  %v2476 = vpack.c.b16 %v1900, %v1836
  %v2477 = vpack.c.b16 %v1901, %v1837
  %v2478 = vpack.c.b16 %v1902, %v1838
  %v2479 = vpack.c.b16 %v1903, %v1839
  %v2480 = vpack.c.b16 %v1904, %v1840
  %v2481 = vpack.c.b16 %v1905, %v1841
  %v2482 = vpack.c.b16 %v1906, %v1842
  %v2483 = vpack.c.b16 %v1907, %v1843
  %v2484 = vpack.c.b16 %v1908, %v1844
  %v2485 = vpack.c.b16 %v1909, %v1845
  %v2486 = vpack.c.b16 %v1910, %v1846
  %v2487 = vpack.c.b16 %v1911, %v1847
  %v2488 = vpack.c.b16 %v1912, %v1848
  %v2489 = vpack.c.b16 %v1913, %v1849
  %v2490 = vpack.c.b16 %v1914, %v1850
  %v2491 = vpack.c.b16 %v1915, %v1851
  %v2492 = vpack.c.b16 %v1916, %v1852
  %v2493 = vpack.c.b16 %v1917, %v1853
  %v2494 = vpack.c.b16 %v1918, %v1854
  %v2495 = vpack.c.b16 %v1919, %v1855
  %v2496 = vpack.c.b16 %v1920, %v1856
  %v2497 = vpack.c.b16 %v1921, %v1857
  %v2498 = vpack.c.b16 %v1922, %v1858
  %v2499 = vpack.c.b16 %v1923, %v1859
  %v2500 = vpack.c.b16 %v1924, %v1860
  %v2501 = vpack.c.b16 %v1925, %v1861
  %v2502 = vpack.c.b16 %v1926, %v1862
  %v2503 = vpack.c.b16 %v1927, %v1863
  %v2504 = vpack.c.b16 %v1928, %v1864
  %v2505 = vpack.c.b16 %v1929, %v1865
  %v2506 = vpack.c.b16 %v1930, %v1866
  %v2507 = vpack.c.b16 %v1931, %v1867
  %v2508 = vpack.c.b16 %v1932, %v1868
  %v2509 = vpack.c.b16 %v1933, %v1869
  %v2510 = vpack.c.b16 %v1934, %v1870
  %v2511 = vpack.c.b16 %v1935, %v1871
  %v2512 = vpack.c.b16 %v1936, %v1872
  %v2513 = vpack.c.b16 %v1937, %v1873
  %v2514 = vpack.c.b16 %v2002, %v1938
  %v2515 = vpack.c.b16 %v2003, %v1939
  %v2516 = vpack.c.b16 %v2004, %v1940
  %v2517 = vpack.c.b16 %v2005, %v1941
  %v2518 = vpack.c.b16 %v2006, %v1942
  %v2519 = vpack.c.b16 %v2007, %v1943
  %v2520 = vpack.c.b16 %v2008, %v1944
  %v2521 = vpack.c.b16 %v2009, %v1945
  %v2522 = vpack.c.b16 %v2010, %v1946
  %v2523 = vpack.c.b16 %v2011, %v1947
  %v2524 = vpack.c.b16 %v2012, %v1948
  %v2525 = vpack.c.b16 %v2013, %v1949
  %v2526 = vpack.c.b16 %v2014, %v1950
  %v2527 = vpack.c.b16 %v2015, %v1951
  %v2528 = vpack.c.b16 %v2016, %v1952
  %v2529 = vpack.c.b16 %v2017, %v1953
  %v2530 = vpack.c.b16 %v2018, %v1954
  %v2531 = vpack.c.b16 %v2019, %v1955
  %v2532 = vpack.c.b16 %v2020, %v1956
  %v2533 = vpack.c.b16 %v2021, %v1957
  %v2534 = vpack.c.b16 %v2022, %v1958
  %v2535 = vpack.c.b16 %v2023, %v1959
  %v2536 = vpack.c.b16 %v2024, %v1960
  %v2537 = vpack.c.b16 %v2025, %v1961
  %v2538 = vpack.c.b16 %v2026, %v1962
  %v2539 = vpack.c.b16 %v2027, %v1963
  %v2540 = vpack.c.b16 %v2028, %v1964
  %v2541 = vpack.c.b16 %v2029, %v1965
  %v2542 = vpack.c.b16 %v2030, %v1966
  %v2543 = vpack.c.b16 %v2031, %v1967
  %v2544 = vpack.c.b16 %v2032, %v1968
  %v2545 = vpack.c.b16 %v2033, %v1969
  %v2546 = vpack.c.b16 %v2034, %v1970
  %v2547 = vpack.c.b16 %v2035, %v1971
  %v2548 = vpack.c.b16 %v2036, %v1972
  %v2549 = vpack.c.b16 %v2037, %v1973
  %v2550 = vpack.c.b16 %v2038, %v1974
  %v2551 = vpack.c.b16 %v2039, %v1975
  %v2552 = vpack.c.b16 %v2040, %v1976
  %v2553 = vpack.c.b16 %v2041, %v1977
  %v2554 = vpack.c.b16 %v2042, %v1978
  %v2555 = vpack.c.b16 %v2043, %v1979
  %v2556 = vpack.c.b16 %v2044, %v1980
  %v2557 = vpack.c.b16 %v2045, %v1981
  %v2558 = vpack.c.b16 %v2046, %v1982
  %v2559 = vpack.c.b16 %v2047, %v1983
  %v2560 = vpack.c.b16 %v2048, %v1984
  %v2561 = vpack.c.b16 %v2049, %v1985
  %v2562 = vpack.c.b16 %v2050, %v1986
  %v2563 = vpack.c.b16 %v2051, %v1987
  %v2564 = vpack.c.b16 %v2052, %v1988
  %v2565 = vpack.c.b16 %v2053, %v1989
  %v2566 = vpack.c.b16 %v2054, %v1990
  %v2567 = vpack.c.b16 %v2055, %v1991
  %v2568 = vpack.c.b16 %v2056, %v1992
  %v2569 = vpack.c.b16 %v2057, %v1993
  %v2570 = vpack.c.b16 %v2058, %v1994
  %v2571 = vpack.c.b16 %v2059, %v1995
  %v2572 = vpack.c.b16 %v2060, %v1996
  %v2573 = vpack.c.b16 %v2061, %v1997
  %v2574 = vpack.c.b16 %v2062, %v1998
  %v2575 = vpack.c.b16 %v2063, %v1999
  %v2576 = vpack.c.b16 %v2064, %v2000
  %v2577 = vpack.c.b16 %v2065, %v2001
  %3090 = vmatpush.bf16.msra.mxu0 %v2514
  %3091 = vmatpush.bf16.msra.mxu0 %v2450
  %3092 = vmatpush.bf16.msra.mxu0 %v2386
  %3093 = vmatpush.bf16.msra.mxu0 %v2322
  %3094 = vmatpush.bf16.msra.mxu0 %v2258
  %3095 = vmatpush.bf16.msra.mxu0 %v2194
  %3096 = vmatpush.bf16.msra.mxu0 %v2130
  %3097 = vmatpush.bf16.msra.mxu0 %v2066
  %3098 = vmatmul.bf16.gmra.mxu0 %v17
  %v3099 = vpop.f32.mrf.mxu0
  %v3100 = vadd.f32 0.0, %v3099
  %v3101 = vpop.f32.mrf.mxu0
  %3102 = vdwg.mxu0
  %3103 = vmatpush.bf16.msra.mxu0 %v2515
  %3104 = vmatpush.bf16.msra.mxu0 %v2451
  %3105 = vmatpush.bf16.msra.mxu0 %v2387
  %3106 = vmatpush.bf16.msra.mxu0 %v2323
  %3107 = vmatpush.bf16.msra.mxu0 %v2259
  %3108 = vmatpush.bf16.msra.mxu0 %v2195
  %3109 = vmatpush.bf16.msra.mxu0 %v2131
  %3110 = vmatpush.bf16.msra.mxu0 %v2067
  %3111 = vmatmul.bf16.gmra.mxu0 %v17
  %v3112 = vpop.f32.mrf.mxu0
  %v3113 = vadd.f32 0.0, %v3112
  %v3114 = vpop.f32.mrf.mxu0
  %3115 = vdwg.mxu0
  %3116 = vmatpush.bf16.msra.mxu0 %v2516
  %3117 = vmatpush.bf16.msra.mxu0 %v2452
  %3118 = vmatpush.bf16.msra.mxu0 %v2388
  %3119 = vmatpush.bf16.msra.mxu0 %v2324
  %3120 = vmatpush.bf16.msra.mxu0 %v2260
  %3121 = vmatpush.bf16.msra.mxu0 %v2196
  %3122 = vmatpush.bf16.msra.mxu0 %v2132
  %3123 = vmatpush.bf16.msra.mxu0 %v2068
  %3124 = vmatmul.bf16.gmra.mxu0 %v17
  %v3125 = vpop.f32.mrf.mxu0
  %v3126 = vadd.f32 0.0, %v3125
  %v3127 = vpop.f32.mrf.mxu0
  %3128 = vdwg.mxu0
  %3129 = vmatpush.bf16.msra.mxu0 %v2517
  %3130 = vmatpush.bf16.msra.mxu0 %v2453
  %3131 = vmatpush.bf16.msra.mxu0 %v2389
  %3132 = vmatpush.bf16.msra.mxu0 %v2325
  %3133 = vmatpush.bf16.msra.mxu0 %v2261
  %3134 = vmatpush.bf16.msra.mxu0 %v2197
  %3135 = vmatpush.bf16.msra.mxu0 %v2133
  %3136 = vmatpush.bf16.msra.mxu0 %v2069
  %3137 = vmatmul.bf16.gmra.mxu0 %v17
  %v3138 = vpop.f32.mrf.mxu0
  %v3139 = vadd.f32 0.0, %v3138
  %v3140 = vpop.f32.mrf.mxu0
  %3141 = vdwg.mxu0
  %3142 = vmatpush.bf16.msra.mxu0 %v2518
  %3143 = vmatpush.bf16.msra.mxu0 %v2454
  %3144 = vmatpush.bf16.msra.mxu0 %v2390
  %3145 = vmatpush.bf16.msra.mxu0 %v2326
  %3146 = vmatpush.bf16.msra.mxu0 %v2262
  %3147 = vmatpush.bf16.msra.mxu0 %v2198
  %3148 = vmatpush.bf16.msra.mxu0 %v2134
  %3149 = vmatpush.bf16.msra.mxu0 %v2070
  %3150 = vmatmul.bf16.gmra.mxu0 %v17
  %v3151 = vpop.f32.mrf.mxu0
  %v3152 = vadd.f32 0.0, %v3151
  %v3153 = vpop.f32.mrf.mxu0
  %3154 = vdwg.mxu0
  %3155 = vmatpush.bf16.msra.mxu0 %v2519
  %3156 = vmatpush.bf16.msra.mxu0 %v2455
  %3157 = vmatpush.bf16.msra.mxu0 %v2391
  %3158 = vmatpush.bf16.msra.mxu0 %v2327
  %3159 = vmatpush.bf16.msra.mxu0 %v2263
  %3160 = vmatpush.bf16.msra.mxu0 %v2199
  %3161 = vmatpush.bf16.msra.mxu0 %v2135
  %3162 = vmatpush.bf16.msra.mxu0 %v2071
  %3163 = vmatmul.bf16.gmra.mxu0 %v17
  %v3164 = vpop.f32.mrf.mxu0
  %v3165 = vadd.f32 0.0, %v3164
  %v3166 = vpop.f32.mrf.mxu0
  %3167 = vdwg.mxu0
  %3168 = vmatpush.bf16.msra.mxu0 %v2520
  %3169 = vmatpush.bf16.msra.mxu0 %v2456
  %3170 = vmatpush.bf16.msra.mxu0 %v2392
  %3171 = vmatpush.bf16.msra.mxu0 %v2328
  %3172 = vmatpush.bf16.msra.mxu0 %v2264
  %3173 = vmatpush.bf16.msra.mxu0 %v2200
  %3174 = vmatpush.bf16.msra.mxu0 %v2136
  %3175 = vmatpush.bf16.msra.mxu0 %v2072
  %3176 = vmatmul.bf16.gmra.mxu0 %v17
  %v3177 = vpop.f32.mrf.mxu0
  %v3178 = vadd.f32 0.0, %v3177
  %v3179 = vpop.f32.mrf.mxu0
  %3180 = vdwg.mxu0
  %3181 = vmatpush.bf16.msra.mxu0 %v2521
  %3182 = vmatpush.bf16.msra.mxu0 %v2457
  %3183 = vmatpush.bf16.msra.mxu0 %v2393
  %3184 = vmatpush.bf16.msra.mxu0 %v2329
  %3185 = vmatpush.bf16.msra.mxu0 %v2265
  %3186 = vmatpush.bf16.msra.mxu0 %v2201
  %3187 = vmatpush.bf16.msra.mxu0 %v2137
  %3188 = vmatpush.bf16.msra.mxu0 %v2073
  %3189 = vmatmul.bf16.gmra.mxu0 %v17
  %v3190 = vpop.f32.mrf.mxu0
  %v3191 = vadd.f32 0.0, %v3190
  %v3192 = vpop.f32.mrf.mxu0
  %3193 = vdwg.mxu0
  %3194 = vmatpush.bf16.msra.mxu0 %v2522
  %3195 = vmatpush.bf16.msra.mxu0 %v2458
  %3196 = vmatpush.bf16.msra.mxu0 %v2394
  %3197 = vmatpush.bf16.msra.mxu0 %v2330
  %3198 = vmatpush.bf16.msra.mxu0 %v2266
  %3199 = vmatpush.bf16.msra.mxu0 %v2202
  %3200 = vmatpush.bf16.msra.mxu0 %v2138
  %3201 = vmatpush.bf16.msra.mxu0 %v2074
  %3202 = vmatmul.bf16.gmra.mxu0 %v17
  %v3203 = vpop.f32.mrf.mxu0
  %v3204 = vadd.f32 0.0, %v3203
  %v3205 = vpop.f32.mrf.mxu0
  %3206 = vdwg.mxu0
  %3207 = vmatpush.bf16.msra.mxu0 %v2523
  %3208 = vmatpush.bf16.msra.mxu0 %v2459
  %3209 = vmatpush.bf16.msra.mxu0 %v2395
  %3210 = vmatpush.bf16.msra.mxu0 %v2331
  %3211 = vmatpush.bf16.msra.mxu0 %v2267
  %3212 = vmatpush.bf16.msra.mxu0 %v2203
  %3213 = vmatpush.bf16.msra.mxu0 %v2139
  %3214 = vmatpush.bf16.msra.mxu0 %v2075
  %3215 = vmatmul.bf16.gmra.mxu0 %v17
  %v3216 = vpop.f32.mrf.mxu0
  %v3217 = vadd.f32 0.0, %v3216
  %v3218 = vpop.f32.mrf.mxu0
  %3219 = vdwg.mxu0
  %3220 = vmatpush.bf16.msra.mxu0 %v2524
  %3221 = vmatpush.bf16.msra.mxu0 %v2460
  %3222 = vmatpush.bf16.msra.mxu0 %v2396
  %3223 = vmatpush.bf16.msra.mxu0 %v2332
  %3224 = vmatpush.bf16.msra.mxu0 %v2268
  %3225 = vmatpush.bf16.msra.mxu0 %v2204
  %3226 = vmatpush.bf16.msra.mxu0 %v2140
  %3227 = vmatpush.bf16.msra.mxu0 %v2076
  %3228 = vmatmul.bf16.gmra.mxu0 %v17
  %v3229 = vpop.f32.mrf.mxu0
  %v3230 = vadd.f32 0.0, %v3229
  %v3231 = vpop.f32.mrf.mxu0
  %3232 = vdwg.mxu0
  %3233 = vmatpush.bf16.msra.mxu0 %v2525
  %3234 = vmatpush.bf16.msra.mxu0 %v2461
  %3235 = vmatpush.bf16.msra.mxu0 %v2397
  %3236 = vmatpush.bf16.msra.mxu0 %v2333
  %3237 = vmatpush.bf16.msra.mxu0 %v2269
  %3238 = vmatpush.bf16.msra.mxu0 %v2205
  %3239 = vmatpush.bf16.msra.mxu0 %v2141
  %3240 = vmatpush.bf16.msra.mxu0 %v2077
  %3241 = vmatmul.bf16.gmra.mxu0 %v17
  %v3242 = vpop.f32.mrf.mxu0
  %v3243 = vadd.f32 0.0, %v3242
  %v3244 = vpop.f32.mrf.mxu0
  %3245 = vdwg.mxu0
  %3246 = vmatpush.bf16.msra.mxu0 %v2526
  %3247 = vmatpush.bf16.msra.mxu0 %v2462
  %3248 = vmatpush.bf16.msra.mxu0 %v2398
  %3249 = vmatpush.bf16.msra.mxu0 %v2334
  %3250 = vmatpush.bf16.msra.mxu0 %v2270
  %3251 = vmatpush.bf16.msra.mxu0 %v2206
  %3252 = vmatpush.bf16.msra.mxu0 %v2142
  %3253 = vmatpush.bf16.msra.mxu0 %v2078
  %3254 = vmatmul.bf16.gmra.mxu0 %v17
  %v3255 = vpop.f32.mrf.mxu0
  %v3256 = vadd.f32 0.0, %v3255
  %v3257 = vpop.f32.mrf.mxu0
  %3258 = vdwg.mxu0
  %3259 = vmatpush.bf16.msra.mxu0 %v2527
  %3260 = vmatpush.bf16.msra.mxu0 %v2463
  %3261 = vmatpush.bf16.msra.mxu0 %v2399
  %3262 = vmatpush.bf16.msra.mxu0 %v2335
  %3263 = vmatpush.bf16.msra.mxu0 %v2271
  %3264 = vmatpush.bf16.msra.mxu0 %v2207
  %3265 = vmatpush.bf16.msra.mxu0 %v2143
  %3266 = vmatpush.bf16.msra.mxu0 %v2079
  %3267 = vmatmul.bf16.gmra.mxu0 %v17
  %v3268 = vpop.f32.mrf.mxu0
  %v3269 = vadd.f32 0.0, %v3268
  %v3270 = vpop.f32.mrf.mxu0
  %3271 = vdwg.mxu0
  %3272 = vmatpush.bf16.msra.mxu0 %v2528
  %3273 = vmatpush.bf16.msra.mxu0 %v2464
  %3274 = vmatpush.bf16.msra.mxu0 %v2400
  %3275 = vmatpush.bf16.msra.mxu0 %v2336
  %3276 = vmatpush.bf16.msra.mxu0 %v2272
  %3277 = vmatpush.bf16.msra.mxu0 %v2208
  %3278 = vmatpush.bf16.msra.mxu0 %v2144
  %3279 = vmatpush.bf16.msra.mxu0 %v2080
  %3280 = vmatmul.bf16.gmra.mxu0 %v17
  %v3281 = vpop.f32.mrf.mxu0
  %v3282 = vadd.f32 0.0, %v3281
  %v3283 = vpop.f32.mrf.mxu0
  %3284 = vdwg.mxu0
  %3285 = vmatpush.bf16.msra.mxu0 %v2529
  %3286 = vmatpush.bf16.msra.mxu0 %v2465
  %3287 = vmatpush.bf16.msra.mxu0 %v2401
  %3288 = vmatpush.bf16.msra.mxu0 %v2337
  %3289 = vmatpush.bf16.msra.mxu0 %v2273
  %3290 = vmatpush.bf16.msra.mxu0 %v2209
  %3291 = vmatpush.bf16.msra.mxu0 %v2145
  %3292 = vmatpush.bf16.msra.mxu0 %v2081
  %3293 = vmatmul.bf16.gmra.mxu0 %v17
  %v3294 = vpop.f32.mrf.mxu0
  %v3295 = vadd.f32 0.0, %v3294
  %v3296 = vpop.f32.mrf.mxu0
  %3297 = vdwg.mxu0
  %3298 = vmatpush.bf16.msra.mxu0 %v2530
  %3299 = vmatpush.bf16.msra.mxu0 %v2466
  %3300 = vmatpush.bf16.msra.mxu0 %v2402
  %3301 = vmatpush.bf16.msra.mxu0 %v2338
  %3302 = vmatpush.bf16.msra.mxu0 %v2274
  %3303 = vmatpush.bf16.msra.mxu0 %v2210
  %3304 = vmatpush.bf16.msra.mxu0 %v2146
  %3305 = vmatpush.bf16.msra.mxu0 %v2082
  %3306 = vmatmul.bf16.gmra.mxu0 %v17
  %v3307 = vpop.f32.mrf.mxu0
  %v3308 = vadd.f32 0.0, %v3307
  %v3309 = vpop.f32.mrf.mxu0
  %3310 = vdwg.mxu0
  %3311 = vmatpush.bf16.msra.mxu0 %v2531
  %3312 = vmatpush.bf16.msra.mxu0 %v2467
  %3313 = vmatpush.bf16.msra.mxu0 %v2403
  %3314 = vmatpush.bf16.msra.mxu0 %v2339
  %3315 = vmatpush.bf16.msra.mxu0 %v2275
  %3316 = vmatpush.bf16.msra.mxu0 %v2211
  %3317 = vmatpush.bf16.msra.mxu0 %v2147
  %3318 = vmatpush.bf16.msra.mxu0 %v2083
  %3319 = vmatmul.bf16.gmra.mxu0 %v17
  %v3320 = vpop.f32.mrf.mxu0
  %v3321 = vadd.f32 0.0, %v3320
  %v3322 = vpop.f32.mrf.mxu0
  %3323 = vdwg.mxu0
  %3324 = vmatpush.bf16.msra.mxu0 %v2532
  %3325 = vmatpush.bf16.msra.mxu0 %v2468
  %3326 = vmatpush.bf16.msra.mxu0 %v2404
  %3327 = vmatpush.bf16.msra.mxu0 %v2340
  %3328 = vmatpush.bf16.msra.mxu0 %v2276
  %3329 = vmatpush.bf16.msra.mxu0 %v2212
  %3330 = vmatpush.bf16.msra.mxu0 %v2148
  %3331 = vmatpush.bf16.msra.mxu0 %v2084
  %3332 = vmatmul.bf16.gmra.mxu0 %v17
  %v3333 = vpop.f32.mrf.mxu0
  %v3334 = vadd.f32 0.0, %v3333
  %v3335 = vpop.f32.mrf.mxu0
  %3336 = vdwg.mxu0
  %3337 = vmatpush.bf16.msra.mxu0 %v2533
  %3338 = vmatpush.bf16.msra.mxu0 %v2469
  %3339 = vmatpush.bf16.msra.mxu0 %v2405
  %3340 = vmatpush.bf16.msra.mxu0 %v2341
  %3341 = vmatpush.bf16.msra.mxu0 %v2277
  %3342 = vmatpush.bf16.msra.mxu0 %v2213
  %3343 = vmatpush.bf16.msra.mxu0 %v2149
  %3344 = vmatpush.bf16.msra.mxu0 %v2085
  %3345 = vmatmul.bf16.gmra.mxu0 %v17
  %v3346 = vpop.f32.mrf.mxu0
  %v3347 = vadd.f32 0.0, %v3346
  %v3348 = vpop.f32.mrf.mxu0
  %3349 = vdwg.mxu0
  %3350 = vmatpush.bf16.msra.mxu0 %v2534
  %3351 = vmatpush.bf16.msra.mxu0 %v2470
  %3352 = vmatpush.bf16.msra.mxu0 %v2406
  %3353 = vmatpush.bf16.msra.mxu0 %v2342
  %3354 = vmatpush.bf16.msra.mxu0 %v2278
  %3355 = vmatpush.bf16.msra.mxu0 %v2214
  %3356 = vmatpush.bf16.msra.mxu0 %v2150
  %3357 = vmatpush.bf16.msra.mxu0 %v2086
  %3358 = vmatmul.bf16.gmra.mxu0 %v17
  %v3359 = vpop.f32.mrf.mxu0
  %v3360 = vadd.f32 0.0, %v3359
  %v3361 = vpop.f32.mrf.mxu0
  %3362 = vdwg.mxu0
  %3363 = vmatpush.bf16.msra.mxu0 %v2535
  %3364 = vmatpush.bf16.msra.mxu0 %v2471
  %3365 = vmatpush.bf16.msra.mxu0 %v2407
  %3366 = vmatpush.bf16.msra.mxu0 %v2343
  %3367 = vmatpush.bf16.msra.mxu0 %v2279
  %3368 = vmatpush.bf16.msra.mxu0 %v2215
  %3369 = vmatpush.bf16.msra.mxu0 %v2151
  %3370 = vmatpush.bf16.msra.mxu0 %v2087
  %3371 = vmatmul.bf16.gmra.mxu0 %v17
  %v3372 = vpop.f32.mrf.mxu0
  %v3373 = vadd.f32 0.0, %v3372
  %v3374 = vpop.f32.mrf.mxu0
  %3375 = vdwg.mxu0
  %3376 = vmatpush.bf16.msra.mxu0 %v2536
  %3377 = vmatpush.bf16.msra.mxu0 %v2472
  %3378 = vmatpush.bf16.msra.mxu0 %v2408
  %3379 = vmatpush.bf16.msra.mxu0 %v2344
  %3380 = vmatpush.bf16.msra.mxu0 %v2280
  %3381 = vmatpush.bf16.msra.mxu0 %v2216
  %3382 = vmatpush.bf16.msra.mxu0 %v2152
  %3383 = vmatpush.bf16.msra.mxu0 %v2088
  %3384 = vmatmul.bf16.gmra.mxu0 %v17
  %v3385 = vpop.f32.mrf.mxu0
  %v3386 = vadd.f32 0.0, %v3385
  %v3387 = vpop.f32.mrf.mxu0
  %3388 = vdwg.mxu0
  %3389 = vmatpush.bf16.msra.mxu0 %v2537
  %3390 = vmatpush.bf16.msra.mxu0 %v2473
  %3391 = vmatpush.bf16.msra.mxu0 %v2409
  %3392 = vmatpush.bf16.msra.mxu0 %v2345
  %3393 = vmatpush.bf16.msra.mxu0 %v2281
  %3394 = vmatpush.bf16.msra.mxu0 %v2217
  %3395 = vmatpush.bf16.msra.mxu0 %v2153
  %3396 = vmatpush.bf16.msra.mxu0 %v2089
  %3397 = vmatmul.bf16.gmra.mxu0 %v17
  %v3398 = vpop.f32.mrf.mxu0
  %v3399 = vadd.f32 0.0, %v3398
  %v3400 = vpop.f32.mrf.mxu0
  %3401 = vdwg.mxu0
  %3402 = vmatpush.bf16.msra.mxu0 %v2538
  %3403 = vmatpush.bf16.msra.mxu0 %v2474
  %3404 = vmatpush.bf16.msra.mxu0 %v2410
  %3405 = vmatpush.bf16.msra.mxu0 %v2346
  %3406 = vmatpush.bf16.msra.mxu0 %v2282
  %3407 = vmatpush.bf16.msra.mxu0 %v2218
  %3408 = vmatpush.bf16.msra.mxu0 %v2154
  %3409 = vmatpush.bf16.msra.mxu0 %v2090
  %3410 = vmatmul.bf16.gmra.mxu0 %v17
  %v3411 = vpop.f32.mrf.mxu0
  %v3412 = vadd.f32 0.0, %v3411
  %v3413 = vpop.f32.mrf.mxu0
  %3414 = vdwg.mxu0
  %3415 = vmatpush.bf16.msra.mxu0 %v2539
  %3416 = vmatpush.bf16.msra.mxu0 %v2475
  %3417 = vmatpush.bf16.msra.mxu0 %v2411
  %3418 = vmatpush.bf16.msra.mxu0 %v2347
  %3419 = vmatpush.bf16.msra.mxu0 %v2283
  %3420 = vmatpush.bf16.msra.mxu0 %v2219
  %3421 = vmatpush.bf16.msra.mxu0 %v2155
  %3422 = vmatpush.bf16.msra.mxu0 %v2091
  %3423 = vmatmul.bf16.gmra.mxu0 %v17
  %v3424 = vpop.f32.mrf.mxu0
  %v3425 = vadd.f32 0.0, %v3424
  %v3426 = vpop.f32.mrf.mxu0
  %3427 = vdwg.mxu0
  %3428 = vmatpush.bf16.msra.mxu0 %v2540
  %3429 = vmatpush.bf16.msra.mxu0 %v2476
  %3430 = vmatpush.bf16.msra.mxu0 %v2412
  %3431 = vmatpush.bf16.msra.mxu0 %v2348
  %3432 = vmatpush.bf16.msra.mxu0 %v2284
  %3433 = vmatpush.bf16.msra.mxu0 %v2220
  %3434 = vmatpush.bf16.msra.mxu0 %v2156
  %3435 = vmatpush.bf16.msra.mxu0 %v2092
  %3436 = vmatmul.bf16.gmra.mxu0 %v17
  %v3437 = vpop.f32.mrf.mxu0
  %v3438 = vadd.f32 0.0, %v3437
  %v3439 = vpop.f32.mrf.mxu0
  %3440 = vdwg.mxu0
  %3441 = vmatpush.bf16.msra.mxu0 %v2541
  %3442 = vmatpush.bf16.msra.mxu0 %v2477
  %3443 = vmatpush.bf16.msra.mxu0 %v2413
  %3444 = vmatpush.bf16.msra.mxu0 %v2349
  %3445 = vmatpush.bf16.msra.mxu0 %v2285
  %3446 = vmatpush.bf16.msra.mxu0 %v2221
  %3447 = vmatpush.bf16.msra.mxu0 %v2157
  %3448 = vmatpush.bf16.msra.mxu0 %v2093
  %3449 = vmatmul.bf16.gmra.mxu0 %v17
  %v3450 = vpop.f32.mrf.mxu0
  %v3451 = vadd.f32 0.0, %v3450
  %v3452 = vpop.f32.mrf.mxu0
  %3453 = vdwg.mxu0
  %3454 = vmatpush.bf16.msra.mxu0 %v2542
  %3455 = vmatpush.bf16.msra.mxu0 %v2478
  %3456 = vmatpush.bf16.msra.mxu0 %v2414
  %3457 = vmatpush.bf16.msra.mxu0 %v2350
  %3458 = vmatpush.bf16.msra.mxu0 %v2286
  %3459 = vmatpush.bf16.msra.mxu0 %v2222
  %3460 = vmatpush.bf16.msra.mxu0 %v2158
  %3461 = vmatpush.bf16.msra.mxu0 %v2094
  %3462 = vmatmul.bf16.gmra.mxu0 %v17
  %v3463 = vpop.f32.mrf.mxu0
  %v3464 = vadd.f32 0.0, %v3463
  %v3465 = vpop.f32.mrf.mxu0
  %3466 = vdwg.mxu0
  %3467 = vmatpush.bf16.msra.mxu0 %v2543
  %3468 = vmatpush.bf16.msra.mxu0 %v2479
  %3469 = vmatpush.bf16.msra.mxu0 %v2415
  %3470 = vmatpush.bf16.msra.mxu0 %v2351
  %3471 = vmatpush.bf16.msra.mxu0 %v2287
  %3472 = vmatpush.bf16.msra.mxu0 %v2223
  %3473 = vmatpush.bf16.msra.mxu0 %v2159
  %3474 = vmatpush.bf16.msra.mxu0 %v2095
  %3475 = vmatmul.bf16.gmra.mxu0 %v17
  %v3476 = vpop.f32.mrf.mxu0
  %v3477 = vadd.f32 0.0, %v3476
  %v3478 = vpop.f32.mrf.mxu0
  %3479 = vdwg.mxu0
  %3480 = vmatpush.bf16.msra.mxu0 %v2544
  %3481 = vmatpush.bf16.msra.mxu0 %v2480
  %3482 = vmatpush.bf16.msra.mxu0 %v2416
  %3483 = vmatpush.bf16.msra.mxu0 %v2352
  %3484 = vmatpush.bf16.msra.mxu0 %v2288
  %3485 = vmatpush.bf16.msra.mxu0 %v2224
  %3486 = vmatpush.bf16.msra.mxu0 %v2160
  %3487 = vmatpush.bf16.msra.mxu0 %v2096
  %3488 = vmatmul.bf16.gmra.mxu0 %v17
  %v3489 = vpop.f32.mrf.mxu0
  %v3490 = vadd.f32 0.0, %v3489
  %v3491 = vpop.f32.mrf.mxu0
  %3492 = vdwg.mxu0
  %3493 = vmatpush.bf16.msra.mxu0 %v2545
  %3494 = vmatpush.bf16.msra.mxu0 %v2481
  %3495 = vmatpush.bf16.msra.mxu0 %v2417
  %3496 = vmatpush.bf16.msra.mxu0 %v2353
  %3497 = vmatpush.bf16.msra.mxu0 %v2289
  %3498 = vmatpush.bf16.msra.mxu0 %v2225
  %3499 = vmatpush.bf16.msra.mxu0 %v2161
  %3500 = vmatpush.bf16.msra.mxu0 %v2097
  %3501 = vmatmul.bf16.gmra.mxu0 %v17
  %v3502 = vpop.f32.mrf.mxu0
  %v3503 = vadd.f32 0.0, %v3502
  %v3504 = vpop.f32.mrf.mxu0
  %3505 = vdwg.mxu0
  %3506 = vmatpush.bf16.msra.mxu0 %v2546
  %3507 = vmatpush.bf16.msra.mxu0 %v2482
  %3508 = vmatpush.bf16.msra.mxu0 %v2418
  %3509 = vmatpush.bf16.msra.mxu0 %v2354
  %3510 = vmatpush.bf16.msra.mxu0 %v2290
  %3511 = vmatpush.bf16.msra.mxu0 %v2226
  %3512 = vmatpush.bf16.msra.mxu0 %v2162
  %3513 = vmatpush.bf16.msra.mxu0 %v2098
  %3514 = vmatmul.bf16.gmra.mxu0 %v17
  %v3515 = vpop.f32.mrf.mxu0
  %v3516 = vadd.f32 0.0, %v3515
  %v3517 = vpop.f32.mrf.mxu0
  %3518 = vdwg.mxu0
  %3519 = vmatpush.bf16.msra.mxu0 %v2547
  %3520 = vmatpush.bf16.msra.mxu0 %v2483
  %3521 = vmatpush.bf16.msra.mxu0 %v2419
  %3522 = vmatpush.bf16.msra.mxu0 %v2355
  %3523 = vmatpush.bf16.msra.mxu0 %v2291
  %3524 = vmatpush.bf16.msra.mxu0 %v2227
  %3525 = vmatpush.bf16.msra.mxu0 %v2163
  %3526 = vmatpush.bf16.msra.mxu0 %v2099
  %3527 = vmatmul.bf16.gmra.mxu0 %v17
  %v3528 = vpop.f32.mrf.mxu0
  %v3529 = vadd.f32 0.0, %v3528
  %v3530 = vpop.f32.mrf.mxu0
  %3531 = vdwg.mxu0
  %3532 = vmatpush.bf16.msra.mxu0 %v2548
  %3533 = vmatpush.bf16.msra.mxu0 %v2484
  %3534 = vmatpush.bf16.msra.mxu0 %v2420
  %3535 = vmatpush.bf16.msra.mxu0 %v2356
  %3536 = vmatpush.bf16.msra.mxu0 %v2292
  %3537 = vmatpush.bf16.msra.mxu0 %v2228
  %3538 = vmatpush.bf16.msra.mxu0 %v2164
  %3539 = vmatpush.bf16.msra.mxu0 %v2100
  %3540 = vmatmul.bf16.gmra.mxu0 %v17
  %v3541 = vpop.f32.mrf.mxu0
  %v3542 = vadd.f32 0.0, %v3541
  %v3543 = vpop.f32.mrf.mxu0
  %3544 = vdwg.mxu0
  %3545 = vmatpush.bf16.msra.mxu0 %v2549
  %3546 = vmatpush.bf16.msra.mxu0 %v2485
  %3547 = vmatpush.bf16.msra.mxu0 %v2421
  %3548 = vmatpush.bf16.msra.mxu0 %v2357
  %3549 = vmatpush.bf16.msra.mxu0 %v2293
  %3550 = vmatpush.bf16.msra.mxu0 %v2229
  %3551 = vmatpush.bf16.msra.mxu0 %v2165
  %3552 = vmatpush.bf16.msra.mxu0 %v2101
  %3553 = vmatmul.bf16.gmra.mxu0 %v17
  %v3554 = vpop.f32.mrf.mxu0
  %v3555 = vadd.f32 0.0, %v3554
  %v3556 = vpop.f32.mrf.mxu0
  %3557 = vdwg.mxu0
  %3558 = vmatpush.bf16.msra.mxu0 %v2550
  %3559 = vmatpush.bf16.msra.mxu0 %v2486
  %3560 = vmatpush.bf16.msra.mxu0 %v2422
  %3561 = vmatpush.bf16.msra.mxu0 %v2358
  %3562 = vmatpush.bf16.msra.mxu0 %v2294
  %3563 = vmatpush.bf16.msra.mxu0 %v2230
  %3564 = vmatpush.bf16.msra.mxu0 %v2166
  %3565 = vmatpush.bf16.msra.mxu0 %v2102
  %3566 = vmatmul.bf16.gmra.mxu0 %v17
  %v3567 = vpop.f32.mrf.mxu0
  %v3568 = vadd.f32 0.0, %v3567
  %v3569 = vpop.f32.mrf.mxu0
  %3570 = vdwg.mxu0
  %3571 = vmatpush.bf16.msra.mxu0 %v2551
  %3572 = vmatpush.bf16.msra.mxu0 %v2487
  %3573 = vmatpush.bf16.msra.mxu0 %v2423
  %3574 = vmatpush.bf16.msra.mxu0 %v2359
  %3575 = vmatpush.bf16.msra.mxu0 %v2295
  %3576 = vmatpush.bf16.msra.mxu0 %v2231
  %3577 = vmatpush.bf16.msra.mxu0 %v2167
  %3578 = vmatpush.bf16.msra.mxu0 %v2103
  %3579 = vmatmul.bf16.gmra.mxu0 %v17
  %v3580 = vpop.f32.mrf.mxu0
  %v3581 = vadd.f32 0.0, %v3580
  %v3582 = vpop.f32.mrf.mxu0
  %3583 = vdwg.mxu0
  %3584 = vmatpush.bf16.msra.mxu0 %v2552
  %3585 = vmatpush.bf16.msra.mxu0 %v2488
  %3586 = vmatpush.bf16.msra.mxu0 %v2424
  %3587 = vmatpush.bf16.msra.mxu0 %v2360
  %3588 = vmatpush.bf16.msra.mxu0 %v2296
  %3589 = vmatpush.bf16.msra.mxu0 %v2232
  %3590 = vmatpush.bf16.msra.mxu0 %v2168
  %3591 = vmatpush.bf16.msra.mxu0 %v2104
  %3592 = vmatmul.bf16.gmra.mxu0 %v17
  %v3593 = vpop.f32.mrf.mxu0
  %v3594 = vadd.f32 0.0, %v3593
  %v3595 = vpop.f32.mrf.mxu0
  %3596 = vdwg.mxu0
  %3597 = vmatpush.bf16.msra.mxu0 %v2553
  %3598 = vmatpush.bf16.msra.mxu0 %v2489
  %3599 = vmatpush.bf16.msra.mxu0 %v2425
  %3600 = vmatpush.bf16.msra.mxu0 %v2361
  %3601 = vmatpush.bf16.msra.mxu0 %v2297
  %3602 = vmatpush.bf16.msra.mxu0 %v2233
  %3603 = vmatpush.bf16.msra.mxu0 %v2169
  %3604 = vmatpush.bf16.msra.mxu0 %v2105
  %3605 = vmatmul.bf16.gmra.mxu0 %v17
  %v3606 = vpop.f32.mrf.mxu0
  %v3607 = vadd.f32 0.0, %v3606
  %v3608 = vpop.f32.mrf.mxu0
  %3609 = vdwg.mxu0
  %3610 = vmatpush.bf16.msra.mxu0 %v2554
  %3611 = vmatpush.bf16.msra.mxu0 %v2490
  %3612 = vmatpush.bf16.msra.mxu0 %v2426
  %3613 = vmatpush.bf16.msra.mxu0 %v2362
  %3614 = vmatpush.bf16.msra.mxu0 %v2298
  %3615 = vmatpush.bf16.msra.mxu0 %v2234
  %3616 = vmatpush.bf16.msra.mxu0 %v2170
  %3617 = vmatpush.bf16.msra.mxu0 %v2106
  %3618 = vmatmul.bf16.gmra.mxu0 %v17
  %v3619 = vpop.f32.mrf.mxu0
  %v3620 = vadd.f32 0.0, %v3619
  %v3621 = vpop.f32.mrf.mxu0
  %3622 = vdwg.mxu0
  %3623 = vmatpush.bf16.msra.mxu0 %v2555
  %3624 = vmatpush.bf16.msra.mxu0 %v2491
  %3625 = vmatpush.bf16.msra.mxu0 %v2427
  %3626 = vmatpush.bf16.msra.mxu0 %v2363
  %3627 = vmatpush.bf16.msra.mxu0 %v2299
  %3628 = vmatpush.bf16.msra.mxu0 %v2235
  %3629 = vmatpush.bf16.msra.mxu0 %v2171
  %3630 = vmatpush.bf16.msra.mxu0 %v2107
  %3631 = vmatmul.bf16.gmra.mxu0 %v17
  %v3632 = vpop.f32.mrf.mxu0
  %v3633 = vadd.f32 0.0, %v3632
  %v3634 = vpop.f32.mrf.mxu0
  %3635 = vdwg.mxu0
  %3636 = vmatpush.bf16.msra.mxu0 %v2556
  %3637 = vmatpush.bf16.msra.mxu0 %v2492
  %3638 = vmatpush.bf16.msra.mxu0 %v2428
  %3639 = vmatpush.bf16.msra.mxu0 %v2364
  %3640 = vmatpush.bf16.msra.mxu0 %v2300
  %3641 = vmatpush.bf16.msra.mxu0 %v2236
  %3642 = vmatpush.bf16.msra.mxu0 %v2172
  %3643 = vmatpush.bf16.msra.mxu0 %v2108
  %3644 = vmatmul.bf16.gmra.mxu0 %v17
  %v3645 = vpop.f32.mrf.mxu0
  %v3646 = vadd.f32 0.0, %v3645
  %v3647 = vpop.f32.mrf.mxu0
  %3648 = vdwg.mxu0
  %3649 = vmatpush.bf16.msra.mxu0 %v2557
  %3650 = vmatpush.bf16.msra.mxu0 %v2493
  %3651 = vmatpush.bf16.msra.mxu0 %v2429
  %3652 = vmatpush.bf16.msra.mxu0 %v2365
  %3653 = vmatpush.bf16.msra.mxu0 %v2301
  %3654 = vmatpush.bf16.msra.mxu0 %v2237
  %3655 = vmatpush.bf16.msra.mxu0 %v2173
  %3656 = vmatpush.bf16.msra.mxu0 %v2109
  %3657 = vmatmul.bf16.gmra.mxu0 %v17
  %v3658 = vpop.f32.mrf.mxu0
  %v3659 = vadd.f32 0.0, %v3658
  %v3660 = vpop.f32.mrf.mxu0
  %3661 = vdwg.mxu0
  %3662 = vmatpush.bf16.msra.mxu0 %v2558
  %3663 = vmatpush.bf16.msra.mxu0 %v2494
  %3664 = vmatpush.bf16.msra.mxu0 %v2430
  %3665 = vmatpush.bf16.msra.mxu0 %v2366
  %3666 = vmatpush.bf16.msra.mxu0 %v2302
  %3667 = vmatpush.bf16.msra.mxu0 %v2238
  %3668 = vmatpush.bf16.msra.mxu0 %v2174
  %3669 = vmatpush.bf16.msra.mxu0 %v2110
  %3670 = vmatmul.bf16.gmra.mxu0 %v17
  %v3671 = vpop.f32.mrf.mxu0
  %v3672 = vadd.f32 0.0, %v3671
  %v3673 = vpop.f32.mrf.mxu0
  %3674 = vdwg.mxu0
  %3675 = vmatpush.bf16.msra.mxu0 %v2559
  %3676 = vmatpush.bf16.msra.mxu0 %v2495
  %3677 = vmatpush.bf16.msra.mxu0 %v2431
  %3678 = vmatpush.bf16.msra.mxu0 %v2367
  %3679 = vmatpush.bf16.msra.mxu0 %v2303
  %3680 = vmatpush.bf16.msra.mxu0 %v2239
  %3681 = vmatpush.bf16.msra.mxu0 %v2175
  %3682 = vmatpush.bf16.msra.mxu0 %v2111
  %3683 = vmatmul.bf16.gmra.mxu0 %v17
  %v3684 = vpop.f32.mrf.mxu0
  %v3685 = vadd.f32 0.0, %v3684
  %v3686 = vpop.f32.mrf.mxu0
  %3687 = vdwg.mxu0
  %3688 = vmatpush.bf16.msra.mxu0 %v2560
  %3689 = vmatpush.bf16.msra.mxu0 %v2496
  %3690 = vmatpush.bf16.msra.mxu0 %v2432
  %3691 = vmatpush.bf16.msra.mxu0 %v2368
  %3692 = vmatpush.bf16.msra.mxu0 %v2304
  %3693 = vmatpush.bf16.msra.mxu0 %v2240
  %3694 = vmatpush.bf16.msra.mxu0 %v2176
  %3695 = vmatpush.bf16.msra.mxu0 %v2112
  %3696 = vmatmul.bf16.gmra.mxu0 %v17
  %v3697 = vpop.f32.mrf.mxu0
  %v3698 = vadd.f32 0.0, %v3697
  %v3699 = vpop.f32.mrf.mxu0
  %3700 = vdwg.mxu0
  %3701 = vmatpush.bf16.msra.mxu0 %v2561
  %3702 = vmatpush.bf16.msra.mxu0 %v2497
  %3703 = vmatpush.bf16.msra.mxu0 %v2433
  %3704 = vmatpush.bf16.msra.mxu0 %v2369
  %3705 = vmatpush.bf16.msra.mxu0 %v2305
  %3706 = vmatpush.bf16.msra.mxu0 %v2241
  %3707 = vmatpush.bf16.msra.mxu0 %v2177
  %3708 = vmatpush.bf16.msra.mxu0 %v2113
  %3709 = vmatmul.bf16.gmra.mxu0 %v17
  %v3710 = vpop.f32.mrf.mxu0
  %v3711 = vadd.f32 0.0, %v3710
  %v3712 = vpop.f32.mrf.mxu0
  %3713 = vdwg.mxu0
  %3714 = vmatpush.bf16.msra.mxu0 %v2562
  %3715 = vmatpush.bf16.msra.mxu0 %v2498
  %3716 = vmatpush.bf16.msra.mxu0 %v2434
  %3717 = vmatpush.bf16.msra.mxu0 %v2370
  %3718 = vmatpush.bf16.msra.mxu0 %v2306
  %3719 = vmatpush.bf16.msra.mxu0 %v2242
  %3720 = vmatpush.bf16.msra.mxu0 %v2178
  %3721 = vmatpush.bf16.msra.mxu0 %v2114
  %3722 = vmatmul.bf16.gmra.mxu0 %v17
  %v3723 = vpop.f32.mrf.mxu0
  %v3724 = vadd.f32 0.0, %v3723
  %v3725 = vpop.f32.mrf.mxu0
  %3726 = vdwg.mxu0
  %3727 = vmatpush.bf16.msra.mxu0 %v2563
  %3728 = vmatpush.bf16.msra.mxu0 %v2499
  %3729 = vmatpush.bf16.msra.mxu0 %v2435
  %3730 = vmatpush.bf16.msra.mxu0 %v2371
  %3731 = vmatpush.bf16.msra.mxu0 %v2307
  %3732 = vmatpush.bf16.msra.mxu0 %v2243
  %3733 = vmatpush.bf16.msra.mxu0 %v2179
  %3734 = vmatpush.bf16.msra.mxu0 %v2115
  %3735 = vmatmul.bf16.gmra.mxu0 %v17
  %v3736 = vpop.f32.mrf.mxu0
  %v3737 = vadd.f32 0.0, %v3736
  %v3738 = vpop.f32.mrf.mxu0
  %3739 = vdwg.mxu0
  %3740 = vmatpush.bf16.msra.mxu0 %v2564
  %3741 = vmatpush.bf16.msra.mxu0 %v2500
  %3742 = vmatpush.bf16.msra.mxu0 %v2436
  %3743 = vmatpush.bf16.msra.mxu0 %v2372
  %3744 = vmatpush.bf16.msra.mxu0 %v2308
  %3745 = vmatpush.bf16.msra.mxu0 %v2244
  %3746 = vmatpush.bf16.msra.mxu0 %v2180
  %3747 = vmatpush.bf16.msra.mxu0 %v2116
  %3748 = vmatmul.bf16.gmra.mxu0 %v17
  %v3749 = vpop.f32.mrf.mxu0
  %v3750 = vadd.f32 0.0, %v3749
  %v3751 = vpop.f32.mrf.mxu0
  %3752 = vdwg.mxu0
  %3753 = vmatpush.bf16.msra.mxu0 %v2565
  %3754 = vmatpush.bf16.msra.mxu0 %v2501
  %3755 = vmatpush.bf16.msra.mxu0 %v2437
  %3756 = vmatpush.bf16.msra.mxu0 %v2373
  %3757 = vmatpush.bf16.msra.mxu0 %v2309
  %3758 = vmatpush.bf16.msra.mxu0 %v2245
  %3759 = vmatpush.bf16.msra.mxu0 %v2181
  %3760 = vmatpush.bf16.msra.mxu0 %v2117
  %3761 = vmatmul.bf16.gmra.mxu0 %v17
  %v3762 = vpop.f32.mrf.mxu0
  %v3763 = vadd.f32 0.0, %v3762
  %v3764 = vpop.f32.mrf.mxu0
  %3765 = vdwg.mxu0
  %3766 = vmatpush.bf16.msra.mxu0 %v2566
  %3767 = vmatpush.bf16.msra.mxu0 %v2502
  %3768 = vmatpush.bf16.msra.mxu0 %v2438
  %3769 = vmatpush.bf16.msra.mxu0 %v2374
  %3770 = vmatpush.bf16.msra.mxu0 %v2310
  %3771 = vmatpush.bf16.msra.mxu0 %v2246
  %3772 = vmatpush.bf16.msra.mxu0 %v2182
  %3773 = vmatpush.bf16.msra.mxu0 %v2118
  %3774 = vmatmul.bf16.gmra.mxu0 %v17
  %v3775 = vpop.f32.mrf.mxu0
  %v3776 = vadd.f32 0.0, %v3775
  %v3777 = vpop.f32.mrf.mxu0
  %3778 = vdwg.mxu0
  %3779 = vmatpush.bf16.msra.mxu0 %v2567
  %3780 = vmatpush.bf16.msra.mxu0 %v2503
  %3781 = vmatpush.bf16.msra.mxu0 %v2439
  %3782 = vmatpush.bf16.msra.mxu0 %v2375
  %3783 = vmatpush.bf16.msra.mxu0 %v2311
  %3784 = vmatpush.bf16.msra.mxu0 %v2247
  %3785 = vmatpush.bf16.msra.mxu0 %v2183
  %3786 = vmatpush.bf16.msra.mxu0 %v2119
  %3787 = vmatmul.bf16.gmra.mxu0 %v17
  %v3788 = vpop.f32.mrf.mxu0
  %v3789 = vadd.f32 0.0, %v3788
  %v3790 = vpop.f32.mrf.mxu0
  %3791 = vdwg.mxu0
  %3792 = vmatpush.bf16.msra.mxu0 %v2568
  %3793 = vmatpush.bf16.msra.mxu0 %v2504
  %3794 = vmatpush.bf16.msra.mxu0 %v2440
  %3795 = vmatpush.bf16.msra.mxu0 %v2376
  %3796 = vmatpush.bf16.msra.mxu0 %v2312
  %3797 = vmatpush.bf16.msra.mxu0 %v2248
  %3798 = vmatpush.bf16.msra.mxu0 %v2184
  %3799 = vmatpush.bf16.msra.mxu0 %v2120
  %3800 = vmatmul.bf16.gmra.mxu0 %v17
  %v3801 = vpop.f32.mrf.mxu0
  %v3802 = vadd.f32 0.0, %v3801
  %v3803 = vpop.f32.mrf.mxu0
  %3804 = vdwg.mxu0
  %3805 = vmatpush.bf16.msra.mxu0 %v2569
  %3806 = vmatpush.bf16.msra.mxu0 %v2505
  %3807 = vmatpush.bf16.msra.mxu0 %v2441
  %3808 = vmatpush.bf16.msra.mxu0 %v2377
  %3809 = vmatpush.bf16.msra.mxu0 %v2313
  %3810 = vmatpush.bf16.msra.mxu0 %v2249
  %3811 = vmatpush.bf16.msra.mxu0 %v2185
  %3812 = vmatpush.bf16.msra.mxu0 %v2121
  %3813 = vmatmul.bf16.gmra.mxu0 %v17
  %v3814 = vpop.f32.mrf.mxu0
  %v3815 = vadd.f32 0.0, %v3814
  %v3816 = vpop.f32.mrf.mxu0
  %3817 = vdwg.mxu0
  %3818 = vmatpush.bf16.msra.mxu0 %v2570
  %3819 = vmatpush.bf16.msra.mxu0 %v2506
  %3820 = vmatpush.bf16.msra.mxu0 %v2442
  %3821 = vmatpush.bf16.msra.mxu0 %v2378
  %3822 = vmatpush.bf16.msra.mxu0 %v2314
  %3823 = vmatpush.bf16.msra.mxu0 %v2250
  %3824 = vmatpush.bf16.msra.mxu0 %v2186
  %3825 = vmatpush.bf16.msra.mxu0 %v2122
  %3826 = vmatmul.bf16.gmra.mxu0 %v17
  %v3827 = vpop.f32.mrf.mxu0
  %v3828 = vadd.f32 0.0, %v3827
  %v3829 = vpop.f32.mrf.mxu0
  %3830 = vdwg.mxu0
  %3831 = vmatpush.bf16.msra.mxu0 %v2571
  %3832 = vmatpush.bf16.msra.mxu0 %v2507
  %3833 = vmatpush.bf16.msra.mxu0 %v2443
  %3834 = vmatpush.bf16.msra.mxu0 %v2379
  %3835 = vmatpush.bf16.msra.mxu0 %v2315
  %3836 = vmatpush.bf16.msra.mxu0 %v2251
  %3837 = vmatpush.bf16.msra.mxu0 %v2187
  %3838 = vmatpush.bf16.msra.mxu0 %v2123
  %3839 = vmatmul.bf16.gmra.mxu0 %v17
  %v3840 = vpop.f32.mrf.mxu0
  %v3841 = vadd.f32 0.0, %v3840
  %v3842 = vpop.f32.mrf.mxu0
  %3843 = vdwg.mxu0
  %3844 = vmatpush.bf16.msra.mxu0 %v2572
  %3845 = vmatpush.bf16.msra.mxu0 %v2508
  %3846 = vmatpush.bf16.msra.mxu0 %v2444
  %3847 = vmatpush.bf16.msra.mxu0 %v2380
  %3848 = vmatpush.bf16.msra.mxu0 %v2316
  %3849 = vmatpush.bf16.msra.mxu0 %v2252
  %3850 = vmatpush.bf16.msra.mxu0 %v2188
  %3851 = vmatpush.bf16.msra.mxu0 %v2124
  %3852 = vmatmul.bf16.gmra.mxu0 %v17
  %v3853 = vpop.f32.mrf.mxu0
  %v3854 = vadd.f32 0.0, %v3853
  %v3855 = vpop.f32.mrf.mxu0
  %3856 = vdwg.mxu0
  %3857 = vmatpush.bf16.msra.mxu0 %v2573
  %3858 = vmatpush.bf16.msra.mxu0 %v2509
  %3859 = vmatpush.bf16.msra.mxu0 %v2445
  %3860 = vmatpush.bf16.msra.mxu0 %v2381
  %3861 = vmatpush.bf16.msra.mxu0 %v2317
  %3862 = vmatpush.bf16.msra.mxu0 %v2253
  %3863 = vmatpush.bf16.msra.mxu0 %v2189
  %3864 = vmatpush.bf16.msra.mxu0 %v2125
  %3865 = vmatmul.bf16.gmra.mxu0 %v17
  %v3866 = vpop.f32.mrf.mxu0
  %v3867 = vadd.f32 0.0, %v3866
  %v3868 = vpop.f32.mrf.mxu0
  %3869 = vdwg.mxu0
  %3870 = vmatpush.bf16.msra.mxu0 %v2574
  %3871 = vmatpush.bf16.msra.mxu0 %v2510
  %3872 = vmatpush.bf16.msra.mxu0 %v2446
  %3873 = vmatpush.bf16.msra.mxu0 %v2382
  %3874 = vmatpush.bf16.msra.mxu0 %v2318
  %3875 = vmatpush.bf16.msra.mxu0 %v2254
  %3876 = vmatpush.bf16.msra.mxu0 %v2190
  %3877 = vmatpush.bf16.msra.mxu0 %v2126
  %3878 = vmatmul.bf16.gmra.mxu0 %v17
  %v3879 = vpop.f32.mrf.mxu0
  %v3880 = vadd.f32 0.0, %v3879
  %v3881 = vpop.f32.mrf.mxu0
  %3882 = vdwg.mxu0
  %3883 = vmatpush.bf16.msra.mxu0 %v2575
  %3884 = vmatpush.bf16.msra.mxu0 %v2511
  %3885 = vmatpush.bf16.msra.mxu0 %v2447
  %3886 = vmatpush.bf16.msra.mxu0 %v2383
  %3887 = vmatpush.bf16.msra.mxu0 %v2319
  %3888 = vmatpush.bf16.msra.mxu0 %v2255
  %3889 = vmatpush.bf16.msra.mxu0 %v2191
  %3890 = vmatpush.bf16.msra.mxu0 %v2127
  %3891 = vmatmul.bf16.gmra.mxu0 %v17
  %v3892 = vpop.f32.mrf.mxu0
  %v3893 = vadd.f32 0.0, %v3892
  %v3894 = vpop.f32.mrf.mxu0
  %3895 = vdwg.mxu0
  %3896 = vmatpush.bf16.msra.mxu0 %v2576
  %3897 = vmatpush.bf16.msra.mxu0 %v2512
  %3898 = vmatpush.bf16.msra.mxu0 %v2448
  %3899 = vmatpush.bf16.msra.mxu0 %v2384
  %3900 = vmatpush.bf16.msra.mxu0 %v2320
  %3901 = vmatpush.bf16.msra.mxu0 %v2256
  %3902 = vmatpush.bf16.msra.mxu0 %v2192
  %3903 = vmatpush.bf16.msra.mxu0 %v2128
  %3904 = vmatmul.bf16.gmra.mxu0 %v17
  %v3905 = vpop.f32.mrf.mxu0
  %v3906 = vadd.f32 0.0, %v3905
  %v3907 = vpop.f32.mrf.mxu0
  %3908 = vdwg.mxu0
  %3909 = vmatpush.bf16.msra.mxu0 %v2577
  %3910 = vmatpush.bf16.msra.mxu0 %v2513
  %3911 = vmatpush.bf16.msra.mxu0 %v2449
  %3912 = vmatpush.bf16.msra.mxu0 %v2385
  %3913 = vmatpush.bf16.msra.mxu0 %v2321
  %3914 = vmatpush.bf16.msra.mxu0 %v2257
  %3915 = vmatpush.bf16.msra.mxu0 %v2193
  %3916 = vmatpush.bf16.msra.mxu0 %v2129
  %3917 = vmatmul.bf16.gmra.mxu0 %v17
  %v3918 = vpop.f32.mrf.mxu0
  %v3919 = vadd.f32 0.0, %v3918
  %v3920 = vpop.f32.mrf.mxu0
  %3921 = vdwg.mxu0
  %v3922 = vadd.f32 %v3100, %v3113
  %v3923 = vadd.f32 %v3922, %v3126
  %v3924 = vadd.f32 %v3923, %v3139
  %v3925 = vadd.f32 %v3924, %v3152
  %v3926 = vadd.f32 %v3925, %v3165
  %v3927 = vadd.f32 %v3926, %v3178
  %v3928 = vadd.f32 %v3927, %v3191
  %v3929 = vadd.f32 %v3928, %v3204
  %v3930 = vadd.f32 %v3929, %v3217
  %v3931 = vadd.f32 %v3930, %v3230
  %v3932 = vadd.f32 %v3931, %v3243
  %v3933 = vadd.f32 %v3932, %v3256
  %v3934 = vadd.f32 %v3933, %v3269
  %v3935 = vadd.f32 %v3934, %v3282
  %v3936 = vadd.f32 %v3935, %v3295
  %v3937 = vadd.f32 %v3936, %v3308
  %v3938 = vadd.f32 %v3937, %v3321
  %v3939 = vadd.f32 %v3938, %v3334
  %v3940 = vadd.f32 %v3939, %v3347
  %v3941 = vadd.f32 %v3940, %v3360
  %v3942 = vadd.f32 %v3941, %v3373
  %v3943 = vadd.f32 %v3942, %v3386
  %v3944 = vadd.f32 %v3943, %v3399
  %v3945 = vadd.f32 %v3944, %v3412
  %v3946 = vadd.f32 %v3945, %v3425
  %v3947 = vadd.f32 %v3946, %v3438
  %v3948 = vadd.f32 %v3947, %v3451
  %v3949 = vadd.f32 %v3948, %v3464
  %v3950 = vadd.f32 %v3949, %v3477
  %v3951 = vadd.f32 %v3950, %v3490
  %v3952 = vadd.f32 %v3951, %v3503
  %v3953 = vadd.f32 %v3952, %v3516
  %v3954 = vadd.f32 %v3953, %v3529
  %v3955 = vadd.f32 %v3954, %v3542
  %v3956 = vadd.f32 %v3955, %v3555
  %v3957 = vadd.f32 %v3956, %v3568
  %v3958 = vadd.f32 %v3957, %v3581
  %v3959 = vadd.f32 %v3958, %v3594
  %v3960 = vadd.f32 %v3959, %v3607
  %v3961 = vadd.f32 %v3960, %v3620
  %v3962 = vadd.f32 %v3961, %v3633
  %v3963 = vadd.f32 %v3962, %v3646
  %v3964 = vadd.f32 %v3963, %v3659
  %v3965 = vadd.f32 %v3964, %v3672
  %v3966 = vadd.f32 %v3965, %v3685
  %v3967 = vadd.f32 %v3966, %v3698
  %v3968 = vadd.f32 %v3967, %v3711
  %v3969 = vadd.f32 %v3968, %v3724
  %v3970 = vadd.f32 %v3969, %v3737
  %v3971 = vadd.f32 %v3970, %v3750
  %v3972 = vadd.f32 %v3971, %v3763
  %v3973 = vadd.f32 %v3972, %v3776
  %v3974 = vadd.f32 %v3973, %v3789
  %v3975 = vadd.f32 %v3974, %v3802
  %v3976 = vadd.f32 %v3975, %v3815
  %v3977 = vadd.f32 %v3976, %v3828
  %v3978 = vadd.f32 %v3977, %v3841
  %v3979 = vadd.f32 %v3978, %v3854
  %v3980 = vadd.f32 %v3979, %v3867
  %v3981 = vadd.f32 %v3980, %v3880
  %v3982 = vadd.f32 %v3981, %v3893
  %v3983 = vadd.f32 %v3982, %v3906
  %v3984 = vadd.f32 %v3983, %v3919
  %3985 = vadd.xlane.f32.xlu0 %v3984
  %v3986 = vpop.xlane.xlu0 %3985
  %v3987 = vrcp.pop 8192.0
  %v3988 = vmul.f32 8192.0, %v3987
  %v3989 = vsub.f32 1.0, %v3988
  %v3990 = vmul.f32 %v3987, %v3989
  %v3991 = vadd.f32 %v3987, %v3990
  %vm3992 = vweird.f32 %v3987
  %v3993 = vsel %vm3992, %v3987, %v3991
  %v3994 = vmul.f32 %v3986, %v3993
  %v3995 = vmul.f32 %v3100, %v3100
  %v3996 = vmul.f32 %v3113, %v3113
  %v3997 = vmul.f32 %v3126, %v3126
  %v3998 = vmul.f32 %v3139, %v3139
  %v3999 = vmul.f32 %v3152, %v3152
  %v4000 = vmul.f32 %v3165, %v3165
  %v4001 = vmul.f32 %v3178, %v3178
  %v4002 = vmul.f32 %v3191, %v3191
  %v4003 = vmul.f32 %v3204, %v3204
  %v4004 = vmul.f32 %v3217, %v3217
  %v4005 = vmul.f32 %v3230, %v3230
  %v4006 = vmul.f32 %v3243, %v3243
  %v4007 = vmul.f32 %v3256, %v3256
  %v4008 = vmul.f32 %v3269, %v3269
  %v4009 = vmul.f32 %v3282, %v3282
  %v4010 = vmul.f32 %v3295, %v3295
  %v4011 = vmul.f32 %v3308, %v3308
  %v4012 = vmul.f32 %v3321, %v3321
  %v4013 = vmul.f32 %v3334, %v3334
  %v4014 = vmul.f32 %v3347, %v3347
  %v4015 = vmul.f32 %v3360, %v3360
  %v4016 = vmul.f32 %v3373, %v3373
  %v4017 = vmul.f32 %v3386, %v3386
  %v4018 = vmul.f32 %v3399, %v3399
  %v4019 = vmul.f32 %v3412, %v3412
  %v4020 = vmul.f32 %v3425, %v3425
  %v4021 = vmul.f32 %v3438, %v3438
  %v4022 = vmul.f32 %v3451, %v3451
  %v4023 = vmul.f32 %v3464, %v3464
  %v4024 = vmul.f32 %v3477, %v3477
  %v4025 = vmul.f32 %v3490, %v3490
  %v4026 = vmul.f32 %v3503, %v3503
  %v4027 = vmul.f32 %v3516, %v3516
  %v4028 = vmul.f32 %v3529, %v3529
  %v4029 = vmul.f32 %v3542, %v3542
  %v4030 = vmul.f32 %v3555, %v3555
  %v4031 = vmul.f32 %v3568, %v3568
  %v4032 = vmul.f32 %v3581, %v3581
  %v4033 = vmul.f32 %v3594, %v3594
  %v4034 = vmul.f32 %v3607, %v3607
  %v4035 = vmul.f32 %v3620, %v3620
  %v4036 = vmul.f32 %v3633, %v3633
  %v4037 = vmul.f32 %v3646, %v3646
  %v4038 = vmul.f32 %v3659, %v3659
  %v4039 = vmul.f32 %v3672, %v3672
  %v4040 = vmul.f32 %v3685, %v3685
  %v4041 = vmul.f32 %v3698, %v3698
  %v4042 = vmul.f32 %v3711, %v3711
  %v4043 = vmul.f32 %v3724, %v3724
  %v4044 = vmul.f32 %v3737, %v3737
  %v4045 = vmul.f32 %v3750, %v3750
  %v4046 = vmul.f32 %v3763, %v3763
  %v4047 = vmul.f32 %v3776, %v3776
  %v4048 = vmul.f32 %v3789, %v3789
  %v4049 = vmul.f32 %v3802, %v3802
  %v4050 = vmul.f32 %v3815, %v3815
  %v4051 = vmul.f32 %v3828, %v3828
  %v4052 = vmul.f32 %v3841, %v3841
  %v4053 = vmul.f32 %v3854, %v3854
  %v4054 = vmul.f32 %v3867, %v3867
  %v4055 = vmul.f32 %v3880, %v3880
  %v4056 = vmul.f32 %v3893, %v3893
  %v4057 = vmul.f32 %v3906, %v3906
  %v4058 = vmul.f32 %v3919, %v3919
  %v4059 = vadd.f32 %v3995, %v3996
  %v4060 = vadd.f32 %v4059, %v3997
  %v4061 = vadd.f32 %v4060, %v3998
  %v4062 = vadd.f32 %v4061, %v3999
  %v4063 = vadd.f32 %v4062, %v4000
  %v4064 = vadd.f32 %v4063, %v4001
  %v4065 = vadd.f32 %v4064, %v4002
  %v4066 = vadd.f32 %v4065, %v4003
  %v4067 = vadd.f32 %v4066, %v4004
  %v4068 = vadd.f32 %v4067, %v4005
  %v4069 = vadd.f32 %v4068, %v4006
  %v4070 = vadd.f32 %v4069, %v4007
  %v4071 = vadd.f32 %v4070, %v4008
  %v4072 = vadd.f32 %v4071, %v4009
  %v4073 = vadd.f32 %v4072, %v4010
  %v4074 = vadd.f32 %v4073, %v4011
  %v4075 = vadd.f32 %v4074, %v4012
  %v4076 = vadd.f32 %v4075, %v4013
  %v4077 = vadd.f32 %v4076, %v4014
  %v4078 = vadd.f32 %v4077, %v4015
  %v4079 = vadd.f32 %v4078, %v4016
  %v4080 = vadd.f32 %v4079, %v4017
  %v4081 = vadd.f32 %v4080, %v4018
  %v4082 = vadd.f32 %v4081, %v4019
  %v4083 = vadd.f32 %v4082, %v4020
  %v4084 = vadd.f32 %v4083, %v4021
  %v4085 = vadd.f32 %v4084, %v4022
  %v4086 = vadd.f32 %v4085, %v4023
  %v4087 = vadd.f32 %v4086, %v4024
  %v4088 = vadd.f32 %v4087, %v4025
  %v4089 = vadd.f32 %v4088, %v4026
  %v4090 = vadd.f32 %v4089, %v4027
  %v4091 = vadd.f32 %v4090, %v4028
  %v4092 = vadd.f32 %v4091, %v4029
  %v4093 = vadd.f32 %v4092, %v4030
  %v4094 = vadd.f32 %v4093, %v4031
  %v4095 = vadd.f32 %v4094, %v4032
  %v4096 = vadd.f32 %v4095, %v4033
  %v4097 = vadd.f32 %v4096, %v4034
  %v4098 = vadd.f32 %v4097, %v4035
  %v4099 = vadd.f32 %v4098, %v4036
  %v4100 = vadd.f32 %v4099, %v4037
  %v4101 = vadd.f32 %v4100, %v4038
  %v4102 = vadd.f32 %v4101, %v4039
  %v4103 = vadd.f32 %v4102, %v4040
  %v4104 = vadd.f32 %v4103, %v4041
  %v4105 = vadd.f32 %v4104, %v4042
  %v4106 = vadd.f32 %v4105, %v4043
  %v4107 = vadd.f32 %v4106, %v4044
  %v4108 = vadd.f32 %v4107, %v4045
  %v4109 = vadd.f32 %v4108, %v4046
  %v4110 = vadd.f32 %v4109, %v4047
  %v4111 = vadd.f32 %v4110, %v4048
  %v4112 = vadd.f32 %v4111, %v4049
  %v4113 = vadd.f32 %v4112, %v4050
  %v4114 = vadd.f32 %v4113, %v4051
  %v4115 = vadd.f32 %v4114, %v4052
  %v4116 = vadd.f32 %v4115, %v4053
  %v4117 = vadd.f32 %v4116, %v4054
  %v4118 = vadd.f32 %v4117, %v4055
  %v4119 = vadd.f32 %v4118, %v4056
  %v4120 = vadd.f32 %v4119, %v4057
  %v4121 = vadd.f32 %v4120, %v4058
  %4122 = vadd.xlane.f32.xlu0 %v4121
  %v4123 = vpop.xlane.xlu0 %4122
  %v4124 = vmul.f32 %v4123, %v3993
  %v4125 = vmul.f32 %v3994, %v3994
  %v4126 = vsub.f32 %v4124, %v4125
  %v4127 = vld [vmem:[%s2] sm:$0xff]
  %v4128 = vadd.f32 %v4126, 1e-05
  %v4129 = vrsqrt.pop %v4128
  %v4130 = vmul.f32 %v4129, %v4128
  %v4131 = vmul.f32 %v4130, %v4129
  %v4132 = vmul.f32 0.5, %v4131
  %v4133 = vsub.f32 1.5, %v4132
  %v4134 = vmul.f32 %v4129, %v4133
  %vm4135 = vweird.f32 %v4128
  %vm4136 = vweird.f32 %v4129
  %vm4137 = vmor %vm4135, %vm4136
  %v4138 = vsel %vm4137, %v4129, %v4134
  %v4139 = vmul.f32 %v4127, %v4138
  %v4140 = vld [vmem:[%s3] sm:$0xff]
  %v4141 = vmul.f32 %v3994, %v4139
  %v4142 = vsub.f32 %v4140, %v4141
  %4144 = vset.pattern.permute.xlu0 0
  %4145 = vperm.xlu0 %4144, %v4139
  %v4146 = vpop.permute.xlu0 %4145
  %v4148 = vmul.f32 %v3100, %v4146
  %v4149 = vmul.f32 %v3113, %v4146
  %v4150 = vmul.f32 %v3126, %v4146
  %v4151 = vmul.f32 %v3139, %v4146
  %v4152 = vmul.f32 %v3152, %v4146
  %v4153 = vmul.f32 %v3165, %v4146
  %v4154 = vmul.f32 %v3178, %v4146
  %v4155 = vmul.f32 %v3191, %v4146
  %v4156 = vmul.f32 %v3204, %v4146
  %v4157 = vmul.f32 %v3217, %v4146
  %v4158 = vmul.f32 %v3230, %v4146
  %v4159 = vmul.f32 %v3243, %v4146
  %v4160 = vmul.f32 %v3256, %v4146
  %v4161 = vmul.f32 %v3269, %v4146
  %v4162 = vmul.f32 %v3282, %v4146
  %v4163 = vmul.f32 %v3295, %v4146
  %v4164 = vmul.f32 %v3308, %v4146
  %v4165 = vmul.f32 %v3321, %v4146
  %v4166 = vmul.f32 %v3334, %v4146
  %v4167 = vmul.f32 %v3347, %v4146
  %v4168 = vmul.f32 %v3360, %v4146
  %v4169 = vmul.f32 %v3373, %v4146
  %v4170 = vmul.f32 %v3386, %v4146
  %v4171 = vmul.f32 %v3399, %v4146
  %v4172 = vmul.f32 %v3412, %v4146
  %v4173 = vmul.f32 %v3425, %v4146
  %v4174 = vmul.f32 %v3438, %v4146
  %v4175 = vmul.f32 %v3451, %v4146
  %v4176 = vmul.f32 %v3464, %v4146
  %v4177 = vmul.f32 %v3477, %v4146
  %v4178 = vmul.f32 %v3490, %v4146
  %v4179 = vmul.f32 %v3503, %v4146
  %v4180 = vmul.f32 %v3516, %v4146
  %v4181 = vmul.f32 %v3529, %v4146
  %v4182 = vmul.f32 %v3542, %v4146
  %v4183 = vmul.f32 %v3555, %v4146
  %v4184 = vmul.f32 %v3568, %v4146
  %v4185 = vmul.f32 %v3581, %v4146
  %v4186 = vmul.f32 %v3594, %v4146
  %v4187 = vmul.f32 %v3607, %v4146
  %v4188 = vmul.f32 %v3620, %v4146
  %v4189 = vmul.f32 %v3633, %v4146
  %v4190 = vmul.f32 %v3646, %v4146
  %v4191 = vmul.f32 %v3659, %v4146
  %v4192 = vmul.f32 %v3672, %v4146
  %v4193 = vmul.f32 %v3685, %v4146
  %v4194 = vmul.f32 %v3698, %v4146
  %v4195 = vmul.f32 %v3711, %v4146
  %v4196 = vmul.f32 %v3724, %v4146
  %v4197 = vmul.f32 %v3737, %v4146
  %v4198 = vmul.f32 %v3750, %v4146
  %v4199 = vmul.f32 %v3763, %v4146
  %v4200 = vmul.f32 %v3776, %v4146
  %v4201 = vmul.f32 %v3789, %v4146
  %v4202 = vmul.f32 %v3802, %v4146
  %v4203 = vmul.f32 %v3815, %v4146
  %v4204 = vmul.f32 %v3828, %v4146
  %v4205 = vmul.f32 %v3841, %v4146
  %v4206 = vmul.f32 %v3854, %v4146
  %v4207 = vmul.f32 %v3867, %v4146
  %v4208 = vmul.f32 %v3880, %v4146
  %v4209 = vmul.f32 %v3893, %v4146
  %v4210 = vmul.f32 %v3906, %v4146
  %v4211 = vmul.f32 %v3919, %v4146
  %4213 = vset.pattern.permute.xlu0 0
  %4214 = vperm.xlu0 %4213, %v4142
  %v4215 = vpop.permute.xlu0 %4214
  %v4217 = vadd.f32 %v4148, %v4215
  %v4218 = vadd.f32 %v4149, %v4215
  %v4219 = vadd.f32 %v4150, %v4215
  %v4220 = vadd.f32 %v4151, %v4215
  %v4221 = vadd.f32 %v4152, %v4215
  %v4222 = vadd.f32 %v4153, %v4215
  %v4223 = vadd.f32 %v4154, %v4215
  %v4224 = vadd.f32 %v4155, %v4215
  %v4225 = vadd.f32 %v4156, %v4215
  %v4226 = vadd.f32 %v4157, %v4215
  %v4227 = vadd.f32 %v4158, %v4215
  %v4228 = vadd.f32 %v4159, %v4215
  %v4229 = vadd.f32 %v4160, %v4215
  %v4230 = vadd.f32 %v4161, %v4215
  %v4231 = vadd.f32 %v4162, %v4215
  %v4232 = vadd.f32 %v4163, %v4215
  %v4233 = vadd.f32 %v4164, %v4215
  %v4234 = vadd.f32 %v4165, %v4215
  %v4235 = vadd.f32 %v4166, %v4215
  %v4236 = vadd.f32 %v4167, %v4215
  %v4237 = vadd.f32 %v4168, %v4215
  %v4238 = vadd.f32 %v4169, %v4215
  %v4239 = vadd.f32 %v4170, %v4215
  %v4240 = vadd.f32 %v4171, %v4215
  %v4241 = vadd.f32 %v4172, %v4215
  %v4242 = vadd.f32 %v4173, %v4215
  %v4243 = vadd.f32 %v4174, %v4215
  %v4244 = vadd.f32 %v4175, %v4215
  %v4245 = vadd.f32 %v4176, %v4215
  %v4246 = vadd.f32 %v4177, %v4215
  %v4247 = vadd.f32 %v4178, %v4215
  %v4248 = vadd.f32 %v4179, %v4215
  %v4249 = vadd.f32 %v4180, %v4215
  %v4250 = vadd.f32 %v4181, %v4215
  %v4251 = vadd.f32 %v4182, %v4215
  %v4252 = vadd.f32 %v4183, %v4215
  %v4253 = vadd.f32 %v4184, %v4215
  %v4254 = vadd.f32 %v4185, %v4215
  %v4255 = vadd.f32 %v4186, %v4215
  %v4256 = vadd.f32 %v4187, %v4215
  %v4257 = vadd.f32 %v4188, %v4215
  %v4258 = vadd.f32 %v4189, %v4215
  %v4259 = vadd.f32 %v4190, %v4215
  %v4260 = vadd.f32 %v4191, %v4215
  %v4261 = vadd.f32 %v4192, %v4215
  %v4262 = vadd.f32 %v4193, %v4215
  %v4263 = vadd.f32 %v4194, %v4215
  %v4264 = vadd.f32 %v4195, %v4215
  %v4265 = vadd.f32 %v4196, %v4215
  %v4266 = vadd.f32 %v4197, %v4215
  %v4267 = vadd.f32 %v4198, %v4215
  %v4268 = vadd.f32 %v4199, %v4215
  %v4269 = vadd.f32 %v4200, %v4215
  %v4270 = vadd.f32 %v4201, %v4215
  %v4271 = vadd.f32 %v4202, %v4215
  %v4272 = vadd.f32 %v4203, %v4215
  %v4273 = vadd.f32 %v4204, %v4215
  %v4274 = vadd.f32 %v4205, %v4215
  %v4275 = vadd.f32 %v4206, %v4215
  %v4276 = vadd.f32 %v4207, %v4215
  %v4277 = vadd.f32 %v4208, %v4215
  %v4278 = vadd.f32 %v4209, %v4215
  %v4279 = vadd.f32 %v4210, %v4215
  %v4280 = vadd.f32 %v4211, %v4215
  %v4281 = vmax.f32 %v4217, 0.0
  %v4282 = vmax.f32 %v4218, 0.0
  %v4283 = vmax.f32 %v4219, 0.0
  %v4284 = vmax.f32 %v4220, 0.0
  %v4285 = vmax.f32 %v4221, 0.0
  %v4286 = vmax.f32 %v4222, 0.0
  %v4287 = vmax.f32 %v4223, 0.0
  %v4288 = vmax.f32 %v4224, 0.0
  %v4289 = vmax.f32 %v4225, 0.0
  %v4290 = vmax.f32 %v4226, 0.0
  %v4291 = vmax.f32 %v4227, 0.0
  %v4292 = vmax.f32 %v4228, 0.0
  %v4293 = vmax.f32 %v4229, 0.0
  %v4294 = vmax.f32 %v4230, 0.0
  %v4295 = vmax.f32 %v4231, 0.0
  %v4296 = vmax.f32 %v4232, 0.0
  %v4297 = vmax.f32 %v4233, 0.0
  %v4298 = vmax.f32 %v4234, 0.0
  %v4299 = vmax.f32 %v4235, 0.0
  %v4300 = vmax.f32 %v4236, 0.0
  %v4301 = vmax.f32 %v4237, 0.0
  %v4302 = vmax.f32 %v4238, 0.0
  %v4303 = vmax.f32 %v4239, 0.0
  %v4304 = vmax.f32 %v4240, 0.0
  %v4305 = vmax.f32 %v4241, 0.0
  %v4306 = vmax.f32 %v4242, 0.0
  %v4307 = vmax.f32 %v4243, 0.0
  %v4308 = vmax.f32 %v4244, 0.0
  %v4309 = vmax.f32 %v4245, 0.0
  %v4310 = vmax.f32 %v4246, 0.0
  %v4311 = vmax.f32 %v4247, 0.0
  %v4312 = vmax.f32 %v4248, 0.0
  %v4313 = vmax.f32 %v4249, 0.0
  %v4314 = vmax.f32 %v4250, 0.0
  %v4315 = vmax.f32 %v4251, 0.0
  %v4316 = vmax.f32 %v4252, 0.0
  %v4317 = vmax.f32 %v4253, 0.0
  %v4318 = vmax.f32 %v4254, 0.0
  %v4319 = vmax.f32 %v4255, 0.0
  %v4320 = vmax.f32 %v4256, 0.0
  %v4321 = vmax.f32 %v4257, 0.0
  %v4322 = vmax.f32 %v4258, 0.0
  %v4323 = vmax.f32 %v4259, 0.0
  %v4324 = vmax.f32 %v4260, 0.0
  %v4325 = vmax.f32 %v4261, 0.0
  %v4326 = vmax.f32 %v4262, 0.0
  %v4327 = vmax.f32 %v4263, 0.0
  %v4328 = vmax.f32 %v4264, 0.0
  %v4329 = vmax.f32 %v4265, 0.0
  %v4330 = vmax.f32 %v4266, 0.0
  %v4331 = vmax.f32 %v4267, 0.0
  %v4332 = vmax.f32 %v4268, 0.0
  %v4333 = vmax.f32 %v4269, 0.0
  %v4334 = vmax.f32 %v4270, 0.0
  %v4335 = vmax.f32 %v4271, 0.0
  %v4336 = vmax.f32 %v4272, 0.0
  %v4337 = vmax.f32 %v4273, 0.0
  %v4338 = vmax.f32 %v4274, 0.0
  %v4339 = vmax.f32 %v4275, 0.0
  %v4340 = vmax.f32 %v4276, 0.0
  %v4341 = vmax.f32 %v4277, 0.0
  %v4342 = vmax.f32 %v4278, 0.0
  %v4343 = vmax.f32 %v4279, 0.0
  %v4344 = vmax.f32 %v4280, 0.0
  %4345 = vst [vmem:[%s4] sm:$0xff] %v4281
  %4346 = vst [vmem:[%s4 + $0x8] sm:$0xff] %v4282
  %4347 = vst [vmem:[%s4 + $0x10] sm:$0xff] %v4283
  %4348 = vst [vmem:[%s4 + $0x18] sm:$0xff] %v4284
  %4349 = vst [vmem:[%s4 + $0x20] sm:$0xff] %v4285
  %4350 = vst [vmem:[%s4 + $0x28] sm:$0xff] %v4286
  %4351 = vst [vmem:[%s4 + $0x30] sm:$0xff] %v4287
  %4352 = vst [vmem:[%s4 + $0x38] sm:$0xff] %v4288
  %4353 = vst [vmem:[%s4 + $0x40] sm:$0xff] %v4289
  %4354 = vst [vmem:[%s4 + $0x48] sm:$0xff] %v4290
  %4355 = vst [vmem:[%s4 + $0x50] sm:$0xff] %v4291
  %4356 = vst [vmem:[%s4 + $0x58] sm:$0xff] %v4292
  %4357 = vst [vmem:[%s4 + $0x60] sm:$0xff] %v4293
  %4358 = vst [vmem:[%s4 + $0x68] sm:$0xff] %v4294
  %4359 = vst [vmem:[%s4 + $0x70] sm:$0xff] %v4295
  %4360 = vst [vmem:[%s4 + $0x78] sm:$0xff] %v4296
  %4361 = vst [vmem:[%s4 + $0x80] sm:$0xff] %v4297
  %4362 = vst [vmem:[%s4 + $0x88] sm:$0xff] %v4298
  %4363 = vst [vmem:[%s4 + $0x90] sm:$0xff] %v4299
  %4364 = vst [vmem:[%s4 + $0x98] sm:$0xff] %v4300
  %4365 = vst [vmem:[%s4 + $0xa0] sm:$0xff] %v4301
  %4366 = vst [vmem:[%s4 + $0xa8] sm:$0xff] %v4302
  %4367 = vst [vmem:[%s4 + $0xb0] sm:$0xff] %v4303
  %4368 = vst [vmem:[%s4 + $0xb8] sm:$0xff] %v4304
  %4369 = vst [vmem:[%s4 + $0xc0] sm:$0xff] %v4305
  %4370 = vst [vmem:[%s4 + $0xc8] sm:$0xff] %v4306
  %4371 = vst [vmem:[%s4 + $0xd0] sm:$0xff] %v4307
  %4372 = vst [vmem:[%s4 + $0xd8] sm:$0xff] %v4308
  %4373 = vst [vmem:[%s4 + $0xe0] sm:$0xff] %v4309
  %4374 = vst [vmem:[%s4 + $0xe8] sm:$0xff] %v4310
  %4375 = vst [vmem:[%s4 + $0xf0] sm:$0xff] %v4311
  %4376 = vst [vmem:[%s4 + $0xf8] sm:$0xff] %v4312
  %4377 = vst [vmem:[%s4 + $0x100] sm:$0xff] %v4313
  %4378 = vst [vmem:[%s4 + $0x108] sm:$0xff] %v4314
  %4379 = vst [vmem:[%s4 + $0x110] sm:$0xff] %v4315
  %4380 = vst [vmem:[%s4 + $0x118] sm:$0xff] %v4316
  %4381 = vst [vmem:[%s4 + $0x120] sm:$0xff] %v4317
  %4382 = vst [vmem:[%s4 + $0x128] sm:$0xff] %v4318
  %4383 = vst [vmem:[%s4 + $0x130] sm:$0xff] %v4319
  %4384 = vst [vmem:[%s4 + $0x138] sm:$0xff] %v4320
  %4385 = vst [vmem:[%s4 + $0x140] sm:$0xff] %v4321
  %4386 = vst [vmem:[%s4 + $0x148] sm:$0xff] %v4322
  %4387 = vst [vmem:[%s4 + $0x150] sm:$0xff] %v4323
  %4388 = vst [vmem:[%s4 + $0x158] sm:$0xff] %v4324
  %4389 = vst [vmem:[%s4 + $0x160] sm:$0xff] %v4325
  %4390 = vst [vmem:[%s4 + $0x168] sm:$0xff] %v4326
  %4391 = vst [vmem:[%s4 + $0x170] sm:$0xff] %v4327
  %4392 = vst [vmem:[%s4 + $0x178] sm:$0xff] %v4328
  %4393 = vst [vmem:[%s4 + $0x180] sm:$0xff] %v4329
  %4394 = vst [vmem:[%s4 + $0x188] sm:$0xff] %v4330
  %4395 = vst [vmem:[%s4 + $0x190] sm:$0xff] %v4331
  %4396 = vst [vmem:[%s4 + $0x198] sm:$0xff] %v4332
  %4397 = vst [vmem:[%s4 + $0x1a0] sm:$0xff] %v4333
  %4398 = vst [vmem:[%s4 + $0x1a8] sm:$0xff] %v4334
  %4399 = vst [vmem:[%s4 + $0x1b0] sm:$0xff] %v4335
  %4400 = vst [vmem:[%s4 + $0x1b8] sm:$0xff] %v4336
  %4401 = vst [vmem:[%s4 + $0x1c0] sm:$0xff] %v4337
  %4402 = vst [vmem:[%s4 + $0x1c8] sm:$0xff] %v4338
  %4403 = vst [vmem:[%s4 + $0x1d0] sm:$0xff] %v4339
  %4404 = vst [vmem:[%s4 + $0x1d8] sm:$0xff] %v4340
  %4405 = vst [vmem:[%s4 + $0x1e0] sm:$0xff] %v4341
  %4406 = vst [vmem:[%s4 + $0x1e8] sm:$0xff] %v4342
  %4407 = vst [vmem:[%s4 + $0x1f0] sm:$0xff] %v4343
  %4408 = vst [vmem:[%s4 + $0x1f8] sm:$0xff] %v4344
  // Predicated region
  $region18: #{_lambda_.10} parent=0 // pred_check
    _
  $region19: #{_lambda_.10} parent=0 // pred_check_branch
    %4410 = sbr.rel (0) target = $region21
  $region20: #{_lambda_.10} parent=0 // pred_region
    _
  $region21: #{_lambda_.10} parent=0 // pred_fallthru
    _
  // Predicated region
  $region22: #{_lambda_.10} parent=0 // pred_check
    _
  $region23: #{_lambda_.10} parent=0 // pred_check_branch
    %4412 = sbr.rel (0) target = $region25
  $region24: #{_lambda_.10} parent=0 // pred_region
    _
  $region25: #{_lambda_.10} parent=0 // pred_fallthru
    _

// kernel: _lambda_.11
$region0: #{_lambda_.11}
  #allocation0 [shape = 'u32[]', space=smem, size = 0x4, offset = 0x4, fixed_abs, tag = 'smem constant byte address 0x4 - core index']
  #allocation1 [shape = 'u32[72,128]{1,0:T(1,128)}', space=vmem, size = 0x9000, scoped, tag = 'internal scratch']
  %s0 = inlined_call_operand.vmem [shape: bf16[8,64], index: 0, kind: input, shape index: {}]
  %s1 = inlined_call_operand.vmem [shape: bf16[64,32768], index: 1, kind: input, shape index: {}]
  %s2 = inlined_call_operand.vmem [shape: f32[8,32768], index: 2, kind: output, shape index: {}]
  %s3 = sld [smem:[#allocation0]]
  $region64: #{_lambda_.11} parent=0
    _
  %s5 = ssub.s32 1, %s3
  %s6 = scalar_select 0, %s5, %s3
  $region1: #{_lambda_.11} parent=0
    #allocation2 [shape = 'u8[2097152]{0}', space=vmem, size = 0x200000, scoped, tag = 'input window, operand 1']
    loop: start=0, step=1, limit=6
    $region2: #{_lambda_.11} parent=1 // loop_pre_header
      _
    $region3: #{_lambda_.11} parent=1 // loop_header
      %s8 = sphi 0, %s12
      %p9 = scmp.ge.s32.totalorder %s8, 6
      %s16 = sphi 0, %s16
      %s18 = sphi 0, %s16
      %s19 = sphi 0, %s18
      %s33 = sphi 0, %s19
      %s39 = sphi 0, %s41
      %s42 = sphi 0, %s39
      %s43 = sphi 0, %s42
      %s59 = sphi 0, %s43
      %s65 = sphi 0, %s67
      %s68 = sphi 0, %s65
      %s69 = sphi 0, %s68
      %s85 = sphi 0, %s69
    $region4: #{_lambda_.11} parent=1 // loop_header_branch
      %11 = sbr.rel (%p9) target = $region8
    $region5: #{_lambda_.11} parent=1 // loop_body
      %s13 = ssub.s32 %s8, 1
      %s14 = ssub.s32 %s8, 2
      %s15 = sadd.s32 %s8, 1
      %s17 = sadd.s32 %s16, 1
      %p20 = scmp.eq.s32.totalorder %s8, 3
      %p21 = scmp.ne.s32.totalorder %s16, %s18
      %p22 = scmp.eq.s32.totalorder %s8, 0
      %p23 = por %p21, %p22
      %p24 = scmp.ne.s32.totalorder %s16, %s18
      %p25 = scmp.eq.s32.totalorder %s13, 3
      %p26 = por %p24, %p25
      %p27 = scmp.ne.s32.totalorder %s18, %s19
      %p28 = scmp.eq.s32.totalorder %s13, 0
      %p29 = por %p27, %p28
      %p30 = scmp.ne.s32.totalorder %s18, %s19
      %p31 = scmp.eq.s32.totalorder %s14, 3
      %p32 = por %p30, %p31
      %p34 = scmp.ne.s32.totalorder %s19, %s33
      %p35 = scmp.eq.s32.totalorder %s14, 0
      %p36 = por %p34, %p35
      %s37 = ssub.s32 %s8, %s15
      %p38 = scmp.eq.s32.totalorder %s37, 0
      %s40 = sadd.s32 %s39, 1
      %s41 = scalar_select %p38, %s39, %s40
      %p44 = pneg %p38
      %p45 = scmp.eq.s32.totalorder %s8, 3
      %p46 = por %p44, %p45
      %p47 = scmp.ne.s32.totalorder %s39, %s42
      %p48 = scmp.eq.s32.totalorder %s8, 0
      %p49 = por %p47, %p48
      %p50 = scmp.ne.s32.totalorder %s39, %s42
      %p51 = scmp.eq.s32.totalorder %s13, 3
      %p52 = por %p50, %p51
      %p53 = scmp.ne.s32.totalorder %s42, %s43
      %p54 = scmp.eq.s32.totalorder %s13, 0
      %p55 = por %p53, %p54
      %p56 = scmp.ne.s32.totalorder %s42, %s43
      %p57 = scmp.eq.s32.totalorder %s14, 3
      %p58 = por %p56, %p57
      %p60 = scmp.ne.s32.totalorder %s43, %s59
      %p61 = scmp.eq.s32.totalorder %s14, 0
      %p62 = por %p60, %p61
      %s63 = ssub.s32 %s8, %s15
      %p64 = scmp.eq.s32.totalorder %s63, 0
      %s66 = sadd.s32 %s65, 1
      %s67 = scalar_select %p64, %s65, %s66
      %p70 = pneg %p64
      %p71 = scmp.eq.s32.totalorder %s8, 3
      %p72 = por %p70, %p71
      %p73 = scmp.ne.s32.totalorder %s65, %s68
      %p74 = scmp.eq.s32.totalorder %s8, 0
      %p75 = por %p73, %p74
      %p76 = scmp.ne.s32.totalorder %s65, %s68
      %p77 = scmp.eq.s32.totalorder %s13, 3
      %p78 = por %p76, %p77
      %p79 = scmp.ne.s32.totalorder %s68, %s69
      %p80 = scmp.eq.s32.totalorder %s13, 0
      %p81 = por %p79, %p80
      %p82 = scmp.ne.s32.totalorder %s68, %s69
      %p83 = scmp.eq.s32.totalorder %s14, 3
      %p84 = por %p82, %p83
      %p86 = scmp.ne.s32.totalorder %s69, %s85
      %p87 = scmp.eq.s32.totalorder %s14, 0
      %p88 = por %p86, %p87
      %p89 = scmp.le.s32.totalorder 1, %s8
      %p90 = scmp.lt.s32.totalorder %s8, 5
      %p91 = pnand %p89, %p90
      %p92 = pneg %p91
      // Predicated region
      $region9: #{_lambda_.11} parent=5 // pred_check
        _
      $region10: #{_lambda_.11} parent=5 // pred_check_branch
        %94 = sbr.rel (%p91) target = $region12
      $region11: #{_lambda_.11} parent=5 // pred_region
        %s95 = ssub.s32 %s8, 1
        // Predicated region
        $region13: #{_lambda_.11} parent=11 // pred_check
          %p96 = pneg %p29
        $region14: #{_lambda_.11} parent=11 // pred_check_branch
          %98 = sbr.rel (%p96) target = $region16
        $region15: #{_lambda_.11} parent=11 // pred_region
          _
        $region16: #{_lambda_.11} parent=11 // pred_fallthru
          _
      $region12: #{_lambda_.11} parent=5 // pred_fallthru
        _
      %p99 = scmp.lt.s32.totalorder %s8, 4
      // Predicated region
      $region17: #{_lambda_.11} parent=5 // pred_check
        %p100 = pneg %p99
      $region18: #{_lambda_.11} parent=5 // pred_check_branch
        %102 = sbr.rel (%p100) target = $region20
      $region19: #{_lambda_.11} parent=5 // pred_region
        // Predicated region
        $region21: #{_lambda_.11} parent=19 // pred_check
          %p103 = pneg %p49
        $region22: #{_lambda_.11} parent=19 // pred_check_branch
          %105 = sbr.rel (%p103) target = $region24
        $region23: #{_lambda_.11} parent=19 // pred_region
          %s106 = sand.u32 %s39, 1
          %s107 = sand.u32 %s39, 1
          %s108 = smul.addr %s107, 2048
          %s109 = scalar_lea.vmem [#allocation2], %s108
          %s110 = smul.u32 64, %s8
          %s111 = smul.addr %s110, 4
          %s112 = scalar_lea.vmem %s1, %s111
          // Predicated region
          $region25: #{_lambda_.11} parent=23 // pred_check
            _
          $region26: #{_lambda_.11} parent=23 // pred_check_branch
            %114 = sbr.rel (0) target = $region28
          $region27: #{_lambda_.11} parent=23 // pred_region
            // Predicated region
            $region29: #{_lambda_.11} parent=27 // pred_check
              _
            $region30: #{_lambda_.11} parent=27 // pred_check_branch
              %116 = sbr.rel (0) target = $region32
            $region31: #{_lambda_.11} parent=27 // pred_region
              loop: start=0, step=1, limit=1
              $region33: #{_lambda_.11} parent=31 // loop_pre_header
                _
              $region34: #{_lambda_.11} parent=31 // loop_header
                %s118 = sphi 0, %s122
                %p119 = scmp.ge.s32.totalorder %s118, 1
                %s123 = sphi %s112, %s112
                %s124 = sphi %s109, %s109
              $region35: #{_lambda_.11} parent=31 // loop_header_branch
                %121 = sbr.rel (%p119) target = $region39
              $region36: #{_lambda_.11} parent=31 // loop_body
                %v125 = vld [vmem:[%s123] sm:$0xff]
                %126 = vst [vmem:[%s124] sm:$0xff] %v125
                %v127 = vld [vmem:[%s123 + $0x8] sm:$0xff]
                %128 = vst [vmem:[%s124 + $0x8] sm:$0xff] %v127
                %v129 = vld [vmem:[%s123 + $0x10] sm:$0xff]
                %130 = vst [vmem:[%s124 + $0x10] sm:$0xff] %v129
                %v131 = vld [vmem:[%s123 + $0x18] sm:$0xff]
                %132 = vst [vmem:[%s124 + $0x18] sm:$0xff] %v131
                %v133 = vld [vmem:[%s123 + $0x20] sm:$0xff]
                %134 = vst [vmem:[%s124 + $0x20] sm:$0xff] %v133
                %v135 = vld [vmem:[%s123 + $0x28] sm:$0xff]
                %136 = vst [vmem:[%s124 + $0x28] sm:$0xff] %v135
                %v137 = vld [vmem:[%s123 + $0x30] sm:$0xff]
                %138 = vst [vmem:[%s124 + $0x30] sm:$0xff] %v137
                %v139 = vld [vmem:[%s123 + $0x38] sm:$0xff]
                %140 = vst [vmem:[%s124 + $0x38] sm:$0xff] %v139
                %v141 = vld [vmem:[%s123 + $0x40] sm:$0xff]
                %142 = vst [vmem:[%s124 + $0x40] sm:$0xff] %v141
                %v143 = vld [vmem:[%s123 + $0x48] sm:$0xff]
                %144 = vst [vmem:[%s124 + $0x48] sm:$0xff] %v143
                %v145 = vld [vmem:[%s123 + $0x50] sm:$0xff]
                %146 = vst [vmem:[%s124 + $0x50] sm:$0xff] %v145
                %v147 = vld [vmem:[%s123 + $0x58] sm:$0xff]
                %148 = vst [vmem:[%s124 + $0x58] sm:$0xff] %v147
                %v149 = vld [vmem:[%s123 + $0x60] sm:$0xff]
                %150 = vst [vmem:[%s124 + $0x60] sm:$0xff] %v149
                %v151 = vld [vmem:[%s123 + $0x68] sm:$0xff]
                %152 = vst [vmem:[%s124 + $0x68] sm:$0xff] %v151
                %v153 = vld [vmem:[%s123 + $0x70] sm:$0xff]
                %154 = vst [vmem:[%s124 + $0x70] sm:$0xff] %v153
                %v155 = vld [vmem:[%s123 + $0x78] sm:$0xff]
                %156 = vst [vmem:[%s124 + $0x78] sm:$0xff] %v155
                %v157 = vld [vmem:[%s123 + $0x80] sm:$0xff]
                %158 = vst [vmem:[%s124 + $0x80] sm:$0xff] %v157
                %v159 = vld [vmem:[%s123 + $0x88] sm:$0xff]
                %160 = vst [vmem:[%s124 + $0x88] sm:$0xff] %v159
                %v161 = vld [vmem:[%s123 + $0x90] sm:$0xff]
                %162 = vst [vmem:[%s124 + $0x90] sm:$0xff] %v161
                %v163 = vld [vmem:[%s123 + $0x98] sm:$0xff]
                %164 = vst [vmem:[%s124 + $0x98] sm:$0xff] %v163
                %v165 = vld [vmem:[%s123 + $0xa0] sm:$0xff]
                %166 = vst [vmem:[%s124 + $0xa0] sm:$0xff] %v165
                %v167 = vld [vmem:[%s123 + $0xa8] sm:$0xff]
                %168 = vst [vmem:[%s124 + $0xa8] sm:$0xff] %v167
                %v169 = vld [vmem:[%s123 + $0xb0] sm:$0xff]
                %170 = vst [vmem:[%s124 + $0xb0] sm:$0xff] %v169
                %v171 = vld [vmem:[%s123 + $0xb8] sm:$0xff]
                %172 = vst [vmem:[%s124 + $0xb8] sm:$0xff] %v171
                %v173 = vld [vmem:[%s123 + $0xc0] sm:$0xff]
                %174 = vst [vmem:[%s124 + $0xc0] sm:$0xff] %v173
                %v175 = vld [vmem:[%s123 + $0xc8] sm:$0xff]
                %176 = vst [vmem:[%s124 + $0xc8] sm:$0xff] %v175
                %v177 = vld [vmem:[%s123 + $0xd0] sm:$0xff]
                %178 = vst [vmem:[%s124 + $0xd0] sm:$0xff] %v177
                %v179 = vld [vmem:[%s123 + $0xd8] sm:$0xff]
                %180 = vst [vmem:[%s124 + $0xd8] sm:$0xff] %v179
                %v181 = vld [vmem:[%s123 + $0xe0] sm:$0xff]
                %182 = vst [vmem:[%s124 + $0xe0] sm:$0xff] %v181
                %v183 = vld [vmem:[%s123 + $0xe8] sm:$0xff]
                %184 = vst [vmem:[%s124 + $0xe8] sm:$0xff] %v183
                %v185 = vld [vmem:[%s123 + $0xf0] sm:$0xff]
                %186 = vst [vmem:[%s124 + $0xf0] sm:$0xff] %v185
                %v187 = vld [vmem:[%s123 + $0xf8] sm:$0xff]
                %188 = vst [vmem:[%s124 + $0xf8] sm:$0xff] %v187
                %v189 = vld [vmem:[%s123 + $0x400] sm:$0xff]
                %190 = vst [vmem:[%s124 + $0x100] sm:$0xff] %v189
                %v191 = vld [vmem:[%s123 + $0x408] sm:$0xff]
                %192 = vst [vmem:[%s124 + $0x108] sm:$0xff] %v191
                %v193 = vld [vmem:[%s123 + $0x410] sm:$0xff]
                %194 = vst [vmem:[%s124 + $0x110] sm:$0xff] %v193
                %v195 = vld [vmem:[%s123 + $0x418] sm:$0xff]
                %196 = vst [vmem:[%s124 + $0x118] sm:$0xff] %v195
                %v197 = vld [vmem:[%s123 + $0x420] sm:$0xff]
                %198 = vst [vmem:[%s124 + $0x120] sm:$0xff] %v197
                %v199 = vld [vmem:[%s123 + $0x428] sm:$0xff]
                %200 = vst [vmem:[%s124 + $0x128] sm:$0xff] %v199
                %v201 = vld [vmem:[%s123 + $0x430] sm:$0xff]
                %202 = vst [vmem:[%s124 + $0x130] sm:$0xff] %v201
                %v203 = vld [vmem:[%s123 + $0x438] sm:$0xff]
                %204 = vst [vmem:[%s124 + $0x138] sm:$0xff] %v203
                %v205 = vld [vmem:[%s123 + $0x440] sm:$0xff]
                %206 = vst [vmem:[%s124 + $0x140] sm:$0xff] %v205
                %v207 = vld [vmem:[%s123 + $0x448] sm:$0xff]
                %208 = vst [vmem:[%s124 + $0x148] sm:$0xff] %v207
                %v209 = vld [vmem:[%s123 + $0x450] sm:$0xff]
                %210 = vst [vmem:[%s124 + $0x150] sm:$0xff] %v209
                %v211 = vld [vmem:[%s123 + $0x458] sm:$0xff]
                %212 = vst [vmem:[%s124 + $0x158] sm:$0xff] %v211
                %v213 = vld [vmem:[%s123 + $0x460] sm:$0xff]
                %214 = vst [vmem:[%s124 + $0x160] sm:$0xff] %v213
                %v215 = vld [vmem:[%s123 + $0x468] sm:$0xff]
                %216 = vst [vmem:[%s124 + $0x168] sm:$0xff] %v215
                %v217 = vld [vmem:[%s123 + $0x470] sm:$0xff]
                %218 = vst [vmem:[%s124 + $0x170] sm:$0xff] %v217
                %v219 = vld [vmem:[%s123 + $0x478] sm:$0xff]
                %220 = vst [vmem:[%s124 + $0x178] sm:$0xff] %v219
                %v221 = vld [vmem:[%s123 + $0x480] sm:$0xff]
                %222 = vst [vmem:[%s124 + $0x180] sm:$0xff] %v221
                %v223 = vld [vmem:[%s123 + $0x488] sm:$0xff]
                %224 = vst [vmem:[%s124 + $0x188] sm:$0xff] %v223
                %v225 = vld [vmem:[%s123 + $0x490] sm:$0xff]
                %226 = vst [vmem:[%s124 + $0x190] sm:$0xff] %v225
                %v227 = vld [vmem:[%s123 + $0x498] sm:$0xff]
                %228 = vst [vmem:[%s124 + $0x198] sm:$0xff] %v227
                %v229 = vld [vmem:[%s123 + $0x4a0] sm:$0xff]
                %230 = vst [vmem:[%s124 + $0x1a0] sm:$0xff] %v229
                %v231 = vld [vmem:[%s123 + $0x4a8] sm:$0xff]
                %232 = vst [vmem:[%s124 + $0x1a8] sm:$0xff] %v231
                %v233 = vld [vmem:[%s123 + $0x4b0] sm:$0xff]
                %234 = vst [vmem:[%s124 + $0x1b0] sm:$0xff] %v233
                %v235 = vld [vmem:[%s123 + $0x4b8] sm:$0xff]
                %236 = vst [vmem:[%s124 + $0x1b8] sm:$0xff] %v235
                %v237 = vld [vmem:[%s123 + $0x4c0] sm:$0xff]
                %238 = vst [vmem:[%s124 + $0x1c0] sm:$0xff] %v237
                %v239 = vld [vmem:[%s123 + $0x4c8] sm:$0xff]
                %240 = vst [vmem:[%s124 + $0x1c8] sm:$0xff] %v239
                %v241 = vld [vmem:[%s123 + $0x4d0] sm:$0xff]
                %242 = vst [vmem:[%s124 + $0x1d0] sm:$0xff] %v241
                %v243 = vld [vmem:[%s123 + $0x4d8] sm:$0xff]
                %244 = vst [vmem:[%s124 + $0x1d8] sm:$0xff] %v243
                %v245 = vld [vmem:[%s123 + $0x4e0] sm:$0xff]
                %246 = vst [vmem:[%s124 + $0x1e0] sm:$0xff] %v245
                %v247 = vld [vmem:[%s123 + $0x4e8] sm:$0xff]
                %248 = vst [vmem:[%s124 + $0x1e8] sm:$0xff] %v247
                %v249 = vld [vmem:[%s123 + $0x4f0] sm:$0xff]
                %250 = vst [vmem:[%s124 + $0x1f0] sm:$0xff] %v249
                %v251 = vld [vmem:[%s123 + $0x4f8] sm:$0xff]
                %252 = vst [vmem:[%s124 + $0x1f8] sm:$0xff] %v251
                %v253 = vld [vmem:[%s123 + $0x800] sm:$0xff]
                %254 = vst [vmem:[%s124 + $0x200] sm:$0xff] %v253
                %v255 = vld [vmem:[%s123 + $0x808] sm:$0xff]
                %256 = vst [vmem:[%s124 + $0x208] sm:$0xff] %v255
                %v257 = vld [vmem:[%s123 + $0x810] sm:$0xff]
                %258 = vst [vmem:[%s124 + $0x210] sm:$0xff] %v257
                %v259 = vld [vmem:[%s123 + $0x818] sm:$0xff]
                %260 = vst [vmem:[%s124 + $0x218] sm:$0xff] %v259
                %v261 = vld [vmem:[%s123 + $0x820] sm:$0xff]
                %262 = vst [vmem:[%s124 + $0x220] sm:$0xff] %v261
                %v263 = vld [vmem:[%s123 + $0x828] sm:$0xff]
                %264 = vst [vmem:[%s124 + $0x228] sm:$0xff] %v263
                %v265 = vld [vmem:[%s123 + $0x830] sm:$0xff]
                %266 = vst [vmem:[%s124 + $0x230] sm:$0xff] %v265
                %v267 = vld [vmem:[%s123 + $0x838] sm:$0xff]
                %268 = vst [vmem:[%s124 + $0x238] sm:$0xff] %v267
                %v269 = vld [vmem:[%s123 + $0x840] sm:$0xff]
                %270 = vst [vmem:[%s124 + $0x240] sm:$0xff] %v269
                %v271 = vld [vmem:[%s123 + $0x848] sm:$0xff]
                %272 = vst [vmem:[%s124 + $0x248] sm:$0xff] %v271
                %v273 = vld [vmem:[%s123 + $0x850] sm:$0xff]
                %274 = vst [vmem:[%s124 + $0x250] sm:$0xff] %v273
                %v275 = vld [vmem:[%s123 + $0x858] sm:$0xff]
                %276 = vst [vmem:[%s124 + $0x258] sm:$0xff] %v275
                %v277 = vld [vmem:[%s123 + $0x860] sm:$0xff]
                %278 = vst [vmem:[%s124 + $0x260] sm:$0xff] %v277
                %v279 = vld [vmem:[%s123 + $0x868] sm:$0xff]
                %280 = vst [vmem:[%s124 + $0x268] sm:$0xff] %v279
                %v281 = vld [vmem:[%s123 + $0x870] sm:$0xff]
                %282 = vst [vmem:[%s124 + $0x270] sm:$0xff] %v281
                %v283 = vld [vmem:[%s123 + $0x878] sm:$0xff]
                %284 = vst [vmem:[%s124 + $0x278] sm:$0xff] %v283
                %v285 = vld [vmem:[%s123 + $0x880] sm:$0xff]
                %286 = vst [vmem:[%s124 + $0x280] sm:$0xff] %v285
                %v287 = vld [vmem:[%s123 + $0x888] sm:$0xff]
                %288 = vst [vmem:[%s124 + $0x288] sm:$0xff] %v287
                %v289 = vld [vmem:[%s123 + $0x890] sm:$0xff]
                %290 = vst [vmem:[%s124 + $0x290] sm:$0xff] %v289
                %v291 = vld [vmem:[%s123 + $0x898] sm:$0xff]
                %292 = vst [vmem:[%s124 + $0x298] sm:$0xff] %v291
                %v293 = vld [vmem:[%s123 + $0x8a0] sm:$0xff]
                %294 = vst [vmem:[%s124 + $0x2a0] sm:$0xff] %v293
                %v295 = vld [vmem:[%s123 + $0x8a8] sm:$0xff]
                %296 = vst [vmem:[%s124 + $0x2a8] sm:$0xff] %v295
                %v297 = vld [vmem:[%s123 + $0x8b0] sm:$0xff]
                %298 = vst [vmem:[%s124 + $0x2b0] sm:$0xff] %v297
                %v299 = vld [vmem:[%s123 + $0x8b8] sm:$0xff]
                %300 = vst [vmem:[%s124 + $0x2b8] sm:$0xff] %v299
                %v301 = vld [vmem:[%s123 + $0x8c0] sm:$0xff]
                %302 = vst [vmem:[%s124 + $0x2c0] sm:$0xff] %v301
                %v303 = vld [vmem:[%s123 + $0x8c8] sm:$0xff]
                %304 = vst [vmem:[%s124 + $0x2c8] sm:$0xff] %v303
                %v305 = vld [vmem:[%s123 + $0x8d0] sm:$0xff]
                %306 = vst [vmem:[%s124 + $0x2d0] sm:$0xff] %v305
                %v307 = vld [vmem:[%s123 + $0x8d8] sm:$0xff]
                %308 = vst [vmem:[%s124 + $0x2d8] sm:$0xff] %v307
                %v309 = vld [vmem:[%s123 + $0x8e0] sm:$0xff]
                %310 = vst [vmem:[%s124 + $0x2e0] sm:$0xff] %v309
                %v311 = vld [vmem:[%s123 + $0x8e8] sm:$0xff]
                %312 = vst [vmem:[%s124 + $0x2e8] sm:$0xff] %v311
                %v313 = vld [vmem:[%s123 + $0x8f0] sm:$0xff]
                %314 = vst [vmem:[%s124 + $0x2f0] sm:$0xff] %v313
                %v315 = vld [vmem:[%s123 + $0x8f8] sm:$0xff]
                %316 = vst [vmem:[%s124 + $0x2f8] sm:$0xff] %v315
                %v317 = vld [vmem:[%s123 + $0xc00] sm:$0xff]
                %318 = vst [vmem:[%s124 + $0x300] sm:$0xff] %v317
                %v319 = vld [vmem:[%s123 + $0xc08] sm:$0xff]
                %320 = vst [vmem:[%s124 + $0x308] sm:$0xff] %v319
                %v321 = vld [vmem:[%s123 + $0xc10] sm:$0xff]
                %322 = vst [vmem:[%s124 + $0x310] sm:$0xff] %v321
                %v323 = vld [vmem:[%s123 + $0xc18] sm:$0xff]
                %324 = vst [vmem:[%s124 + $0x318] sm:$0xff] %v323
                %v325 = vld [vmem:[%s123 + $0xc20] sm:$0xff]
                %326 = vst [vmem:[%s124 + $0x320] sm:$0xff] %v325
                %v327 = vld [vmem:[%s123 + $0xc28] sm:$0xff]
                %328 = vst [vmem:[%s124 + $0x328] sm:$0xff] %v327
                %v329 = vld [vmem:[%s123 + $0xc30] sm:$0xff]
                %330 = vst [vmem:[%s124 + $0x330] sm:$0xff] %v329
                %v331 = vld [vmem:[%s123 + $0xc38] sm:$0xff]
                %332 = vst [vmem:[%s124 + $0x338] sm:$0xff] %v331
                %v333 = vld [vmem:[%s123 + $0xc40] sm:$0xff]
                %334 = vst [vmem:[%s124 + $0x340] sm:$0xff] %v333
                %v335 = vld [vmem:[%s123 + $0xc48] sm:$0xff]
                %336 = vst [vmem:[%s124 + $0x348] sm:$0xff] %v335
                %v337 = vld [vmem:[%s123 + $0xc50] sm:$0xff]
                %338 = vst [vmem:[%s124 + $0x350] sm:$0xff] %v337
                %v339 = vld [vmem:[%s123 + $0xc58] sm:$0xff]
                %340 = vst [vmem:[%s124 + $0x358] sm:$0xff] %v339
                %v341 = vld [vmem:[%s123 + $0xc60] sm:$0xff]
                %342 = vst [vmem:[%s124 + $0x360] sm:$0xff] %v341
                %v343 = vld [vmem:[%s123 + $0xc68] sm:$0xff]
                %344 = vst [vmem:[%s124 + $0x368] sm:$0xff] %v343
                %v345 = vld [vmem:[%s123 + $0xc70] sm:$0xff]
                %346 = vst [vmem:[%s124 + $0x370] sm:$0xff] %v345
                %v347 = vld [vmem:[%s123 + $0xc78] sm:$0xff]
                %348 = vst [vmem:[%s124 + $0x378] sm:$0xff] %v347
                %v349 = vld [vmem:[%s123 + $0xc80] sm:$0xff]
                %350 = vst [vmem:[%s124 + $0x380] sm:$0xff] %v349
                %v351 = vld [vmem:[%s123 + $0xc88] sm:$0xff]
                %352 = vst [vmem:[%s124 + $0x388] sm:$0xff] %v351
                %v353 = vld [vmem:[%s123 + $0xc90] sm:$0xff]
                %354 = vst [vmem:[%s124 + $0x390] sm:$0xff] %v353
                %v355 = vld [vmem:[%s123 + $0xc98] sm:$0xff]
                %356 = vst [vmem:[%s124 + $0x398] sm:$0xff] %v355
                %v357 = vld [vmem:[%s123 + $0xca0] sm:$0xff]
                %358 = vst [vmem:[%s124 + $0x3a0] sm:$0xff] %v357
                %v359 = vld [vmem:[%s123 + $0xca8] sm:$0xff]
                %360 = vst [vmem:[%s124 + $0x3a8] sm:$0xff] %v359
                %v361 = vld [vmem:[%s123 + $0xcb0] sm:$0xff]
                %362 = vst [vmem:[%s124 + $0x3b0] sm:$0xff] %v361
                %v363 = vld [vmem:[%s123 + $0xcb8] sm:$0xff]
                %364 = vst [vmem:[%s124 + $0x3b8] sm:$0xff] %v363
                %v365 = vld [vmem:[%s123 + $0xcc0] sm:$0xff]
                %366 = vst [vmem:[%s124 + $0x3c0] sm:$0xff] %v365
                %v367 = vld [vmem:[%s123 + $0xcc8] sm:$0xff]
                %368 = vst [vmem:[%s124 + $0x3c8] sm:$0xff] %v367
                %v369 = vld [vmem:[%s123 + $0xcd0] sm:$0xff]
                %370 = vst [vmem:[%s124 + $0x3d0] sm:$0xff] %v369
                %v371 = vld [vmem:[%s123 + $0xcd8] sm:$0xff]
                %372 = vst [vmem:[%s124 + $0x3d8] sm:$0xff] %v371
                %v373 = vld [vmem:[%s123 + $0xce0] sm:$0xff]
                %374 = vst [vmem:[%s124 + $0x3e0] sm:$0xff] %v373
                %v375 = vld [vmem:[%s123 + $0xce8] sm:$0xff]
                %376 = vst [vmem:[%s124 + $0x3e8] sm:$0xff] %v375
                %v377 = vld [vmem:[%s123 + $0xcf0] sm:$0xff]
                %378 = vst [vmem:[%s124 + $0x3f0] sm:$0xff] %v377
                %v379 = vld [vmem:[%s123 + $0xcf8] sm:$0xff]
                %380 = vst [vmem:[%s124 + $0x3f8] sm:$0xff] %v379
                %v381 = vld [vmem:[%s123 + $0x1000] sm:$0xff]
                %382 = vst [vmem:[%s124 + $0x400] sm:$0xff] %v381
                %v383 = vld [vmem:[%s123 + $0x1008] sm:$0xff]
                %384 = vst [vmem:[%s124 + $0x408] sm:$0xff] %v383
                %v385 = vld [vmem:[%s123 + $0x1010] sm:$0xff]
                %386 = vst [vmem:[%s124 + $0x410] sm:$0xff] %v385
                %v387 = vld [vmem:[%s123 + $0x1018] sm:$0xff]
                %388 = vst [vmem:[%s124 + $0x418] sm:$0xff] %v387
                %v389 = vld [vmem:[%s123 + $0x1020] sm:$0xff]
                %390 = vst [vmem:[%s124 + $0x420] sm:$0xff] %v389
                %v391 = vld [vmem:[%s123 + $0x1028] sm:$0xff]
                %392 = vst [vmem:[%s124 + $0x428] sm:$0xff] %v391
                %v393 = vld [vmem:[%s123 + $0x1030] sm:$0xff]
                %394 = vst [vmem:[%s124 + $0x430] sm:$0xff] %v393
                %v395 = vld [vmem:[%s123 + $0x1038] sm:$0xff]
                %396 = vst [vmem:[%s124 + $0x438] sm:$0xff] %v395
                %v397 = vld [vmem:[%s123 + $0x1040] sm:$0xff]
                %398 = vst [vmem:[%s124 + $0x440] sm:$0xff] %v397
                %v399 = vld [vmem:[%s123 + $0x1048] sm:$0xff]
                %400 = vst [vmem:[%s124 + $0x448] sm:$0xff] %v399
                %v401 = vld [vmem:[%s123 + $0x1050] sm:$0xff]
                %402 = vst [vmem:[%s124 + $0x450] sm:$0xff] %v401
                %v403 = vld [vmem:[%s123 + $0x1058] sm:$0xff]
                %404 = vst [vmem:[%s124 + $0x458] sm:$0xff] %v403
                %v405 = vld [vmem:[%s123 + $0x1060] sm:$0xff]
                %406 = vst [vmem:[%s124 + $0x460] sm:$0xff] %v405
                %v407 = vld [vmem:[%s123 + $0x1068] sm:$0xff]
                %408 = vst [vmem:[%s124 + $0x468] sm:$0xff] %v407
                %v409 = vld [vmem:[%s123 + $0x1070] sm:$0xff]
                %410 = vst [vmem:[%s124 + $0x470] sm:$0xff] %v409
                %v411 = vld [vmem:[%s123 + $0x1078] sm:$0xff]
                %412 = vst [vmem:[%s124 + $0x478] sm:$0xff] %v411
                %v413 = vld [vmem:[%s123 + $0x1080] sm:$0xff]
                %414 = vst [vmem:[%s124 + $0x480] sm:$0xff] %v413
                %v415 = vld [vmem:[%s123 + $0x1088] sm:$0xff]
                %416 = vst [vmem:[%s124 + $0x488] sm:$0xff] %v415
                %v417 = vld [vmem:[%s123 + $0x1090] sm:$0xff]
                %418 = vst [vmem:[%s124 + $0x490] sm:$0xff] %v417
                %v419 = vld [vmem:[%s123 + $0x1098] sm:$0xff]
                %420 = vst [vmem:[%s124 + $0x498] sm:$0xff] %v419
                %v421 = vld [vmem:[%s123 + $0x10a0] sm:$0xff]
                %422 = vst [vmem:[%s124 + $0x4a0] sm:$0xff] %v421
                %v423 = vld [vmem:[%s123 + $0x10a8] sm:$0xff]
                %424 = vst [vmem:[%s124 + $0x4a8] sm:$0xff] %v423
                %v425 = vld [vmem:[%s123 + $0x10b0] sm:$0xff]
                %426 = vst [vmem:[%s124 + $0x4b0] sm:$0xff] %v425
                %v427 = vld [vmem:[%s123 + $0x10b8] sm:$0xff]
                %428 = vst [vmem:[%s124 + $0x4b8] sm:$0xff] %v427
                %v429 = vld [vmem:[%s123 + $0x10c0] sm:$0xff]
                %430 = vst [vmem:[%s124 + $0x4c0] sm:$0xff] %v429
                %v431 = vld [vmem:[%s123 + $0x10c8] sm:$0xff]
                %432 = vst [vmem:[%s124 + $0x4c8] sm:$0xff] %v431
                %v433 = vld [vmem:[%s123 + $0x10d0] sm:$0xff]
                %434 = vst [vmem:[%s124 + $0x4d0] sm:$0xff] %v433
                %v435 = vld [vmem:[%s123 + $0x10d8] sm:$0xff]
                %436 = vst [vmem:[%s124 + $0x4d8] sm:$0xff] %v435
                %v437 = vld [vmem:[%s123 + $0x10e0] sm:$0xff]
                %438 = vst [vmem:[%s124 + $0x4e0] sm:$0xff] %v437
                %v439 = vld [vmem:[%s123 + $0x10e8] sm:$0xff]
                %440 = vst [vmem:[%s124 + $0x4e8] sm:$0xff] %v439
                %v441 = vld [vmem:[%s123 + $0x10f0] sm:$0xff]
                %442 = vst [vmem:[%s124 + $0x4f0] sm:$0xff] %v441
                %v443 = vld [vmem:[%s123 + $0x10f8] sm:$0xff]
                %444 = vst [vmem:[%s124 + $0x4f8] sm:$0xff] %v443
                %v445 = vld [vmem:[%s123 + $0x1400] sm:$0xff]
                %446 = vst [vmem:[%s124 + $0x500] sm:$0xff] %v445
                %v447 = vld [vmem:[%s123 + $0x1408] sm:$0xff]
                %448 = vst [vmem:[%s124 + $0x508] sm:$0xff] %v447
                %v449 = vld [vmem:[%s123 + $0x1410] sm:$0xff]
                %450 = vst [vmem:[%s124 + $0x510] sm:$0xff] %v449
                %v451 = vld [vmem:[%s123 + $0x1418] sm:$0xff]
                %452 = vst [vmem:[%s124 + $0x518] sm:$0xff] %v451
                %v453 = vld [vmem:[%s123 + $0x1420] sm:$0xff]
                %454 = vst [vmem:[%s124 + $0x520] sm:$0xff] %v453
                %v455 = vld [vmem:[%s123 + $0x1428] sm:$0xff]
                %456 = vst [vmem:[%s124 + $0x528] sm:$0xff] %v455
                %v457 = vld [vmem:[%s123 + $0x1430] sm:$0xff]
                %458 = vst [vmem:[%s124 + $0x530] sm:$0xff] %v457
                %v459 = vld [vmem:[%s123 + $0x1438] sm:$0xff]
                %460 = vst [vmem:[%s124 + $0x538] sm:$0xff] %v459
                %v461 = vld [vmem:[%s123 + $0x1440] sm:$0xff]
                %462 = vst [vmem:[%s124 + $0x540] sm:$0xff] %v461
                %v463 = vld [vmem:[%s123 + $0x1448] sm:$0xff]
                %464 = vst [vmem:[%s124 + $0x548] sm:$0xff] %v463
                %v465 = vld [vmem:[%s123 + $0x1450] sm:$0xff]
                %466 = vst [vmem:[%s124 + $0x550] sm:$0xff] %v465
                %v467 = vld [vmem:[%s123 + $0x1458] sm:$0xff]
                %468 = vst [vmem:[%s124 + $0x558] sm:$0xff] %v467
                %v469 = vld [vmem:[%s123 + $0x1460] sm:$0xff]
                %470 = vst [vmem:[%s124 + $0x560] sm:$0xff] %v469
                %v471 = vld [vmem:[%s123 + $0x1468] sm:$0xff]
                %472 = vst [vmem:[%s124 + $0x568] sm:$0xff] %v471
                %v473 = vld [vmem:[%s123 + $0x1470] sm:$0xff]
                %474 = vst [vmem:[%s124 + $0x570] sm:$0xff] %v473
                %v475 = vld [vmem:[%s123 + $0x1478] sm:$0xff]
                %476 = vst [vmem:[%s124 + $0x578] sm:$0xff] %v475
                %v477 = vld [vmem:[%s123 + $0x1480] sm:$0xff]
                %478 = vst [vmem:[%s124 + $0x580] sm:$0xff] %v477
                %v479 = vld [vmem:[%s123 + $0x1488] sm:$0xff]
                %480 = vst [vmem:[%s124 + $0x588] sm:$0xff] %v479
                %v481 = vld [vmem:[%s123 + $0x1490] sm:$0xff]
                %482 = vst [vmem:[%s124 + $0x590] sm:$0xff] %v481
                %v483 = vld [vmem:[%s123 + $0x1498] sm:$0xff]
                %484 = vst [vmem:[%s124 + $0x598] sm:$0xff] %v483
                %v485 = vld [vmem:[%s123 + $0x14a0] sm:$0xff]
                %486 = vst [vmem:[%s124 + $0x5a0] sm:$0xff] %v485
                %v487 = vld [vmem:[%s123 + $0x14a8] sm:$0xff]
                %488 = vst [vmem:[%s124 + $0x5a8] sm:$0xff] %v487
                %v489 = vld [vmem:[%s123 + $0x14b0] sm:$0xff]
                %490 = vst [vmem:[%s124 + $0x5b0] sm:$0xff] %v489
                %v491 = vld [vmem:[%s123 + $0x14b8] sm:$0xff]
                %492 = vst [vmem:[%s124 + $0x5b8] sm:$0xff] %v491
                %v493 = vld [vmem:[%s123 + $0x14c0] sm:$0xff]
                %494 = vst [vmem:[%s124 + $0x5c0] sm:$0xff] %v493
                %v495 = vld [vmem:[%s123 + $0x14c8] sm:$0xff]
                %496 = vst [vmem:[%s124 + $0x5c8] sm:$0xff] %v495
                %v497 = vld [vmem:[%s123 + $0x14d0] sm:$0xff]
                %498 = vst [vmem:[%s124 + $0x5d0] sm:$0xff] %v497
                %v499 = vld [vmem:[%s123 + $0x14d8] sm:$0xff]
                %500 = vst [vmem:[%s124 + $0x5d8] sm:$0xff] %v499
                %v501 = vld [vmem:[%s123 + $0x14e0] sm:$0xff]
                %502 = vst [vmem:[%s124 + $0x5e0] sm:$0xff] %v501
                %v503 = vld [vmem:[%s123 + $0x14e8] sm:$0xff]
                %504 = vst [vmem:[%s124 + $0x5e8] sm:$0xff] %v503
                %v505 = vld [vmem:[%s123 + $0x14f0] sm:$0xff]
                %506 = vst [vmem:[%s124 + $0x5f0] sm:$0xff] %v505
                %v507 = vld [vmem:[%s123 + $0x14f8] sm:$0xff]
                %508 = vst [vmem:[%s124 + $0x5f8] sm:$0xff] %v507
                %v509 = vld [vmem:[%s123 + $0x1800] sm:$0xff]
                %510 = vst [vmem:[%s124 + $0x600] sm:$0xff] %v509
                %v511 = vld [vmem:[%s123 + $0x1808] sm:$0xff]
                %512 = vst [vmem:[%s124 + $0x608] sm:$0xff] %v511
                %v513 = vld [vmem:[%s123 + $0x1810] sm:$0xff]
                %514 = vst [vmem:[%s124 + $0x610] sm:$0xff] %v513
                %v515 = vld [vmem:[%s123 + $0x1818] sm:$0xff]
                %516 = vst [vmem:[%s124 + $0x618] sm:$0xff] %v515
                %v517 = vld [vmem:[%s123 + $0x1820] sm:$0xff]
                %518 = vst [vmem:[%s124 + $0x620] sm:$0xff] %v517
                %v519 = vld [vmem:[%s123 + $0x1828] sm:$0xff]
                %520 = vst [vmem:[%s124 + $0x628] sm:$0xff] %v519
                %v521 = vld [vmem:[%s123 + $0x1830] sm:$0xff]
                %522 = vst [vmem:[%s124 + $0x630] sm:$0xff] %v521
                %v523 = vld [vmem:[%s123 + $0x1838] sm:$0xff]
                %524 = vst [vmem:[%s124 + $0x638] sm:$0xff] %v523
                %v525 = vld [vmem:[%s123 + $0x1840] sm:$0xff]
                %526 = vst [vmem:[%s124 + $0x640] sm:$0xff] %v525
                %v527 = vld [vmem:[%s123 + $0x1848] sm:$0xff]
                %528 = vst [vmem:[%s124 + $0x648] sm:$0xff] %v527
                %v529 = vld [vmem:[%s123 + $0x1850] sm:$0xff]
                %530 = vst [vmem:[%s124 + $0x650] sm:$0xff] %v529
                %v531 = vld [vmem:[%s123 + $0x1858] sm:$0xff]
                %532 = vst [vmem:[%s124 + $0x658] sm:$0xff] %v531
                %v533 = vld [vmem:[%s123 + $0x1860] sm:$0xff]
                %534 = vst [vmem:[%s124 + $0x660] sm:$0xff] %v533
                %v535 = vld [vmem:[%s123 + $0x1868] sm:$0xff]
                %536 = vst [vmem:[%s124 + $0x668] sm:$0xff] %v535
                %v537 = vld [vmem:[%s123 + $0x1870] sm:$0xff]
                %538 = vst [vmem:[%s124 + $0x670] sm:$0xff] %v537
                %v539 = vld [vmem:[%s123 + $0x1878] sm:$0xff]
                %540 = vst [vmem:[%s124 + $0x678] sm:$0xff] %v539
                %v541 = vld [vmem:[%s123 + $0x1880] sm:$0xff]
                %542 = vst [vmem:[%s124 + $0x680] sm:$0xff] %v541
                %v543 = vld [vmem:[%s123 + $0x1888] sm:$0xff]
                %544 = vst [vmem:[%s124 + $0x688] sm:$0xff] %v543
                %v545 = vld [vmem:[%s123 + $0x1890] sm:$0xff]
                %546 = vst [vmem:[%s124 + $0x690] sm:$0xff] %v545
                %v547 = vld [vmem:[%s123 + $0x1898] sm:$0xff]
                %548 = vst [vmem:[%s124 + $0x698] sm:$0xff] %v547
                %v549 = vld [vmem:[%s123 + $0x18a0] sm:$0xff]
                %550 = vst [vmem:[%s124 + $0x6a0] sm:$0xff] %v549
                %v551 = vld [vmem:[%s123 + $0x18a8] sm:$0xff]
                %552 = vst [vmem:[%s124 + $0x6a8] sm:$0xff] %v551
                %v553 = vld [vmem:[%s123 + $0x18b0] sm:$0xff]
                %554 = vst [vmem:[%s124 + $0x6b0] sm:$0xff] %v553
                %v555 = vld [vmem:[%s123 + $0x18b8] sm:$0xff]
                %556 = vst [vmem:[%s124 + $0x6b8] sm:$0xff] %v555
                %v557 = vld [vmem:[%s123 + $0x18c0] sm:$0xff]
                %558 = vst [vmem:[%s124 + $0x6c0] sm:$0xff] %v557
                %v559 = vld [vmem:[%s123 + $0x18c8] sm:$0xff]
                %560 = vst [vmem:[%s124 + $0x6c8] sm:$0xff] %v559
                %v561 = vld [vmem:[%s123 + $0x18d0] sm:$0xff]
                %562 = vst [vmem:[%s124 + $0x6d0] sm:$0xff] %v561
                %v563 = vld [vmem:[%s123 + $0x18d8] sm:$0xff]
                %564 = vst [vmem:[%s124 + $0x6d8] sm:$0xff] %v563
                %v565 = vld [vmem:[%s123 + $0x18e0] sm:$0xff]
                %566 = vst [vmem:[%s124 + $0x6e0] sm:$0xff] %v565
                %v567 = vld [vmem:[%s123 + $0x18e8] sm:$0xff]
                %568 = vst [vmem:[%s124 + $0x6e8] sm:$0xff] %v567
                %v569 = vld [vmem:[%s123 + $0x18f0] sm:$0xff]
                %570 = vst [vmem:[%s124 + $0x6f0] sm:$0xff] %v569
                %v571 = vld [vmem:[%s123 + $0x18f8] sm:$0xff]
                %572 = vst [vmem:[%s124 + $0x6f8] sm:$0xff] %v571
                %v573 = vld [vmem:[%s123 + $0x1c00] sm:$0xff]
                %574 = vst [vmem:[%s124 + $0x700] sm:$0xff] %v573
                %v575 = vld [vmem:[%s123 + $0x1c08] sm:$0xff]
                %576 = vst [vmem:[%s124 + $0x708] sm:$0xff] %v575
                %v577 = vld [vmem:[%s123 + $0x1c10] sm:$0xff]
                %578 = vst [vmem:[%s124 + $0x710] sm:$0xff] %v577
                %v579 = vld [vmem:[%s123 + $0x1c18] sm:$0xff]
                %580 = vst [vmem:[%s124 + $0x718] sm:$0xff] %v579
                %v581 = vld [vmem:[%s123 + $0x1c20] sm:$0xff]
                %582 = vst [vmem:[%s124 + $0x720] sm:$0xff] %v581
                %v583 = vld [vmem:[%s123 + $0x1c28] sm:$0xff]
                %584 = vst [vmem:[%s124 + $0x728] sm:$0xff] %v583
                %v585 = vld [vmem:[%s123 + $0x1c30] sm:$0xff]
                %586 = vst [vmem:[%s124 + $0x730] sm:$0xff] %v585
                %v587 = vld [vmem:[%s123 + $0x1c38] sm:$0xff]
                %588 = vst [vmem:[%s124 + $0x738] sm:$0xff] %v587
                %v589 = vld [vmem:[%s123 + $0x1c40] sm:$0xff]
                %590 = vst [vmem:[%s124 + $0x740] sm:$0xff] %v589
                %v591 = vld [vmem:[%s123 + $0x1c48] sm:$0xff]
                %592 = vst [vmem:[%s124 + $0x748] sm:$0xff] %v591
                %v593 = vld [vmem:[%s123 + $0x1c50] sm:$0xff]
                %594 = vst [vmem:[%s124 + $0x750] sm:$0xff] %v593
                %v595 = vld [vmem:[%s123 + $0x1c58] sm:$0xff]
                %596 = vst [vmem:[%s124 + $0x758] sm:$0xff] %v595
                %v597 = vld [vmem:[%s123 + $0x1c60] sm:$0xff]
                %598 = vst [vmem:[%s124 + $0x760] sm:$0xff] %v597
                %v599 = vld [vmem:[%s123 + $0x1c68] sm:$0xff]
                %600 = vst [vmem:[%s124 + $0x768] sm:$0xff] %v599
                %v601 = vld [vmem:[%s123 + $0x1c70] sm:$0xff]
                %602 = vst [vmem:[%s124 + $0x770] sm:$0xff] %v601
                %v603 = vld [vmem:[%s123 + $0x1c78] sm:$0xff]
                %604 = vst [vmem:[%s124 + $0x778] sm:$0xff] %v603
                %v605 = vld [vmem:[%s123 + $0x1c80] sm:$0xff]
                %606 = vst [vmem:[%s124 + $0x780] sm:$0xff] %v605
                %v607 = vld [vmem:[%s123 + $0x1c88] sm:$0xff]
                %608 = vst [vmem:[%s124 + $0x788] sm:$0xff] %v607
                %v609 = vld [vmem:[%s123 + $0x1c90] sm:$0xff]
                %610 = vst [vmem:[%s124 + $0x790] sm:$0xff] %v609
                %v611 = vld [vmem:[%s123 + $0x1c98] sm:$0xff]
                %612 = vst [vmem:[%s124 + $0x798] sm:$0xff] %v611
                %v613 = vld [vmem:[%s123 + $0x1ca0] sm:$0xff]
                %614 = vst [vmem:[%s124 + $0x7a0] sm:$0xff] %v613
                %v615 = vld [vmem:[%s123 + $0x1ca8] sm:$0xff]
                %616 = vst [vmem:[%s124 + $0x7a8] sm:$0xff] %v615
                %v617 = vld [vmem:[%s123 + $0x1cb0] sm:$0xff]
                %618 = vst [vmem:[%s124 + $0x7b0] sm:$0xff] %v617
                %v619 = vld [vmem:[%s123 + $0x1cb8] sm:$0xff]
                %620 = vst [vmem:[%s124 + $0x7b8] sm:$0xff] %v619
                %v621 = vld [vmem:[%s123 + $0x1cc0] sm:$0xff]
                %622 = vst [vmem:[%s124 + $0x7c0] sm:$0xff] %v621
                %v623 = vld [vmem:[%s123 + $0x1cc8] sm:$0xff]
                %624 = vst [vmem:[%s124 + $0x7c8] sm:$0xff] %v623
                %v625 = vld [vmem:[%s123 + $0x1cd0] sm:$0xff]
                %626 = vst [vmem:[%s124 + $0x7d0] sm:$0xff] %v625
                %v627 = vld [vmem:[%s123 + $0x1cd8] sm:$0xff]
                %628 = vst [vmem:[%s124 + $0x7d8] sm:$0xff] %v627
                %v629 = vld [vmem:[%s123 + $0x1ce0] sm:$0xff]
                %630 = vst [vmem:[%s124 + $0x7e0] sm:$0xff] %v629
                %v631 = vld [vmem:[%s123 + $0x1ce8] sm:$0xff]
                %632 = vst [vmem:[%s124 + $0x7e8] sm:$0xff] %v631
                %v633 = vld [vmem:[%s123 + $0x1cf0] sm:$0xff]
                %634 = vst [vmem:[%s124 + $0x7f0] sm:$0xff] %v633
                %v635 = vld [vmem:[%s123 + $0x1cf8] sm:$0xff]
                %636 = vst [vmem:[%s124 + $0x7f8] sm:$0xff] %v635
              $region37: #{_lambda_.11} parent=31 // loop_footer
                %s122 = sadd.s32 1, %s118
              $region38: #{_lambda_.11} parent=31 // loop_footer_branch
                %117 = sbr.rel target = $region34
              $region39: #{_lambda_.11} parent=31 // loop_exit
                _
            $region32: #{_lambda_.11} parent=27 // pred_fallthru
              _
            // Predicated region
            $region40: #{_lambda_.11} parent=27 // pred_check
              _
            $region41: #{_lambda_.11} parent=27 // pred_check_branch
              %638 = sbr.rel target = $region43
            $region42: #{_lambda_.11} parent=27 // pred_region
              _
            $region43: #{_lambda_.11} parent=27 // pred_fallthru
              _
          $region28: #{_lambda_.11} parent=23 // pred_fallthru
            _
          %639 = vnop
        $region24: #{_lambda_.11} parent=19 // pred_fallthru
          _
      $region20: #{_lambda_.11} parent=5 // pred_fallthru
        _
      %p640 = scmp.le.s32.totalorder 1, %s8
      %p641 = scmp.lt.s32.totalorder %s8, 5
      %p642 = pnand %p640, %p641
      %p643 = pneg %p642
      // Predicated region
      $region44: #{_lambda_.11} parent=5 // pred_check
        _
      $region45: #{_lambda_.11} parent=5 // pred_check_branch
        %645 = sbr.rel (%p642) target = $region47
      $region46: #{_lambda_.11} parent=5 // pred_region
        %s646 = ssub.s32 %s8, 1
        %s647 = sand.u32 %s42, 1
        %s648 = sand.u32 %s42, 1
        %s649 = smul.addr %s648, 2048
        %s650 = scalar_lea.vmem [#allocation2], %s649
        // Predicated region
        $region48: #{_lambda_.11} parent=46 // pred_check
          %p651 = pneg %p55
        $region49: #{_lambda_.11} parent=46 // pred_check_branch
          %653 = sbr.rel (%p651) target = $region51
        $region50: #{_lambda_.11} parent=46 // pred_region
          _
        $region51: #{_lambda_.11} parent=46 // pred_fallthru
          _
        %p654 = pneg %p29
        %p655 = pneg %p26
        %s656 = sand.u32 %s42, 1
        %s657 = sand.u32 %s42, 1
        %s658 = smul.addr %s657, 2048
        %s659 = scalar_lea.vmem [#allocation2], %s658
        %p660 = pneg %p55
        %p661 = pneg %p52
        %p662 = pneg %p81
        %p663 = pneg %p78
        %s664 = smul.u32 64, %s13
        %p665 = scmp.lt.s32.totalorder %s664, 255
        %s666 = scalar_select %p665, %s664, 255
        %s667 = smul.addr %s666, 8
        %s668 = scalar_lea.vmem %s2, %s667
        %s669 = smul.u32 64, %s13
        %s670 = smul.u32 64, %s13
        %p671 = scmp.lt.s32.totalorder %s670, 255
        %s672 = scalar_select %p671, %s670, 255
        %s673 = smul.addr %s672, 8
        %s674 = scalar_lea.vmem %s2, %s673
        %s675 = smul.u32 64, %s13
        %v677 = vld [vmem:[%s0] sm:$0xf]
        %v678 = vld [vmem:[%s650] sm:$0xff]
        %v679 = vld [vmem:[%s650 + $0x8] sm:$0xff]
        %v680 = vld [vmem:[%s650 + $0x10] sm:$0xff]
        %v681 = vld [vmem:[%s650 + $0x18] sm:$0xff]
        %v682 = vld [vmem:[%s650 + $0x20] sm:$0xff]
        %v683 = vld [vmem:[%s650 + $0x28] sm:$0xff]
        %v684 = vld [vmem:[%s650 + $0x30] sm:$0xff]
        %v685 = vld [vmem:[%s650 + $0x38] sm:$0xff]
        %v686 = vld [vmem:[%s650 + $0x40] sm:$0xff]
        %v687 = vld [vmem:[%s650 + $0x48] sm:$0xff]
        %v688 = vld [vmem:[%s650 + $0x50] sm:$0xff]
        %v689 = vld [vmem:[%s650 + $0x58] sm:$0xff]
        %v690 = vld [vmem:[%s650 + $0x60] sm:$0xff]
        %v691 = vld [vmem:[%s650 + $0x68] sm:$0xff]
        %v692 = vld [vmem:[%s650 + $0x70] sm:$0xff]
        %v693 = vld [vmem:[%s650 + $0x78] sm:$0xff]
        %v694 = vld [vmem:[%s650 + $0x80] sm:$0xff]
        %v695 = vld [vmem:[%s650 + $0x88] sm:$0xff]
        %v696 = vld [vmem:[%s650 + $0x90] sm:$0xff]
        %v697 = vld [vmem:[%s650 + $0x98] sm:$0xff]
        %v698 = vld [vmem:[%s650 + $0xa0] sm:$0xff]
        %v699 = vld [vmem:[%s650 + $0xa8] sm:$0xff]
        %v700 = vld [vmem:[%s650 + $0xb0] sm:$0xff]
        %v701 = vld [vmem:[%s650 + $0xb8] sm:$0xff]
        %v702 = vld [vmem:[%s650 + $0xc0] sm:$0xff]
        %v703 = vld [vmem:[%s650 + $0xc8] sm:$0xff]
        %v704 = vld [vmem:[%s650 + $0xd0] sm:$0xff]
        %v705 = vld [vmem:[%s650 + $0xd8] sm:$0xff]
        %v706 = vld [vmem:[%s650 + $0xe0] sm:$0xff]
        %v707 = vld [vmem:[%s650 + $0xe8] sm:$0xff]
        %v708 = vld [vmem:[%s650 + $0xf0] sm:$0xff]
        %v709 = vld [vmem:[%s650 + $0xf8] sm:$0xff]
        %v710 = vld [vmem:[%s650 + $0x100] sm:$0xff]
        %v711 = vld [vmem:[%s650 + $0x108] sm:$0xff]
        %v712 = vld [vmem:[%s650 + $0x110] sm:$0xff]
        %v713 = vld [vmem:[%s650 + $0x118] sm:$0xff]
        %v714 = vld [vmem:[%s650 + $0x120] sm:$0xff]
        %v715 = vld [vmem:[%s650 + $0x128] sm:$0xff]
        %v716 = vld [vmem:[%s650 + $0x130] sm:$0xff]
        %v717 = vld [vmem:[%s650 + $0x138] sm:$0xff]
        %v718 = vld [vmem:[%s650 + $0x140] sm:$0xff]
        %v719 = vld [vmem:[%s650 + $0x148] sm:$0xff]
        %v720 = vld [vmem:[%s650 + $0x150] sm:$0xff]
        %v721 = vld [vmem:[%s650 + $0x158] sm:$0xff]
        %v722 = vld [vmem:[%s650 + $0x160] sm:$0xff]
        %v723 = vld [vmem:[%s650 + $0x168] sm:$0xff]
        %v724 = vld [vmem:[%s650 + $0x170] sm:$0xff]
        %v725 = vld [vmem:[%s650 + $0x178] sm:$0xff]
        %v726 = vld [vmem:[%s650 + $0x180] sm:$0xff]
        %v727 = vld [vmem:[%s650 + $0x188] sm:$0xff]
        %v728 = vld [vmem:[%s650 + $0x190] sm:$0xff]
        %v729 = vld [vmem:[%s650 + $0x198] sm:$0xff]
        %v730 = vld [vmem:[%s650 + $0x1a0] sm:$0xff]
        %v731 = vld [vmem:[%s650 + $0x1a8] sm:$0xff]
        %v732 = vld [vmem:[%s650 + $0x1b0] sm:$0xff]
        %v733 = vld [vmem:[%s650 + $0x1b8] sm:$0xff]
        %v734 = vld [vmem:[%s650 + $0x1c0] sm:$0xff]
        %v735 = vld [vmem:[%s650 + $0x1c8] sm:$0xff]
        %v736 = vld [vmem:[%s650 + $0x1d0] sm:$0xff]
        %v737 = vld [vmem:[%s650 + $0x1d8] sm:$0xff]
        %v738 = vld [vmem:[%s650 + $0x1e0] sm:$0xff]
        %v739 = vld [vmem:[%s650 + $0x1e8] sm:$0xff]
        %v740 = vld [vmem:[%s650 + $0x1f0] sm:$0xff]
        %v741 = vld [vmem:[%s650 + $0x1f8] sm:$0xff]
        %v742 = vld [vmem:[%s650 + $0x200] sm:$0xff]
        %v743 = vld [vmem:[%s650 + $0x208] sm:$0xff]
        %v744 = vld [vmem:[%s650 + $0x210] sm:$0xff]
        %v745 = vld [vmem:[%s650 + $0x218] sm:$0xff]
        %v746 = vld [vmem:[%s650 + $0x220] sm:$0xff]
        %v747 = vld [vmem:[%s650 + $0x228] sm:$0xff]
        %v748 = vld [vmem:[%s650 + $0x230] sm:$0xff]
        %v749 = vld [vmem:[%s650 + $0x238] sm:$0xff]
        %v750 = vld [vmem:[%s650 + $0x240] sm:$0xff]
        %v751 = vld [vmem:[%s650 + $0x248] sm:$0xff]
        %v752 = vld [vmem:[%s650 + $0x250] sm:$0xff]
        %v753 = vld [vmem:[%s650 + $0x258] sm:$0xff]
        %v754 = vld [vmem:[%s650 + $0x260] sm:$0xff]
        %v755 = vld [vmem:[%s650 + $0x268] sm:$0xff]
        %v756 = vld [vmem:[%s650 + $0x270] sm:$0xff]
        %v757 = vld [vmem:[%s650 + $0x278] sm:$0xff]
        %v758 = vld [vmem:[%s650 + $0x280] sm:$0xff]
        %v759 = vld [vmem:[%s650 + $0x288] sm:$0xff]
        %v760 = vld [vmem:[%s650 + $0x290] sm:$0xff]
        %v761 = vld [vmem:[%s650 + $0x298] sm:$0xff]
        %v762 = vld [vmem:[%s650 + $0x2a0] sm:$0xff]
        %v763 = vld [vmem:[%s650 + $0x2a8] sm:$0xff]
        %v764 = vld [vmem:[%s650 + $0x2b0] sm:$0xff]
        %v765 = vld [vmem:[%s650 + $0x2b8] sm:$0xff]
        %v766 = vld [vmem:[%s650 + $0x2c0] sm:$0xff]
        %v767 = vld [vmem:[%s650 + $0x2c8] sm:$0xff]
        %v768 = vld [vmem:[%s650 + $0x2d0] sm:$0xff]
        %v769 = vld [vmem:[%s650 + $0x2d8] sm:$0xff]
        %v770 = vld [vmem:[%s650 + $0x2e0] sm:$0xff]
        %v771 = vld [vmem:[%s650 + $0x2e8] sm:$0xff]
        %v772 = vld [vmem:[%s650 + $0x2f0] sm:$0xff]
        %v773 = vld [vmem:[%s650 + $0x2f8] sm:$0xff]
        %v774 = vld [vmem:[%s650 + $0x300] sm:$0xff]
        %v775 = vld [vmem:[%s650 + $0x308] sm:$0xff]
        %v776 = vld [vmem:[%s650 + $0x310] sm:$0xff]
        %v777 = vld [vmem:[%s650 + $0x318] sm:$0xff]
        %v778 = vld [vmem:[%s650 + $0x320] sm:$0xff]
        %v779 = vld [vmem:[%s650 + $0x328] sm:$0xff]
        %v780 = vld [vmem:[%s650 + $0x330] sm:$0xff]
        %v781 = vld [vmem:[%s650 + $0x338] sm:$0xff]
        %v782 = vld [vmem:[%s650 + $0x340] sm:$0xff]
        %v783 = vld [vmem:[%s650 + $0x348] sm:$0xff]
        %v784 = vld [vmem:[%s650 + $0x350] sm:$0xff]
        %v785 = vld [vmem:[%s650 + $0x358] sm:$0xff]
        %v786 = vld [vmem:[%s650 + $0x360] sm:$0xff]
        %v787 = vld [vmem:[%s650 + $0x368] sm:$0xff]
        %v788 = vld [vmem:[%s650 + $0x370] sm:$0xff]
        %v789 = vld [vmem:[%s650 + $0x378] sm:$0xff]
        %v790 = vld [vmem:[%s650 + $0x380] sm:$0xff]
        %v791 = vld [vmem:[%s650 + $0x388] sm:$0xff]
        %v792 = vld [vmem:[%s650 + $0x390] sm:$0xff]
        %v793 = vld [vmem:[%s650 + $0x398] sm:$0xff]
        %v794 = vld [vmem:[%s650 + $0x3a0] sm:$0xff]
        %v795 = vld [vmem:[%s650 + $0x3a8] sm:$0xff]
        %v796 = vld [vmem:[%s650 + $0x3b0] sm:$0xff]
        %v797 = vld [vmem:[%s650 + $0x3b8] sm:$0xff]
        %v798 = vld [vmem:[%s650 + $0x3c0] sm:$0xff]
        %v799 = vld [vmem:[%s650 + $0x3c8] sm:$0xff]
        %v800 = vld [vmem:[%s650 + $0x3d0] sm:$0xff]
        %v801 = vld [vmem:[%s650 + $0x3d8] sm:$0xff]
        %v802 = vld [vmem:[%s650 + $0x3e0] sm:$0xff]
        %v803 = vld [vmem:[%s650 + $0x3e8] sm:$0xff]
        %v804 = vld [vmem:[%s650 + $0x3f0] sm:$0xff]
        %v805 = vld [vmem:[%s650 + $0x3f8] sm:$0xff]
        %v806 = vld [vmem:[%s650 + $0x400] sm:$0xff]
        %v807 = vld [vmem:[%s650 + $0x408] sm:$0xff]
        %v808 = vld [vmem:[%s650 + $0x410] sm:$0xff]
        %v809 = vld [vmem:[%s650 + $0x418] sm:$0xff]
        %v810 = vld [vmem:[%s650 + $0x420] sm:$0xff]
        %v811 = vld [vmem:[%s650 + $0x428] sm:$0xff]
        %v812 = vld [vmem:[%s650 + $0x430] sm:$0xff]
        %v813 = vld [vmem:[%s650 + $0x438] sm:$0xff]
        %v814 = vld [vmem:[%s650 + $0x440] sm:$0xff]
        %v815 = vld [vmem:[%s650 + $0x448] sm:$0xff]
        %v816 = vld [vmem:[%s650 + $0x450] sm:$0xff]
        %v817 = vld [vmem:[%s650 + $0x458] sm:$0xff]
        %v818 = vld [vmem:[%s650 + $0x460] sm:$0xff]
        %v819 = vld [vmem:[%s650 + $0x468] sm:$0xff]
        %v820 = vld [vmem:[%s650 + $0x470] sm:$0xff]
        %v821 = vld [vmem:[%s650 + $0x478] sm:$0xff]
        %v822 = vld [vmem:[%s650 + $0x480] sm:$0xff]
        %v823 = vld [vmem:[%s650 + $0x488] sm:$0xff]
        %v824 = vld [vmem:[%s650 + $0x490] sm:$0xff]
        %v825 = vld [vmem:[%s650 + $0x498] sm:$0xff]
        %v826 = vld [vmem:[%s650 + $0x4a0] sm:$0xff]
        %v827 = vld [vmem:[%s650 + $0x4a8] sm:$0xff]
        %v828 = vld [vmem:[%s650 + $0x4b0] sm:$0xff]
        %v829 = vld [vmem:[%s650 + $0x4b8] sm:$0xff]
        %v830 = vld [vmem:[%s650 + $0x4c0] sm:$0xff]
        %v831 = vld [vmem:[%s650 + $0x4c8] sm:$0xff]
        %v832 = vld [vmem:[%s650 + $0x4d0] sm:$0xff]
        %v833 = vld [vmem:[%s650 + $0x4d8] sm:$0xff]
        %v834 = vld [vmem:[%s650 + $0x4e0] sm:$0xff]
        %v835 = vld [vmem:[%s650 + $0x4e8] sm:$0xff]
        %v836 = vld [vmem:[%s650 + $0x4f0] sm:$0xff]
        %v837 = vld [vmem:[%s650 + $0x4f8] sm:$0xff]
        %v838 = vld [vmem:[%s650 + $0x500] sm:$0xff]
        %v839 = vld [vmem:[%s650 + $0x508] sm:$0xff]
        %v840 = vld [vmem:[%s650 + $0x510] sm:$0xff]
        %v841 = vld [vmem:[%s650 + $0x518] sm:$0xff]
        %v842 = vld [vmem:[%s650 + $0x520] sm:$0xff]
        %v843 = vld [vmem:[%s650 + $0x528] sm:$0xff]
        %v844 = vld [vmem:[%s650 + $0x530] sm:$0xff]
        %v845 = vld [vmem:[%s650 + $0x538] sm:$0xff]
        %v846 = vld [vmem:[%s650 + $0x540] sm:$0xff]
        %v847 = vld [vmem:[%s650 + $0x548] sm:$0xff]
        %v848 = vld [vmem:[%s650 + $0x550] sm:$0xff]
        %v849 = vld [vmem:[%s650 + $0x558] sm:$0xff]
        %v850 = vld [vmem:[%s650 + $0x560] sm:$0xff]
        %v851 = vld [vmem:[%s650 + $0x568] sm:$0xff]
        %v852 = vld [vmem:[%s650 + $0x570] sm:$0xff]
        %v853 = vld [vmem:[%s650 + $0x578] sm:$0xff]
        %v854 = vld [vmem:[%s650 + $0x580] sm:$0xff]
        %v855 = vld [vmem:[%s650 + $0x588] sm:$0xff]
        %v856 = vld [vmem:[%s650 + $0x590] sm:$0xff]
        %v857 = vld [vmem:[%s650 + $0x598] sm:$0xff]
        %v858 = vld [vmem:[%s650 + $0x5a0] sm:$0xff]
        %v859 = vld [vmem:[%s650 + $0x5a8] sm:$0xff]
        %v860 = vld [vmem:[%s650 + $0x5b0] sm:$0xff]
        %v861 = vld [vmem:[%s650 + $0x5b8] sm:$0xff]
        %v862 = vld [vmem:[%s650 + $0x5c0] sm:$0xff]
        %v863 = vld [vmem:[%s650 + $0x5c8] sm:$0xff]
        %v864 = vld [vmem:[%s650 + $0x5d0] sm:$0xff]
        %v865 = vld [vmem:[%s650 + $0x5d8] sm:$0xff]
        %v866 = vld [vmem:[%s650 + $0x5e0] sm:$0xff]
        %v867 = vld [vmem:[%s650 + $0x5e8] sm:$0xff]
        %v868 = vld [vmem:[%s650 + $0x5f0] sm:$0xff]
        %v869 = vld [vmem:[%s650 + $0x5f8] sm:$0xff]
        %v870 = vld [vmem:[%s650 + $0x600] sm:$0xff]
        %v871 = vld [vmem:[%s650 + $0x608] sm:$0xff]
        %v872 = vld [vmem:[%s650 + $0x610] sm:$0xff]
        %v873 = vld [vmem:[%s650 + $0x618] sm:$0xff]
        %v874 = vld [vmem:[%s650 + $0x620] sm:$0xff]
        %v875 = vld [vmem:[%s650 + $0x628] sm:$0xff]
        %v876 = vld [vmem:[%s650 + $0x630] sm:$0xff]
        %v877 = vld [vmem:[%s650 + $0x638] sm:$0xff]
        %v878 = vld [vmem:[%s650 + $0x640] sm:$0xff]
        %v879 = vld [vmem:[%s650 + $0x648] sm:$0xff]
        %v880 = vld [vmem:[%s650 + $0x650] sm:$0xff]
        %v881 = vld [vmem:[%s650 + $0x658] sm:$0xff]
        %v882 = vld [vmem:[%s650 + $0x660] sm:$0xff]
        %v883 = vld [vmem:[%s650 + $0x668] sm:$0xff]
        %v884 = vld [vmem:[%s650 + $0x670] sm:$0xff]
        %v885 = vld [vmem:[%s650 + $0x678] sm:$0xff]
        %v886 = vld [vmem:[%s650 + $0x680] sm:$0xff]
        %v887 = vld [vmem:[%s650 + $0x688] sm:$0xff]
        %v888 = vld [vmem:[%s650 + $0x690] sm:$0xff]
        %v889 = vld [vmem:[%s650 + $0x698] sm:$0xff]
        %v890 = vld [vmem:[%s650 + $0x6a0] sm:$0xff]
        %v891 = vld [vmem:[%s650 + $0x6a8] sm:$0xff]
        %v892 = vld [vmem:[%s650 + $0x6b0] sm:$0xff]
        %v893 = vld [vmem:[%s650 + $0x6b8] sm:$0xff]
        %v894 = vld [vmem:[%s650 + $0x6c0] sm:$0xff]
        %v895 = vld [vmem:[%s650 + $0x6c8] sm:$0xff]
        %v896 = vld [vmem:[%s650 + $0x6d0] sm:$0xff]
        %v897 = vld [vmem:[%s650 + $0x6d8] sm:$0xff]
        %v898 = vld [vmem:[%s650 + $0x6e0] sm:$0xff]
        %v899 = vld [vmem:[%s650 + $0x6e8] sm:$0xff]
        %v900 = vld [vmem:[%s650 + $0x6f0] sm:$0xff]
        %v901 = vld [vmem:[%s650 + $0x6f8] sm:$0xff]
        %v902 = vld [vmem:[%s650 + $0x700] sm:$0xff]
        %v903 = vld [vmem:[%s650 + $0x708] sm:$0xff]
        %v904 = vld [vmem:[%s650 + $0x710] sm:$0xff]
        %v905 = vld [vmem:[%s650 + $0x718] sm:$0xff]
        %v906 = vld [vmem:[%s650 + $0x720] sm:$0xff]
        %v907 = vld [vmem:[%s650 + $0x728] sm:$0xff]
        %v908 = vld [vmem:[%s650 + $0x730] sm:$0xff]
        %v909 = vld [vmem:[%s650 + $0x738] sm:$0xff]
        %v910 = vld [vmem:[%s650 + $0x740] sm:$0xff]
        %v911 = vld [vmem:[%s650 + $0x748] sm:$0xff]
        %v912 = vld [vmem:[%s650 + $0x750] sm:$0xff]
        %v913 = vld [vmem:[%s650 + $0x758] sm:$0xff]
        %v914 = vld [vmem:[%s650 + $0x760] sm:$0xff]
        %v915 = vld [vmem:[%s650 + $0x768] sm:$0xff]
        %v916 = vld [vmem:[%s650 + $0x770] sm:$0xff]
        %v917 = vld [vmem:[%s650 + $0x778] sm:$0xff]
        %v918 = vld [vmem:[%s650 + $0x780] sm:$0xff]
        %v919 = vld [vmem:[%s650 + $0x788] sm:$0xff]
        %v920 = vld [vmem:[%s650 + $0x790] sm:$0xff]
        %v921 = vld [vmem:[%s650 + $0x798] sm:$0xff]
        %v922 = vld [vmem:[%s650 + $0x7a0] sm:$0xff]
        %v923 = vld [vmem:[%s650 + $0x7a8] sm:$0xff]
        %v924 = vld [vmem:[%s650 + $0x7b0] sm:$0xff]
        %v925 = vld [vmem:[%s650 + $0x7b8] sm:$0xff]
        %v926 = vld [vmem:[%s650 + $0x7c0] sm:$0xff]
        %v927 = vld [vmem:[%s650 + $0x7c8] sm:$0xff]
        %v928 = vld [vmem:[%s650 + $0x7d0] sm:$0xff]
        %v929 = vld [vmem:[%s650 + $0x7d8] sm:$0xff]
        %v930 = vld [vmem:[%s650 + $0x7e0] sm:$0xff]
        %v931 = vld [vmem:[%s650 + $0x7e8] sm:$0xff]
        %v932 = vld [vmem:[%s650 + $0x7f0] sm:$0xff]
        %v933 = vld [vmem:[%s650 + $0x7f8] sm:$0xff]
        %v1190 = vunpack.c.l.b16 %v678
        %v1191 = vunpack.c.h.b16 %v678
        %v1192 = vunpack.c.l.b16 %v679
        %v1193 = vunpack.c.h.b16 %v679
        %v1194 = vunpack.c.l.b16 %v680
        %v1195 = vunpack.c.h.b16 %v680
        %v1196 = vunpack.c.l.b16 %v681
        %v1197 = vunpack.c.h.b16 %v681
        %v1198 = vunpack.c.l.b16 %v682
        %v1199 = vunpack.c.h.b16 %v682
        %v1200 = vunpack.c.l.b16 %v683
        %v1201 = vunpack.c.h.b16 %v683
        %v1202 = vunpack.c.l.b16 %v684
        %v1203 = vunpack.c.h.b16 %v684
        %v1204 = vunpack.c.l.b16 %v685
        %v1205 = vunpack.c.h.b16 %v685
        %v1206 = vunpack.c.l.b16 %v686
        %v1207 = vunpack.c.h.b16 %v686
        %v1208 = vunpack.c.l.b16 %v687
        %v1209 = vunpack.c.h.b16 %v687
        %v1210 = vunpack.c.l.b16 %v688
        %v1211 = vunpack.c.h.b16 %v688
        %v1212 = vunpack.c.l.b16 %v689
        %v1213 = vunpack.c.h.b16 %v689
        %v1214 = vunpack.c.l.b16 %v690
        %v1215 = vunpack.c.h.b16 %v690
        %v1216 = vunpack.c.l.b16 %v691
        %v1217 = vunpack.c.h.b16 %v691
        %v1218 = vunpack.c.l.b16 %v692
        %v1219 = vunpack.c.h.b16 %v692
        %v1220 = vunpack.c.l.b16 %v693
        %v1221 = vunpack.c.h.b16 %v693
        %v1222 = vunpack.c.l.b16 %v694
        %v1223 = vunpack.c.h.b16 %v694
        %v1224 = vunpack.c.l.b16 %v695
        %v1225 = vunpack.c.h.b16 %v695
        %v1226 = vunpack.c.l.b16 %v696
        %v1227 = vunpack.c.h.b16 %v696
        %v1228 = vunpack.c.l.b16 %v697
        %v1229 = vunpack.c.h.b16 %v697
        %v1230 = vunpack.c.l.b16 %v698
        %v1231 = vunpack.c.h.b16 %v698
        %v1232 = vunpack.c.l.b16 %v699
        %v1233 = vunpack.c.h.b16 %v699
        %v1234 = vunpack.c.l.b16 %v700
        %v1235 = vunpack.c.h.b16 %v700
        %v1236 = vunpack.c.l.b16 %v701
        %v1237 = vunpack.c.h.b16 %v701
        %v1238 = vunpack.c.l.b16 %v702
        %v1239 = vunpack.c.h.b16 %v702
        %v1240 = vunpack.c.l.b16 %v703
        %v1241 = vunpack.c.h.b16 %v703
        %v1242 = vunpack.c.l.b16 %v704
        %v1243 = vunpack.c.h.b16 %v704
        %v1244 = vunpack.c.l.b16 %v705
        %v1245 = vunpack.c.h.b16 %v705
        %v1246 = vunpack.c.l.b16 %v706
        %v1247 = vunpack.c.h.b16 %v706
        %v1248 = vunpack.c.l.b16 %v707
        %v1249 = vunpack.c.h.b16 %v707
        %v1250 = vunpack.c.l.b16 %v708
        %v1251 = vunpack.c.h.b16 %v708
        %v1252 = vunpack.c.l.b16 %v709
        %v1253 = vunpack.c.h.b16 %v709
        %v1254 = vunpack.c.l.b16 %v710
        %v1255 = vunpack.c.h.b16 %v710
        %v1256 = vunpack.c.l.b16 %v711
        %v1257 = vunpack.c.h.b16 %v711
        %v1258 = vunpack.c.l.b16 %v712
        %v1259 = vunpack.c.h.b16 %v712
        %v1260 = vunpack.c.l.b16 %v713
        %v1261 = vunpack.c.h.b16 %v713
        %v1262 = vunpack.c.l.b16 %v714
        %v1263 = vunpack.c.h.b16 %v714
        %v1264 = vunpack.c.l.b16 %v715
        %v1265 = vunpack.c.h.b16 %v715
        %v1266 = vunpack.c.l.b16 %v716
        %v1267 = vunpack.c.h.b16 %v716
        %v1268 = vunpack.c.l.b16 %v717
        %v1269 = vunpack.c.h.b16 %v717
        %v1270 = vunpack.c.l.b16 %v718
        %v1271 = vunpack.c.h.b16 %v718
        %v1272 = vunpack.c.l.b16 %v719
        %v1273 = vunpack.c.h.b16 %v719
        %v1274 = vunpack.c.l.b16 %v720
        %v1275 = vunpack.c.h.b16 %v720
        %v1276 = vunpack.c.l.b16 %v721
        %v1277 = vunpack.c.h.b16 %v721
        %v1278 = vunpack.c.l.b16 %v722
        %v1279 = vunpack.c.h.b16 %v722
        %v1280 = vunpack.c.l.b16 %v723
        %v1281 = vunpack.c.h.b16 %v723
        %v1282 = vunpack.c.l.b16 %v724
        %v1283 = vunpack.c.h.b16 %v724
        %v1284 = vunpack.c.l.b16 %v725
        %v1285 = vunpack.c.h.b16 %v725
        %v1286 = vunpack.c.l.b16 %v726
        %v1287 = vunpack.c.h.b16 %v726
        %v1288 = vunpack.c.l.b16 %v727
        %v1289 = vunpack.c.h.b16 %v727
        %v1290 = vunpack.c.l.b16 %v728
        %v1291 = vunpack.c.h.b16 %v728
        %v1292 = vunpack.c.l.b16 %v729
        %v1293 = vunpack.c.h.b16 %v729
        %v1294 = vunpack.c.l.b16 %v730
        %v1295 = vunpack.c.h.b16 %v730
        %v1296 = vunpack.c.l.b16 %v731
        %v1297 = vunpack.c.h.b16 %v731
        %v1298 = vunpack.c.l.b16 %v732
        %v1299 = vunpack.c.h.b16 %v732
        %v1300 = vunpack.c.l.b16 %v733
        %v1301 = vunpack.c.h.b16 %v733
        %v1302 = vunpack.c.l.b16 %v734
        %v1303 = vunpack.c.h.b16 %v734
        %v1304 = vunpack.c.l.b16 %v735
        %v1305 = vunpack.c.h.b16 %v735
        %v1306 = vunpack.c.l.b16 %v736
        %v1307 = vunpack.c.h.b16 %v736
        %v1308 = vunpack.c.l.b16 %v737
        %v1309 = vunpack.c.h.b16 %v737
        %v1310 = vunpack.c.l.b16 %v738
        %v1311 = vunpack.c.h.b16 %v738
        %v1312 = vunpack.c.l.b16 %v739
        %v1313 = vunpack.c.h.b16 %v739
        %v1314 = vunpack.c.l.b16 %v740
        %v1315 = vunpack.c.h.b16 %v740
        %v1316 = vunpack.c.l.b16 %v741
        %v1317 = vunpack.c.h.b16 %v741
        %v1318 = vunpack.c.l.b16 %v742
        %v1319 = vunpack.c.h.b16 %v742
        %v1320 = vunpack.c.l.b16 %v743
        %v1321 = vunpack.c.h.b16 %v743
        %v1322 = vunpack.c.l.b16 %v744
        %v1323 = vunpack.c.h.b16 %v744
        %v1324 = vunpack.c.l.b16 %v745
        %v1325 = vunpack.c.h.b16 %v745
        %v1326 = vunpack.c.l.b16 %v746
        %v1327 = vunpack.c.h.b16 %v746
        %v1328 = vunpack.c.l.b16 %v747
        %v1329 = vunpack.c.h.b16 %v747
        %v1330 = vunpack.c.l.b16 %v748
        %v1331 = vunpack.c.h.b16 %v748
        %v1332 = vunpack.c.l.b16 %v749
        %v1333 = vunpack.c.h.b16 %v749
        %v1334 = vunpack.c.l.b16 %v750
        %v1335 = vunpack.c.h.b16 %v750
        %v1336 = vunpack.c.l.b16 %v751
        %v1337 = vunpack.c.h.b16 %v751
        %v1338 = vunpack.c.l.b16 %v752
        %v1339 = vunpack.c.h.b16 %v752
        %v1340 = vunpack.c.l.b16 %v753
        %v1341 = vunpack.c.h.b16 %v753
        %v1342 = vunpack.c.l.b16 %v754
        %v1343 = vunpack.c.h.b16 %v754
        %v1344 = vunpack.c.l.b16 %v755
        %v1345 = vunpack.c.h.b16 %v755
        %v1346 = vunpack.c.l.b16 %v756
        %v1347 = vunpack.c.h.b16 %v756
        %v1348 = vunpack.c.l.b16 %v757
        %v1349 = vunpack.c.h.b16 %v757
        %v1350 = vunpack.c.l.b16 %v758
        %v1351 = vunpack.c.h.b16 %v758
        %v1352 = vunpack.c.l.b16 %v759
        %v1353 = vunpack.c.h.b16 %v759
        %v1354 = vunpack.c.l.b16 %v760
        %v1355 = vunpack.c.h.b16 %v760
        %v1356 = vunpack.c.l.b16 %v761
        %v1357 = vunpack.c.h.b16 %v761
        %v1358 = vunpack.c.l.b16 %v762
        %v1359 = vunpack.c.h.b16 %v762
        %v1360 = vunpack.c.l.b16 %v763
        %v1361 = vunpack.c.h.b16 %v763
        %v1362 = vunpack.c.l.b16 %v764
        %v1363 = vunpack.c.h.b16 %v764
        %v1364 = vunpack.c.l.b16 %v765
        %v1365 = vunpack.c.h.b16 %v765
        %v1366 = vunpack.c.l.b16 %v766
        %v1367 = vunpack.c.h.b16 %v766
        %v1368 = vunpack.c.l.b16 %v767
        %v1369 = vunpack.c.h.b16 %v767
        %v1370 = vunpack.c.l.b16 %v768
        %v1371 = vunpack.c.h.b16 %v768
        %v1372 = vunpack.c.l.b16 %v769
        %v1373 = vunpack.c.h.b16 %v769
        %v1374 = vunpack.c.l.b16 %v770
        %v1375 = vunpack.c.h.b16 %v770
        %v1376 = vunpack.c.l.b16 %v771
        %v1377 = vunpack.c.h.b16 %v771
        %v1378 = vunpack.c.l.b16 %v772
        %v1379 = vunpack.c.h.b16 %v772
        %v1380 = vunpack.c.l.b16 %v773
        %v1381 = vunpack.c.h.b16 %v773
        %v1382 = vunpack.c.l.b16 %v774
        %v1383 = vunpack.c.h.b16 %v774
        %v1384 = vunpack.c.l.b16 %v775
        %v1385 = vunpack.c.h.b16 %v775
        %v1386 = vunpack.c.l.b16 %v776
        %v1387 = vunpack.c.h.b16 %v776
        %v1388 = vunpack.c.l.b16 %v777
        %v1389 = vunpack.c.h.b16 %v777
        %v1390 = vunpack.c.l.b16 %v778
        %v1391 = vunpack.c.h.b16 %v778
        %v1392 = vunpack.c.l.b16 %v779
        %v1393 = vunpack.c.h.b16 %v779
        %v1394 = vunpack.c.l.b16 %v780
        %v1395 = vunpack.c.h.b16 %v780
        %v1396 = vunpack.c.l.b16 %v781
        %v1397 = vunpack.c.h.b16 %v781
        %v1398 = vunpack.c.l.b16 %v782
        %v1399 = vunpack.c.h.b16 %v782
        %v1400 = vunpack.c.l.b16 %v783
        %v1401 = vunpack.c.h.b16 %v783
        %v1402 = vunpack.c.l.b16 %v784
        %v1403 = vunpack.c.h.b16 %v784
        %v1404 = vunpack.c.l.b16 %v785
        %v1405 = vunpack.c.h.b16 %v785
        %v1406 = vunpack.c.l.b16 %v786
        %v1407 = vunpack.c.h.b16 %v786
        %v1408 = vunpack.c.l.b16 %v787
        %v1409 = vunpack.c.h.b16 %v787
        %v1410 = vunpack.c.l.b16 %v788
        %v1411 = vunpack.c.h.b16 %v788
        %v1412 = vunpack.c.l.b16 %v789
        %v1413 = vunpack.c.h.b16 %v789
        %v1414 = vunpack.c.l.b16 %v790
        %v1415 = vunpack.c.h.b16 %v790
        %v1416 = vunpack.c.l.b16 %v791
        %v1417 = vunpack.c.h.b16 %v791
        %v1418 = vunpack.c.l.b16 %v792
        %v1419 = vunpack.c.h.b16 %v792
        %v1420 = vunpack.c.l.b16 %v793
        %v1421 = vunpack.c.h.b16 %v793
        %v1422 = vunpack.c.l.b16 %v794
        %v1423 = vunpack.c.h.b16 %v794
        %v1424 = vunpack.c.l.b16 %v795
        %v1425 = vunpack.c.h.b16 %v795
        %v1426 = vunpack.c.l.b16 %v796
        %v1427 = vunpack.c.h.b16 %v796
        %v1428 = vunpack.c.l.b16 %v797
        %v1429 = vunpack.c.h.b16 %v797
        %v1430 = vunpack.c.l.b16 %v798
        %v1431 = vunpack.c.h.b16 %v798
        %v1432 = vunpack.c.l.b16 %v799
        %v1433 = vunpack.c.h.b16 %v799
        %v1434 = vunpack.c.l.b16 %v800
        %v1435 = vunpack.c.h.b16 %v800
        %v1436 = vunpack.c.l.b16 %v801
        %v1437 = vunpack.c.h.b16 %v801
        %v1438 = vunpack.c.l.b16 %v802
        %v1439 = vunpack.c.h.b16 %v802
        %v1440 = vunpack.c.l.b16 %v803
        %v1441 = vunpack.c.h.b16 %v803
        %v1442 = vunpack.c.l.b16 %v804
        %v1443 = vunpack.c.h.b16 %v804
        %v1444 = vunpack.c.l.b16 %v805
        %v1445 = vunpack.c.h.b16 %v805
        %v1446 = vunpack.c.l.b16 %v806
        %v1447 = vunpack.c.h.b16 %v806
        %v1448 = vunpack.c.l.b16 %v807
        %v1449 = vunpack.c.h.b16 %v807
        %v1450 = vunpack.c.l.b16 %v808
        %v1451 = vunpack.c.h.b16 %v808
        %v1452 = vunpack.c.l.b16 %v809
        %v1453 = vunpack.c.h.b16 %v809
        %v1454 = vunpack.c.l.b16 %v810
        %v1455 = vunpack.c.h.b16 %v810
        %v1456 = vunpack.c.l.b16 %v811
        %v1457 = vunpack.c.h.b16 %v811
        %v1458 = vunpack.c.l.b16 %v812
        %v1459 = vunpack.c.h.b16 %v812
        %v1460 = vunpack.c.l.b16 %v813
        %v1461 = vunpack.c.h.b16 %v813
        %v1462 = vunpack.c.l.b16 %v814
        %v1463 = vunpack.c.h.b16 %v814
        %v1464 = vunpack.c.l.b16 %v815
        %v1465 = vunpack.c.h.b16 %v815
        %v1466 = vunpack.c.l.b16 %v816
        %v1467 = vunpack.c.h.b16 %v816
        %v1468 = vunpack.c.l.b16 %v817
        %v1469 = vunpack.c.h.b16 %v817
        %v1470 = vunpack.c.l.b16 %v818
        %v1471 = vunpack.c.h.b16 %v818
        %v1472 = vunpack.c.l.b16 %v819
        %v1473 = vunpack.c.h.b16 %v819
        %v1474 = vunpack.c.l.b16 %v820
        %v1475 = vunpack.c.h.b16 %v820
        %v1476 = vunpack.c.l.b16 %v821
        %v1477 = vunpack.c.h.b16 %v821
        %v1478 = vunpack.c.l.b16 %v822
        %v1479 = vunpack.c.h.b16 %v822
        %v1480 = vunpack.c.l.b16 %v823
        %v1481 = vunpack.c.h.b16 %v823
        %v1482 = vunpack.c.l.b16 %v824
        %v1483 = vunpack.c.h.b16 %v824
        %v1484 = vunpack.c.l.b16 %v825
        %v1485 = vunpack.c.h.b16 %v825
        %v1486 = vunpack.c.l.b16 %v826
        %v1487 = vunpack.c.h.b16 %v826
        %v1488 = vunpack.c.l.b16 %v827
        %v1489 = vunpack.c.h.b16 %v827
        %v1490 = vunpack.c.l.b16 %v828
        %v1491 = vunpack.c.h.b16 %v828
        %v1492 = vunpack.c.l.b16 %v829
        %v1493 = vunpack.c.h.b16 %v829
        %v1494 = vunpack.c.l.b16 %v830
        %v1495 = vunpack.c.h.b16 %v830
        %v1496 = vunpack.c.l.b16 %v831
        %v1497 = vunpack.c.h.b16 %v831
        %v1498 = vunpack.c.l.b16 %v832
        %v1499 = vunpack.c.h.b16 %v832
        %v1500 = vunpack.c.l.b16 %v833
        %v1501 = vunpack.c.h.b16 %v833
        %v1502 = vunpack.c.l.b16 %v834
        %v1503 = vunpack.c.h.b16 %v834
        %v1504 = vunpack.c.l.b16 %v835
        %v1505 = vunpack.c.h.b16 %v835
        %v1506 = vunpack.c.l.b16 %v836
        %v1507 = vunpack.c.h.b16 %v836
        %v1508 = vunpack.c.l.b16 %v837
        %v1509 = vunpack.c.h.b16 %v837
        %v1510 = vunpack.c.l.b16 %v838
        %v1511 = vunpack.c.h.b16 %v838
        %v1512 = vunpack.c.l.b16 %v839
        %v1513 = vunpack.c.h.b16 %v839
        %v1514 = vunpack.c.l.b16 %v840
        %v1515 = vunpack.c.h.b16 %v840
        %v1516 = vunpack.c.l.b16 %v841
        %v1517 = vunpack.c.h.b16 %v841
        %v1518 = vunpack.c.l.b16 %v842
        %v1519 = vunpack.c.h.b16 %v842
        %v1520 = vunpack.c.l.b16 %v843
        %v1521 = vunpack.c.h.b16 %v843
        %v1522 = vunpack.c.l.b16 %v844
        %v1523 = vunpack.c.h.b16 %v844
        %v1524 = vunpack.c.l.b16 %v845
        %v1525 = vunpack.c.h.b16 %v845
        %v1526 = vunpack.c.l.b16 %v846
        %v1527 = vunpack.c.h.b16 %v846
        %v1528 = vunpack.c.l.b16 %v847
        %v1529 = vunpack.c.h.b16 %v847
        %v1530 = vunpack.c.l.b16 %v848
        %v1531 = vunpack.c.h.b16 %v848
        %v1532 = vunpack.c.l.b16 %v849
        %v1533 = vunpack.c.h.b16 %v849
        %v1534 = vunpack.c.l.b16 %v850
        %v1535 = vunpack.c.h.b16 %v850
        %v1536 = vunpack.c.l.b16 %v851
        %v1537 = vunpack.c.h.b16 %v851
        %v1538 = vunpack.c.l.b16 %v852
        %v1539 = vunpack.c.h.b16 %v852
        %v1540 = vunpack.c.l.b16 %v853
        %v1541 = vunpack.c.h.b16 %v853
        %v1542 = vunpack.c.l.b16 %v854
        %v1543 = vunpack.c.h.b16 %v854
        %v1544 = vunpack.c.l.b16 %v855
        %v1545 = vunpack.c.h.b16 %v855
        %v1546 = vunpack.c.l.b16 %v856
        %v1547 = vunpack.c.h.b16 %v856
        %v1548 = vunpack.c.l.b16 %v857
        %v1549 = vunpack.c.h.b16 %v857
        %v1550 = vunpack.c.l.b16 %v858
        %v1551 = vunpack.c.h.b16 %v858
        %v1552 = vunpack.c.l.b16 %v859
        %v1553 = vunpack.c.h.b16 %v859
        %v1554 = vunpack.c.l.b16 %v860
        %v1555 = vunpack.c.h.b16 %v860
        %v1556 = vunpack.c.l.b16 %v861
        %v1557 = vunpack.c.h.b16 %v861
        %v1558 = vunpack.c.l.b16 %v862
        %v1559 = vunpack.c.h.b16 %v862
        %v1560 = vunpack.c.l.b16 %v863
        %v1561 = vunpack.c.h.b16 %v863
        %v1562 = vunpack.c.l.b16 %v864
        %v1563 = vunpack.c.h.b16 %v864
        %v1564 = vunpack.c.l.b16 %v865
        %v1565 = vunpack.c.h.b16 %v865
        %v1566 = vunpack.c.l.b16 %v866
        %v1567 = vunpack.c.h.b16 %v866
        %v1568 = vunpack.c.l.b16 %v867
        %v1569 = vunpack.c.h.b16 %v867
        %v1570 = vunpack.c.l.b16 %v868
        %v1571 = vunpack.c.h.b16 %v868
        %v1572 = vunpack.c.l.b16 %v869
        %v1573 = vunpack.c.h.b16 %v869
        %v1574 = vunpack.c.l.b16 %v870
        %v1575 = vunpack.c.h.b16 %v870
        %v1576 = vunpack.c.l.b16 %v871
        %v1577 = vunpack.c.h.b16 %v871
        %v1578 = vunpack.c.l.b16 %v872
        %v1579 = vunpack.c.h.b16 %v872
        %v1580 = vunpack.c.l.b16 %v873
        %v1581 = vunpack.c.h.b16 %v873
        %v1582 = vunpack.c.l.b16 %v874
        %v1583 = vunpack.c.h.b16 %v874
        %v1584 = vunpack.c.l.b16 %v875
        %v1585 = vunpack.c.h.b16 %v875
        %v1586 = vunpack.c.l.b16 %v876
        %v1587 = vunpack.c.h.b16 %v876
        %v1588 = vunpack.c.l.b16 %v877
        %v1589 = vunpack.c.h.b16 %v877
        %v1590 = vunpack.c.l.b16 %v878
        %v1591 = vunpack.c.h.b16 %v878
        %v1592 = vunpack.c.l.b16 %v879
        %v1593 = vunpack.c.h.b16 %v879
        %v1594 = vunpack.c.l.b16 %v880
        %v1595 = vunpack.c.h.b16 %v880
        %v1596 = vunpack.c.l.b16 %v881
        %v1597 = vunpack.c.h.b16 %v881
        %v1598 = vunpack.c.l.b16 %v882
        %v1599 = vunpack.c.h.b16 %v882
        %v1600 = vunpack.c.l.b16 %v883
        %v1601 = vunpack.c.h.b16 %v883
        %v1602 = vunpack.c.l.b16 %v884
        %v1603 = vunpack.c.h.b16 %v884
        %v1604 = vunpack.c.l.b16 %v885
        %v1605 = vunpack.c.h.b16 %v885
        %v1606 = vunpack.c.l.b16 %v886
        %v1607 = vunpack.c.h.b16 %v886
        %v1608 = vunpack.c.l.b16 %v887
        %v1609 = vunpack.c.h.b16 %v887
        %v1610 = vunpack.c.l.b16 %v888
        %v1611 = vunpack.c.h.b16 %v888
        %v1612 = vunpack.c.l.b16 %v889
        %v1613 = vunpack.c.h.b16 %v889
        %v1614 = vunpack.c.l.b16 %v890
        %v1615 = vunpack.c.h.b16 %v890
        %v1616 = vunpack.c.l.b16 %v891
        %v1617 = vunpack.c.h.b16 %v891
        %v1618 = vunpack.c.l.b16 %v892
        %v1619 = vunpack.c.h.b16 %v892
        %v1620 = vunpack.c.l.b16 %v893
        %v1621 = vunpack.c.h.b16 %v893
        %v1622 = vunpack.c.l.b16 %v894
        %v1623 = vunpack.c.h.b16 %v894
        %v1624 = vunpack.c.l.b16 %v895
        %v1625 = vunpack.c.h.b16 %v895
        %v1626 = vunpack.c.l.b16 %v896
        %v1627 = vunpack.c.h.b16 %v896
        %v1628 = vunpack.c.l.b16 %v897
        %v1629 = vunpack.c.h.b16 %v897
        %v1630 = vunpack.c.l.b16 %v898
        %v1631 = vunpack.c.h.b16 %v898
        %v1632 = vunpack.c.l.b16 %v899
        %v1633 = vunpack.c.h.b16 %v899
        %v1634 = vunpack.c.l.b16 %v900
        %v1635 = vunpack.c.h.b16 %v900
        %v1636 = vunpack.c.l.b16 %v901
        %v1637 = vunpack.c.h.b16 %v901
        %v1638 = vunpack.c.l.b16 %v902
        %v1639 = vunpack.c.h.b16 %v902
        %v1640 = vunpack.c.l.b16 %v903
        %v1641 = vunpack.c.h.b16 %v903
        %v1642 = vunpack.c.l.b16 %v904
        %v1643 = vunpack.c.h.b16 %v904
        %v1644 = vunpack.c.l.b16 %v905
        %v1645 = vunpack.c.h.b16 %v905
        %v1646 = vunpack.c.l.b16 %v906
        %v1647 = vunpack.c.h.b16 %v906
        %v1648 = vunpack.c.l.b16 %v907
        %v1649 = vunpack.c.h.b16 %v907
        %v1650 = vunpack.c.l.b16 %v908
        %v1651 = vunpack.c.h.b16 %v908
        %v1652 = vunpack.c.l.b16 %v909
        %v1653 = vunpack.c.h.b16 %v909
        %v1654 = vunpack.c.l.b16 %v910
        %v1655 = vunpack.c.h.b16 %v910
        %v1656 = vunpack.c.l.b16 %v911
        %v1657 = vunpack.c.h.b16 %v911
        %v1658 = vunpack.c.l.b16 %v912
        %v1659 = vunpack.c.h.b16 %v912
        %v1660 = vunpack.c.l.b16 %v913
        %v1661 = vunpack.c.h.b16 %v913
        %v1662 = vunpack.c.l.b16 %v914
        %v1663 = vunpack.c.h.b16 %v914
        %v1664 = vunpack.c.l.b16 %v915
        %v1665 = vunpack.c.h.b16 %v915
        %v1666 = vunpack.c.l.b16 %v916
        %v1667 = vunpack.c.h.b16 %v916
        %v1668 = vunpack.c.l.b16 %v917
        %v1669 = vunpack.c.h.b16 %v917
        %v1670 = vunpack.c.l.b16 %v918
        %v1671 = vunpack.c.h.b16 %v918
        %v1672 = vunpack.c.l.b16 %v919
        %v1673 = vunpack.c.h.b16 %v919
        %v1674 = vunpack.c.l.b16 %v920
        %v1675 = vunpack.c.h.b16 %v920
        %v1676 = vunpack.c.l.b16 %v921
        %v1677 = vunpack.c.h.b16 %v921
        %v1678 = vunpack.c.l.b16 %v922
        %v1679 = vunpack.c.h.b16 %v922
        %v1680 = vunpack.c.l.b16 %v923
        %v1681 = vunpack.c.h.b16 %v923
        %v1682 = vunpack.c.l.b16 %v924
        %v1683 = vunpack.c.h.b16 %v924
        %v1684 = vunpack.c.l.b16 %v925
        %v1685 = vunpack.c.h.b16 %v925
        %v1686 = vunpack.c.l.b16 %v926
        %v1687 = vunpack.c.h.b16 %v926
        %v1688 = vunpack.c.l.b16 %v927
        %v1689 = vunpack.c.h.b16 %v927
        %v1690 = vunpack.c.l.b16 %v928
        %v1691 = vunpack.c.h.b16 %v928
        %v1692 = vunpack.c.l.b16 %v929
        %v1693 = vunpack.c.h.b16 %v929
        %v1694 = vunpack.c.l.b16 %v930
        %v1695 = vunpack.c.h.b16 %v930
        %v1696 = vunpack.c.l.b16 %v931
        %v1697 = vunpack.c.h.b16 %v931
        %v1698 = vunpack.c.l.b16 %v932
        %v1699 = vunpack.c.h.b16 %v932
        %v1700 = vunpack.c.l.b16 %v933
        %v1701 = vunpack.c.h.b16 %v933
        %v1702 = vpack.c.b16 %v1254, %v1190
        %v1703 = vpack.c.b16 %v1255, %v1191
        %v1704 = vpack.c.b16 %v1256, %v1192
        %v1705 = vpack.c.b16 %v1257, %v1193
        %v1706 = vpack.c.b16 %v1258, %v1194
        %v1707 = vpack.c.b16 %v1259, %v1195
        %v1708 = vpack.c.b16 %v1260, %v1196
        %v1709 = vpack.c.b16 %v1261, %v1197
        %v1710 = vpack.c.b16 %v1262, %v1198
        %v1711 = vpack.c.b16 %v1263, %v1199
        %v1712 = vpack.c.b16 %v1264, %v1200
        %v1713 = vpack.c.b16 %v1265, %v1201
        %v1714 = vpack.c.b16 %v1266, %v1202
        %v1715 = vpack.c.b16 %v1267, %v1203
        %v1716 = vpack.c.b16 %v1268, %v1204
        %v1717 = vpack.c.b16 %v1269, %v1205
        %v1718 = vpack.c.b16 %v1270, %v1206
        %v1719 = vpack.c.b16 %v1271, %v1207
        %v1720 = vpack.c.b16 %v1272, %v1208
        %v1721 = vpack.c.b16 %v1273, %v1209
        %v1722 = vpack.c.b16 %v1274, %v1210
        %v1723 = vpack.c.b16 %v1275, %v1211
        %v1724 = vpack.c.b16 %v1276, %v1212
        %v1725 = vpack.c.b16 %v1277, %v1213
        %v1726 = vpack.c.b16 %v1278, %v1214
        %v1727 = vpack.c.b16 %v1279, %v1215
        %v1728 = vpack.c.b16 %v1280, %v1216
        %v1729 = vpack.c.b16 %v1281, %v1217
        %v1730 = vpack.c.b16 %v1282, %v1218
        %v1731 = vpack.c.b16 %v1283, %v1219
        %v1732 = vpack.c.b16 %v1284, %v1220
        %v1733 = vpack.c.b16 %v1285, %v1221
        %v1734 = vpack.c.b16 %v1286, %v1222
        %v1735 = vpack.c.b16 %v1287, %v1223
        %v1736 = vpack.c.b16 %v1288, %v1224
        %v1737 = vpack.c.b16 %v1289, %v1225
        %v1738 = vpack.c.b16 %v1290, %v1226
        %v1739 = vpack.c.b16 %v1291, %v1227
        %v1740 = vpack.c.b16 %v1292, %v1228
        %v1741 = vpack.c.b16 %v1293, %v1229
        %v1742 = vpack.c.b16 %v1294, %v1230
        %v1743 = vpack.c.b16 %v1295, %v1231
        %v1744 = vpack.c.b16 %v1296, %v1232
        %v1745 = vpack.c.b16 %v1297, %v1233
        %v1746 = vpack.c.b16 %v1298, %v1234
        %v1747 = vpack.c.b16 %v1299, %v1235
        %v1748 = vpack.c.b16 %v1300, %v1236
        %v1749 = vpack.c.b16 %v1301, %v1237
        %v1750 = vpack.c.b16 %v1302, %v1238
        %v1751 = vpack.c.b16 %v1303, %v1239
        %v1752 = vpack.c.b16 %v1304, %v1240
        %v1753 = vpack.c.b16 %v1305, %v1241
        %v1754 = vpack.c.b16 %v1306, %v1242
        %v1755 = vpack.c.b16 %v1307, %v1243
        %v1756 = vpack.c.b16 %v1308, %v1244
        %v1757 = vpack.c.b16 %v1309, %v1245
        %v1758 = vpack.c.b16 %v1310, %v1246
        %v1759 = vpack.c.b16 %v1311, %v1247
        %v1760 = vpack.c.b16 %v1312, %v1248
        %v1761 = vpack.c.b16 %v1313, %v1249
        %v1762 = vpack.c.b16 %v1314, %v1250
        %v1763 = vpack.c.b16 %v1315, %v1251
        %v1764 = vpack.c.b16 %v1316, %v1252
        %v1765 = vpack.c.b16 %v1317, %v1253
        %v1766 = vpack.c.b16 %v1382, %v1318
        %v1767 = vpack.c.b16 %v1383, %v1319
        %v1768 = vpack.c.b16 %v1384, %v1320
        %v1769 = vpack.c.b16 %v1385, %v1321
        %v1770 = vpack.c.b16 %v1386, %v1322
        %v1771 = vpack.c.b16 %v1387, %v1323
        %v1772 = vpack.c.b16 %v1388, %v1324
        %v1773 = vpack.c.b16 %v1389, %v1325
        %v1774 = vpack.c.b16 %v1390, %v1326
        %v1775 = vpack.c.b16 %v1391, %v1327
        %v1776 = vpack.c.b16 %v1392, %v1328
        %v1777 = vpack.c.b16 %v1393, %v1329
        %v1778 = vpack.c.b16 %v1394, %v1330
        %v1779 = vpack.c.b16 %v1395, %v1331
        %v1780 = vpack.c.b16 %v1396, %v1332
        %v1781 = vpack.c.b16 %v1397, %v1333
        %v1782 = vpack.c.b16 %v1398, %v1334
        %v1783 = vpack.c.b16 %v1399, %v1335
        %v1784 = vpack.c.b16 %v1400, %v1336
        %v1785 = vpack.c.b16 %v1401, %v1337
        %v1786 = vpack.c.b16 %v1402, %v1338
        %v1787 = vpack.c.b16 %v1403, %v1339
        %v1788 = vpack.c.b16 %v1404, %v1340
        %v1789 = vpack.c.b16 %v1405, %v1341
        %v1790 = vpack.c.b16 %v1406, %v1342
        %v1791 = vpack.c.b16 %v1407, %v1343
        %v1792 = vpack.c.b16 %v1408, %v1344
        %v1793 = vpack.c.b16 %v1409, %v1345
        %v1794 = vpack.c.b16 %v1410, %v1346
        %v1795 = vpack.c.b16 %v1411, %v1347
        %v1796 = vpack.c.b16 %v1412, %v1348
        %v1797 = vpack.c.b16 %v1413, %v1349
        %v1798 = vpack.c.b16 %v1414, %v1350
        %v1799 = vpack.c.b16 %v1415, %v1351
        %v1800 = vpack.c.b16 %v1416, %v1352
        %v1801 = vpack.c.b16 %v1417, %v1353
        %v1802 = vpack.c.b16 %v1418, %v1354
        %v1803 = vpack.c.b16 %v1419, %v1355
        %v1804 = vpack.c.b16 %v1420, %v1356
        %v1805 = vpack.c.b16 %v1421, %v1357
        %v1806 = vpack.c.b16 %v1422, %v1358
        %v1807 = vpack.c.b16 %v1423, %v1359
        %v1808 = vpack.c.b16 %v1424, %v1360
        %v1809 = vpack.c.b16 %v1425, %v1361
        %v1810 = vpack.c.b16 %v1426, %v1362
        %v1811 = vpack.c.b16 %v1427, %v1363
        %v1812 = vpack.c.b16 %v1428, %v1364
        %v1813 = vpack.c.b16 %v1429, %v1365
        %v1814 = vpack.c.b16 %v1430, %v1366
        %v1815 = vpack.c.b16 %v1431, %v1367
        %v1816 = vpack.c.b16 %v1432, %v1368
        %v1817 = vpack.c.b16 %v1433, %v1369
        %v1818 = vpack.c.b16 %v1434, %v1370
        %v1819 = vpack.c.b16 %v1435, %v1371
        %v1820 = vpack.c.b16 %v1436, %v1372
        %v1821 = vpack.c.b16 %v1437, %v1373
        %v1822 = vpack.c.b16 %v1438, %v1374
        %v1823 = vpack.c.b16 %v1439, %v1375
        %v1824 = vpack.c.b16 %v1440, %v1376
        %v1825 = vpack.c.b16 %v1441, %v1377
        %v1826 = vpack.c.b16 %v1442, %v1378
        %v1827 = vpack.c.b16 %v1443, %v1379
        %v1828 = vpack.c.b16 %v1444, %v1380
        %v1829 = vpack.c.b16 %v1445, %v1381
        %v1830 = vpack.c.b16 %v1510, %v1446
        %v1831 = vpack.c.b16 %v1511, %v1447
        %v1832 = vpack.c.b16 %v1512, %v1448
        %v1833 = vpack.c.b16 %v1513, %v1449
        %v1834 = vpack.c.b16 %v1514, %v1450
        %v1835 = vpack.c.b16 %v1515, %v1451
        %v1836 = vpack.c.b16 %v1516, %v1452
        %v1837 = vpack.c.b16 %v1517, %v1453
        %v1838 = vpack.c.b16 %v1518, %v1454
        %v1839 = vpack.c.b16 %v1519, %v1455
        %v1840 = vpack.c.b16 %v1520, %v1456
        %v1841 = vpack.c.b16 %v1521, %v1457
        %v1842 = vpack.c.b16 %v1522, %v1458
        %v1843 = vpack.c.b16 %v1523, %v1459
        %v1844 = vpack.c.b16 %v1524, %v1460
        %v1845 = vpack.c.b16 %v1525, %v1461
        %v1846 = vpack.c.b16 %v1526, %v1462
        %v1847 = vpack.c.b16 %v1527, %v1463
        %v1848 = vpack.c.b16 %v1528, %v1464
        %v1849 = vpack.c.b16 %v1529, %v1465
        %v1850 = vpack.c.b16 %v1530, %v1466
        %v1851 = vpack.c.b16 %v1531, %v1467
        %v1852 = vpack.c.b16 %v1532, %v1468
        %v1853 = vpack.c.b16 %v1533, %v1469
        %v1854 = vpack.c.b16 %v1534, %v1470
        %v1855 = vpack.c.b16 %v1535, %v1471
        %v1856 = vpack.c.b16 %v1536, %v1472
        %v1857 = vpack.c.b16 %v1537, %v1473
        %v1858 = vpack.c.b16 %v1538, %v1474
        %v1859 = vpack.c.b16 %v1539, %v1475
        %v1860 = vpack.c.b16 %v1540, %v1476
        %v1861 = vpack.c.b16 %v1541, %v1477
        %v1862 = vpack.c.b16 %v1542, %v1478
        %v1863 = vpack.c.b16 %v1543, %v1479
        %v1864 = vpack.c.b16 %v1544, %v1480
        %v1865 = vpack.c.b16 %v1545, %v1481
        %v1866 = vpack.c.b16 %v1546, %v1482
        %v1867 = vpack.c.b16 %v1547, %v1483
        %v1868 = vpack.c.b16 %v1548, %v1484
        %v1869 = vpack.c.b16 %v1549, %v1485
        %v1870 = vpack.c.b16 %v1550, %v1486
        %v1871 = vpack.c.b16 %v1551, %v1487
        %v1872 = vpack.c.b16 %v1552, %v1488
        %v1873 = vpack.c.b16 %v1553, %v1489
        %v1874 = vpack.c.b16 %v1554, %v1490
        %v1875 = vpack.c.b16 %v1555, %v1491
        %v1876 = vpack.c.b16 %v1556, %v1492
        %v1877 = vpack.c.b16 %v1557, %v1493
        %v1878 = vpack.c.b16 %v1558, %v1494
        %v1879 = vpack.c.b16 %v1559, %v1495
        %v1880 = vpack.c.b16 %v1560, %v1496
        %v1881 = vpack.c.b16 %v1561, %v1497
        %v1882 = vpack.c.b16 %v1562, %v1498
        %v1883 = vpack.c.b16 %v1563, %v1499
        %v1884 = vpack.c.b16 %v1564, %v1500
        %v1885 = vpack.c.b16 %v1565, %v1501
        %v1886 = vpack.c.b16 %v1566, %v1502
        %v1887 = vpack.c.b16 %v1567, %v1503
        %v1888 = vpack.c.b16 %v1568, %v1504
        %v1889 = vpack.c.b16 %v1569, %v1505
        %v1890 = vpack.c.b16 %v1570, %v1506
        %v1891 = vpack.c.b16 %v1571, %v1507
        %v1892 = vpack.c.b16 %v1572, %v1508
        %v1893 = vpack.c.b16 %v1573, %v1509
        %v1894 = vpack.c.b16 %v1638, %v1574
        %v1895 = vpack.c.b16 %v1639, %v1575
        %v1896 = vpack.c.b16 %v1640, %v1576
        %v1897 = vpack.c.b16 %v1641, %v1577
        %v1898 = vpack.c.b16 %v1642, %v1578
        %v1899 = vpack.c.b16 %v1643, %v1579
        %v1900 = vpack.c.b16 %v1644, %v1580
        %v1901 = vpack.c.b16 %v1645, %v1581
        %v1902 = vpack.c.b16 %v1646, %v1582
        %v1903 = vpack.c.b16 %v1647, %v1583
        %v1904 = vpack.c.b16 %v1648, %v1584
        %v1905 = vpack.c.b16 %v1649, %v1585
        %v1906 = vpack.c.b16 %v1650, %v1586
        %v1907 = vpack.c.b16 %v1651, %v1587
        %v1908 = vpack.c.b16 %v1652, %v1588
        %v1909 = vpack.c.b16 %v1653, %v1589
        %v1910 = vpack.c.b16 %v1654, %v1590
        %v1911 = vpack.c.b16 %v1655, %v1591
        %v1912 = vpack.c.b16 %v1656, %v1592
        %v1913 = vpack.c.b16 %v1657, %v1593
        %v1914 = vpack.c.b16 %v1658, %v1594
        %v1915 = vpack.c.b16 %v1659, %v1595
        %v1916 = vpack.c.b16 %v1660, %v1596
        %v1917 = vpack.c.b16 %v1661, %v1597
        %v1918 = vpack.c.b16 %v1662, %v1598
        %v1919 = vpack.c.b16 %v1663, %v1599
        %v1920 = vpack.c.b16 %v1664, %v1600
        %v1921 = vpack.c.b16 %v1665, %v1601
        %v1922 = vpack.c.b16 %v1666, %v1602
        %v1923 = vpack.c.b16 %v1667, %v1603
        %v1924 = vpack.c.b16 %v1668, %v1604
        %v1925 = vpack.c.b16 %v1669, %v1605
        %v1926 = vpack.c.b16 %v1670, %v1606
        %v1927 = vpack.c.b16 %v1671, %v1607
        %v1928 = vpack.c.b16 %v1672, %v1608
        %v1929 = vpack.c.b16 %v1673, %v1609
        %v1930 = vpack.c.b16 %v1674, %v1610
        %v1931 = vpack.c.b16 %v1675, %v1611
        %v1932 = vpack.c.b16 %v1676, %v1612
        %v1933 = vpack.c.b16 %v1677, %v1613
        %v1934 = vpack.c.b16 %v1678, %v1614
        %v1935 = vpack.c.b16 %v1679, %v1615
        %v1936 = vpack.c.b16 %v1680, %v1616
        %v1937 = vpack.c.b16 %v1681, %v1617
        %v1938 = vpack.c.b16 %v1682, %v1618
        %v1939 = vpack.c.b16 %v1683, %v1619
        %v1940 = vpack.c.b16 %v1684, %v1620
        %v1941 = vpack.c.b16 %v1685, %v1621
        %v1942 = vpack.c.b16 %v1686, %v1622
        %v1943 = vpack.c.b16 %v1687, %v1623
        %v1944 = vpack.c.b16 %v1688, %v1624
        %v1945 = vpack.c.b16 %v1689, %v1625
        %v1946 = vpack.c.b16 %v1690, %v1626
        %v1947 = vpack.c.b16 %v1691, %v1627
        %v1948 = vpack.c.b16 %v1692, %v1628
        %v1949 = vpack.c.b16 %v1693, %v1629
        %v1950 = vpack.c.b16 %v1694, %v1630
        %v1951 = vpack.c.b16 %v1695, %v1631
        %v1952 = vpack.c.b16 %v1696, %v1632
        %v1953 = vpack.c.b16 %v1697, %v1633
        %v1954 = vpack.c.b16 %v1698, %v1634
        %v1955 = vpack.c.b16 %v1699, %v1635
        %v1956 = vpack.c.b16 %v1700, %v1636
        %v1957 = vpack.c.b16 %v1701, %v1637
        %vm2214 = vcmask 523264
        %v2216 = vsel %vm2214, %v677, 0
        %2218 = vmatpush.bf16.msra.mxu0 0
        %2219 = vmatpush.bf16.msra.mxu0 0
        %2220 = vmatpush.bf16.msra.mxu0 0
        %2221 = vmatpush.bf16.msra.mxu0 0
        %2222 = vmatpush.bf16.msra.mxu0 %v1894
        %2223 = vmatpush.bf16.msra.mxu0 %v1830
        %2224 = vmatpush.bf16.msra.mxu0 %v1766
        %2225 = vmatpush.bf16.msra.mxu0 %v1702
        %2226 = vmatmul.bf16.gmra.mxu0 %v2216
        %v2227 = vpop.f32.mrf.mxu0
        %v2228 = vadd.f32 0.0, %v2227
        %v2229 = vpop.f32.mrf.mxu0
        %2230 = vdwg.mxu0
        %2231 = vmatpush.bf16.msra.mxu0 0
        %2232 = vmatpush.bf16.msra.mxu0 0
        %2233 = vmatpush.bf16.msra.mxu0 0
        %2234 = vmatpush.bf16.msra.mxu0 0
        %2235 = vmatpush.bf16.msra.mxu0 %v1895
        %2236 = vmatpush.bf16.msra.mxu0 %v1831
        %2237 = vmatpush.bf16.msra.mxu0 %v1767
        %2238 = vmatpush.bf16.msra.mxu0 %v1703
        %2239 = vmatmul.bf16.gmra.mxu0 %v2216
        %v2240 = vpop.f32.mrf.mxu0
        %v2241 = vadd.f32 0.0, %v2240
        %v2242 = vpop.f32.mrf.mxu0
        %2243 = vdwg.mxu0
        %2244 = vmatpush.bf16.msra.mxu0 0
        %2245 = vmatpush.bf16.msra.mxu0 0
        %2246 = vmatpush.bf16.msra.mxu0 0
        %2247 = vmatpush.bf16.msra.mxu0 0
        %2248 = vmatpush.bf16.msra.mxu0 %v1896
        %2249 = vmatpush.bf16.msra.mxu0 %v1832
        %2250 = vmatpush.bf16.msra.mxu0 %v1768
        %2251 = vmatpush.bf16.msra.mxu0 %v1704
        %2252 = vmatmul.bf16.gmra.mxu0 %v2216
        %v2253 = vpop.f32.mrf.mxu0
        %v2254 = vadd.f32 0.0, %v2253
        %v2255 = vpop.f32.mrf.mxu0
        %2256 = vdwg.mxu0
        %2257 = vmatpush.bf16.msra.mxu0 0
        %2258 = vmatpush.bf16.msra.mxu0 0
        %2259 = vmatpush.bf16.msra.mxu0 0
        %2260 = vmatpush.bf16.msra.mxu0 0
        %2261 = vmatpush.bf16.msra.mxu0 %v1897
        %2262 = vmatpush.bf16.msra.mxu0 %v1833
        %2263 = vmatpush.bf16.msra.mxu0 %v1769
        %2264 = vmatpush.bf16.msra.mxu0 %v1705
        %2265 = vmatmul.bf16.gmra.mxu0 %v2216
        %v2266 = vpop.f32.mrf.mxu0
        %v2267 = vadd.f32 0.0, %v2266
        %v2268 = vpop.f32.mrf.mxu0
        %2269 = vdwg.mxu0
        %2270 = vmatpush.bf16.msra.mxu0 0
        %2271 = vmatpush.bf16.msra.mxu0 0
        %2272 = vmatpush.bf16.msra.mxu0 0
        %2273 = vmatpush.bf16.msra.mxu0 0
        %2274 = vmatpush.bf16.msra.mxu0 %v1898
        %2275 = vmatpush.bf16.msra.mxu0 %v1834
        %2276 = vmatpush.bf16.msra.mxu0 %v1770
        %2277 = vmatpush.bf16.msra.mxu0 %v1706
        %2278 = vmatmul.bf16.gmra.mxu0 %v2216
        %v2279 = vpop.f32.mrf.mxu0
        %v2280 = vadd.f32 0.0, %v2279
        %v2281 = vpop.f32.mrf.mxu0
        %2282 = vdwg.mxu0
        %2283 = vmatpush.bf16.msra.mxu0 0
        %2284 = vmatpush.bf16.msra.mxu0 0
        %2285 = vmatpush.bf16.msra.mxu0 0
        %2286 = vmatpush.bf16.msra.mxu0 0
        %2287 = vmatpush.bf16.msra.mxu0 %v1899
        %2288 = vmatpush.bf16.msra.mxu0 %v1835
        %2289 = vmatpush.bf16.msra.mxu0 %v1771
        %2290 = vmatpush.bf16.msra.mxu0 %v1707
        %2291 = vmatmul.bf16.gmra.mxu0 %v2216
        %v2292 = vpop.f32.mrf.mxu0
        %v2293 = vadd.f32 0.0, %v2292
        %v2294 = vpop.f32.mrf.mxu0
        %2295 = vdwg.mxu0
        %2296 = vmatpush.bf16.msra.mxu0 0
        %2297 = vmatpush.bf16.msra.mxu0 0
        %2298 = vmatpush.bf16.msra.mxu0 0
        %2299 = vmatpush.bf16.msra.mxu0 0
        %2300 = vmatpush.bf16.msra.mxu0 %v1900
        %2301 = vmatpush.bf16.msra.mxu0 %v1836
        %2302 = vmatpush.bf16.msra.mxu0 %v1772
        %2303 = vmatpush.bf16.msra.mxu0 %v1708
        %2304 = vmatmul.bf16.gmra.mxu0 %v2216
        %v2305 = vpop.f32.mrf.mxu0
        %v2306 = vadd.f32 0.0, %v2305
        %v2307 = vpop.f32.mrf.mxu0
        %2308 = vdwg.mxu0
        %2309 = vmatpush.bf16.msra.mxu0 0
        %2310 = vmatpush.bf16.msra.mxu0 0
        %2311 = vmatpush.bf16.msra.mxu0 0
        %2312 = vmatpush.bf16.msra.mxu0 0
        %2313 = vmatpush.bf16.msra.mxu0 %v1901
        %2314 = vmatpush.bf16.msra.mxu0 %v1837
        %2315 = vmatpush.bf16.msra.mxu0 %v1773
        %2316 = vmatpush.bf16.msra.mxu0 %v1709
        %2317 = vmatmul.bf16.gmra.mxu0 %v2216
        %v2318 = vpop.f32.mrf.mxu0
        %v2319 = vadd.f32 0.0, %v2318
        %v2320 = vpop.f32.mrf.mxu0
        %2321 = vdwg.mxu0
        %2322 = vmatpush.bf16.msra.mxu0 0
        %2323 = vmatpush.bf16.msra.mxu0 0
        %2324 = vmatpush.bf16.msra.mxu0 0
        %2325 = vmatpush.bf16.msra.mxu0 0
        %2326 = vmatpush.bf16.msra.mxu0 %v1902
        %2327 = vmatpush.bf16.msra.mxu0 %v1838
        %2328 = vmatpush.bf16.msra.mxu0 %v1774
        %2329 = vmatpush.bf16.msra.mxu0 %v1710
        %2330 = vmatmul.bf16.gmra.mxu0 %v2216
        %v2331 = vpop.f32.mrf.mxu0
        %v2332 = vadd.f32 0.0, %v2331
        %v2333 = vpop.f32.mrf.mxu0
        %2334 = vdwg.mxu0
        %2335 = vmatpush.bf16.msra.mxu0 0
        %2336 = vmatpush.bf16.msra.mxu0 0
        %2337 = vmatpush.bf16.msra.mxu0 0
        %2338 = vmatpush.bf16.msra.mxu0 0
        %2339 = vmatpush.bf16.msra.mxu0 %v1903
        %2340 = vmatpush.bf16.msra.mxu0 %v1839
        %2341 = vmatpush.bf16.msra.mxu0 %v1775
        %2342 = vmatpush.bf16.msra.mxu0 %v1711
        %2343 = vmatmul.bf16.gmra.mxu0 %v2216
        %v2344 = vpop.f32.mrf.mxu0
        %v2345 = vadd.f32 0.0, %v2344
        %v2346 = vpop.f32.mrf.mxu0
        %2347 = vdwg.mxu0
        %2348 = vmatpush.bf16.msra.mxu0 0
        %2349 = vmatpush.bf16.msra.mxu0 0
        %2350 = vmatpush.bf16.msra.mxu0 0
        %2351 = vmatpush.bf16.msra.mxu0 0
        %2352 = vmatpush.bf16.msra.mxu0 %v1904
        %2353 = vmatpush.bf16.msra.mxu0 %v1840
        %2354 = vmatpush.bf16.msra.mxu0 %v1776
        %2355 = vmatpush.bf16.msra.mxu0 %v1712
        %2356 = vmatmul.bf16.gmra.mxu0 %v2216
        %v2357 = vpop.f32.mrf.mxu0
        %v2358 = vadd.f32 0.0, %v2357
        %v2359 = vpop.f32.mrf.mxu0
        %2360 = vdwg.mxu0
        %2361 = vmatpush.bf16.msra.mxu0 0
        %2362 = vmatpush.bf16.msra.mxu0 0
        %2363 = vmatpush.bf16.msra.mxu0 0
        %2364 = vmatpush.bf16.msra.mxu0 0
        %2365 = vmatpush.bf16.msra.mxu0 %v1905
        %2366 = vmatpush.bf16.msra.mxu0 %v1841
        %2367 = vmatpush.bf16.msra.mxu0 %v1777
        %2368 = vmatpush.bf16.msra.mxu0 %v1713
        %2369 = vmatmul.bf16.gmra.mxu0 %v2216
        %v2370 = vpop.f32.mrf.mxu0
        %v2371 = vadd.f32 0.0, %v2370
        %v2372 = vpop.f32.mrf.mxu0
        %2373 = vdwg.mxu0
        %2374 = vmatpush.bf16.msra.mxu0 0
        %2375 = vmatpush.bf16.msra.mxu0 0
        %2376 = vmatpush.bf16.msra.mxu0 0
        %2377 = vmatpush.bf16.msra.mxu0 0
        %2378 = vmatpush.bf16.msra.mxu0 %v1906
        %2379 = vmatpush.bf16.msra.mxu0 %v1842
        %2380 = vmatpush.bf16.msra.mxu0 %v1778
        %2381 = vmatpush.bf16.msra.mxu0 %v1714
        %2382 = vmatmul.bf16.gmra.mxu0 %v2216
        %v2383 = vpop.f32.mrf.mxu0
        %v2384 = vadd.f32 0.0, %v2383
        %v2385 = vpop.f32.mrf.mxu0
        %2386 = vdwg.mxu0
        %2387 = vmatpush.bf16.msra.mxu0 0
        %2388 = vmatpush.bf16.msra.mxu0 0
        %2389 = vmatpush.bf16.msra.mxu0 0
        %2390 = vmatpush.bf16.msra.mxu0 0
        %2391 = vmatpush.bf16.msra.mxu0 %v1907
        %2392 = vmatpush.bf16.msra.mxu0 %v1843
        %2393 = vmatpush.bf16.msra.mxu0 %v1779
        %2394 = vmatpush.bf16.msra.mxu0 %v1715
        %2395 = vmatmul.bf16.gmra.mxu0 %v2216
        %v2396 = vpop.f32.mrf.mxu0
        %v2397 = vadd.f32 0.0, %v2396
        %v2398 = vpop.f32.mrf.mxu0
        %2399 = vdwg.mxu0
        %2400 = vmatpush.bf16.msra.mxu0 0
        %2401 = vmatpush.bf16.msra.mxu0 0
        %2402 = vmatpush.bf16.msra.mxu0 0
        %2403 = vmatpush.bf16.msra.mxu0 0
        %2404 = vmatpush.bf16.msra.mxu0 %v1908
        %2405 = vmatpush.bf16.msra.mxu0 %v1844
        %2406 = vmatpush.bf16.msra.mxu0 %v1780
        %2407 = vmatpush.bf16.msra.mxu0 %v1716
        %2408 = vmatmul.bf16.gmra.mxu0 %v2216
        %v2409 = vpop.f32.mrf.mxu0
        %v2410 = vadd.f32 0.0, %v2409
        %v2411 = vpop.f32.mrf.mxu0
        %2412 = vdwg.mxu0
        %2413 = vmatpush.bf16.msra.mxu0 0
        %2414 = vmatpush.bf16.msra.mxu0 0
        %2415 = vmatpush.bf16.msra.mxu0 0
        %2416 = vmatpush.bf16.msra.mxu0 0
        %2417 = vmatpush.bf16.msra.mxu0 %v1909
        %2418 = vmatpush.bf16.msra.mxu0 %v1845
        %2419 = vmatpush.bf16.msra.mxu0 %v1781
        %2420 = vmatpush.bf16.msra.mxu0 %v1717
        %2421 = vmatmul.bf16.gmra.mxu0 %v2216
        %v2422 = vpop.f32.mrf.mxu0
        %v2423 = vadd.f32 0.0, %v2422
        %v2424 = vpop.f32.mrf.mxu0
        %2425 = vdwg.mxu0
        %2426 = vmatpush.bf16.msra.mxu0 0
        %2427 = vmatpush.bf16.msra.mxu0 0
        %2428 = vmatpush.bf16.msra.mxu0 0
        %2429 = vmatpush.bf16.msra.mxu0 0
        %2430 = vmatpush.bf16.msra.mxu0 %v1910
        %2431 = vmatpush.bf16.msra.mxu0 %v1846
        %2432 = vmatpush.bf16.msra.mxu0 %v1782
        %2433 = vmatpush.bf16.msra.mxu0 %v1718
        %2434 = vmatmul.bf16.gmra.mxu0 %v2216
        %v2435 = vpop.f32.mrf.mxu0
        %v2436 = vadd.f32 0.0, %v2435
        %v2437 = vpop.f32.mrf.mxu0
        %2438 = vdwg.mxu0
        %2439 = vmatpush.bf16.msra.mxu0 0
        %2440 = vmatpush.bf16.msra.mxu0 0
        %2441 = vmatpush.bf16.msra.mxu0 0
        %2442 = vmatpush.bf16.msra.mxu0 0
        %2443 = vmatpush.bf16.msra.mxu0 %v1911
        %2444 = vmatpush.bf16.msra.mxu0 %v1847
        %2445 = vmatpush.bf16.msra.mxu0 %v1783
        %2446 = vmatpush.bf16.msra.mxu0 %v1719
        %2447 = vmatmul.bf16.gmra.mxu0 %v2216
        %v2448 = vpop.f32.mrf.mxu0
        %v2449 = vadd.f32 0.0, %v2448
        %v2450 = vpop.f32.mrf.mxu0
        %2451 = vdwg.mxu0
        %2452 = vmatpush.bf16.msra.mxu0 0
        %2453 = vmatpush.bf16.msra.mxu0 0
        %2454 = vmatpush.bf16.msra.mxu0 0
        %2455 = vmatpush.bf16.msra.mxu0 0
        %2456 = vmatpush.bf16.msra.mxu0 %v1912
        %2457 = vmatpush.bf16.msra.mxu0 %v1848
        %2458 = vmatpush.bf16.msra.mxu0 %v1784
        %2459 = vmatpush.bf16.msra.mxu0 %v1720
        %2460 = vmatmul.bf16.gmra.mxu0 %v2216
        %v2461 = vpop.f32.mrf.mxu0
        %v2462 = vadd.f32 0.0, %v2461
        %v2463 = vpop.f32.mrf.mxu0
        %2464 = vdwg.mxu0
        %2465 = vmatpush.bf16.msra.mxu0 0
        %2466 = vmatpush.bf16.msra.mxu0 0
        %2467 = vmatpush.bf16.msra.mxu0 0
        %2468 = vmatpush.bf16.msra.mxu0 0
        %2469 = vmatpush.bf16.msra.mxu0 %v1913
        %2470 = vmatpush.bf16.msra.mxu0 %v1849
        %2471 = vmatpush.bf16.msra.mxu0 %v1785
        %2472 = vmatpush.bf16.msra.mxu0 %v1721
        %2473 = vmatmul.bf16.gmra.mxu0 %v2216
        %v2474 = vpop.f32.mrf.mxu0
        %v2475 = vadd.f32 0.0, %v2474
        %v2476 = vpop.f32.mrf.mxu0
        %2477 = vdwg.mxu0
        %2478 = vmatpush.bf16.msra.mxu0 0
        %2479 = vmatpush.bf16.msra.mxu0 0
        %2480 = vmatpush.bf16.msra.mxu0 0
        %2481 = vmatpush.bf16.msra.mxu0 0
        %2482 = vmatpush.bf16.msra.mxu0 %v1914
        %2483 = vmatpush.bf16.msra.mxu0 %v1850
        %2484 = vmatpush.bf16.msra.mxu0 %v1786
        %2485 = vmatpush.bf16.msra.mxu0 %v1722
        %2486 = vmatmul.bf16.gmra.mxu0 %v2216
        %v2487 = vpop.f32.mrf.mxu0
        %v2488 = vadd.f32 0.0, %v2487
        %v2489 = vpop.f32.mrf.mxu0
        %2490 = vdwg.mxu0
        %2491 = vmatpush.bf16.msra.mxu0 0
        %2492 = vmatpush.bf16.msra.mxu0 0
        %2493 = vmatpush.bf16.msra.mxu0 0
        %2494 = vmatpush.bf16.msra.mxu0 0
        %2495 = vmatpush.bf16.msra.mxu0 %v1915
        %2496 = vmatpush.bf16.msra.mxu0 %v1851
        %2497 = vmatpush.bf16.msra.mxu0 %v1787
        %2498 = vmatpush.bf16.msra.mxu0 %v1723
        %2499 = vmatmul.bf16.gmra.mxu0 %v2216
        %v2500 = vpop.f32.mrf.mxu0
        %v2501 = vadd.f32 0.0, %v2500
        %v2502 = vpop.f32.mrf.mxu0
        %2503 = vdwg.mxu0
        %2504 = vmatpush.bf16.msra.mxu0 0
        %2505 = vmatpush.bf16.msra.mxu0 0
        %2506 = vmatpush.bf16.msra.mxu0 0
        %2507 = vmatpush.bf16.msra.mxu0 0
        %2508 = vmatpush.bf16.msra.mxu0 %v1916
        %2509 = vmatpush.bf16.msra.mxu0 %v1852
        %2510 = vmatpush.bf16.msra.mxu0 %v1788
        %2511 = vmatpush.bf16.msra.mxu0 %v1724
        %2512 = vmatmul.bf16.gmra.mxu0 %v2216
        %v2513 = vpop.f32.mrf.mxu0
        %v2514 = vadd.f32 0.0, %v2513
        %v2515 = vpop.f32.mrf.mxu0
        %2516 = vdwg.mxu0
        %2517 = vmatpush.bf16.msra.mxu0 0
        %2518 = vmatpush.bf16.msra.mxu0 0
        %2519 = vmatpush.bf16.msra.mxu0 0
        %2520 = vmatpush.bf16.msra.mxu0 0
        %2521 = vmatpush.bf16.msra.mxu0 %v1917
        %2522 = vmatpush.bf16.msra.mxu0 %v1853
        %2523 = vmatpush.bf16.msra.mxu0 %v1789
        %2524 = vmatpush.bf16.msra.mxu0 %v1725
        %2525 = vmatmul.bf16.gmra.mxu0 %v2216
        %v2526 = vpop.f32.mrf.mxu0
        %v2527 = vadd.f32 0.0, %v2526
        %v2528 = vpop.f32.mrf.mxu0
        %2529 = vdwg.mxu0
        %2530 = vmatpush.bf16.msra.mxu0 0
        %2531 = vmatpush.bf16.msra.mxu0 0
        %2532 = vmatpush.bf16.msra.mxu0 0
        %2533 = vmatpush.bf16.msra.mxu0 0
        %2534 = vmatpush.bf16.msra.mxu0 %v1918
        %2535 = vmatpush.bf16.msra.mxu0 %v1854
        %2536 = vmatpush.bf16.msra.mxu0 %v1790
        %2537 = vmatpush.bf16.msra.mxu0 %v1726
        %2538 = vmatmul.bf16.gmra.mxu0 %v2216
        %v2539 = vpop.f32.mrf.mxu0
        %v2540 = vadd.f32 0.0, %v2539
        %v2541 = vpop.f32.mrf.mxu0
        %2542 = vdwg.mxu0
        %2543 = vmatpush.bf16.msra.mxu0 0
        %2544 = vmatpush.bf16.msra.mxu0 0
        %2545 = vmatpush.bf16.msra.mxu0 0
        %2546 = vmatpush.bf16.msra.mxu0 0
        %2547 = vmatpush.bf16.msra.mxu0 %v1919
        %2548 = vmatpush.bf16.msra.mxu0 %v1855
        %2549 = vmatpush.bf16.msra.mxu0 %v1791
        %2550 = vmatpush.bf16.msra.mxu0 %v1727
        %2551 = vmatmul.bf16.gmra.mxu0 %v2216
        %v2552 = vpop.f32.mrf.mxu0
        %v2553 = vadd.f32 0.0, %v2552
        %v2554 = vpop.f32.mrf.mxu0
        %2555 = vdwg.mxu0
        %2556 = vmatpush.bf16.msra.mxu0 0
        %2557 = vmatpush.bf16.msra.mxu0 0
        %2558 = vmatpush.bf16.msra.mxu0 0
        %2559 = vmatpush.bf16.msra.mxu0 0
        %2560 = vmatpush.bf16.msra.mxu0 %v1920
        %2561 = vmatpush.bf16.msra.mxu0 %v1856
        %2562 = vmatpush.bf16.msra.mxu0 %v1792
        %2563 = vmatpush.bf16.msra.mxu0 %v1728
        %2564 = vmatmul.bf16.gmra.mxu0 %v2216
        %v2565 = vpop.f32.mrf.mxu0
        %v2566 = vadd.f32 0.0, %v2565
        %v2567 = vpop.f32.mrf.mxu0
        %2568 = vdwg.mxu0
        %2569 = vmatpush.bf16.msra.mxu0 0
        %2570 = vmatpush.bf16.msra.mxu0 0
        %2571 = vmatpush.bf16.msra.mxu0 0
        %2572 = vmatpush.bf16.msra.mxu0 0
        %2573 = vmatpush.bf16.msra.mxu0 %v1921
        %2574 = vmatpush.bf16.msra.mxu0 %v1857
        %2575 = vmatpush.bf16.msra.mxu0 %v1793
        %2576 = vmatpush.bf16.msra.mxu0 %v1729
        %2577 = vmatmul.bf16.gmra.mxu0 %v2216
        %v2578 = vpop.f32.mrf.mxu0
        %v2579 = vadd.f32 0.0, %v2578
        %v2580 = vpop.f32.mrf.mxu0
        %2581 = vdwg.mxu0
        %2582 = vmatpush.bf16.msra.mxu0 0
        %2583 = vmatpush.bf16.msra.mxu0 0
        %2584 = vmatpush.bf16.msra.mxu0 0
        %2585 = vmatpush.bf16.msra.mxu0 0
        %2586 = vmatpush.bf16.msra.mxu0 %v1922
        %2587 = vmatpush.bf16.msra.mxu0 %v1858
        %2588 = vmatpush.bf16.msra.mxu0 %v1794
        %2589 = vmatpush.bf16.msra.mxu0 %v1730
        %2590 = vmatmul.bf16.gmra.mxu0 %v2216
        %v2591 = vpop.f32.mrf.mxu0
        %v2592 = vadd.f32 0.0, %v2591
        %v2593 = vpop.f32.mrf.mxu0
        %2594 = vdwg.mxu0
        %2595 = vmatpush.bf16.msra.mxu0 0
        %2596 = vmatpush.bf16.msra.mxu0 0
        %2597 = vmatpush.bf16.msra.mxu0 0
        %2598 = vmatpush.bf16.msra.mxu0 0
        %2599 = vmatpush.bf16.msra.mxu0 %v1923
        %2600 = vmatpush.bf16.msra.mxu0 %v1859
        %2601 = vmatpush.bf16.msra.mxu0 %v1795
        %2602 = vmatpush.bf16.msra.mxu0 %v1731
        %2603 = vmatmul.bf16.gmra.mxu0 %v2216
        %v2604 = vpop.f32.mrf.mxu0
        %v2605 = vadd.f32 0.0, %v2604
        %v2606 = vpop.f32.mrf.mxu0
        %2607 = vdwg.mxu0
        %2608 = vmatpush.bf16.msra.mxu0 0
        %2609 = vmatpush.bf16.msra.mxu0 0
        %2610 = vmatpush.bf16.msra.mxu0 0
        %2611 = vmatpush.bf16.msra.mxu0 0
        %2612 = vmatpush.bf16.msra.mxu0 %v1924
        %2613 = vmatpush.bf16.msra.mxu0 %v1860
        %2614 = vmatpush.bf16.msra.mxu0 %v1796
        %2615 = vmatpush.bf16.msra.mxu0 %v1732
        %2616 = vmatmul.bf16.gmra.mxu0 %v2216
        %v2617 = vpop.f32.mrf.mxu0
        %v2618 = vadd.f32 0.0, %v2617
        %v2619 = vpop.f32.mrf.mxu0
        %2620 = vdwg.mxu0
        %2621 = vmatpush.bf16.msra.mxu0 0
        %2622 = vmatpush.bf16.msra.mxu0 0
        %2623 = vmatpush.bf16.msra.mxu0 0
        %2624 = vmatpush.bf16.msra.mxu0 0
        %2625 = vmatpush.bf16.msra.mxu0 %v1925
        %2626 = vmatpush.bf16.msra.mxu0 %v1861
        %2627 = vmatpush.bf16.msra.mxu0 %v1797
        %2628 = vmatpush.bf16.msra.mxu0 %v1733
        %2629 = vmatmul.bf16.gmra.mxu0 %v2216
        %v2630 = vpop.f32.mrf.mxu0
        %v2631 = vadd.f32 0.0, %v2630
        %v2632 = vpop.f32.mrf.mxu0
        %2633 = vdwg.mxu0
        %2634 = vmatpush.bf16.msra.mxu0 0
        %2635 = vmatpush.bf16.msra.mxu0 0
        %2636 = vmatpush.bf16.msra.mxu0 0
        %2637 = vmatpush.bf16.msra.mxu0 0
        %2638 = vmatpush.bf16.msra.mxu0 %v1926
        %2639 = vmatpush.bf16.msra.mxu0 %v1862
        %2640 = vmatpush.bf16.msra.mxu0 %v1798
        %2641 = vmatpush.bf16.msra.mxu0 %v1734
        %2642 = vmatmul.bf16.gmra.mxu0 %v2216
        %v2643 = vpop.f32.mrf.mxu0
        %v2644 = vadd.f32 0.0, %v2643
        %v2645 = vpop.f32.mrf.mxu0
        %2646 = vdwg.mxu0
        %2647 = vmatpush.bf16.msra.mxu0 0
        %2648 = vmatpush.bf16.msra.mxu0 0
        %2649 = vmatpush.bf16.msra.mxu0 0
        %2650 = vmatpush.bf16.msra.mxu0 0
        %2651 = vmatpush.bf16.msra.mxu0 %v1927
        %2652 = vmatpush.bf16.msra.mxu0 %v1863
        %2653 = vmatpush.bf16.msra.mxu0 %v1799
        %2654 = vmatpush.bf16.msra.mxu0 %v1735
        %2655 = vmatmul.bf16.gmra.mxu0 %v2216
        %v2656 = vpop.f32.mrf.mxu0
        %v2657 = vadd.f32 0.0, %v2656
        %v2658 = vpop.f32.mrf.mxu0
        %2659 = vdwg.mxu0
        %2660 = vmatpush.bf16.msra.mxu0 0
        %2661 = vmatpush.bf16.msra.mxu0 0
        %2662 = vmatpush.bf16.msra.mxu0 0
        %2663 = vmatpush.bf16.msra.mxu0 0
        %2664 = vmatpush.bf16.msra.mxu0 %v1928
        %2665 = vmatpush.bf16.msra.mxu0 %v1864
        %2666 = vmatpush.bf16.msra.mxu0 %v1800
        %2667 = vmatpush.bf16.msra.mxu0 %v1736
        %2668 = vmatmul.bf16.gmra.mxu0 %v2216
        %v2669 = vpop.f32.mrf.mxu0
        %v2670 = vadd.f32 0.0, %v2669
        %v2671 = vpop.f32.mrf.mxu0
        %2672 = vdwg.mxu0
        %2673 = vmatpush.bf16.msra.mxu0 0
        %2674 = vmatpush.bf16.msra.mxu0 0
        %2675 = vmatpush.bf16.msra.mxu0 0
        %2676 = vmatpush.bf16.msra.mxu0 0
        %2677 = vmatpush.bf16.msra.mxu0 %v1929
        %2678 = vmatpush.bf16.msra.mxu0 %v1865
        %2679 = vmatpush.bf16.msra.mxu0 %v1801
        %2680 = vmatpush.bf16.msra.mxu0 %v1737
        %2681 = vmatmul.bf16.gmra.mxu0 %v2216
        %v2682 = vpop.f32.mrf.mxu0
        %v2683 = vadd.f32 0.0, %v2682
        %v2684 = vpop.f32.mrf.mxu0
        %2685 = vdwg.mxu0
        %2686 = vmatpush.bf16.msra.mxu0 0
        %2687 = vmatpush.bf16.msra.mxu0 0
        %2688 = vmatpush.bf16.msra.mxu0 0
        %2689 = vmatpush.bf16.msra.mxu0 0
        %2690 = vmatpush.bf16.msra.mxu0 %v1930
        %2691 = vmatpush.bf16.msra.mxu0 %v1866
        %2692 = vmatpush.bf16.msra.mxu0 %v1802
        %2693 = vmatpush.bf16.msra.mxu0 %v1738
        %2694 = vmatmul.bf16.gmra.mxu0 %v2216
        %v2695 = vpop.f32.mrf.mxu0
        %v2696 = vadd.f32 0.0, %v2695
        %v2697 = vpop.f32.mrf.mxu0
        %2698 = vdwg.mxu0
        %2699 = vmatpush.bf16.msra.mxu0 0
        %2700 = vmatpush.bf16.msra.mxu0 0
        %2701 = vmatpush.bf16.msra.mxu0 0
        %2702 = vmatpush.bf16.msra.mxu0 0
        %2703 = vmatpush.bf16.msra.mxu0 %v1931
        %2704 = vmatpush.bf16.msra.mxu0 %v1867
        %2705 = vmatpush.bf16.msra.mxu0 %v1803
        %2706 = vmatpush.bf16.msra.mxu0 %v1739
        %2707 = vmatmul.bf16.gmra.mxu0 %v2216
        %v2708 = vpop.f32.mrf.mxu0
        %v2709 = vadd.f32 0.0, %v2708
        %v2710 = vpop.f32.mrf.mxu0
        %2711 = vdwg.mxu0
        %2712 = vmatpush.bf16.msra.mxu0 0
        %2713 = vmatpush.bf16.msra.mxu0 0
        %2714 = vmatpush.bf16.msra.mxu0 0
        %2715 = vmatpush.bf16.msra.mxu0 0
        %2716 = vmatpush.bf16.msra.mxu0 %v1932
        %2717 = vmatpush.bf16.msra.mxu0 %v1868
        %2718 = vmatpush.bf16.msra.mxu0 %v1804
        %2719 = vmatpush.bf16.msra.mxu0 %v1740
        %2720 = vmatmul.bf16.gmra.mxu0 %v2216
        %v2721 = vpop.f32.mrf.mxu0
        %v2722 = vadd.f32 0.0, %v2721
        %v2723 = vpop.f32.mrf.mxu0
        %2724 = vdwg.mxu0
        %2725 = vmatpush.bf16.msra.mxu0 0
        %2726 = vmatpush.bf16.msra.mxu0 0
        %2727 = vmatpush.bf16.msra.mxu0 0
        %2728 = vmatpush.bf16.msra.mxu0 0
        %2729 = vmatpush.bf16.msra.mxu0 %v1933
        %2730 = vmatpush.bf16.msra.mxu0 %v1869
        %2731 = vmatpush.bf16.msra.mxu0 %v1805
        %2732 = vmatpush.bf16.msra.mxu0 %v1741
        %2733 = vmatmul.bf16.gmra.mxu0 %v2216
        %v2734 = vpop.f32.mrf.mxu0
        %v2735 = vadd.f32 0.0, %v2734
        %v2736 = vpop.f32.mrf.mxu0
        %2737 = vdwg.mxu0
        %2738 = vmatpush.bf16.msra.mxu0 0
        %2739 = vmatpush.bf16.msra.mxu0 0
        %2740 = vmatpush.bf16.msra.mxu0 0
        %2741 = vmatpush.bf16.msra.mxu0 0
        %2742 = vmatpush.bf16.msra.mxu0 %v1934
        %2743 = vmatpush.bf16.msra.mxu0 %v1870
        %2744 = vmatpush.bf16.msra.mxu0 %v1806
        %2745 = vmatpush.bf16.msra.mxu0 %v1742
        %2746 = vmatmul.bf16.gmra.mxu0 %v2216
        %v2747 = vpop.f32.mrf.mxu0
        %v2748 = vadd.f32 0.0, %v2747
        %v2749 = vpop.f32.mrf.mxu0
        %2750 = vdwg.mxu0
        %2751 = vmatpush.bf16.msra.mxu0 0
        %2752 = vmatpush.bf16.msra.mxu0 0
        %2753 = vmatpush.bf16.msra.mxu0 0
        %2754 = vmatpush.bf16.msra.mxu0 0
        %2755 = vmatpush.bf16.msra.mxu0 %v1935
        %2756 = vmatpush.bf16.msra.mxu0 %v1871
        %2757 = vmatpush.bf16.msra.mxu0 %v1807
        %2758 = vmatpush.bf16.msra.mxu0 %v1743
        %2759 = vmatmul.bf16.gmra.mxu0 %v2216
        %v2760 = vpop.f32.mrf.mxu0
        %v2761 = vadd.f32 0.0, %v2760
        %v2762 = vpop.f32.mrf.mxu0
        %2763 = vdwg.mxu0
        %2764 = vmatpush.bf16.msra.mxu0 0
        %2765 = vmatpush.bf16.msra.mxu0 0
        %2766 = vmatpush.bf16.msra.mxu0 0
        %2767 = vmatpush.bf16.msra.mxu0 0
        %2768 = vmatpush.bf16.msra.mxu0 %v1936
        %2769 = vmatpush.bf16.msra.mxu0 %v1872
        %2770 = vmatpush.bf16.msra.mxu0 %v1808
        %2771 = vmatpush.bf16.msra.mxu0 %v1744
        %2772 = vmatmul.bf16.gmra.mxu0 %v2216
        %v2773 = vpop.f32.mrf.mxu0
        %v2774 = vadd.f32 0.0, %v2773
        %v2775 = vpop.f32.mrf.mxu0
        %2776 = vdwg.mxu0
        %2777 = vmatpush.bf16.msra.mxu0 0
        %2778 = vmatpush.bf16.msra.mxu0 0
        %2779 = vmatpush.bf16.msra.mxu0 0
        %2780 = vmatpush.bf16.msra.mxu0 0
        %2781 = vmatpush.bf16.msra.mxu0 %v1937
        %2782 = vmatpush.bf16.msra.mxu0 %v1873
        %2783 = vmatpush.bf16.msra.mxu0 %v1809
        %2784 = vmatpush.bf16.msra.mxu0 %v1745
        %2785 = vmatmul.bf16.gmra.mxu0 %v2216
        %v2786 = vpop.f32.mrf.mxu0
        %v2787 = vadd.f32 0.0, %v2786
        %v2788 = vpop.f32.mrf.mxu0
        %2789 = vdwg.mxu0
        %2790 = vmatpush.bf16.msra.mxu0 0
        %2791 = vmatpush.bf16.msra.mxu0 0
        %2792 = vmatpush.bf16.msra.mxu0 0
        %2793 = vmatpush.bf16.msra.mxu0 0
        %2794 = vmatpush.bf16.msra.mxu0 %v1938
        %2795 = vmatpush.bf16.msra.mxu0 %v1874
        %2796 = vmatpush.bf16.msra.mxu0 %v1810
        %2797 = vmatpush.bf16.msra.mxu0 %v1746
        %2798 = vmatmul.bf16.gmra.mxu0 %v2216
        %v2799 = vpop.f32.mrf.mxu0
        %v2800 = vadd.f32 0.0, %v2799
        %v2801 = vpop.f32.mrf.mxu0
        %2802 = vdwg.mxu0
        %2803 = vmatpush.bf16.msra.mxu0 0
        %2804 = vmatpush.bf16.msra.mxu0 0
        %2805 = vmatpush.bf16.msra.mxu0 0
        %2806 = vmatpush.bf16.msra.mxu0 0
        %2807 = vmatpush.bf16.msra.mxu0 %v1939
        %2808 = vmatpush.bf16.msra.mxu0 %v1875
        %2809 = vmatpush.bf16.msra.mxu0 %v1811
        %2810 = vmatpush.bf16.msra.mxu0 %v1747
        %2811 = vmatmul.bf16.gmra.mxu0 %v2216
        %v2812 = vpop.f32.mrf.mxu0
        %v2813 = vadd.f32 0.0, %v2812
        %v2814 = vpop.f32.mrf.mxu0
        %2815 = vdwg.mxu0
        %2816 = vmatpush.bf16.msra.mxu0 0
        %2817 = vmatpush.bf16.msra.mxu0 0
        %2818 = vmatpush.bf16.msra.mxu0 0
        %2819 = vmatpush.bf16.msra.mxu0 0
        %2820 = vmatpush.bf16.msra.mxu0 %v1940
        %2821 = vmatpush.bf16.msra.mxu0 %v1876
        %2822 = vmatpush.bf16.msra.mxu0 %v1812
        %2823 = vmatpush.bf16.msra.mxu0 %v1748
        %2824 = vmatmul.bf16.gmra.mxu0 %v2216
        %v2825 = vpop.f32.mrf.mxu0
        %v2826 = vadd.f32 0.0, %v2825
        %v2827 = vpop.f32.mrf.mxu0
        %2828 = vdwg.mxu0
        %2829 = vmatpush.bf16.msra.mxu0 0
        %2830 = vmatpush.bf16.msra.mxu0 0
        %2831 = vmatpush.bf16.msra.mxu0 0
        %2832 = vmatpush.bf16.msra.mxu0 0
        %2833 = vmatpush.bf16.msra.mxu0 %v1941
        %2834 = vmatpush.bf16.msra.mxu0 %v1877
        %2835 = vmatpush.bf16.msra.mxu0 %v1813
        %2836 = vmatpush.bf16.msra.mxu0 %v1749
        %2837 = vmatmul.bf16.gmra.mxu0 %v2216
        %v2838 = vpop.f32.mrf.mxu0
        %v2839 = vadd.f32 0.0, %v2838
        %v2840 = vpop.f32.mrf.mxu0
        %2841 = vdwg.mxu0
        %2842 = vmatpush.bf16.msra.mxu0 0
        %2843 = vmatpush.bf16.msra.mxu0 0
        %2844 = vmatpush.bf16.msra.mxu0 0
        %2845 = vmatpush.bf16.msra.mxu0 0
        %2846 = vmatpush.bf16.msra.mxu0 %v1942
        %2847 = vmatpush.bf16.msra.mxu0 %v1878
        %2848 = vmatpush.bf16.msra.mxu0 %v1814
        %2849 = vmatpush.bf16.msra.mxu0 %v1750
        %2850 = vmatmul.bf16.gmra.mxu0 %v2216
        %v2851 = vpop.f32.mrf.mxu0
        %v2852 = vadd.f32 0.0, %v2851
        %v2853 = vpop.f32.mrf.mxu0
        %2854 = vdwg.mxu0
        %2855 = vmatpush.bf16.msra.mxu0 0
        %2856 = vmatpush.bf16.msra.mxu0 0
        %2857 = vmatpush.bf16.msra.mxu0 0
        %2858 = vmatpush.bf16.msra.mxu0 0
        %2859 = vmatpush.bf16.msra.mxu0 %v1943
        %2860 = vmatpush.bf16.msra.mxu0 %v1879
        %2861 = vmatpush.bf16.msra.mxu0 %v1815
        %2862 = vmatpush.bf16.msra.mxu0 %v1751
        %2863 = vmatmul.bf16.gmra.mxu0 %v2216
        %v2864 = vpop.f32.mrf.mxu0
        %v2865 = vadd.f32 0.0, %v2864
        %v2866 = vpop.f32.mrf.mxu0
        %2867 = vdwg.mxu0
        %2868 = vmatpush.bf16.msra.mxu0 0
        %2869 = vmatpush.bf16.msra.mxu0 0
        %2870 = vmatpush.bf16.msra.mxu0 0
        %2871 = vmatpush.bf16.msra.mxu0 0
        %2872 = vmatpush.bf16.msra.mxu0 %v1944
        %2873 = vmatpush.bf16.msra.mxu0 %v1880
        %2874 = vmatpush.bf16.msra.mxu0 %v1816
        %2875 = vmatpush.bf16.msra.mxu0 %v1752
        %2876 = vmatmul.bf16.gmra.mxu0 %v2216
        %v2877 = vpop.f32.mrf.mxu0
        %v2878 = vadd.f32 0.0, %v2877
        %v2879 = vpop.f32.mrf.mxu0
        %2880 = vdwg.mxu0
        %2881 = vmatpush.bf16.msra.mxu0 0
        %2882 = vmatpush.bf16.msra.mxu0 0
        %2883 = vmatpush.bf16.msra.mxu0 0
        %2884 = vmatpush.bf16.msra.mxu0 0
        %2885 = vmatpush.bf16.msra.mxu0 %v1945
        %2886 = vmatpush.bf16.msra.mxu0 %v1881
        %2887 = vmatpush.bf16.msra.mxu0 %v1817
        %2888 = vmatpush.bf16.msra.mxu0 %v1753
        %2889 = vmatmul.bf16.gmra.mxu0 %v2216
        %v2890 = vpop.f32.mrf.mxu0
        %v2891 = vadd.f32 0.0, %v2890
        %v2892 = vpop.f32.mrf.mxu0
        %2893 = vdwg.mxu0
        %2894 = vmatpush.bf16.msra.mxu0 0
        %2895 = vmatpush.bf16.msra.mxu0 0
        %2896 = vmatpush.bf16.msra.mxu0 0
        %2897 = vmatpush.bf16.msra.mxu0 0
        %2898 = vmatpush.bf16.msra.mxu0 %v1946
        %2899 = vmatpush.bf16.msra.mxu0 %v1882
        %2900 = vmatpush.bf16.msra.mxu0 %v1818
        %2901 = vmatpush.bf16.msra.mxu0 %v1754
        %2902 = vmatmul.bf16.gmra.mxu0 %v2216
        %v2903 = vpop.f32.mrf.mxu0
        %v2904 = vadd.f32 0.0, %v2903
        %v2905 = vpop.f32.mrf.mxu0
        %2906 = vdwg.mxu0
        %2907 = vmatpush.bf16.msra.mxu0 0
        %2908 = vmatpush.bf16.msra.mxu0 0
        %2909 = vmatpush.bf16.msra.mxu0 0
        %2910 = vmatpush.bf16.msra.mxu0 0
        %2911 = vmatpush.bf16.msra.mxu0 %v1947
        %2912 = vmatpush.bf16.msra.mxu0 %v1883
        %2913 = vmatpush.bf16.msra.mxu0 %v1819
        %2914 = vmatpush.bf16.msra.mxu0 %v1755
        %2915 = vmatmul.bf16.gmra.mxu0 %v2216
        %v2916 = vpop.f32.mrf.mxu0
        %v2917 = vadd.f32 0.0, %v2916
        %v2918 = vpop.f32.mrf.mxu0
        %2919 = vdwg.mxu0
        %2920 = vmatpush.bf16.msra.mxu0 0
        %2921 = vmatpush.bf16.msra.mxu0 0
        %2922 = vmatpush.bf16.msra.mxu0 0
        %2923 = vmatpush.bf16.msra.mxu0 0
        %2924 = vmatpush.bf16.msra.mxu0 %v1948
        %2925 = vmatpush.bf16.msra.mxu0 %v1884
        %2926 = vmatpush.bf16.msra.mxu0 %v1820
        %2927 = vmatpush.bf16.msra.mxu0 %v1756
        %2928 = vmatmul.bf16.gmra.mxu0 %v2216
        %v2929 = vpop.f32.mrf.mxu0
        %v2930 = vadd.f32 0.0, %v2929
        %v2931 = vpop.f32.mrf.mxu0
        %2932 = vdwg.mxu0
        %2933 = vmatpush.bf16.msra.mxu0 0
        %2934 = vmatpush.bf16.msra.mxu0 0
        %2935 = vmatpush.bf16.msra.mxu0 0
        %2936 = vmatpush.bf16.msra.mxu0 0
        %2937 = vmatpush.bf16.msra.mxu0 %v1949
        %2938 = vmatpush.bf16.msra.mxu0 %v1885
        %2939 = vmatpush.bf16.msra.mxu0 %v1821
        %2940 = vmatpush.bf16.msra.mxu0 %v1757
        %2941 = vmatmul.bf16.gmra.mxu0 %v2216
        %v2942 = vpop.f32.mrf.mxu0
        %v2943 = vadd.f32 0.0, %v2942
        %v2944 = vpop.f32.mrf.mxu0
        %2945 = vdwg.mxu0
        %2946 = vmatpush.bf16.msra.mxu0 0
        %2947 = vmatpush.bf16.msra.mxu0 0
        %2948 = vmatpush.bf16.msra.mxu0 0
        %2949 = vmatpush.bf16.msra.mxu0 0
        %2950 = vmatpush.bf16.msra.mxu0 %v1950
        %2951 = vmatpush.bf16.msra.mxu0 %v1886
        %2952 = vmatpush.bf16.msra.mxu0 %v1822
        %2953 = vmatpush.bf16.msra.mxu0 %v1758
        %2954 = vmatmul.bf16.gmra.mxu0 %v2216
        %v2955 = vpop.f32.mrf.mxu0
        %v2956 = vadd.f32 0.0, %v2955
        %v2957 = vpop.f32.mrf.mxu0
        %2958 = vdwg.mxu0
        %2959 = vmatpush.bf16.msra.mxu0 0
        %2960 = vmatpush.bf16.msra.mxu0 0
        %2961 = vmatpush.bf16.msra.mxu0 0
        %2962 = vmatpush.bf16.msra.mxu0 0
        %2963 = vmatpush.bf16.msra.mxu0 %v1951
        %2964 = vmatpush.bf16.msra.mxu0 %v1887
        %2965 = vmatpush.bf16.msra.mxu0 %v1823
        %2966 = vmatpush.bf16.msra.mxu0 %v1759
        %2967 = vmatmul.bf16.gmra.mxu0 %v2216
        %v2968 = vpop.f32.mrf.mxu0
        %v2969 = vadd.f32 0.0, %v2968
        %v2970 = vpop.f32.mrf.mxu0
        %2971 = vdwg.mxu0
        %2972 = vmatpush.bf16.msra.mxu0 0
        %2973 = vmatpush.bf16.msra.mxu0 0
        %2974 = vmatpush.bf16.msra.mxu0 0
        %2975 = vmatpush.bf16.msra.mxu0 0
        %2976 = vmatpush.bf16.msra.mxu0 %v1952
        %2977 = vmatpush.bf16.msra.mxu0 %v1888
        %2978 = vmatpush.bf16.msra.mxu0 %v1824
        %2979 = vmatpush.bf16.msra.mxu0 %v1760
        %2980 = vmatmul.bf16.gmra.mxu0 %v2216
        %v2981 = vpop.f32.mrf.mxu0
        %v2982 = vadd.f32 0.0, %v2981
        %v2983 = vpop.f32.mrf.mxu0
        %2984 = vdwg.mxu0
        %2985 = vmatpush.bf16.msra.mxu0 0
        %2986 = vmatpush.bf16.msra.mxu0 0
        %2987 = vmatpush.bf16.msra.mxu0 0
        %2988 = vmatpush.bf16.msra.mxu0 0
        %2989 = vmatpush.bf16.msra.mxu0 %v1953
        %2990 = vmatpush.bf16.msra.mxu0 %v1889
        %2991 = vmatpush.bf16.msra.mxu0 %v1825
        %2992 = vmatpush.bf16.msra.mxu0 %v1761
        %2993 = vmatmul.bf16.gmra.mxu0 %v2216
        %v2994 = vpop.f32.mrf.mxu0
        %v2995 = vadd.f32 0.0, %v2994
        %v2996 = vpop.f32.mrf.mxu0
        %2997 = vdwg.mxu0
        %2998 = vmatpush.bf16.msra.mxu0 0
        %2999 = vmatpush.bf16.msra.mxu0 0
        %3000 = vmatpush.bf16.msra.mxu0 0
        %3001 = vmatpush.bf16.msra.mxu0 0
        %3002 = vmatpush.bf16.msra.mxu0 %v1954
        %3003 = vmatpush.bf16.msra.mxu0 %v1890
        %3004 = vmatpush.bf16.msra.mxu0 %v1826
        %3005 = vmatpush.bf16.msra.mxu0 %v1762
        %3006 = vmatmul.bf16.gmra.mxu0 %v2216
        %v3007 = vpop.f32.mrf.mxu0
        %v3008 = vadd.f32 0.0, %v3007
        %v3009 = vpop.f32.mrf.mxu0
        %3010 = vdwg.mxu0
        %3011 = vmatpush.bf16.msra.mxu0 0
        %3012 = vmatpush.bf16.msra.mxu0 0
        %3013 = vmatpush.bf16.msra.mxu0 0
        %3014 = vmatpush.bf16.msra.mxu0 0
        %3015 = vmatpush.bf16.msra.mxu0 %v1955
        %3016 = vmatpush.bf16.msra.mxu0 %v1891
        %3017 = vmatpush.bf16.msra.mxu0 %v1827
        %3018 = vmatpush.bf16.msra.mxu0 %v1763
        %3019 = vmatmul.bf16.gmra.mxu0 %v2216
        %v3020 = vpop.f32.mrf.mxu0
        %v3021 = vadd.f32 0.0, %v3020
        %v3022 = vpop.f32.mrf.mxu0
        %3023 = vdwg.mxu0
        %3024 = vmatpush.bf16.msra.mxu0 0
        %3025 = vmatpush.bf16.msra.mxu0 0
        %3026 = vmatpush.bf16.msra.mxu0 0
        %3027 = vmatpush.bf16.msra.mxu0 0
        %3028 = vmatpush.bf16.msra.mxu0 %v1956
        %3029 = vmatpush.bf16.msra.mxu0 %v1892
        %3030 = vmatpush.bf16.msra.mxu0 %v1828
        %3031 = vmatpush.bf16.msra.mxu0 %v1764
        %3032 = vmatmul.bf16.gmra.mxu0 %v2216
        %v3033 = vpop.f32.mrf.mxu0
        %v3034 = vadd.f32 0.0, %v3033
        %v3035 = vpop.f32.mrf.mxu0
        %3036 = vdwg.mxu0
        %3037 = vmatpush.bf16.msra.mxu0 0
        %3038 = vmatpush.bf16.msra.mxu0 0
        %3039 = vmatpush.bf16.msra.mxu0 0
        %3040 = vmatpush.bf16.msra.mxu0 0
        %3041 = vmatpush.bf16.msra.mxu0 %v1957
        %3042 = vmatpush.bf16.msra.mxu0 %v1893
        %3043 = vmatpush.bf16.msra.mxu0 %v1829
        %3044 = vmatpush.bf16.msra.mxu0 %v1765
        %3045 = vmatmul.bf16.gmra.mxu0 %v2216
        %v3046 = vpop.f32.mrf.mxu0
        %v3047 = vadd.f32 0.0, %v3046
        %v3048 = vpop.f32.mrf.mxu0
        %3049 = vdwg.mxu0
        %v3050 = vtanh.pop %v2228
        %v3051 = vtanh.pop %v2241
        %v3052 = vtanh.pop %v2254
        %v3053 = vtanh.pop %v2267
        %v3054 = vtanh.pop %v2280
        %v3055 = vtanh.pop %v2293
        %v3056 = vtanh.pop %v2306
        %v3057 = vtanh.pop %v2319
        %v3058 = vtanh.pop %v2332
        %v3059 = vtanh.pop %v2345
        %v3060 = vtanh.pop %v2358
        %v3061 = vtanh.pop %v2371
        %v3062 = vtanh.pop %v2384
        %v3063 = vtanh.pop %v2397
        %v3064 = vtanh.pop %v2410
        %v3065 = vtanh.pop %v2423
        %v3066 = vtanh.pop %v2436
        %v3067 = vtanh.pop %v2449
        %v3068 = vtanh.pop %v2462
        %v3069 = vtanh.pop %v2475
        %v3070 = vtanh.pop %v2488
        %v3071 = vtanh.pop %v2501
        %v3072 = vtanh.pop %v2514
        %v3073 = vtanh.pop %v2527
        %v3074 = vtanh.pop %v2540
        %v3075 = vtanh.pop %v2553
        %v3076 = vtanh.pop %v2566
        %v3077 = vtanh.pop %v2579
        %v3078 = vtanh.pop %v2592
        %v3079 = vtanh.pop %v2605
        %v3080 = vtanh.pop %v2618
        %v3081 = vtanh.pop %v2631
        %v3082 = vtanh.pop %v2644
        %v3083 = vtanh.pop %v2657
        %v3084 = vtanh.pop %v2670
        %v3085 = vtanh.pop %v2683
        %v3086 = vtanh.pop %v2696
        %v3087 = vtanh.pop %v2709
        %v3088 = vtanh.pop %v2722
        %v3089 = vtanh.pop %v2735
        %v3090 = vtanh.pop %v2748
        %v3091 = vtanh.pop %v2761
        %v3092 = vtanh.pop %v2774
        %v3093 = vtanh.pop %v2787
        %v3094 = vtanh.pop %v2800
        %v3095 = vtanh.pop %v2813
        %v3096 = vtanh.pop %v2826
        %v3097 = vtanh.pop %v2839
        %v3098 = vtanh.pop %v2852
        %v3099 = vtanh.pop %v2865
        %v3100 = vtanh.pop %v2878
        %v3101 = vtanh.pop %v2891
        %v3102 = vtanh.pop %v2904
        %v3103 = vtanh.pop %v2917
        %v3104 = vtanh.pop %v2930
        %v3105 = vtanh.pop %v2943
        %v3106 = vtanh.pop %v2956
        %v3107 = vtanh.pop %v2969
        %v3108 = vtanh.pop %v2982
        %v3109 = vtanh.pop %v2995
        %v3110 = vtanh.pop %v3008
        %v3111 = vtanh.pop %v3021
        %v3112 = vtanh.pop %v3034
        %v3113 = vtanh.pop %v3047
        %3114 = vst [vmem:[%s674] sm:$0xff] %v3050
        %3115 = vst [vmem:[%s674 + $0x8] sm:$0xff] %v3051
        %3116 = vst [vmem:[%s674 + $0x10] sm:$0xff] %v3052
        %3117 = vst [vmem:[%s674 + $0x18] sm:$0xff] %v3053
        %3118 = vst [vmem:[%s674 + $0x20] sm:$0xff] %v3054
        %3119 = vst [vmem:[%s674 + $0x28] sm:$0xff] %v3055
        %3120 = vst [vmem:[%s674 + $0x30] sm:$0xff] %v3056
        %3121 = vst [vmem:[%s674 + $0x38] sm:$0xff] %v3057
        %3122 = vst [vmem:[%s674 + $0x40] sm:$0xff] %v3058
        %3123 = vst [vmem:[%s674 + $0x48] sm:$0xff] %v3059
        %3124 = vst [vmem:[%s674 + $0x50] sm:$0xff] %v3060
        %3125 = vst [vmem:[%s674 + $0x58] sm:$0xff] %v3061
        %3126 = vst [vmem:[%s674 + $0x60] sm:$0xff] %v3062
        %3127 = vst [vmem:[%s674 + $0x68] sm:$0xff] %v3063
        %3128 = vst [vmem:[%s674 + $0x70] sm:$0xff] %v3064
        %3129 = vst [vmem:[%s674 + $0x78] sm:$0xff] %v3065
        %3130 = vst [vmem:[%s674 + $0x80] sm:$0xff] %v3066
        %3131 = vst [vmem:[%s674 + $0x88] sm:$0xff] %v3067
        %3132 = vst [vmem:[%s674 + $0x90] sm:$0xff] %v3068
        %3133 = vst [vmem:[%s674 + $0x98] sm:$0xff] %v3069
        %3134 = vst [vmem:[%s674 + $0xa0] sm:$0xff] %v3070
        %3135 = vst [vmem:[%s674 + $0xa8] sm:$0xff] %v3071
        %3136 = vst [vmem:[%s674 + $0xb0] sm:$0xff] %v3072
        %3137 = vst [vmem:[%s674 + $0xb8] sm:$0xff] %v3073
        %3138 = vst [vmem:[%s674 + $0xc0] sm:$0xff] %v3074
        %3139 = vst [vmem:[%s674 + $0xc8] sm:$0xff] %v3075
        %3140 = vst [vmem:[%s674 + $0xd0] sm:$0xff] %v3076
        %3141 = vst [vmem:[%s674 + $0xd8] sm:$0xff] %v3077
        %3142 = vst [vmem:[%s674 + $0xe0] sm:$0xff] %v3078
        %3143 = vst [vmem:[%s674 + $0xe8] sm:$0xff] %v3079
        %3144 = vst [vmem:[%s674 + $0xf0] sm:$0xff] %v3080
        %3145 = vst [vmem:[%s674 + $0xf8] sm:$0xff] %v3081
        %3146 = vst [vmem:[%s674 + $0x100] sm:$0xff] %v3082
        %3147 = vst [vmem:[%s674 + $0x108] sm:$0xff] %v3083
        %3148 = vst [vmem:[%s674 + $0x110] sm:$0xff] %v3084
        %3149 = vst [vmem:[%s674 + $0x118] sm:$0xff] %v3085
        %3150 = vst [vmem:[%s674 + $0x120] sm:$0xff] %v3086
        %3151 = vst [vmem:[%s674 + $0x128] sm:$0xff] %v3087
        %3152 = vst [vmem:[%s674 + $0x130] sm:$0xff] %v3088
        %3153 = vst [vmem:[%s674 + $0x138] sm:$0xff] %v3089
        %3154 = vst [vmem:[%s674 + $0x140] sm:$0xff] %v3090
        %3155 = vst [vmem:[%s674 + $0x148] sm:$0xff] %v3091
        %3156 = vst [vmem:[%s674 + $0x150] sm:$0xff] %v3092
        %3157 = vst [vmem:[%s674 + $0x158] sm:$0xff] %v3093
        %3158 = vst [vmem:[%s674 + $0x160] sm:$0xff] %v3094
        %3159 = vst [vmem:[%s674 + $0x168] sm:$0xff] %v3095
        %3160 = vst [vmem:[%s674 + $0x170] sm:$0xff] %v3096
        %3161 = vst [vmem:[%s674 + $0x178] sm:$0xff] %v3097
        %3162 = vst [vmem:[%s674 + $0x180] sm:$0xff] %v3098
        %3163 = vst [vmem:[%s674 + $0x188] sm:$0xff] %v3099
        %3164 = vst [vmem:[%s674 + $0x190] sm:$0xff] %v3100
        %3165 = vst [vmem:[%s674 + $0x198] sm:$0xff] %v3101
        %3166 = vst [vmem:[%s674 + $0x1a0] sm:$0xff] %v3102
        %3167 = vst [vmem:[%s674 + $0x1a8] sm:$0xff] %v3103
        %3168 = vst [vmem:[%s674 + $0x1b0] sm:$0xff] %v3104
        %3169 = vst [vmem:[%s674 + $0x1b8] sm:$0xff] %v3105
        %3170 = vst [vmem:[%s674 + $0x1c0] sm:$0xff] %v3106
        %3171 = vst [vmem:[%s674 + $0x1c8] sm:$0xff] %v3107
        %3172 = vst [vmem:[%s674 + $0x1d0] sm:$0xff] %v3108
        %3173 = vst [vmem:[%s674 + $0x1d8] sm:$0xff] %v3109
        %3174 = vst [vmem:[%s674 + $0x1e0] sm:$0xff] %v3110
        %3175 = vst [vmem:[%s674 + $0x1e8] sm:$0xff] %v3111
        %3176 = vst [vmem:[%s674 + $0x1f0] sm:$0xff] %v3112
        %3177 = vst [vmem:[%s674 + $0x1f8] sm:$0xff] %v3113
        %s3178 = smul.u32 64, %s13
        %p3179 = scmp.lt.s32.totalorder %s3178, 255
        %s3180 = scalar_select %p3179, %s3178, 255
        %s3181 = smul.addr %s3180, 8
        %s3182 = scalar_lea.vmem %s2, %s3181
        // Predicated region
        $region52: #{_lambda_.11} parent=46 // pred_check
          %p3183 = pneg %p78
        $region53: #{_lambda_.11} parent=46 // pred_check_branch
          %3185 = sbr.rel (%p3183) target = $region55
        $region54: #{_lambda_.11} parent=46 // pred_region
          %s3186 = smul.u32 64, %s13
        $region55: #{_lambda_.11} parent=46 // pred_fallthru
          _
      $region47: #{_lambda_.11} parent=5 // pred_fallthru
        _
      %p3187 = scmp.le.s32.totalorder 2, %s8
      // Predicated region
      $region56: #{_lambda_.11} parent=5 // pred_check
        %p3188 = pneg %p3187
      $region57: #{_lambda_.11} parent=5 // pred_check_branch
        %3190 = sbr.rel (%p3188) target = $region59
      $region58: #{_lambda_.11} parent=5 // pred_region
        %s3191 = ssub.s32 %s8, 2
        // Predicated region
        $region60: #{_lambda_.11} parent=58 // pred_check
          %p3192 = pneg %p84
        $region61: #{_lambda_.11} parent=58 // pred_check_branch
          %3194 = sbr.rel (%p3192) target = $region63
        $region62: #{_lambda_.11} parent=58 // pred_region
          %s3195 = smul.u32 64, %s14
          %p3196 = scmp.lt.s32.totalorder %s3195, 255
          %s3197 = scalar_select %p3196, %s3195, 255
          %s3198 = smul.addr %s3197, 8
          %s3199 = scalar_lea.vmem %s2, %s3198
        $region63: #{_lambda_.11} parent=58 // pred_fallthru
          _
      $region59: #{_lambda_.11} parent=5 // pred_fallthru
        _
    $region6: #{_lambda_.11} parent=1 // loop_footer
      %s12 = sadd.s32 1, %s8
    $region7: #{_lambda_.11} parent=1 // loop_footer_branch
      %7 = sbr.rel target = $region3
    $region8: #{_lambda_.11} parent=1 // loop_exit
      _

</llo_original>
